<compile_context>
chip_gen: v7x
topology: tpu7x:2x2x1
jax: 0.10.0
libtpu: 0.0.40
codegen_flags: <defaults>
</compile_context>

<pallas_src>
import functools

import jax
import jax.numpy as jnp
from jax import lax
from jax.experimental import pallas as pl
from jax.experimental.pallas import tpu as pltpu


# ----------------------------------------------------------------------------
# helpers
# ----------------------------------------------------------------------------
def _round_up(x, m):
    return ((x + m - 1) // m) * m


def _pick_tm(m_rows, cap=256, align=16):
    """Largest tile <= cap (multiple of `align`) dividing m_rows; else cap (pad path)."""
    hi = min(cap, _round_up(m_rows, align))
    hi -= hi % align
    for t in range(hi, align - 1, -align):
        if m_rows % t == 0:
            return t
    return hi


# ----------------------------------------------------------------------------
# Pallas kernels
# ----------------------------------------------------------------------------
def _matmul_bias_kernel(a_ref, b_ref, off_ref, o_ref, *, relu):
    # (tm, K) bf16 @ (K, N) bf16 -> f32 accumulate, + per-channel offset, optional ReLU.
    acc = jnp.dot(a_ref[...], b_ref[...], preferred_element_type=jnp.float32)
    y = acc + off_ref[...]
    if relu:
        y = jnp.maximum(y, 0.0)
    o_ref[...] = y.astype(o_ref.dtype)


def _conv3_taps_kernel(xw_ref, w_ref, off_ref, o_ref, *, tap_offsets, tm, relu):
    # 3x3x3 conv as 9 in-kernel tap matmuls over a flattened, padded activation.
    # xw_ref : (rows, 3*Cin) bf16, fully VMEM-resident (same block every grid step)
    # w_ref  : (9, 3*Cin, Cout) bf16 (BN scale folded)
    # off_ref: (1, Cout) f32
    i = pl.program_id(0)
    base = pl.multiple_of(i * tm, 16)          # tm is a multiple of 16
    cout = o_ref.shape[-1]
    acc = jnp.zeros((tm, cout), jnp.float32)
    for t, roff in enumerate(tap_offsets):      # 9 static, 16-aligned row offsets
        a = xw_ref[pl.ds(base + roff, tm), :]   # (tm, 3*Cin) bf16
        acc = acc + jnp.dot(a, w_ref[t], preferred_element_type=jnp.float32)
    y = acc + off_ref[...]
    if relu:
        y = jnp.maximum(y, 0.0)
    o_ref[...] = y.astype(o_ref.dtype)


# ----------------------------------------------------------------------------
# wrappers
# ----------------------------------------------------------------------------
def fused_matmul_bias(a, b, off, *, relu=False, out_dtype=jnp.bfloat16):
    """relu?(a @ b + off).  a:[M,K], b:[K,N], off:[N] f32 -> [M,N] bf16."""
    M, K = a.shape
    N = b.shape[1]
    tm = _pick_tm(M)
    Mp = _round_up(M, tm)
    if Mp != M:                                   # fallback only; common path divides
        a = jnp.pad(a, ((0, Mp - M), (0, 0)))
    out = pl.pallas_call(
        functools.partial(_matmul_bias_kernel, relu=relu),
        out_shape=jax.ShapeDtypeStruct((Mp, N), out_dtype),
        grid_spec=pltpu.PrefetchScalarGridSpec(
            num_scalar_prefetch=0,
            grid=(Mp // tm,),
            in_specs=[
                pl.BlockSpec((tm, K), lambda i: (i, 0)),
                pl.BlockSpec((K, N), lambda i: (0, 0)),
                pl.BlockSpec((1, N), lambda i: (0, 0)),
            ],
            out_specs=pl.BlockSpec((tm, N), lambda i: (i, 0)),
        ),
        compiler_params=pltpu.CompilerParams(dimension_semantics=("parallel",)),
    )(a.astype(jnp.bfloat16), b.astype(jnp.bfloat16),
      off.reshape(1, N).astype(jnp.float32))
    return out[:M] if Mp != M else out


def conv3x3x3_bn_relu(x, w_taps, off, *, relu=True, tm_cap=256):
    """3x3x3 'same' conv (+ folded BN + ReLU) on an NDHWC bf16 activation.

    w_taps: [9, 3*Cin, Cout] bf16 (BN scale folded in), off: [Cout] f32.
    """
    N, D, H, W, C = x.shape
    cout = w_taps.shape[-1]
    Dp, Hp = D + 2, H + 2
    Wp = _round_up(W + 2, 16)                 # 16-align row offsets for packed bf16
    # spatial zero-pad (conv halo + lane alignment), flatten all padded voxels to rows
    xp = jnp.pad(x, ((0, 0), (1, 1), (1, 1), (1, Wp - W - 1), (0, 0)))
    m_in = N * Dp * Hp * Wp
    xflat = xp.reshape(m_in, C)

    tm = min(tm_cap, _round_up(m_in, 16))
    m_comp = _round_up(m_in, tm)
    off_max = (2 * Hp + 2) * Wp               # largest (kd,kh) row offset, 16-aligned
    rows = m_comp + off_max
    xflat = jnp.pad(xflat, ((0, rows + 2 - m_in), (0, 0)))
    # fold only the kw taps (0,1,2) into the K dimension: [rows, 3*C]
    xw = jnp.concatenate([xflat[k:k + rows] for k in range(3)], axis=1)

    tap_offsets = tuple((kd * Hp + kh) * Wp for kd in range(3) for kh in range(3))
    kernel = functools.partial(_conv3_taps_kernel, tap_offsets=tap_offsets,
                               tm=tm, relu=relu)
    out = pl.pallas_call(
        kernel,
        out_shape=jax.ShapeDtypeStruct((m_comp, cout), jnp.bfloat16),
        grid_spec=pltpu.PrefetchScalarGridSpec(
            num_scalar_prefetch=0,
            grid=(m_comp // tm,),
            in_specs=[
                pl.BlockSpec((rows, 3 * C), lambda i: (0, 0)),      # VMEM-resident
                pl.BlockSpec((9, 3 * C, cout), lambda i: (0, 0, 0)),
                pl.BlockSpec((1, cout), lambda i: (0, 0)),
            ],
            out_specs=pl.BlockSpec((tm, cout), lambda i: (i, 0)),
        ),
        compiler_params=pltpu.CompilerParams(dimension_semantics=("parallel",)),
    )(xw.astype(jnp.bfloat16), w_taps.astype(jnp.bfloat16),
      off.reshape(1, cout).astype(jnp.float32))
    # keep only the valid (un-padded) voxels
    return out[:m_in].reshape(N, Dp, Hp, Wp, cout)[:, :D, :H, :W, :]


def strided_conv2(x, w, b):
    """Conv3d(k=2, s=2, p=0) via space-to-depth + fused matmul.  x: NDHWC bf16."""
    N, D, H, W, C = x.shape
    cout = w.shape[0]
    xr = x.reshape(N, D // 2, 2, H // 2, 2, W // 2, 2, C)
    xr = jnp.transpose(xr, (0, 1, 3, 5, 2, 4, 6, 7))      # ..., kd, kh, kw, C
    a = xr.reshape(N * (D // 2) * (H // 2) * (W // 2), 8 * C)
    wm = jnp.transpose(w, (2, 3, 4, 1, 0)).reshape(8 * C, cout)
    y = fused_matmul_bias(a, wm, b, relu=False)
    return y.reshape(N, D // 2, H // 2, W // 2, cout)


# ----------------------------------------------------------------------------
# parameters (deterministic init; eval-mode BN folded at construction)
# ----------------------------------------------------------------------------
def _he_normal(key, shape, fan_in):
    return jax.random.normal(key, shape, jnp.float32) * jnp.sqrt(2.0 / fan_in)


def init_conv_bn(key, cin, cout, k=3, eps=1e-5):
    ks = jax.random.split(key, 6)
    w = _he_normal(ks[0], (cout, cin, k, k, k), cin * k ** 3)
    b = 0.1 * jax.random.normal(ks[1], (cout,), jnp.float32)
    # non-trivial eval-mode BatchNorm parameters / running stats
    gamma = 1.0 + 0.2 * jax.random.normal(ks[2], (cout,), jnp.float32)
    beta = 0.1 * jax.random.normal(ks[3], (cout,), jnp.float32)
    rmean = 0.1 * jax.random.normal(ks[4], (cout,), jnp.float32)
    rvar = 0.5 + jax.random.uniform(ks[5], (cout,), jnp.float32)
    scale = gamma / jnp.sqrt(rvar + eps)
    shift = beta - rmean * scale
    # fold BN into the conv: W' = W * scale (per out channel), off = b*scale + shift
    w_folded = w * scale[:, None, None, None, None]
    off = b * scale + shift
    # tap-major weight tensor: [(kd,kh)=9, (kw,cin)=3*cin, cout]
    w_taps = jnp.transpose(w_folded, (2, 3, 4, 1, 0)).reshape(9, 3 * cin, cout)
    return {"w_taps": w_taps.astype(jnp.bfloat16), "off": off, "w_folded": w_folded}


def init_sconv(key, cin, k=2):
    kw, kb = jax.random.split(key)
    w = _he_normal(kw, (cin, cin, k, k, k), cin * k ** 3)
    b = 0.1 * jax.random.normal(kb, (cin,), jnp.float32)
    return {"w": w, "b": b}


def init_down(key, in_ch, out_ch):
    ks = jax.random.split(key, 4)
    return {"sconv": init_sconv(ks[0], in_ch),
            "dconv": [init_conv_bn(ks[1], in_ch, out_ch),
                      init_conv_bn(ks[2], out_ch, out_ch),
                      init_conv_bn(ks[3], out_ch, out_ch)]}


# ----------------------------------------------------------------------------
# Down forward (Pallas path) and an XLA-conv reference with matched precision
# ----------------------------------------------------------------------------
def down_forward(params, x_ncdhw):
    """Down block. x: [N, C, D, H, W] f32 (PyTorch layout) -> [N, Cout, D/2, H/2, W/2]."""
    x = jnp.transpose(x_ncdhw, (0, 2, 3, 4, 1)).astype(jnp.bfloat16)    # NDHWC
    p = params["sconv"]
    x = strided_conv2(x, p["w"], p["b"])
    for p in params["dconv"]:
        x = conv3x3x3_bn_relu(x, p["w_taps"], p["off"], relu=True)
    return jnp.transpose(x, (0, 4, 1, 2, 3)).astype(jnp.float32)        # NCDHW


def _conv_ref(x, w_torch, off, *, stride, pad, relu):
    # x: NDHWC bf16; w_torch: [Cout, Cin, kd, kh, kw] f32 (BN scale already folded)
    w = jnp.transpose(w_torch, (2, 3, 4, 1, 0)).astype(jnp.bfloat16)    # DHWIO
    dn = lax.conv_dimension_numbers(x.shape, w.shape, ("NDHWC", "DHWIO", "NDHWC"))
    y = lax.conv_general_dilated(x, w, window_strides=stride,
                                 padding=[(pad, pad)] * 3,
                                 dimension_numbers=dn,
                                 preferred_element_type=jnp.float32)
    y = y + off.reshape(1, 1, 1, 1, -1)
    if relu:
        y = jnp.maximum(y, 0.0)
    return y.astype(jnp.bfloat16)


def down_forward_ref(params, x_ncdhw):
    x = jnp.transpose(x_ncdhw, (0, 2, 3, 4, 1)).astype(jnp.bfloat16)
    p = params["sconv"]
    x = _conv_ref(x, p["w"], p["b"], stride=(2, 2, 2), pad=0, relu=False)
    for p in params["dconv"]:
        x = _conv_ref(x, p["w_folded"], p["off"], stride=(1, 1, 1), pad=1, relu=True)
    return jnp.transpose(x, (0, 4, 1, 2, 3)).astype(jnp.float32)


# ----------------------------------------------------------------------------
if __name__ == "__main__":
    key = jax.random.PRNGKey(0)
    kp, kx = jax.random.split(key)

    in_ch, out_ch = 4, 8
    N, D, H, W = 2, 16, 16, 16          # spatial must be even (stride-2 conv)

    params = init_down(kp, in_ch, out_ch)
    x = jax.random.normal(kx, (N, in_ch, D, H, W), jnp.float32)   # NCDHW like PyTorch

    out = jax.jit(down_forward)(params, x)
    jax.block_until_ready(out)

    assert out.shape == (N, out_ch, D // 2, H // 2, W // 2), out.shape
    assert bool(jnp.all(jnp.isfinite(out)))

    # numerical check vs XLA conv reference with identical bf16/f32 mixed precision
    ref = jax.jit(down_forward_ref)(params, x)
    rel_err = float(jnp.max(jnp.abs(out - ref) / (1.0 + jnp.abs(ref))))
    assert rel_err < 0.08, f"max relative error vs reference = {rel_err}"

    print("KERNEL_OK")
</pallas_src>

<mosaic_0001>
module attributes {stable_mosaic.version = 11 : i64} {
  func.func @_matmul_bias_kernel(%arg0: i32, %arg1: memref<256x32xbf16, #tpu.memory_space<vmem>>, %arg2: memref<32x4xbf16, #tpu.memory_space<vmem>>, %arg3: memref<1x4xf32, #tpu.memory_space<vmem>>, %arg4: memref<256x4xbf16, #tpu.memory_space<vmem>>) attributes {dimension_semantics = [#tpu.dimension_semantics<parallel>], iteration_bounds = array<i64: 4>, scalar_prefetch = 0 : i64, scratch_operands = 0 : i64, tpu.core_type = #tpu.core_type<tc>, window_params = [{transform_indices = @transform_0, window_bounds = array<i64: 256, 32>}, {pipeline_mode = #tpu.pipeline_mode<synchronous>, transform_indices = @transform_1, window_bounds = array<i64: 32, 4>}, {pipeline_mode = #tpu.pipeline_mode<synchronous>, transform_indices = @transform_2, window_bounds = array<i64: 1, 4>}, {transform_indices = @transform_3, window_bounds = array<i64: 256, 4>}]} {
    %c0 = arith.constant 0 : index
    %c0_0 = arith.constant 0 : index
    %0 = vector.load %arg1[%c0, %c0_0] : memref<256x32xbf16, #tpu.memory_space<vmem>>, vector<256x32xbf16>
    %c0_1 = arith.constant 0 : index
    %c0_2 = arith.constant 0 : index
    %1 = vector.load %arg2[%c0_1, %c0_2] : memref<32x4xbf16, #tpu.memory_space<vmem>>, vector<32x4xbf16>
    %cst = arith.constant dense<0.000000e+00> : vector<256x4xf32>
    %2 = tpu.matmul %0, %1, %cst {dimension_numbers = #tpu.dot_dimension_numbers<[1], [0], [0], [1], [0, 0, 1, 1], [], []>} : vector<256x32xbf16>, vector<32x4xbf16>, vector<256x4xf32> -> vector<256x4xf32>
    %c0_3 = arith.constant 0 : index
    %c0_4 = arith.constant 0 : index
    %3 = vector.load %arg3[%c0_3, %c0_4] : memref<1x4xf32, #tpu.memory_space<vmem>>, vector<1x4xf32>
    %4 = vector.broadcast %3 : vector<1x4xf32> to vector<256x4xf32>
    %5 = arith.addf %2, %4 : vector<256x4xf32>
    %6 = arith.truncf %5 : vector<256x4xf32> to vector<256x4xbf16>
    %c0_5 = arith.constant 0 : index
    %c0_6 = arith.constant 0 : index
    %7 = vector.load %arg4[%c0_5, %c0_6] : memref<256x4xbf16, #tpu.memory_space<vmem>>, vector<256x4xbf16>
    tpu.vector_store %arg4[%c0_5, %c0_6], %6 {strides = array<i32>} : memref<256x4xbf16, #tpu.memory_space<vmem>>, vector<256x4xbf16>,
    return
  }
  func.func @transform_0(%arg0: i32) -> (i32, i32) {
    %c0_i32 = arith.constant 0 : i32
    %c0_i32_0 = arith.constant 0 : i32
    return %arg0, %c0_i32 : i32, i32
  }
  func.func @transform_1(%arg0: i32) -> (i32, i32) {
    %c0_i32 = arith.constant 0 : i32
    %c0_i32_0 = arith.constant 0 : i32
    %c0_i32_1 = arith.constant 0 : i32
    return %c0_i32, %c0_i32_0 : i32, i32
  }
  func.func @transform_2(%arg0: i32) -> (i32, i32) {
    %c0_i32 = arith.constant 0 : i32
    %c0_i32_0 = arith.constant 0 : i32
    %c0_i32_1 = arith.constant 0 : i32
    return %c0_i32, %c0_i32_0 : i32, i32
  }
  func.func @transform_3(%arg0: i32) -> (i32, i32) {
    %c0_i32 = arith.constant 0 : i32
    %c0_i32_0 = arith.constant 0 : i32
    return %arg0, %c0_i32 : i32, i32
  }
}

module attributes {stable_mosaic.version = 11 : i64} {
  func.func @_conv3_taps_kernel(%arg0: i32, %arg1: memref<3680x12xbf16, #tpu.memory_space<vmem>>, %arg2: memref<9x12x8xbf16, #tpu.memory_space<vmem>>, %arg3: memref<1x8xf32, #tpu.memory_space<vmem>>, %arg4: memref<256x8xbf16, #tpu.memory_space<vmem>>) attributes {dimension_semantics = [#tpu.dimension_semantics<parallel>], iteration_bounds = array<i64: 13>, scalar_prefetch = 0 : i64, scratch_operands = 0 : i64, tpu.core_type = #tpu.core_type<tc>, window_params = [{pipeline_mode = #tpu.pipeline_mode<synchronous>, transform_indices = @transform_0, window_bounds = array<i64: 3680, 12>}, {pipeline_mode = #tpu.pipeline_mode<synchronous>, transform_indices = @transform_1, window_bounds = array<i64: 9, 12, 8>}, {pipeline_mode = #tpu.pipeline_mode<synchronous>, transform_indices = @transform_2, window_bounds = array<i64: 1, 8>}, {transform_indices = @transform_3, window_bounds = array<i64: 256, 8>}]} {
    %c256_i32 = arith.constant 256 : i32
    %0 = arith.muli %arg0, %c256_i32 : i32
    %1 = tpu.assume_multiple %0, 16 : i32
    %cst = arith.constant 0.000000e+00 : f32
    %2 = vector.broadcast %cst : f32 to vector<256x8xf32>
    %c0_i32 = arith.constant 0 : i32
    %3 = arith.addi %1, %c0_i32 : i32
    %4 = arith.index_cast %3 : i32 to index
    %c0 = arith.constant 0 : index
    %5 = vector.load %arg1[%4, %c0] : memref<3680x12xbf16, #tpu.memory_space<vmem>>, vector<256x12xbf16>
    %c0_0 = arith.constant 0 : index
    %c0_1 = arith.constant 0 : index
    %c0_2 = arith.constant 0 : index
    %6 = vector.load %arg2[%c0_0, %c0_1, %c0_2] : memref<9x12x8xbf16, #tpu.memory_space<vmem>>, vector<1x12x8xbf16>
    %7 = vector.shape_cast %6 : vector<1x12x8xbf16> to vector<12x8xbf16>
    %cst_3 = arith.constant dense<0.000000e+00> : vector<256x8xf32>
    %8 = tpu.matmul %5, %7, %cst_3 {dimension_numbers = #tpu.dot_dimension_numbers<[1], [0], [0], [1], [0, 0, 1, 1], [], []>} : vector<256x12xbf16>, vector<12x8xbf16>, vector<256x8xf32> -> vector<256x8xf32>
    %9 = arith.addf %2, %8 : vector<256x8xf32>
    %c16_i32 = arith.constant 16 : i32
    %10 = arith.addi %1, %c16_i32 : i32
    %11 = arith.index_cast %10 : i32 to index
    %c0_4 = arith.constant 0 : index
    %12 = vector.load %arg1[%11, %c0_4] : memref<3680x12xbf16, #tpu.memory_space<vmem>>, vector<256x12xbf16>
    %c1 = arith.constant 1 : index
    %c0_5 = arith.constant 0 : index
    %c0_6 = arith.constant 0 : index
    %13 = vector.load %arg2[%c1, %c0_5, %c0_6] : memref<9x12x8xbf16, #tpu.memory_space<vmem>>, vector<1x12x8xbf16>
    %14 = vector.shape_cast %13 : vector<1x12x8xbf16> to vector<12x8xbf16>
    %cst_7 = arith.constant dense<0.000000e+00> : vector<256x8xf32>
    %15 = tpu.matmul %12, %14, %cst_7 {dimension_numbers = #tpu.dot_dimension_numbers<[1], [0], [0], [1], [0, 0, 1, 1], [], []>} : vector<256x12xbf16>, vector<12x8xbf16>, vector<256x8xf32> -> vector<256x8xf32>
    %16 = arith.addf %9, %15 : vector<256x8xf32>
    %c32_i32 = arith.constant 32 : i32
    %17 = arith.addi %1, %c32_i32 : i32
    %18 = arith.index_cast %17 : i32 to index
    %c0_8 = arith.constant 0 : index
    %19 = vector.load %arg1[%18, %c0_8] : memref<3680x12xbf16, #tpu.memory_space<vmem>>, vector<256x12xbf16>
    %c2 = arith.constant 2 : index
    %c0_9 = arith.constant 0 : index
    %c0_10 = arith.constant 0 : index
    %20 = vector.load %arg2[%c2, %c0_9, %c0_10] : memref<9x12x8xbf16, #tpu.memory_space<vmem>>, vector<1x12x8xbf16>
    %21 = vector.shape_cast %20 : vector<1x12x8xbf16> to vector<12x8xbf16>
    %cst_11 = arith.constant dense<0.000000e+00> : vector<256x8xf32>
    %22 = tpu.matmul %19, %21, %cst_11 {dimension_numbers = #tpu.dot_dimension_numbers<[1], [0], [0], [1], [0, 0, 1, 1], [], []>} : vector<256x12xbf16>, vector<12x8xbf16>, vector<256x8xf32> -> vector<256x8xf32>
    %23 = arith.addf %16, %22 : vector<256x8xf32>
    %c160_i32 = arith.constant 160 : i32
    %24 = arith.addi %1, %c160_i32 : i32
    %25 = arith.index_cast %24 : i32 to index
    %c0_12 = arith.constant 0 : index
    %26 = vector.load %arg1[%25, %c0_12] : memref<3680x12xbf16, #tpu.memory_space<vmem>>, vector<256x12xbf16>
    %c3 = arith.constant 3 : index
    %c0_13 = arith.constant 0 : index
    %c0_14 = arith.constant 0 : index
    %27 = vector.load %arg2[%c3, %c0_13, %c0_14] : memref<9x12x8xbf16, #tpu.memory_space<vmem>>, vector<1x12x8xbf16>
    %28 = vector.shape_cast %27 : vector<1x12x8xbf16> to vector<12x8xbf16>
    %cst_15 = arith.constant dense<0.000000e+00> : vector<256x8xf32>
    %29 = tpu.matmul %26, %28, %cst_15 {dimension_numbers = #tpu.dot_dimension_numbers<[1], [0], [0], [1], [0, 0, 1, 1], [], []>} : vector<256x12xbf16>, vector<12x8xbf16>, vector<256x8xf32> -> vector<256x8xf32>
    %30 = arith.addf %23, %29 : vector<256x8xf32>
    %c176_i32 = arith.constant 176 : i32
    %31 = arith.addi %1, %c176_i32 : i32
    %32 = arith.index_cast %31 : i32 to index
    %c0_16 = arith.constant 0 : index
    %33 = vector.load %arg1[%32, %c0_16] : memref<3680x12xbf16, #tpu.memory_space<vmem>>, vector<256x12xbf16>
    %c4 = arith.constant 4 : index
    %c0_17 = arith.constant 0 : index
    %c0_18 = arith.constant 0 : index
    %34 = vector.load %arg2[%c4, %c0_17, %c0_18] : memref<9x12x8xbf16, #tpu.memory_space<vmem>>, vector<1x12x8xbf16>
    %35 = vector.shape_cast %34 : vector<1x12x8xbf16> to vector<12x8xbf16>
    %cst_19 = arith.constant dense<0.000000e+00> : vector<256x8xf32>
    %36 = tpu.matmul %33, %35, %cst_19 {dimension_numbers = #tpu.dot_dimension_numbers<[1], [0], [0], [1], [0, 0, 1, 1], [], []>} : vector<256x12xbf16>, vector<12x8xbf16>, vector<256x8xf32> -> vector<256x8xf32>
    %37 = arith.addf %30, %36 : vector<256x8xf32>
    %c192_i32 = arith.constant 192 : i32
    %38 = arith.addi %1, %c192_i32 : i32
    %39 = arith.index_cast %38 : i32 to index
    %c0_20 = arith.constant 0 : index
    %40 = vector.load %arg1[%39, %c0_20] : memref<3680x12xbf16, #tpu.memory_space<vmem>>, vector<256x12xbf16>
    %c5 = arith.constant 5 : index
    %c0_21 = arith.constant 0 : index
    %c0_22 = arith.constant 0 : index
    %41 = vector.load %arg2[%c5, %c0_21, %c0_22] : memref<9x12x8xbf16, #tpu.memory_space<vmem>>, vector<1x12x8xbf16>
    %42 = vector.shape_cast %41 : vector<1x12x8xbf16> to vector<12x8xbf16>
    %cst_23 = arith.constant dense<0.000000e+00> : vector<256x8xf32>
    %43 = tpu.matmul %40, %42, %cst_23 {dimension_numbers = #tpu.dot_dimension_numbers<[1], [0], [0], [1], [0, 0, 1, 1], [], []>} : vector<256x12xbf16>, vector<12x8xbf16>, vector<256x8xf32> -> vector<256x8xf32>
    %44 = arith.addf %37, %43 : vector<256x8xf32>
    %c320_i32 = arith.constant 320 : i32
    %45 = arith.addi %1, %c320_i32 : i32
    %46 = arith.index_cast %45 : i32 to index
    %c0_24 = arith.constant 0 : index
    %47 = vector.load %arg1[%46, %c0_24] : memref<3680x12xbf16, #tpu.memory_space<vmem>>, vector<256x12xbf16>
    %c6 = arith.constant 6 : index
    %c0_25 = arith.constant 0 : index
    %c0_26 = arith.constant 0 : index
    %48 = vector.load %arg2[%c6, %c0_25, %c0_26] : memref<9x12x8xbf16, #tpu.memory_space<vmem>>, vector<1x12x8xbf16>
    %49 = vector.shape_cast %48 : vector<1x12x8xbf16> to vector<12x8xbf16>
    %cst_27 = arith.constant dense<0.000000e+00> : vector<256x8xf32>
    %50 = tpu.matmul %47, %49, %cst_27 {dimension_numbers = #tpu.dot_dimension_numbers<[1], [0], [0], [1], [0, 0, 1, 1], [], []>} : vector<256x12xbf16>, vector<12x8xbf16>, vector<256x8xf32> -> vector<256x8xf32>
    %51 = arith.addf %44, %50 : vector<256x8xf32>
    %c336_i32 = arith.constant 336 : i32
    %52 = arith.addi %1, %c336_i32 : i32
    %53 = arith.index_cast %52 : i32 to index
    %c0_28 = arith.constant 0 : index
    %54 = vector.load %arg1[%53, %c0_28] : memref<3680x12xbf16, #tpu.memory_space<vmem>>, vector<256x12xbf16>
    %c7 = arith.constant 7 : index
    %c0_29 = arith.constant 0 : index
    %c0_30 = arith.constant 0 : index
    %55 = vector.load %arg2[%c7, %c0_29, %c0_30] : memref<9x12x8xbf16, #tpu.memory_space<vmem>>, vector<1x12x8xbf16>
    %56 = vector.shape_cast %55 : vector<1x12x8xbf16> to vector<12x8xbf16>
    %cst_31 = arith.constant dense<0.000000e+00> : vector<256x8xf32>
    %57 = tpu.matmul %54, %56, %cst_31 {dimension_numbers = #tpu.dot_dimension_numbers<[1], [0], [0], [1], [0, 0, 1, 1], [], []>} : vector<256x12xbf16>, vector<12x8xbf16>, vector<256x8xf32> -> vector<256x8xf32>
    %58 = arith.addf %51, %57 : vector<256x8xf32>
    %c352_i32 = arith.constant 352 : i32
    %59 = arith.addi %1, %c352_i32 : i32
    %60 = arith.index_cast %59 : i32 to index
    %c0_32 = arith.constant 0 : index
    %61 = vector.load %arg1[%60, %c0_32] : memref<3680x12xbf16, #tpu.memory_space<vmem>>, vector<256x12xbf16>
    %c8 = arith.constant 8 : index
    %c0_33 = arith.constant 0 : index
    %c0_34 = arith.constant 0 : index
    %62 = vector.load %arg2[%c8, %c0_33, %c0_34] : memref<9x12x8xbf16, #tpu.memory_space<vmem>>, vector<1x12x8xbf16>
    %63 = vector.shape_cast %62 : vector<1x12x8xbf16> to vector<12x8xbf16>
    %cst_35 = arith.constant dense<0.000000e+00> : vector<256x8xf32>
    %64 = tpu.matmul %61, %63, %cst_35 {dimension_numbers = #tpu.dot_dimension_numbers<[1], [0], [0], [1], [0, 0, 1, 1], [], []>} : vector<256x12xbf16>, vector<12x8xbf16>, vector<256x8xf32> -> vector<256x8xf32>
    %65 = arith.addf %58, %64 : vector<256x8xf32>
    %c0_36 = arith.constant 0 : index
    %c0_37 = arith.constant 0 : index
    %66 = vector.load %arg3[%c0_36, %c0_37] : memref<1x8xf32, #tpu.memory_space<vmem>>, vector<1x8xf32>
    %67 = vector.broadcast %66 : vector<1x8xf32> to vector<256x8xf32>
    %68 = arith.addf %65, %67 : vector<256x8xf32>
    %cst_38 = arith.constant 0.000000e+00 : f32
    %69 = vector.broadcast %cst_38 : f32 to vector<256x8xf32>
    %70 = arith.maximumf %68, %69 : vector<256x8xf32>
    %71 = arith.truncf %70 : vector<256x8xf32> to vector<256x8xbf16>
    %c0_39 = arith.constant 0 : index
    %c0_40 = arith.constant 0 : index
    %72 = vector.load %arg4[%c0_39, %c0_40] : memref<256x8xbf16, #tpu.memory_space<vmem>>, vector<256x8xbf16>
    tpu.vector_store %arg4[%c0_39, %c0_40], %71 {strides = array<i32>} : memref<256x8xbf16, #tpu.memory_space<vmem>>, vector<256x8xbf16>,
    return
  }
  func.func @transform_0(%arg0: i32) -> (i32, i32) {
    %c0_i32 = arith.constant 0 : i32
    %c0_i32_0 = arith.constant 0 : i32
    %c0_i32_1 = arith.constant 0 : i32
    return %c0_i32, %c0_i32_0 : i32, i32
  }
  func.func @transform_1(%arg0: i32) -> (i32, i32, i32) {
    %c0_i32 = arith.constant 0 : i32
    %c0_i32_0 = arith.constant 0 : i32
    %c0_i32_1 = arith.constant 0 : i32
    %c0_i32_2 = arith.constant 0 : i32
    return %c0_i32, %c0_i32_0, %c0_i32_1 : i32, i32, i32
  }
  func.func @transform_2(%arg0: i32) -> (i32, i32) {
    %c0_i32 = arith.constant 0 : i32
    %c0_i32_0 = arith.constant 0 : i32
    %c0_i32_1 = arith.constant 0 : i32
    return %c0_i32, %c0_i32_0 : i32, i32
  }
  func.func @transform_3(%arg0: i32) -> (i32, i32) {
    %c0_i32 = arith.constant 0 : i32
    %c0_i32_0 = arith.constant 0 : i32
    return %arg0, %c0_i32 : i32, i32
  }
}

module attributes {stable_mosaic.version = 11 : i64} {
  func.func @_conv3_taps_kernel(%arg0: i32, %arg1: memref<3680x24xbf16, #tpu.memory_space<vmem>>, %arg2: memref<9x24x8xbf16, #tpu.memory_space<vmem>>, %arg3: memref<1x8xf32, #tpu.memory_space<vmem>>, %arg4: memref<256x8xbf16, #tpu.memory_space<vmem>>) attributes {dimension_semantics = [#tpu.dimension_semantics<parallel>], iteration_bounds = array<i64: 13>, scalar_prefetch = 0 : i64, scratch_operands = 0 : i64, tpu.core_type = #tpu.core_type<tc>, window_params = [{pipeline_mode = #tpu.pipeline_mode<synchronous>, transform_indices = @transform_0, window_bounds = array<i64: 3680, 24>}, {pipeline_mode = #tpu.pipeline_mode<synchronous>, transform_indices = @transform_1, window_bounds = array<i64: 9, 24, 8>}, {pipeline_mode = #tpu.pipeline_mode<synchronous>, transform_indices = @transform_2, window_bounds = array<i64: 1, 8>}, {transform_indices = @transform_3, window_bounds = array<i64: 256, 8>}]} {
    %c256_i32 = arith.constant 256 : i32
    %0 = arith.muli %arg0, %c256_i32 : i32
    %1 = tpu.assume_multiple %0, 16 : i32
    %cst = arith.constant 0.000000e+00 : f32
    %2 = vector.broadcast %cst : f32 to vector<256x8xf32>
    %c0_i32 = arith.constant 0 : i32
    %3 = arith.addi %1, %c0_i32 : i32
    %4 = arith.index_cast %3 : i32 to index
    %c0 = arith.constant 0 : index
    %5 = vector.load %arg1[%4, %c0] : memref<3680x24xbf16, #tpu.memory_space<vmem>>, vector<256x24xbf16>
    %c0_0 = arith.constant 0 : index
    %c0_1 = arith.constant 0 : index
    %c0_2 = arith.constant 0 : index
    %6 = vector.load %arg2[%c0_0, %c0_1, %c0_2] : memref<9x24x8xbf16, #tpu.memory_space<vmem>>, vector<1x24x8xbf16>
    %7 = vector.shape_cast %6 : vector<1x24x8xbf16> to vector<24x8xbf16>
    %cst_3 = arith.constant dense<0.000000e+00> : vector<256x8xf32>
    %8 = tpu.matmul %5, %7, %cst_3 {dimension_numbers = #tpu.dot_dimension_numbers<[1], [0], [0], [1], [0, 0, 1, 1], [], []>} : vector<256x24xbf16>, vector<24x8xbf16>, vector<256x8xf32> -> vector<256x8xf32>
    %9 = arith.addf %2, %8 : vector<256x8xf32>
    %c16_i32 = arith.constant 16 : i32
    %10 = arith.addi %1, %c16_i32 : i32
    %11 = arith.index_cast %10 : i32 to index
    %c0_4 = arith.constant 0 : index
    %12 = vector.load %arg1[%11, %c0_4] : memref<3680x24xbf16, #tpu.memory_space<vmem>>, vector<256x24xbf16>
    %c1 = arith.constant 1 : index
    %c0_5 = arith.constant 0 : index
    %c0_6 = arith.constant 0 : index
    %13 = vector.load %arg2[%c1, %c0_5, %c0_6] : memref<9x24x8xbf16, #tpu.memory_space<vmem>>, vector<1x24x8xbf16>
    %14 = vector.shape_cast %13 : vector<1x24x8xbf16> to vector<24x8xbf16>
    %cst_7 = arith.constant dense<0.000000e+00> : vector<256x8xf32>
    %15 = tpu.matmul %12, %14, %cst_7 {dimension_numbers = #tpu.dot_dimension_numbers<[1], [0], [0], [1], [0, 0, 1, 1], [], []>} : vector<256x24xbf16>, vector<24x8xbf16>, vector<256x8xf32> -> vector<256x8xf32>
    %16 = arith.addf %9, %15 : vector<256x8xf32>
    %c32_i32 = arith.constant 32 : i32
    %17 = arith.addi %1, %c32_i32 : i32
    %18 = arith.index_cast %17 : i32 to index
    %c0_8 = arith.constant 0 : index
    %19 = vector.load %arg1[%18, %c0_8] : memref<3680x24xbf16, #tpu.memory_space<vmem>>, vector<256x24xbf16>
    %c2 = arith.constant 2 : index
    %c0_9 = arith.constant 0 : index
    %c0_10 = arith.constant 0 : index
    %20 = vector.load %arg2[%c2, %c0_9, %c0_10] : memref<9x24x8xbf16, #tpu.memory_space<vmem>>, vector<1x24x8xbf16>
    %21 = vector.shape_cast %20 : vector<1x24x8xbf16> to vector<24x8xbf16>
    %cst_11 = arith.constant dense<0.000000e+00> : vector<256x8xf32>
    %22 = tpu.matmul %19, %21, %cst_11 {dimension_numbers = #tpu.dot_dimension_numbers<[1], [0], [0], [1], [0, 0, 1, 1], [], []>} : vector<256x24xbf16>, vector<24x8xbf16>, vector<256x8xf32> -> vector<256x8xf32>
    %23 = arith.addf %16, %22 : vector<256x8xf32>
    %c160_i32 = arith.constant 160 : i32
    %24 = arith.addi %1, %c160_i32 : i32
    %25 = arith.index_cast %24 : i32 to index
    %c0_12 = arith.constant 0 : index
    %26 = vector.load %arg1[%25, %c0_12] : memref<3680x24xbf16, #tpu.memory_space<vmem>>, vector<256x24xbf16>
    %c3 = arith.constant 3 : index
    %c0_13 = arith.constant 0 : index
    %c0_14 = arith.constant 0 : index
    %27 = vector.load %arg2[%c3, %c0_13, %c0_14] : memref<9x24x8xbf16, #tpu.memory_space<vmem>>, vector<1x24x8xbf16>
    %28 = vector.shape_cast %27 : vector<1x24x8xbf16> to vector<24x8xbf16>
    %cst_15 = arith.constant dense<0.000000e+00> : vector<256x8xf32>
    %29 = tpu.matmul %26, %28, %cst_15 {dimension_numbers = #tpu.dot_dimension_numbers<[1], [0], [0], [1], [0, 0, 1, 1], [], []>} : vector<256x24xbf16>, vector<24x8xbf16>, vector<256x8xf32> -> vector<256x8xf32>
    %30 = arith.addf %23, %29 : vector<256x8xf32>
    %c176_i32 = arith.constant 176 : i32
    %31 = arith.addi %1, %c176_i32 : i32
    %32 = arith.index_cast %31 : i32 to index
    %c0_16 = arith.constant 0 : index
    %33 = vector.load %arg1[%32, %c0_16] : memref<3680x24xbf16, #tpu.memory_space<vmem>>, vector<256x24xbf16>
    %c4 = arith.constant 4 : index
    %c0_17 = arith.constant 0 : index
    %c0_18 = arith.constant 0 : index
    %34 = vector.load %arg2[%c4, %c0_17, %c0_18] : memref<9x24x8xbf16, #tpu.memory_space<vmem>>, vector<1x24x8xbf16>
    %35 = vector.shape_cast %34 : vector<1x24x8xbf16> to vector<24x8xbf16>
    %cst_19 = arith.constant dense<0.000000e+00> : vector<256x8xf32>
    %36 = tpu.matmul %33, %35, %cst_19 {dimension_numbers = #tpu.dot_dimension_numbers<[1], [0], [0], [1], [0, 0, 1, 1], [], []>} : vector<256x24xbf16>, vector<24x8xbf16>, vector<256x8xf32> -> vector<256x8xf32>
    %37 = arith.addf %30, %36 : vector<256x8xf32>
    %c192_i32 = arith.constant 192 : i32
    %38 = arith.addi %1, %c192_i32 : i32
    %39 = arith.index_cast %38 : i32 to index
    %c0_20 = arith.constant 0 : index
    %40 = vector.load %arg1[%39, %c0_20] : memref<3680x24xbf16, #tpu.memory_space<vmem>>, vector<256x24xbf16>
    %c5 = arith.constant 5 : index
    %c0_21 = arith.constant 0 : index
    %c0_22 = arith.constant 0 : index
    %41 = vector.load %arg2[%c5, %c0_21, %c0_22] : memref<9x24x8xbf16, #tpu.memory_space<vmem>>, vector<1x24x8xbf16>
    %42 = vector.shape_cast %41 : vector<1x24x8xbf16> to vector<24x8xbf16>
    %cst_23 = arith.constant dense<0.000000e+00> : vector<256x8xf32>
    %43 = tpu.matmul %40, %42, %cst_23 {dimension_numbers = #tpu.dot_dimension_numbers<[1], [0], [0], [1], [0, 0, 1, 1], [], []>} : vector<256x24xbf16>, vector<24x8xbf16>, vector<256x8xf32> -> vector<256x8xf32>
    %44 = arith.addf %37, %43 : vector<256x8xf32>
    %c320_i32 = arith.constant 320 : i32
    %45 = arith.addi %1, %c320_i32 : i32
    %46 = arith.index_cast %45 : i32 to index
    %c0_24 = arith.constant 0 : index
    %47 = vector.load %arg1[%46, %c0_24] : memref<3680x24xbf16, #tpu.memory_space<vmem>>, vector<256x24xbf16>
    %c6 = arith.constant 6 : index
    %c0_25 = arith.constant 0 : index
    %c0_26 = arith.constant 0 : index
    %48 = vector.load %arg2[%c6, %c0_25, %c0_26] : memref<9x24x8xbf16, #tpu.memory_space<vmem>>, vector<1x24x8xbf16>
    %49 = vector.shape_cast %48 : vector<1x24x8xbf16> to vector<24x8xbf16>
    %cst_27 = arith.constant dense<0.000000e+00> : vector<256x8xf32>
    %50 = tpu.matmul %47, %49, %cst_27 {dimension_numbers = #tpu.dot_dimension_numbers<[1], [0], [0], [1], [0, 0, 1, 1], [], []>} : vector<256x24xbf16>, vector<24x8xbf16>, vector<256x8xf32> -> vector<256x8xf32>
    %51 = arith.addf %44, %50 : vector<256x8xf32>
    %c336_i32 = arith.constant 336 : i32
    %52 = arith.addi %1, %c336_i32 : i32
    %53 = arith.index_cast %52 : i32 to index
    %c0_28 = arith.constant 0 : index
    %54 = vector.load %arg1[%53, %c0_28] : memref<3680x24xbf16, #tpu.memory_space<vmem>>, vector<256x24xbf16>
    %c7 = arith.constant 7 : index
    %c0_29 = arith.constant 0 : index
    %c0_30 = arith.constant 0 : index
    %55 = vector.load %arg2[%c7, %c0_29, %c0_30] : memref<9x24x8xbf16, #tpu.memory_space<vmem>>, vector<1x24x8xbf16>
    %56 = vector.shape_cast %55 : vector<1x24x8xbf16> to vector<24x8xbf16>
    %cst_31 = arith.constant dense<0.000000e+00> : vector<256x8xf32>
    %57 = tpu.matmul %54, %56, %cst_31 {dimension_numbers = #tpu.dot_dimension_numbers<[1], [0], [0], [1], [0, 0, 1, 1], [], []>} : vector<256x24xbf16>, vector<24x8xbf16>, vector<256x8xf32> -> vector<256x8xf32>
    %58 = arith.addf %51, %57 : vector<256x8xf32>
    %c352_i32 = arith.constant 352 : i32
    %59 = arith.addi %1, %c352_i32 : i32
    %60 = arith.index_cast %59 : i32 to index
    %c0_32 = arith.constant 0 : index
    %61 = vector.load %arg1[%60, %c0_32] : memref<3680x24xbf16, #tpu.memory_space<vmem>>, vector<256x24xbf16>
    %c8 = arith.constant 8 : index
    %c0_33 = arith.constant 0 : index
    %c0_34 = arith.constant 0 : index
    %62 = vector.load %arg2[%c8, %c0_33, %c0_34] : memref<9x24x8xbf16, #tpu.memory_space<vmem>>, vector<1x24x8xbf16>
    %63 = vector.shape_cast %62 : vector<1x24x8xbf16> to vector<24x8xbf16>
    %cst_35 = arith.constant dense<0.000000e+00> : vector<256x8xf32>
    %64 = tpu.matmul %61, %63, %cst_35 {dimension_numbers = #tpu.dot_dimension_numbers<[1], [0], [0], [1], [0, 0, 1, 1], [], []>} : vector<256x24xbf16>, vector<24x8xbf16>, vector<256x8xf32> -> vector<256x8xf32>
    %65 = arith.addf %58, %64 : vector<256x8xf32>
    %c0_36 = arith.constant 0 : index
    %c0_37 = arith.constant 0 : index
    %66 = vector.load %arg3[%c0_36, %c0_37] : memref<1x8xf32, #tpu.memory_space<vmem>>, vector<1x8xf32>
    %67 = vector.broadcast %66 : vector<1x8xf32> to vector<256x8xf32>
    %68 = arith.addf %65, %67 : vector<256x8xf32>
    %cst_38 = arith.constant 0.000000e+00 : f32
    %69 = vector.broadcast %cst_38 : f32 to vector<256x8xf32>
    %70 = arith.maximumf %68, %69 : vector<256x8xf32>
    %71 = arith.truncf %70 : vector<256x8xf32> to vector<256x8xbf16>
    %c0_39 = arith.constant 0 : index
    %c0_40 = arith.constant 0 : index
    %72 = vector.load %arg4[%c0_39, %c0_40] : memref<256x8xbf16, #tpu.memory_space<vmem>>, vector<256x8xbf16>
    tpu.vector_store %arg4[%c0_39, %c0_40], %71 {strides = array<i32>} : memref<256x8xbf16, #tpu.memory_space<vmem>>, vector<256x8xbf16>,
    return
  }
  func.func @transform_0(%arg0: i32) -> (i32, i32) {
    %c0_i32 = arith.constant 0 : i32
    %c0_i32_0 = arith.constant 0 : i32
    %c0_i32_1 = arith.constant 0 : i32
    return %c0_i32, %c0_i32_0 : i32, i32
  }
  func.func @transform_1(%arg0: i32) -> (i32, i32, i32) {
    %c0_i32 = arith.constant 0 : i32
    %c0_i32_0 = arith.constant 0 : i32
    %c0_i32_1 = arith.constant 0 : i32
    %c0_i32_2 = arith.constant 0 : i32
    return %c0_i32, %c0_i32_0, %c0_i32_1 : i32, i32, i32
  }
  func.func @transform_2(%arg0: i32) -> (i32, i32) {
    %c0_i32 = arith.constant 0 : i32
    %c0_i32_0 = arith.constant 0 : i32
    %c0_i32_1 = arith.constant 0 : i32
    return %c0_i32, %c0_i32_0 : i32, i32
  }
  func.func @transform_3(%arg0: i32) -> (i32, i32) {
    %c0_i32 = arith.constant 0 : i32
    %c0_i32_0 = arith.constant 0 : i32
    return %arg0, %c0_i32 : i32, i32
  }
}

</mosaic_0001>

<llo_original>
// kernel: down_forward.4
$region0: #{down_forward.4}
  #allocation0 [shape = 'u32[]', space=smem, size = 0x4, offset = 0x4, fixed_abs, tag = 'smem constant byte address 0x4 - core index']
  #allocation1 [shape = 'u32[144,128]{1,0:T(1,128)}', space=vmem, size = 0x12000, scoped, tag = 'internal scratch']
  %s0 = inlined_call_operand.vmem [shape: bf16[1024,32], index: 0, kind: input, shape index: {}]
  %s1 = inlined_call_operand.vmem [shape: bf16[32,4], index: 1, kind: input, shape index: {}]
  %s2 = inlined_call_operand.vmem [shape: f32[1,4], index: 2, kind: input, shape index: {}]
  %s3 = inlined_call_operand.vmem [shape: bf16[1024,4], index: 3, kind: output, shape index: {}]
  %s4 = sld [smem:[#allocation0]]
  $region45: #{down_forward.4} parent=0
    _
  %s6 = ssub.s32 1, %s4
  %s7 = scalar_select 0, %s6, %s4
  loop: start=0, step=1, limit=6
  $region2: #{down_forward.4} parent=0 // loop_pre_header
    _
  $region3: #{down_forward.4} parent=0 // loop_header
    %s9 = sphi 0, %s13
    %p10 = scmp.ge.s32.totalorder %s9, 6
    %s19 = sphi 0, %s21
    %s22 = sphi 0, %s19
    %s23 = sphi 0, %s22
    %s39 = sphi 0, %s23
    %s43 = sphi 0, %s43
    %s45 = sphi 0, %s43
    %s46 = sphi 0, %s45
    %s60 = sphi 0, %s46
    %s64 = sphi 0, %s64
    %s66 = sphi 0, %s64
    %s67 = sphi 0, %s66
    %s81 = sphi 0, %s67
    %s87 = sphi 0, %s89
    %s90 = sphi 0, %s87
    %s91 = sphi 0, %s90
    %s107 = sphi 0, %s91
  $region4: #{down_forward.4} parent=0 // loop_header_branch
    %12 = sbr.rel (%p10) target = $region8
  $region5: #{down_forward.4} parent=0 // loop_body
    %s14 = ssub.s32 %s9, 1
    %s15 = ssub.s32 %s9, 2
    %s16 = sadd.s32 %s9, 1
    %s17 = ssub.s32 %s9, %s16
    %p18 = scmp.eq.s32.totalorder %s17, 0
    %s20 = sadd.s32 %s19, 1
    %s21 = scalar_select %p18, %s19, %s20
    %p24 = pneg %p18
    %p25 = scmp.eq.s32.totalorder %s9, 3
    %p26 = por %p24, %p25
    %p27 = scmp.ne.s32.totalorder %s19, %s22
    %p28 = scmp.eq.s32.totalorder %s9, 0
    %p29 = por %p27, %p28
    %p30 = scmp.ne.s32.totalorder %s19, %s22
    %p31 = scmp.eq.s32.totalorder %s14, 3
    %p32 = por %p30, %p31
    %p33 = scmp.ne.s32.totalorder %s22, %s23
    %p34 = scmp.eq.s32.totalorder %s14, 0
    %p35 = por %p33, %p34
    %p36 = scmp.ne.s32.totalorder %s22, %s23
    %p37 = scmp.eq.s32.totalorder %s15, 3
    %p38 = por %p36, %p37
    %p40 = scmp.ne.s32.totalorder %s23, %s39
    %p41 = scmp.eq.s32.totalorder %s15, 0
    %p42 = por %p40, %p41
    %s44 = sadd.s32 %s43, 1
    %p47 = scmp.eq.s32.totalorder %s9, 3
    %p48 = scmp.ne.s32.totalorder %s43, %s45
    %p49 = scmp.eq.s32.totalorder %s9, 0
    %p50 = por %p48, %p49
    %p51 = scmp.ne.s32.totalorder %s43, %s45
    %p52 = scmp.eq.s32.totalorder %s14, 3
    %p53 = por %p51, %p52
    %p54 = scmp.ne.s32.totalorder %s45, %s46
    %p55 = scmp.eq.s32.totalorder %s14, 0
    %p56 = por %p54, %p55
    %p57 = scmp.ne.s32.totalorder %s45, %s46
    %p58 = scmp.eq.s32.totalorder %s15, 3
    %p59 = por %p57, %p58
    %p61 = scmp.ne.s32.totalorder %s46, %s60
    %p62 = scmp.eq.s32.totalorder %s15, 0
    %p63 = por %p61, %p62
    %s65 = sadd.s32 %s64, 1
    %p68 = scmp.eq.s32.totalorder %s9, 3
    %p69 = scmp.ne.s32.totalorder %s64, %s66
    %p70 = scmp.eq.s32.totalorder %s9, 0
    %p71 = por %p69, %p70
    %p72 = scmp.ne.s32.totalorder %s64, %s66
    %p73 = scmp.eq.s32.totalorder %s14, 3
    %p74 = por %p72, %p73
    %p75 = scmp.ne.s32.totalorder %s66, %s67
    %p76 = scmp.eq.s32.totalorder %s14, 0
    %p77 = por %p75, %p76
    %p78 = scmp.ne.s32.totalorder %s66, %s67
    %p79 = scmp.eq.s32.totalorder %s15, 3
    %p80 = por %p78, %p79
    %p82 = scmp.ne.s32.totalorder %s67, %s81
    %p83 = scmp.eq.s32.totalorder %s15, 0
    %p84 = por %p82, %p83
    %s85 = ssub.s32 %s9, %s16
    %p86 = scmp.eq.s32.totalorder %s85, 0
    %s88 = sadd.s32 %s87, 1
    %s89 = scalar_select %p86, %s87, %s88
    %p92 = pneg %p86
    %p93 = scmp.eq.s32.totalorder %s9, 3
    %p94 = por %p92, %p93
    %p95 = scmp.ne.s32.totalorder %s87, %s90
    %p96 = scmp.eq.s32.totalorder %s9, 0
    %p97 = por %p95, %p96
    %p98 = scmp.ne.s32.totalorder %s87, %s90
    %p99 = scmp.eq.s32.totalorder %s14, 3
    %p100 = por %p98, %p99
    %p101 = scmp.ne.s32.totalorder %s90, %s91
    %p102 = scmp.eq.s32.totalorder %s14, 0
    %p103 = por %p101, %p102
    %p104 = scmp.ne.s32.totalorder %s90, %s91
    %p105 = scmp.eq.s32.totalorder %s15, 3
    %p106 = por %p104, %p105
    %p108 = scmp.ne.s32.totalorder %s91, %s107
    %p109 = scmp.eq.s32.totalorder %s15, 0
    %p110 = por %p108, %p109
    %p111 = scmp.le.s32.totalorder 1, %s9
    %p112 = scmp.lt.s32.totalorder %s9, 5
    %p113 = pnand %p111, %p112
    %p114 = pneg %p113
    // Predicated region
    $region9: #{down_forward.4} parent=5 // pred_check
      _
    $region10: #{down_forward.4} parent=5 // pred_check_branch
      %116 = sbr.rel (%p113) target = $region12
    $region11: #{down_forward.4} parent=5 // pred_region
      %s117 = ssub.s32 %s9, 1
      // Predicated region
      $region13: #{down_forward.4} parent=11 // pred_check
        %p118 = pneg %p56
      $region14: #{down_forward.4} parent=11 // pred_check_branch
        %120 = sbr.rel (%p118) target = $region16
      $region15: #{down_forward.4} parent=11 // pred_region
        _
      $region16: #{down_forward.4} parent=11 // pred_fallthru
        _
      // Predicated region
      $region17: #{down_forward.4} parent=11 // pred_check
        %p121 = pneg %p77
      $region18: #{down_forward.4} parent=11 // pred_check_branch
        %123 = sbr.rel (%p121) target = $region20
      $region19: #{down_forward.4} parent=11 // pred_region
        _
      $region20: #{down_forward.4} parent=11 // pred_fallthru
        _
    $region12: #{down_forward.4} parent=5 // pred_fallthru
      _
    %p124 = scmp.lt.s32.totalorder %s9, 4
    // Predicated region
    $region21: #{down_forward.4} parent=5 // pred_check
      %p125 = pneg %p124
    $region22: #{down_forward.4} parent=5 // pred_check_branch
      %127 = sbr.rel (%p125) target = $region24
    $region23: #{down_forward.4} parent=5 // pred_region
      // Predicated region
      $region25: #{down_forward.4} parent=23 // pred_check
        %p128 = pneg %p29
      $region26: #{down_forward.4} parent=23 // pred_check_branch
        %130 = sbr.rel (%p128) target = $region28
      $region27: #{down_forward.4} parent=23 // pred_region
        %s131 = smul.u32 32, %s9
        %p132 = scmp.lt.s32.totalorder %s131, 127
        %s133 = scalar_select %p132, %s131, 127
        %s134 = smul.addr %s133, 4
        %s135 = scalar_lea.vmem %s0, %s134
        %s136 = smul.u32 32, %s9
      $region28: #{down_forward.4} parent=23 // pred_fallthru
        _
    $region24: #{down_forward.4} parent=5 // pred_fallthru
      _
    %p137 = scmp.le.s32.totalorder 1, %s9
    %p138 = scmp.lt.s32.totalorder %s9, 5
    %p139 = pnand %p137, %p138
    %p140 = pneg %p139
    // Predicated region
    $region29: #{down_forward.4} parent=5 // pred_check
      _
    $region30: #{down_forward.4} parent=5 // pred_check_branch
      %142 = sbr.rel (%p139) target = $region32
    $region31: #{down_forward.4} parent=5 // pred_region
      %s143 = ssub.s32 %s9, 1
      %s144 = smul.u32 32, %s14
      %p145 = scmp.lt.s32.totalorder %s144, 127
      %s146 = scalar_select %p145, %s144, 127
      %s147 = smul.addr %s146, 4
      %s148 = scalar_lea.vmem %s0, %s147
      %p149 = pneg %p35
      %p150 = pneg %p32
      %p151 = pneg %p56
      %p152 = pneg %p53
      %p153 = pneg %p77
      %p154 = pneg %p74
      %p155 = pneg %p103
      %p156 = pneg %p100
      %s157 = smul.u32 32, %s14
      %p158 = scmp.lt.s32.totalorder %s157, 127
      %s159 = scalar_select %p158, %s157, 127
      %s160 = smul.addr %s159, 4
      %s161 = scalar_lea.vmem %s3, %s160
      %s162 = smul.u32 32, %s14
      %p163 = scmp.lt.s32.totalorder %s162, 127
      %s164 = scalar_select %p163, %s162, 127
      %s165 = smul.addr %s164, 4
      %s166 = scalar_lea.vmem %s0, %s165
      %s167 = smul.u32 32, %s14
      %s168 = smul.u32 32, %s14
      %p169 = scmp.lt.s32.totalorder %s168, 127
      %s170 = scalar_select %p169, %s168, 127
      %s171 = smul.addr %s170, 4
      %s172 = scalar_lea.vmem %s3, %s171
      %s173 = smul.u32 32, %s14
      %v175 = vld [vmem:[%s166] sm:$0xf]
      %v176 = vld [vmem:[%s166 + $0x4] sm:$0xf]
      %v177 = vld [vmem:[%s166 + $0x8] sm:$0xf]
      %v178 = vld [vmem:[%s166 + $0xc] sm:$0xf]
      %v179 = vld [vmem:[%s166 + $0x10] sm:$0xf]
      %v180 = vld [vmem:[%s166 + $0x14] sm:$0xf]
      %v181 = vld [vmem:[%s166 + $0x18] sm:$0xf]
      %v182 = vld [vmem:[%s166 + $0x1c] sm:$0xf]
      %v183 = vld [vmem:[%s166 + $0x20] sm:$0xf]
      %v184 = vld [vmem:[%s166 + $0x24] sm:$0xf]
      %v185 = vld [vmem:[%s166 + $0x28] sm:$0xf]
      %v186 = vld [vmem:[%s166 + $0x2c] sm:$0xf]
      %v187 = vld [vmem:[%s166 + $0x30] sm:$0xf]
      %v188 = vld [vmem:[%s166 + $0x34] sm:$0xf]
      %v189 = vld [vmem:[%s166 + $0x38] sm:$0xf]
      %v190 = vld [vmem:[%s166 + $0x3c] sm:$0xf]
      %v191 = vld [vmem:[%s166 + $0x40] sm:$0xf]
      %v192 = vld [vmem:[%s166 + $0x44] sm:$0xf]
      %v193 = vld [vmem:[%s166 + $0x48] sm:$0xf]
      %v194 = vld [vmem:[%s166 + $0x4c] sm:$0xf]
      %v195 = vld [vmem:[%s166 + $0x50] sm:$0xf]
      %v196 = vld [vmem:[%s166 + $0x54] sm:$0xf]
      %v197 = vld [vmem:[%s166 + $0x58] sm:$0xf]
      %v198 = vld [vmem:[%s166 + $0x5c] sm:$0xf]
      %v199 = vld [vmem:[%s166 + $0x60] sm:$0xf]
      %v200 = vld [vmem:[%s166 + $0x64] sm:$0xf]
      %v201 = vld [vmem:[%s166 + $0x68] sm:$0xf]
      %v202 = vld [vmem:[%s166 + $0x6c] sm:$0xf]
      %v203 = vld [vmem:[%s166 + $0x70] sm:$0xf]
      %v204 = vld [vmem:[%s166 + $0x74] sm:$0xf]
      %v205 = vld [vmem:[%s166 + $0x78] sm:$0xf]
      %v206 = vld [vmem:[%s166 + $0x7c] sm:$0xf]
      %v207 = vld [vmem:[%s1] sm:$0xf]
      %v208 = vld [vmem:[%s1 + $0x4] sm:$0xf]
      %v209 = vld [vmem:[%s1 + $0x8] sm:$0xf]
      %v210 = vld [vmem:[%s1 + $0xc] sm:$0xf]
      %v211 = vld [vmem:[%s2] sm:$0x1]
      %v213 = vlaneseq
      %v214 = vshrl.u32 %v213, 7
      %v215 = vsub.s32 0, %v214
      %v216 = vrot.slane %v211, %v215
      %v250 = vunpack.c.l.b16 %v175
      %v251 = vunpack.c.l.b16 %v176
      %v252 = vunpack.c.l.b16 %v177
      %v253 = vunpack.c.l.b16 %v178
      %v254 = vunpack.c.l.b16 %v179
      %v255 = vunpack.c.l.b16 %v180
      %v256 = vunpack.c.l.b16 %v181
      %v257 = vunpack.c.l.b16 %v182
      %v258 = vunpack.c.l.b16 %v183
      %v259 = vunpack.c.l.b16 %v184
      %v260 = vunpack.c.l.b16 %v185
      %v261 = vunpack.c.l.b16 %v186
      %v262 = vunpack.c.l.b16 %v187
      %v263 = vunpack.c.l.b16 %v188
      %v264 = vunpack.c.l.b16 %v189
      %v265 = vunpack.c.l.b16 %v190
      %v266 = vunpack.c.l.b16 %v191
      %v267 = vunpack.c.l.b16 %v192
      %v268 = vunpack.c.l.b16 %v193
      %v269 = vunpack.c.l.b16 %v194
      %v270 = vunpack.c.l.b16 %v195
      %v271 = vunpack.c.l.b16 %v196
      %v272 = vunpack.c.l.b16 %v197
      %v273 = vunpack.c.l.b16 %v198
      %v274 = vunpack.c.l.b16 %v199
      %v275 = vunpack.c.l.b16 %v200
      %v276 = vunpack.c.l.b16 %v201
      %v277 = vunpack.c.l.b16 %v202
      %v278 = vunpack.c.l.b16 %v203
      %v279 = vunpack.c.l.b16 %v204
      %v280 = vunpack.c.l.b16 %v205
      %v281 = vunpack.c.l.b16 %v206
      %v282 = vpack.c.b16 %v251, %v250
      %v283 = vpack.c.b16 %v253, %v252
      %v284 = vpack.c.b16 %v255, %v254
      %v285 = vpack.c.b16 %v257, %v256
      %v286 = vpack.c.b16 %v259, %v258
      %v287 = vpack.c.b16 %v261, %v260
      %v288 = vpack.c.b16 %v263, %v262
      %v289 = vpack.c.b16 %v265, %v264
      %v290 = vpack.c.b16 %v267, %v266
      %v291 = vpack.c.b16 %v269, %v268
      %v292 = vpack.c.b16 %v271, %v270
      %v293 = vpack.c.b16 %v273, %v272
      %v294 = vpack.c.b16 %v275, %v274
      %v295 = vpack.c.b16 %v277, %v276
      %v296 = vpack.c.b16 %v279, %v278
      %v297 = vpack.c.b16 %v281, %v280
      %v302 = vunpack.c.l.b16 %v207
      %v303 = vunpack.c.l.b16 %v208
      %v304 = vunpack.c.l.b16 %v209
      %v305 = vunpack.c.l.b16 %v210
      %v306 = vpack.c.b16 %v303, %v302
      %v307 = vpack.c.b16 %v305, %v304
      %vm310 = vcmask 261120
      %v312 = vsel %vm310, %v282, 0
      %v315 = vsel %vm310, %v283, 0
      %v318 = vsel %vm310, %v284, 0
      %v321 = vsel %vm310, %v285, 0
      %v324 = vsel %vm310, %v286, 0
      %v327 = vsel %vm310, %v287, 0
      %v330 = vsel %vm310, %v288, 0
      %v333 = vsel %vm310, %v289, 0
      %v336 = vsel %vm310, %v290, 0
      %v339 = vsel %vm310, %v291, 0
      %v342 = vsel %vm310, %v292, 0
      %v345 = vsel %vm310, %v293, 0
      %v348 = vsel %vm310, %v294, 0
      %v351 = vsel %vm310, %v295, 0
      %v354 = vsel %vm310, %v296, 0
      %v357 = vsel %vm310, %v297, 0
      %359 = vmatprep.subr.bf16.mxu0 0
      %360 = vmatpush1.bf16.msra.mxu0 %v306
      %361 = vmatprep.subr.bf16.mxu0 0
      %362 = vmatpush1.bf16.msra.mxu0 %v307
      %363 = vmatprep.subr.bf16.mxu0 0
      %364 = vmatpush1.bf16.msra.mxu0 0
      %365 = vmatprep.subr.bf16.mxu0 0
      %366 = vmatpush1.bf16.msra.mxu0 0
      %367 = vmatprep.subr.bf16.mxu0 0
      %368 = vmatpush1.bf16.msra.mxu0 0
      %369 = vmatprep.subr.bf16.mxu0 0
      %370 = vmatpush1.bf16.msra.mxu0 0
      %371 = vmatprep.subr.bf16.mxu0 0
      %372 = vmatpush1.bf16.msra.mxu0 0
      %373 = vmatprep.subr.bf16.mxu0 0
      %374 = vmatpush1.bf16.msra.mxu0 0
      %375 = vmatprep.subr.bf16.mxu0 0
      %376 = vmatpush1.bf16.msra.mxu0 0
      %377 = vmatprep.subr.bf16.mxu0 0
      %378 = vmatpush1.bf16.msra.mxu0 0
      %379 = vmatprep.subr.bf16.mxu0 0
      %380 = vmatpush1.bf16.msra.mxu0 0
      %381 = vmatprep.subr.bf16.mxu0 0
      %382 = vmatpush1.bf16.msra.mxu0 0
      %383 = vmatprep.subr.bf16.mxu0 0
      %384 = vmatpush1.bf16.msra.mxu0 0
      %385 = vmatprep.subr.bf16.mxu0 0
      %386 = vmatpush1.bf16.msra.mxu0 0
      %387 = vmatprep.subr.bf16.mxu0 0
      %388 = vmatpush1.bf16.msra.mxu0 0
      %389 = vmatprep.subr.bf16.mxu0 0
      %390 = vmatpush1.bf16.msra.mxu0 0
      %391 = vmatprep.mubr.bf16.mxu0 0
      %392 = vmatmul.mubr.bf16.gmra.mrb[0].mxu0 %v312
      %v393 = vpop.f32.mrb[0].mxu0
      %v394 = vadd.f32 %v216, %v393
      %v395 = vpop.f32.mrb[0].mxu0
      %v396 = vpop.f32.mrb[0].mxu0
      %v397 = vadd.f32 %v216, %v396
      %v398 = vpop.f32.mrb[0].mxu0
      %399 = vmatprep.mubr.bf16.mxu0 0
      %400 = vmatmul.mubr.bf16.gmra.mrb[0].mxu0 %v315
      %v401 = vpop.f32.mrb[0].mxu0
      %v402 = vadd.f32 %v216, %v401
      %v403 = vpop.f32.mrb[0].mxu0
      %v404 = vpop.f32.mrb[0].mxu0
      %v405 = vadd.f32 %v216, %v404
      %v406 = vpop.f32.mrb[0].mxu0
      %407 = vmatprep.mubr.bf16.mxu0 0
      %408 = vmatmul.mubr.bf16.gmra.mrb[0].mxu0 %v318
      %v409 = vpop.f32.mrb[0].mxu0
      %v410 = vadd.f32 %v216, %v409
      %v411 = vpop.f32.mrb[0].mxu0
      %v412 = vpop.f32.mrb[0].mxu0
      %v413 = vadd.f32 %v216, %v412
      %v414 = vpop.f32.mrb[0].mxu0
      %415 = vmatprep.mubr.bf16.mxu0 0
      %416 = vmatmul.mubr.bf16.gmra.mrb[0].mxu0 %v321
      %v417 = vpop.f32.mrb[0].mxu0
      %v418 = vadd.f32 %v216, %v417
      %v419 = vpop.f32.mrb[0].mxu0
      %v420 = vpop.f32.mrb[0].mxu0
      %v421 = vadd.f32 %v216, %v420
      %v422 = vpop.f32.mrb[0].mxu0
      %423 = vmatprep.mubr.bf16.mxu0 0
      %424 = vmatmul.mubr.bf16.gmra.mrb[0].mxu0 %v324
      %v425 = vpop.f32.mrb[0].mxu0
      %v426 = vadd.f32 %v216, %v425
      %v427 = vpop.f32.mrb[0].mxu0
      %v428 = vpop.f32.mrb[0].mxu0
      %v429 = vadd.f32 %v216, %v428
      %v430 = vpop.f32.mrb[0].mxu0
      %431 = vmatprep.mubr.bf16.mxu0 0
      %432 = vmatmul.mubr.bf16.gmra.mrb[0].mxu0 %v327
      %v433 = vpop.f32.mrb[0].mxu0
      %v434 = vadd.f32 %v216, %v433
      %v435 = vpop.f32.mrb[0].mxu0
      %v436 = vpop.f32.mrb[0].mxu0
      %v437 = vadd.f32 %v216, %v436
      %v438 = vpop.f32.mrb[0].mxu0
      %439 = vmatprep.mubr.bf16.mxu0 0
      %440 = vmatmul.mubr.bf16.gmra.mrb[0].mxu0 %v330
      %v441 = vpop.f32.mrb[0].mxu0
      %v442 = vadd.f32 %v216, %v441
      %v443 = vpop.f32.mrb[0].mxu0
      %v444 = vpop.f32.mrb[0].mxu0
      %v445 = vadd.f32 %v216, %v444
      %v446 = vpop.f32.mrb[0].mxu0
      %447 = vmatprep.mubr.bf16.mxu0 0
      %448 = vmatmul.mubr.bf16.gmra.mrb[0].mxu0 %v333
      %v449 = vpop.f32.mrb[0].mxu0
      %v450 = vadd.f32 %v216, %v449
      %v451 = vpop.f32.mrb[0].mxu0
      %v452 = vpop.f32.mrb[0].mxu0
      %v453 = vadd.f32 %v216, %v452
      %v454 = vpop.f32.mrb[0].mxu0
      %455 = vmatprep.mubr.bf16.mxu0 0
      %456 = vmatmul.mubr.bf16.gmra.mrb[0].mxu0 %v336
      %v457 = vpop.f32.mrb[0].mxu0
      %v458 = vadd.f32 %v216, %v457
      %v459 = vpop.f32.mrb[0].mxu0
      %v460 = vpop.f32.mrb[0].mxu0
      %v461 = vadd.f32 %v216, %v460
      %v462 = vpop.f32.mrb[0].mxu0
      %463 = vmatprep.mubr.bf16.mxu0 0
      %464 = vmatmul.mubr.bf16.gmra.mrb[0].mxu0 %v339
      %v465 = vpop.f32.mrb[0].mxu0
      %v466 = vadd.f32 %v216, %v465
      %v467 = vpop.f32.mrb[0].mxu0
      %v468 = vpop.f32.mrb[0].mxu0
      %v469 = vadd.f32 %v216, %v468
      %v470 = vpop.f32.mrb[0].mxu0
      %471 = vmatprep.mubr.bf16.mxu0 0
      %472 = vmatmul.mubr.bf16.gmra.mrb[0].mxu0 %v342
      %v473 = vpop.f32.mrb[0].mxu0
      %v474 = vadd.f32 %v216, %v473
      %v475 = vpop.f32.mrb[0].mxu0
      %v476 = vpop.f32.mrb[0].mxu0
      %v477 = vadd.f32 %v216, %v476
      %v478 = vpop.f32.mrb[0].mxu0
      %479 = vmatprep.mubr.bf16.mxu0 0
      %480 = vmatmul.mubr.bf16.gmra.mrb[0].mxu0 %v345
      %v481 = vpop.f32.mrb[0].mxu0
      %v482 = vadd.f32 %v216, %v481
      %v483 = vpop.f32.mrb[0].mxu0
      %v484 = vpop.f32.mrb[0].mxu0
      %v485 = vadd.f32 %v216, %v484
      %v486 = vpop.f32.mrb[0].mxu0
      %487 = vmatprep.mubr.bf16.mxu0 0
      %488 = vmatmul.mubr.bf16.gmra.mrb[0].mxu0 %v348
      %v489 = vpop.f32.mrb[0].mxu0
      %v490 = vadd.f32 %v216, %v489
      %v491 = vpop.f32.mrb[0].mxu0
      %v492 = vpop.f32.mrb[0].mxu0
      %v493 = vadd.f32 %v216, %v492
      %v494 = vpop.f32.mrb[0].mxu0
      %495 = vmatprep.mubr.bf16.mxu0 0
      %496 = vmatmul.mubr.bf16.gmra.mrb[0].mxu0 %v351
      %v497 = vpop.f32.mrb[0].mxu0
      %v498 = vadd.f32 %v216, %v497
      %v499 = vpop.f32.mrb[0].mxu0
      %v500 = vpop.f32.mrb[0].mxu0
      %v501 = vadd.f32 %v216, %v500
      %v502 = vpop.f32.mrb[0].mxu0
      %503 = vmatprep.mubr.bf16.mxu0 0
      %504 = vmatmul.mubr.bf16.gmra.mrb[0].mxu0 %v354
      %v505 = vpop.f32.mrb[0].mxu0
      %v506 = vadd.f32 %v216, %v505
      %v507 = vpop.f32.mrb[0].mxu0
      %v508 = vpop.f32.mrb[0].mxu0
      %v509 = vadd.f32 %v216, %v508
      %v510 = vpop.f32.mrb[0].mxu0
      %511 = vmatprep.mubr.bf16.mxu0 0
      %512 = vmatmul.mubr.bf16.gmra.mrb[0].mxu0 %v357
      %v513 = vpop.f32.mrb[0].mxu0
      %v514 = vadd.f32 %v216, %v513
      %v515 = vpop.f32.mrb[0].mxu0
      %v516 = vpop.f32.mrb[0].mxu0
      %v517 = vadd.f32 %v216, %v516
      %v518 = vpop.f32.mrb[0].mxu0
      %519 = vdwg.mxu0
      %v520 = vpack.c.bf16 %v397, %v394
      %v521 = vpack.c.bf16 %v405, %v402
      %v522 = vpack.c.bf16 %v413, %v410
      %v523 = vpack.c.bf16 %v421, %v418
      %v524 = vpack.c.bf16 %v429, %v426
      %v525 = vpack.c.bf16 %v437, %v434
      %v526 = vpack.c.bf16 %v445, %v442
      %v527 = vpack.c.bf16 %v453, %v450
      %v528 = vpack.c.bf16 %v461, %v458
      %v529 = vpack.c.bf16 %v469, %v466
      %v530 = vpack.c.bf16 %v477, %v474
      %v531 = vpack.c.bf16 %v485, %v482
      %v532 = vpack.c.bf16 %v493, %v490
      %v533 = vpack.c.bf16 %v501, %v498
      %v534 = vpack.c.bf16 %v509, %v506
      %v535 = vpack.c.bf16 %v517, %v514
      %v552 = vunpack.c.l.b16 %v520
      %v553 = vunpack.c.h.b16 %v520
      %v554 = vunpack.c.l.b16 %v521
      %v555 = vunpack.c.h.b16 %v521
      %v556 = vunpack.c.l.b16 %v522
      %v557 = vunpack.c.h.b16 %v522
      %v558 = vunpack.c.l.b16 %v523
      %v559 = vunpack.c.h.b16 %v523
      %v560 = vunpack.c.l.b16 %v524
      %v561 = vunpack.c.h.b16 %v524
      %v562 = vunpack.c.l.b16 %v525
      %v563 = vunpack.c.h.b16 %v525
      %v564 = vunpack.c.l.b16 %v526
      %v565 = vunpack.c.h.b16 %v526
      %v566 = vunpack.c.l.b16 %v527
      %v567 = vunpack.c.h.b16 %v527
      %v568 = vunpack.c.l.b16 %v528
      %v569 = vunpack.c.h.b16 %v528
      %v570 = vunpack.c.l.b16 %v529
      %v571 = vunpack.c.h.b16 %v529
      %v572 = vunpack.c.l.b16 %v530
      %v573 = vunpack.c.h.b16 %v530
      %v574 = vunpack.c.l.b16 %v531
      %v575 = vunpack.c.h.b16 %v531
      %v576 = vunpack.c.l.b16 %v532
      %v577 = vunpack.c.h.b16 %v532
      %v578 = vunpack.c.l.b16 %v533
      %v579 = vunpack.c.h.b16 %v533
      %v580 = vunpack.c.l.b16 %v534
      %v581 = vunpack.c.h.b16 %v534
      %v582 = vunpack.c.l.b16 %v535
      %v583 = vunpack.c.h.b16 %v535
      %v584 = vpack.c.b16 %v552, %v552
      %v585 = vpack.c.b16 %v553, %v553
      %v586 = vpack.c.b16 %v554, %v554
      %v587 = vpack.c.b16 %v555, %v555
      %v588 = vpack.c.b16 %v556, %v556
      %v589 = vpack.c.b16 %v557, %v557
      %v590 = vpack.c.b16 %v558, %v558
      %v591 = vpack.c.b16 %v559, %v559
      %v592 = vpack.c.b16 %v560, %v560
      %v593 = vpack.c.b16 %v561, %v561
      %v594 = vpack.c.b16 %v562, %v562
      %v595 = vpack.c.b16 %v563, %v563
      %v596 = vpack.c.b16 %v564, %v564
      %v597 = vpack.c.b16 %v565, %v565
      %v598 = vpack.c.b16 %v566, %v566
      %v599 = vpack.c.b16 %v567, %v567
      %v600 = vpack.c.b16 %v568, %v568
      %v601 = vpack.c.b16 %v569, %v569
      %v602 = vpack.c.b16 %v570, %v570
      %v603 = vpack.c.b16 %v571, %v571
      %v604 = vpack.c.b16 %v572, %v572
      %v605 = vpack.c.b16 %v573, %v573
      %v606 = vpack.c.b16 %v574, %v574
      %v607 = vpack.c.b16 %v575, %v575
      %v608 = vpack.c.b16 %v576, %v576
      %v609 = vpack.c.b16 %v577, %v577
      %v610 = vpack.c.b16 %v578, %v578
      %v611 = vpack.c.b16 %v579, %v579
      %v612 = vpack.c.b16 %v580, %v580
      %v613 = vpack.c.b16 %v581, %v581
      %v614 = vpack.c.b16 %v582, %v582
      %v615 = vpack.c.b16 %v583, %v583
      %vm648 = vcmask 27648
      %649 = vst.msk [vmem:[%s172] sm:$0xf] %vm648, %v584
      %650 = vst.msk [vmem:[%s172 + $0x4] sm:$0xf] %vm648, %v585
      %651 = vst.msk [vmem:[%s172 + $0x8] sm:$0xf] %vm648, %v586
      %652 = vst.msk [vmem:[%s172 + $0xc] sm:$0xf] %vm648, %v587
      %653 = vst.msk [vmem:[%s172 + $0x10] sm:$0xf] %vm648, %v588
      %654 = vst.msk [vmem:[%s172 + $0x14] sm:$0xf] %vm648, %v589
      %655 = vst.msk [vmem:[%s172 + $0x18] sm:$0xf] %vm648, %v590
      %656 = vst.msk [vmem:[%s172 + $0x1c] sm:$0xf] %vm648, %v591
      %657 = vst.msk [vmem:[%s172 + $0x20] sm:$0xf] %vm648, %v592
      %658 = vst.msk [vmem:[%s172 + $0x24] sm:$0xf] %vm648, %v593
      %659 = vst.msk [vmem:[%s172 + $0x28] sm:$0xf] %vm648, %v594
      %660 = vst.msk [vmem:[%s172 + $0x2c] sm:$0xf] %vm648, %v595
      %661 = vst.msk [vmem:[%s172 + $0x30] sm:$0xf] %vm648, %v596
      %662 = vst.msk [vmem:[%s172 + $0x34] sm:$0xf] %vm648, %v597
      %663 = vst.msk [vmem:[%s172 + $0x38] sm:$0xf] %vm648, %v598
      %664 = vst.msk [vmem:[%s172 + $0x3c] sm:$0xf] %vm648, %v599
      %665 = vst.msk [vmem:[%s172 + $0x40] sm:$0xf] %vm648, %v600
      %666 = vst.msk [vmem:[%s172 + $0x44] sm:$0xf] %vm648, %v601
      %667 = vst.msk [vmem:[%s172 + $0x48] sm:$0xf] %vm648, %v602
      %668 = vst.msk [vmem:[%s172 + $0x4c] sm:$0xf] %vm648, %v603
      %669 = vst.msk [vmem:[%s172 + $0x50] sm:$0xf] %vm648, %v604
      %670 = vst.msk [vmem:[%s172 + $0x54] sm:$0xf] %vm648, %v605
      %671 = vst.msk [vmem:[%s172 + $0x58] sm:$0xf] %vm648, %v606
      %672 = vst.msk [vmem:[%s172 + $0x5c] sm:$0xf] %vm648, %v607
      %673 = vst.msk [vmem:[%s172 + $0x60] sm:$0xf] %vm648, %v608
      %674 = vst.msk [vmem:[%s172 + $0x64] sm:$0xf] %vm648, %v609
      %675 = vst.msk [vmem:[%s172 + $0x68] sm:$0xf] %vm648, %v610
      %676 = vst.msk [vmem:[%s172 + $0x6c] sm:$0xf] %vm648, %v611
      %677 = vst.msk [vmem:[%s172 + $0x70] sm:$0xf] %vm648, %v612
      %678 = vst.msk [vmem:[%s172 + $0x74] sm:$0xf] %vm648, %v613
      %679 = vst.msk [vmem:[%s172 + $0x78] sm:$0xf] %vm648, %v614
      %680 = vst.msk [vmem:[%s172 + $0x7c] sm:$0xf] %vm648, %v615
      %s681 = smul.u32 32, %s14
      %p682 = scmp.lt.s32.totalorder %s681, 127
      %s683 = scalar_select %p682, %s681, 127
      %s684 = smul.addr %s683, 4
      %s685 = scalar_lea.vmem %s3, %s684
      // Predicated region
      $region33: #{down_forward.4} parent=31 // pred_check
        %p686 = pneg %p100
      $region34: #{down_forward.4} parent=31 // pred_check_branch
        %688 = sbr.rel (%p686) target = $region36
      $region35: #{down_forward.4} parent=31 // pred_region
        %s689 = smul.u32 32, %s14
      $region36: #{down_forward.4} parent=31 // pred_fallthru
        _
    $region32: #{down_forward.4} parent=5 // pred_fallthru
      _
    %p690 = scmp.le.s32.totalorder 2, %s9
    // Predicated region
    $region37: #{down_forward.4} parent=5 // pred_check
      %p691 = pneg %p690
    $region38: #{down_forward.4} parent=5 // pred_check_branch
      %693 = sbr.rel (%p691) target = $region40
    $region39: #{down_forward.4} parent=5 // pred_region
      %s694 = ssub.s32 %s9, 2
      // Predicated region
      $region41: #{down_forward.4} parent=39 // pred_check
        %p695 = pneg %p106
      $region42: #{down_forward.4} parent=39 // pred_check_branch
        %697 = sbr.rel (%p695) target = $region44
      $region43: #{down_forward.4} parent=39 // pred_region
        %s698 = smul.u32 32, %s15
        %p699 = scmp.lt.s32.totalorder %s698, 127
        %s700 = scalar_select %p699, %s698, 127
        %s701 = smul.addr %s700, 4
        %s702 = scalar_lea.vmem %s3, %s701
      $region44: #{down_forward.4} parent=39 // pred_fallthru
        _
    $region40: #{down_forward.4} parent=5 // pred_fallthru
      _
  $region6: #{down_forward.4} parent=0 // loop_footer
    %s13 = sadd.s32 1, %s9
  $region7: #{down_forward.4} parent=0 // loop_footer_branch
    %8 = sbr.rel target = $region3
  $region8: #{down_forward.4} parent=0 // loop_exit
    _

// kernel: down_forward.5
$region0: #{down_forward.5}
  #allocation0 [shape = 'u32[]', space=smem, size = 0x4, offset = 0x4, fixed_abs, tag = 'smem constant byte address 0x4 - core index']
  #allocation1 [shape = 'u32[144,128]{1,0:T(1,128)}', space=vmem, size = 0x12000, scoped, tag = 'internal scratch']
  %s0 = inlined_call_operand.vmem [shape: bf16[3680,12], index: 0, kind: input, shape index: {}]
  %s1 = inlined_call_operand.vmem [shape: bf16[9,12,8], index: 1, kind: input, shape index: {}]
  %s2 = inlined_call_operand.vmem [shape: f32[1,8], index: 2, kind: input, shape index: {}]
  %s3 = inlined_call_operand.vmem [shape: bf16[3328,8], index: 3, kind: output, shape index: {}]
  %s4 = sld [smem:[#allocation0]]
  $region45: #{down_forward.5} parent=0
    _
  %s6 = ssub.s32 1, %s4
  %s7 = scalar_select 0, %s6, %s4
  loop: start=0, step=1, limit=15
  $region2: #{down_forward.5} parent=0 // loop_pre_header
    _
  $region3: #{down_forward.5} parent=0 // loop_header
    %s9 = sphi 0, %s13
    %p10 = scmp.ge.s32.totalorder %s9, 15
    %s17 = sphi 0, %s17
    %s19 = sphi 0, %s17
    %s20 = sphi 0, %s19
    %s34 = sphi 0, %s20
    %s38 = sphi 0, %s38
    %s40 = sphi 0, %s38
    %s41 = sphi 0, %s40
    %s55 = sphi 0, %s41
    %s59 = sphi 0, %s59
    %s61 = sphi 0, %s59
    %s62 = sphi 0, %s61
    %s76 = sphi 0, %s62
    %s82 = sphi 0, %s84
    %s85 = sphi 0, %s82
    %s86 = sphi 0, %s85
    %s102 = sphi 0, %s86
  $region4: #{down_forward.5} parent=0 // loop_header_branch
    %12 = sbr.rel (%p10) target = $region8
  $region5: #{down_forward.5} parent=0 // loop_body
    %s14 = ssub.s32 %s9, 1
    %s15 = ssub.s32 %s9, 2
    %s16 = sadd.s32 %s9, 1
    %s18 = sadd.s32 %s17, 1
    %p21 = scmp.eq.s32.totalorder %s9, 12
    %p22 = scmp.ne.s32.totalorder %s17, %s19
    %p23 = scmp.eq.s32.totalorder %s9, 0
    %p24 = por %p22, %p23
    %p25 = scmp.ne.s32.totalorder %s17, %s19
    %p26 = scmp.eq.s32.totalorder %s14, 12
    %p27 = por %p25, %p26
    %p28 = scmp.ne.s32.totalorder %s19, %s20
    %p29 = scmp.eq.s32.totalorder %s14, 0
    %p30 = por %p28, %p29
    %p31 = scmp.ne.s32.totalorder %s19, %s20
    %p32 = scmp.eq.s32.totalorder %s15, 12
    %p33 = por %p31, %p32
    %p35 = scmp.ne.s32.totalorder %s20, %s34
    %p36 = scmp.eq.s32.totalorder %s15, 0
    %p37 = por %p35, %p36
    %s39 = sadd.s32 %s38, 1
    %p42 = scmp.eq.s32.totalorder %s9, 12
    %p43 = scmp.ne.s32.totalorder %s38, %s40
    %p44 = scmp.eq.s32.totalorder %s9, 0
    %p45 = por %p43, %p44
    %p46 = scmp.ne.s32.totalorder %s38, %s40
    %p47 = scmp.eq.s32.totalorder %s14, 12
    %p48 = por %p46, %p47
    %p49 = scmp.ne.s32.totalorder %s40, %s41
    %p50 = scmp.eq.s32.totalorder %s14, 0
    %p51 = por %p49, %p50
    %p52 = scmp.ne.s32.totalorder %s40, %s41
    %p53 = scmp.eq.s32.totalorder %s15, 12
    %p54 = por %p52, %p53
    %p56 = scmp.ne.s32.totalorder %s41, %s55
    %p57 = scmp.eq.s32.totalorder %s15, 0
    %p58 = por %p56, %p57
    %s60 = sadd.s32 %s59, 1
    %p63 = scmp.eq.s32.totalorder %s9, 12
    %p64 = scmp.ne.s32.totalorder %s59, %s61
    %p65 = scmp.eq.s32.totalorder %s9, 0
    %p66 = por %p64, %p65
    %p67 = scmp.ne.s32.totalorder %s59, %s61
    %p68 = scmp.eq.s32.totalorder %s14, 12
    %p69 = por %p67, %p68
    %p70 = scmp.ne.s32.totalorder %s61, %s62
    %p71 = scmp.eq.s32.totalorder %s14, 0
    %p72 = por %p70, %p71
    %p73 = scmp.ne.s32.totalorder %s61, %s62
    %p74 = scmp.eq.s32.totalorder %s15, 12
    %p75 = por %p73, %p74
    %p77 = scmp.ne.s32.totalorder %s62, %s76
    %p78 = scmp.eq.s32.totalorder %s15, 0
    %p79 = por %p77, %p78
    %s80 = ssub.s32 %s9, %s16
    %p81 = scmp.eq.s32.totalorder %s80, 0
    %s83 = sadd.s32 %s82, 1
    %s84 = scalar_select %p81, %s82, %s83
    %p87 = pneg %p81
    %p88 = scmp.eq.s32.totalorder %s9, 12
    %p89 = por %p87, %p88
    %p90 = scmp.ne.s32.totalorder %s82, %s85
    %p91 = scmp.eq.s32.totalorder %s9, 0
    %p92 = por %p90, %p91
    %p93 = scmp.ne.s32.totalorder %s82, %s85
    %p94 = scmp.eq.s32.totalorder %s14, 12
    %p95 = por %p93, %p94
    %p96 = scmp.ne.s32.totalorder %s85, %s86
    %p97 = scmp.eq.s32.totalorder %s14, 0
    %p98 = por %p96, %p97
    %p99 = scmp.ne.s32.totalorder %s85, %s86
    %p100 = scmp.eq.s32.totalorder %s15, 12
    %p101 = por %p99, %p100
    %p103 = scmp.ne.s32.totalorder %s86, %s102
    %p104 = scmp.eq.s32.totalorder %s15, 0
    %p105 = por %p103, %p104
    %p106 = scmp.le.s32.totalorder 1, %s9
    %p107 = scmp.lt.s32.totalorder %s9, 14
    %p108 = pnand %p106, %p107
    %p109 = pneg %p108
    // Predicated region
    $region9: #{down_forward.5} parent=5 // pred_check
      _
    $region10: #{down_forward.5} parent=5 // pred_check_branch
      %111 = sbr.rel (%p108) target = $region12
    $region11: #{down_forward.5} parent=5 // pred_region
      %s112 = ssub.s32 %s9, 1
      // Predicated region
      $region13: #{down_forward.5} parent=11 // pred_check
        %p113 = pneg %p30
      $region14: #{down_forward.5} parent=11 // pred_check_branch
        %115 = sbr.rel (%p113) target = $region16
      $region15: #{down_forward.5} parent=11 // pred_region
        _
      $region16: #{down_forward.5} parent=11 // pred_fallthru
        _
      // Predicated region
      $region17: #{down_forward.5} parent=11 // pred_check
        %p116 = pneg %p51
      $region18: #{down_forward.5} parent=11 // pred_check_branch
        %118 = sbr.rel (%p116) target = $region20
      $region19: #{down_forward.5} parent=11 // pred_region
        _
      $region20: #{down_forward.5} parent=11 // pred_fallthru
        _
      // Predicated region
      $region21: #{down_forward.5} parent=11 // pred_check
        %p119 = pneg %p72
      $region22: #{down_forward.5} parent=11 // pred_check_branch
        %121 = sbr.rel (%p119) target = $region24
      $region23: #{down_forward.5} parent=11 // pred_region
        _
      $region24: #{down_forward.5} parent=11 // pred_fallthru
        _
    $region12: #{down_forward.5} parent=5 // pred_fallthru
      _
    %p122 = scmp.lt.s32.totalorder %s9, 13
    // Predicated region
    $region25: #{down_forward.5} parent=5 // pred_check
      %p123 = pneg %p122
    $region26: #{down_forward.5} parent=5 // pred_check_branch
      %125 = sbr.rel (%p123) target = $region28
    $region27: #{down_forward.5} parent=5 // pred_region
      _
    $region28: #{down_forward.5} parent=5 // pred_fallthru
      _
    %p126 = scmp.le.s32.totalorder 1, %s9
    %p127 = scmp.lt.s32.totalorder %s9, 14
    %p128 = pnand %p126, %p127
    %p129 = pneg %p128
    // Predicated region
    $region29: #{down_forward.5} parent=5 // pred_check
      _
    $region30: #{down_forward.5} parent=5 // pred_check_branch
      %131 = sbr.rel (%p128) target = $region32
    $region31: #{down_forward.5} parent=5 // pred_region
      %s132 = ssub.s32 %s9, 1
      %p133 = pneg %p30
      %p134 = pneg %p27
      %p135 = pneg %p51
      %p136 = pneg %p48
      %p137 = pneg %p72
      %p138 = pneg %p69
      %p139 = pneg %p98
      %p140 = pneg %p95
      %s141 = smul.u32 32, %s14
      %p142 = scmp.lt.s32.totalorder %s141, 415
      %s143 = scalar_select %p142, %s141, 415
      %s144 = smul.addr %s143, 4
      %s145 = scalar_lea.vmem %s3, %s144
      %s146 = smul.u32 32, %s14
      %p147 = scmp.lt.s32.totalorder %s146, 415
      %s148 = scalar_select %p147, %s146, 415
      %s149 = smul.addr %s148, 4
      %s150 = scalar_lea.vmem %s3, %s149
      %s151 = smul.u32 32, %s14
      %s153 = smul.u32 %s14, 256
      %s154 = sshra.s32 %s153, 3
      %s155 = sand.u32 %s153, 7
      %s156 = smul.addr %s154, 4
      %s157 = scalar_lea.vmem %s0, %s156
      %v158 = vld [vmem:[%s157] sm:$0xf]
      %v159 = vld [vmem:[%s157 + $0x4] sm:$0xf]
      %v160 = vld [vmem:[%s157 + $0x8] sm:$0xf]
      %v161 = vld [vmem:[%s157 + $0xc] sm:$0xf]
      %v162 = vld [vmem:[%s157 + $0x10] sm:$0xf]
      %v163 = vld [vmem:[%s157 + $0x14] sm:$0xf]
      %v164 = vld [vmem:[%s157 + $0x18] sm:$0xf]
      %v165 = vld [vmem:[%s157 + $0x1c] sm:$0xf]
      %v166 = vld [vmem:[%s157 + $0x20] sm:$0xf]
      %v167 = vld [vmem:[%s157 + $0x24] sm:$0xf]
      %v168 = vld [vmem:[%s157 + $0x28] sm:$0xf]
      %v169 = vld [vmem:[%s157 + $0x2c] sm:$0xf]
      %v170 = vld [vmem:[%s157 + $0x30] sm:$0xf]
      %v171 = vld [vmem:[%s157 + $0x34] sm:$0xf]
      %v172 = vld [vmem:[%s157 + $0x38] sm:$0xf]
      %v173 = vld [vmem:[%s157 + $0x3c] sm:$0xf]
      %v174 = vld [vmem:[%s157 + $0x40] sm:$0xf]
      %v175 = vld [vmem:[%s157 + $0x44] sm:$0xf]
      %v176 = vld [vmem:[%s157 + $0x48] sm:$0xf]
      %v177 = vld [vmem:[%s157 + $0x4c] sm:$0xf]
      %v178 = vld [vmem:[%s157 + $0x50] sm:$0xf]
      %v179 = vld [vmem:[%s157 + $0x54] sm:$0xf]
      %v180 = vld [vmem:[%s157 + $0x58] sm:$0xf]
      %v181 = vld [vmem:[%s157 + $0x5c] sm:$0xf]
      %v182 = vld [vmem:[%s157 + $0x60] sm:$0xf]
      %v183 = vld [vmem:[%s157 + $0x64] sm:$0xf]
      %v184 = vld [vmem:[%s157 + $0x68] sm:$0xf]
      %v185 = vld [vmem:[%s157 + $0x6c] sm:$0xf]
      %v186 = vld [vmem:[%s157 + $0x70] sm:$0xf]
      %v187 = vld [vmem:[%s157 + $0x74] sm:$0xf]
      %v188 = vld [vmem:[%s157 + $0x78] sm:$0xf]
      %v189 = vld [vmem:[%s157 + $0x7c] sm:$0xf]
      %v190 = vld [vmem:[%s1] sm:$0xf]
      %v191 = vld [vmem:[%s1 + $0x4] sm:$0x3]
      %s192 = sadd.s32 %s153, 16
      %s193 = sshra.s32 %s192, 3
      %s194 = sand.u32 %s192, 7
      %s195 = smul.addr %s193, 4
      %s196 = scalar_lea.vmem %s0, %s195
      %v197 = vld [vmem:[%s196] sm:$0xf]
      %v198 = vld [vmem:[%s196 + $0x4] sm:$0xf]
      %v199 = vld [vmem:[%s196 + $0x8] sm:$0xf]
      %v200 = vld [vmem:[%s196 + $0xc] sm:$0xf]
      %v201 = vld [vmem:[%s196 + $0x10] sm:$0xf]
      %v202 = vld [vmem:[%s196 + $0x14] sm:$0xf]
      %v203 = vld [vmem:[%s196 + $0x18] sm:$0xf]
      %v204 = vld [vmem:[%s196 + $0x1c] sm:$0xf]
      %v205 = vld [vmem:[%s196 + $0x20] sm:$0xf]
      %v206 = vld [vmem:[%s196 + $0x24] sm:$0xf]
      %v207 = vld [vmem:[%s196 + $0x28] sm:$0xf]
      %v208 = vld [vmem:[%s196 + $0x2c] sm:$0xf]
      %v209 = vld [vmem:[%s196 + $0x30] sm:$0xf]
      %v210 = vld [vmem:[%s196 + $0x34] sm:$0xf]
      %v211 = vld [vmem:[%s196 + $0x38] sm:$0xf]
      %v212 = vld [vmem:[%s196 + $0x3c] sm:$0xf]
      %v213 = vld [vmem:[%s196 + $0x40] sm:$0xf]
      %v214 = vld [vmem:[%s196 + $0x44] sm:$0xf]
      %v215 = vld [vmem:[%s196 + $0x48] sm:$0xf]
      %v216 = vld [vmem:[%s196 + $0x4c] sm:$0xf]
      %v217 = vld [vmem:[%s196 + $0x50] sm:$0xf]
      %v218 = vld [vmem:[%s196 + $0x54] sm:$0xf]
      %v219 = vld [vmem:[%s196 + $0x58] sm:$0xf]
      %v220 = vld [vmem:[%s196 + $0x5c] sm:$0xf]
      %v221 = vld [vmem:[%s196 + $0x60] sm:$0xf]
      %v222 = vld [vmem:[%s196 + $0x64] sm:$0xf]
      %v223 = vld [vmem:[%s196 + $0x68] sm:$0xf]
      %v224 = vld [vmem:[%s196 + $0x6c] sm:$0xf]
      %v225 = vld [vmem:[%s196 + $0x70] sm:$0xf]
      %v226 = vld [vmem:[%s196 + $0x74] sm:$0xf]
      %v227 = vld [vmem:[%s196 + $0x78] sm:$0xf]
      %v228 = vld [vmem:[%s196 + $0x7c] sm:$0xf]
      %s229 = scalar_lea.vmem %s1, 8
      %v230 = vld [vmem:[%s229] sm:$0xf]
      %v231 = vld [vmem:[%s229 + $0x4] sm:$0x3]
      %v264 = vunpack.c.l.b16 %v197
      %v265 = vunpack.c.l.b16 %v198
      %v266 = vunpack.c.l.b16 %v199
      %v267 = vunpack.c.l.b16 %v200
      %v268 = vunpack.c.l.b16 %v201
      %v269 = vunpack.c.l.b16 %v202
      %v270 = vunpack.c.l.b16 %v203
      %v271 = vunpack.c.l.b16 %v204
      %v272 = vunpack.c.l.b16 %v205
      %v273 = vunpack.c.l.b16 %v206
      %v274 = vunpack.c.l.b16 %v207
      %v275 = vunpack.c.l.b16 %v208
      %v276 = vunpack.c.l.b16 %v209
      %v277 = vunpack.c.l.b16 %v210
      %v278 = vunpack.c.l.b16 %v211
      %v279 = vunpack.c.l.b16 %v212
      %v280 = vunpack.c.l.b16 %v213
      %v281 = vunpack.c.l.b16 %v214
      %v282 = vunpack.c.l.b16 %v215
      %v283 = vunpack.c.l.b16 %v216
      %v284 = vunpack.c.l.b16 %v217
      %v285 = vunpack.c.l.b16 %v218
      %v286 = vunpack.c.l.b16 %v219
      %v287 = vunpack.c.l.b16 %v220
      %v288 = vunpack.c.l.b16 %v221
      %v289 = vunpack.c.l.b16 %v222
      %v290 = vunpack.c.l.b16 %v223
      %v291 = vunpack.c.l.b16 %v224
      %v292 = vunpack.c.l.b16 %v225
      %v293 = vunpack.c.l.b16 %v226
      %v294 = vunpack.c.l.b16 %v227
      %v295 = vunpack.c.l.b16 %v228
      %v296 = vpack.c.b16 %v265, %v264
      %v297 = vpack.c.b16 %v267, %v266
      %v298 = vpack.c.b16 %v269, %v268
      %v299 = vpack.c.b16 %v271, %v270
      %v300 = vpack.c.b16 %v273, %v272
      %v301 = vpack.c.b16 %v275, %v274
      %v302 = vpack.c.b16 %v277, %v276
      %v303 = vpack.c.b16 %v279, %v278
      %v304 = vpack.c.b16 %v281, %v280
      %v305 = vpack.c.b16 %v283, %v282
      %v306 = vpack.c.b16 %v285, %v284
      %v307 = vpack.c.b16 %v287, %v286
      %v308 = vpack.c.b16 %v289, %v288
      %v309 = vpack.c.b16 %v291, %v290
      %v310 = vpack.c.b16 %v293, %v292
      %v311 = vpack.c.b16 %v295, %v294
      %v314 = vunpack.c.l.b16 %v230
      %v315 = vunpack.c.l.b16 %v231
      %v316 = vpack.c.b16 %v315, %v314
      %vm317 = vcmask 97280
      %v319 = vsel %vm317, %v296, 0
      %v322 = vsel %vm317, %v297, 0
      %v325 = vsel %vm317, %v298, 0
      %v328 = vsel %vm317, %v299, 0
      %v331 = vsel %vm317, %v300, 0
      %v334 = vsel %vm317, %v301, 0
      %v337 = vsel %vm317, %v302, 0
      %v340 = vsel %vm317, %v303, 0
      %v343 = vsel %vm317, %v304, 0
      %v346 = vsel %vm317, %v305, 0
      %v349 = vsel %vm317, %v306, 0
      %v352 = vsel %vm317, %v307, 0
      %v355 = vsel %vm317, %v308, 0
      %v358 = vsel %vm317, %v309, 0
      %v361 = vsel %vm317, %v310, 0
      %v364 = vsel %vm317, %v311, 0
      %vm366 = vcmask 1045504
      %v368 = vsel %vm366, %v316, 0
      %370 = vmatprep.subr.bf16.mxu0 0
      %371 = vmatpush1.bf16.msra.mxu0 %v368
      %372 = vmatprep.subr.bf16.mxu0 0
      %373 = vmatpush1.bf16.msra.mxu0 0
      %374 = vmatprep.subr.bf16.mxu0 0
      %375 = vmatpush1.bf16.msra.mxu0 0
      %376 = vmatprep.subr.bf16.mxu0 0
      %377 = vmatpush1.bf16.msra.mxu0 0
      %378 = vmatprep.subr.bf16.mxu0 0
      %379 = vmatpush1.bf16.msra.mxu0 0
      %380 = vmatprep.subr.bf16.mxu0 0
      %381 = vmatpush1.bf16.msra.mxu0 0
      %382 = vmatprep.subr.bf16.mxu0 0
      %383 = vmatpush1.bf16.msra.mxu0 0
      %384 = vmatprep.subr.bf16.mxu0 0
      %385 = vmatpush1.bf16.msra.mxu0 0
      %386 = vmatprep.subr.bf16.mxu0 0
      %387 = vmatpush1.bf16.msra.mxu0 0
      %388 = vmatprep.subr.bf16.mxu0 0
      %389 = vmatpush1.bf16.msra.mxu0 0
      %390 = vmatprep.subr.bf16.mxu0 0
      %391 = vmatpush1.bf16.msra.mxu0 0
      %392 = vmatprep.subr.bf16.mxu0 0
      %393 = vmatpush1.bf16.msra.mxu0 0
      %394 = vmatprep.subr.bf16.mxu0 0
      %395 = vmatpush1.bf16.msra.mxu0 0
      %396 = vmatprep.subr.bf16.mxu0 0
      %397 = vmatpush1.bf16.msra.mxu0 0
      %398 = vmatprep.subr.bf16.mxu0 0
      %399 = vmatpush1.bf16.msra.mxu0 0
      %400 = vmatprep.subr.bf16.mxu0 0
      %401 = vmatpush1.bf16.msra.mxu0 0
      %402 = vmatprep.mubr.bf16.mxu0 0
      %403 = vmatmul.mubr.bf16.gmra.mrb[0].mxu0 %v319
      %v404 = vpop.f32.mrb[0].mxu0
      %v405 = vadd.f32 0.0, %v404
      %v406 = vpop.f32.mrb[0].mxu0
      %v407 = vpop.f32.mrb[0].mxu0
      %v408 = vadd.f32 0.0, %v407
      %v409 = vpop.f32.mrb[0].mxu0
      %410 = vmatprep.mubr.bf16.mxu0 0
      %411 = vmatmul.mubr.bf16.gmra.mrb[0].mxu0 %v322
      %v412 = vpop.f32.mrb[0].mxu0
      %v413 = vadd.f32 0.0, %v412
      %v414 = vpop.f32.mrb[0].mxu0
      %v415 = vpop.f32.mrb[0].mxu0
      %v416 = vadd.f32 0.0, %v415
      %v417 = vpop.f32.mrb[0].mxu0
      %418 = vmatprep.mubr.bf16.mxu0 0
      %419 = vmatmul.mubr.bf16.gmra.mrb[0].mxu0 %v325
      %v420 = vpop.f32.mrb[0].mxu0
      %v421 = vadd.f32 0.0, %v420
      %v422 = vpop.f32.mrb[0].mxu0
      %v423 = vpop.f32.mrb[0].mxu0
      %v424 = vadd.f32 0.0, %v423
      %v425 = vpop.f32.mrb[0].mxu0
      %426 = vmatprep.mubr.bf16.mxu0 0
      %427 = vmatmul.mubr.bf16.gmra.mrb[0].mxu0 %v328
      %v428 = vpop.f32.mrb[0].mxu0
      %v429 = vadd.f32 0.0, %v428
      %v430 = vpop.f32.mrb[0].mxu0
      %v431 = vpop.f32.mrb[0].mxu0
      %v432 = vadd.f32 0.0, %v431
      %v433 = vpop.f32.mrb[0].mxu0
      %434 = vmatprep.mubr.bf16.mxu0 0
      %435 = vmatmul.mubr.bf16.gmra.mrb[0].mxu0 %v331
      %v436 = vpop.f32.mrb[0].mxu0
      %v437 = vadd.f32 0.0, %v436
      %v438 = vpop.f32.mrb[0].mxu0
      %v439 = vpop.f32.mrb[0].mxu0
      %v440 = vadd.f32 0.0, %v439
      %v441 = vpop.f32.mrb[0].mxu0
      %442 = vmatprep.mubr.bf16.mxu0 0
      %443 = vmatmul.mubr.bf16.gmra.mrb[0].mxu0 %v334
      %v444 = vpop.f32.mrb[0].mxu0
      %v445 = vadd.f32 0.0, %v444
      %v446 = vpop.f32.mrb[0].mxu0
      %v447 = vpop.f32.mrb[0].mxu0
      %v448 = vadd.f32 0.0, %v447
      %v449 = vpop.f32.mrb[0].mxu0
      %450 = vmatprep.mubr.bf16.mxu0 0
      %451 = vmatmul.mubr.bf16.gmra.mrb[0].mxu0 %v337
      %v452 = vpop.f32.mrb[0].mxu0
      %v453 = vadd.f32 0.0, %v452
      %v454 = vpop.f32.mrb[0].mxu0
      %v455 = vpop.f32.mrb[0].mxu0
      %v456 = vadd.f32 0.0, %v455
      %v457 = vpop.f32.mrb[0].mxu0
      %458 = vmatprep.mubr.bf16.mxu0 0
      %459 = vmatmul.mubr.bf16.gmra.mrb[0].mxu0 %v340
      %v460 = vpop.f32.mrb[0].mxu0
      %v461 = vadd.f32 0.0, %v460
      %v462 = vpop.f32.mrb[0].mxu0
      %v463 = vpop.f32.mrb[0].mxu0
      %v464 = vadd.f32 0.0, %v463
      %v465 = vpop.f32.mrb[0].mxu0
      %466 = vmatprep.mubr.bf16.mxu0 0
      %467 = vmatmul.mubr.bf16.gmra.mrb[0].mxu0 %v343
      %v468 = vpop.f32.mrb[0].mxu0
      %v469 = vadd.f32 0.0, %v468
      %v470 = vpop.f32.mrb[0].mxu0
      %v471 = vpop.f32.mrb[0].mxu0
      %v472 = vadd.f32 0.0, %v471
      %v473 = vpop.f32.mrb[0].mxu0
      %474 = vmatprep.mubr.bf16.mxu0 0
      %475 = vmatmul.mubr.bf16.gmra.mrb[0].mxu0 %v346
      %v476 = vpop.f32.mrb[0].mxu0
      %v477 = vadd.f32 0.0, %v476
      %v478 = vpop.f32.mrb[0].mxu0
      %v479 = vpop.f32.mrb[0].mxu0
      %v480 = vadd.f32 0.0, %v479
      %v481 = vpop.f32.mrb[0].mxu0
      %482 = vmatprep.mubr.bf16.mxu0 0
      %483 = vmatmul.mubr.bf16.gmra.mrb[0].mxu0 %v349
      %v484 = vpop.f32.mrb[0].mxu0
      %v485 = vadd.f32 0.0, %v484
      %v486 = vpop.f32.mrb[0].mxu0
      %v487 = vpop.f32.mrb[0].mxu0
      %v488 = vadd.f32 0.0, %v487
      %v489 = vpop.f32.mrb[0].mxu0
      %490 = vmatprep.mubr.bf16.mxu0 0
      %491 = vmatmul.mubr.bf16.gmra.mrb[0].mxu0 %v352
      %v492 = vpop.f32.mrb[0].mxu0
      %v493 = vadd.f32 0.0, %v492
      %v494 = vpop.f32.mrb[0].mxu0
      %v495 = vpop.f32.mrb[0].mxu0
      %v496 = vadd.f32 0.0, %v495
      %v497 = vpop.f32.mrb[0].mxu0
      %498 = vmatprep.mubr.bf16.mxu0 0
      %499 = vmatmul.mubr.bf16.gmra.mrb[0].mxu0 %v355
      %v500 = vpop.f32.mrb[0].mxu0
      %v501 = vadd.f32 0.0, %v500
      %v502 = vpop.f32.mrb[0].mxu0
      %v503 = vpop.f32.mrb[0].mxu0
      %v504 = vadd.f32 0.0, %v503
      %v505 = vpop.f32.mrb[0].mxu0
      %506 = vmatprep.mubr.bf16.mxu0 0
      %507 = vmatmul.mubr.bf16.gmra.mrb[0].mxu0 %v358
      %v508 = vpop.f32.mrb[0].mxu0
      %v509 = vadd.f32 0.0, %v508
      %v510 = vpop.f32.mrb[0].mxu0
      %v511 = vpop.f32.mrb[0].mxu0
      %v512 = vadd.f32 0.0, %v511
      %v513 = vpop.f32.mrb[0].mxu0
      %514 = vmatprep.mubr.bf16.mxu0 0
      %515 = vmatmul.mubr.bf16.gmra.mrb[0].mxu0 %v361
      %v516 = vpop.f32.mrb[0].mxu0
      %v517 = vadd.f32 0.0, %v516
      %v518 = vpop.f32.mrb[0].mxu0
      %v519 = vpop.f32.mrb[0].mxu0
      %v520 = vadd.f32 0.0, %v519
      %v521 = vpop.f32.mrb[0].mxu0
      %522 = vmatprep.mubr.bf16.mxu0 0
      %523 = vmatmul.mubr.bf16.gmra.mrb[0].mxu0 %v364
      %v524 = vpop.f32.mrb[0].mxu0
      %v525 = vadd.f32 0.0, %v524
      %v526 = vpop.f32.mrb[0].mxu0
      %v527 = vpop.f32.mrb[0].mxu0
      %v528 = vadd.f32 0.0, %v527
      %v529 = vpop.f32.mrb[0].mxu0
      %530 = vdwg.mxu0
      %v563 = vunpack.c.l.b16 %v158
      %v564 = vunpack.c.l.b16 %v159
      %v565 = vunpack.c.l.b16 %v160
      %v566 = vunpack.c.l.b16 %v161
      %v567 = vunpack.c.l.b16 %v162
      %v568 = vunpack.c.l.b16 %v163
      %v569 = vunpack.c.l.b16 %v164
      %v570 = vunpack.c.l.b16 %v165
      %v571 = vunpack.c.l.b16 %v166
      %v572 = vunpack.c.l.b16 %v167
      %v573 = vunpack.c.l.b16 %v168
      %v574 = vunpack.c.l.b16 %v169
      %v575 = vunpack.c.l.b16 %v170
      %v576 = vunpack.c.l.b16 %v171
      %v577 = vunpack.c.l.b16 %v172
      %v578 = vunpack.c.l.b16 %v173
      %v579 = vunpack.c.l.b16 %v174
      %v580 = vunpack.c.l.b16 %v175
      %v581 = vunpack.c.l.b16 %v176
      %v582 = vunpack.c.l.b16 %v177
      %v583 = vunpack.c.l.b16 %v178
      %v584 = vunpack.c.l.b16 %v179
      %v585 = vunpack.c.l.b16 %v180
      %v586 = vunpack.c.l.b16 %v181
      %v587 = vunpack.c.l.b16 %v182
      %v588 = vunpack.c.l.b16 %v183
      %v589 = vunpack.c.l.b16 %v184
      %v590 = vunpack.c.l.b16 %v185
      %v591 = vunpack.c.l.b16 %v186
      %v592 = vunpack.c.l.b16 %v187
      %v593 = vunpack.c.l.b16 %v188
      %v594 = vunpack.c.l.b16 %v189
      %v595 = vpack.c.b16 %v564, %v563
      %v596 = vpack.c.b16 %v566, %v565
      %v597 = vpack.c.b16 %v568, %v567
      %v598 = vpack.c.b16 %v570, %v569
      %v599 = vpack.c.b16 %v572, %v571
      %v600 = vpack.c.b16 %v574, %v573
      %v601 = vpack.c.b16 %v576, %v575
      %v602 = vpack.c.b16 %v578, %v577
      %v603 = vpack.c.b16 %v580, %v579
      %v604 = vpack.c.b16 %v582, %v581
      %v605 = vpack.c.b16 %v584, %v583
      %v606 = vpack.c.b16 %v586, %v585
      %v607 = vpack.c.b16 %v588, %v587
      %v608 = vpack.c.b16 %v590, %v589
      %v609 = vpack.c.b16 %v592, %v591
      %v610 = vpack.c.b16 %v594, %v593
      %v613 = vunpack.c.l.b16 %v190
      %v614 = vunpack.c.l.b16 %v191
      %v615 = vpack.c.b16 %v614, %v613
      %v617 = vsel %vm317, %v595, 0
      %v620 = vsel %vm317, %v596, 0
      %v623 = vsel %vm317, %v597, 0
      %v626 = vsel %vm317, %v598, 0
      %v629 = vsel %vm317, %v599, 0
      %v632 = vsel %vm317, %v600, 0
      %v635 = vsel %vm317, %v601, 0
      %v638 = vsel %vm317, %v602, 0
      %v641 = vsel %vm317, %v603, 0
      %v644 = vsel %vm317, %v604, 0
      %v647 = vsel %vm317, %v605, 0
      %v650 = vsel %vm317, %v606, 0
      %v653 = vsel %vm317, %v607, 0
      %v656 = vsel %vm317, %v608, 0
      %v659 = vsel %vm317, %v609, 0
      %v662 = vsel %vm317, %v610, 0
      %v665 = vsel %vm366, %v615, 0
      %667 = vmatprep.subr.bf16.mxu0 0
      %668 = vmatpush1.bf16.msra.mxu0 %v665
      %669 = vmatprep.subr.bf16.mxu0 0
      %670 = vmatpush1.bf16.msra.mxu0 0
      %671 = vmatprep.subr.bf16.mxu0 0
      %672 = vmatpush1.bf16.msra.mxu0 0
      %673 = vmatprep.subr.bf16.mxu0 0
      %674 = vmatpush1.bf16.msra.mxu0 0
      %675 = vmatprep.subr.bf16.mxu0 0
      %676 = vmatpush1.bf16.msra.mxu0 0
      %677 = vmatprep.subr.bf16.mxu0 0
      %678 = vmatpush1.bf16.msra.mxu0 0
      %679 = vmatprep.subr.bf16.mxu0 0
      %680 = vmatpush1.bf16.msra.mxu0 0
      %681 = vmatprep.subr.bf16.mxu0 0
      %682 = vmatpush1.bf16.msra.mxu0 0
      %683 = vmatprep.subr.bf16.mxu0 0
      %684 = vmatpush1.bf16.msra.mxu0 0
      %685 = vmatprep.subr.bf16.mxu0 0
      %686 = vmatpush1.bf16.msra.mxu0 0
      %687 = vmatprep.subr.bf16.mxu0 0
      %688 = vmatpush1.bf16.msra.mxu0 0
      %689 = vmatprep.subr.bf16.mxu0 0
      %690 = vmatpush1.bf16.msra.mxu0 0
      %691 = vmatprep.subr.bf16.mxu0 0
      %692 = vmatpush1.bf16.msra.mxu0 0
      %693 = vmatprep.subr.bf16.mxu0 0
      %694 = vmatpush1.bf16.msra.mxu0 0
      %695 = vmatprep.subr.bf16.mxu0 0
      %696 = vmatpush1.bf16.msra.mxu0 0
      %697 = vmatprep.subr.bf16.mxu0 0
      %698 = vmatpush1.bf16.msra.mxu0 0
      %699 = vmatprep.mubr.bf16.mxu0 0
      %700 = vmatmul.mubr.bf16.gmra.mrb[0].mxu0 %v617
      %v701 = vpop.f32.mrb[0].mxu0
      %v702 = vadd.f32 %v405, %v701
      %v703 = vpop.f32.mrb[0].mxu0
      %v704 = vpop.f32.mrb[0].mxu0
      %v705 = vadd.f32 %v408, %v704
      %v706 = vpop.f32.mrb[0].mxu0
      %707 = vmatprep.mubr.bf16.mxu0 0
      %708 = vmatmul.mubr.bf16.gmra.mrb[0].mxu0 %v620
      %v709 = vpop.f32.mrb[0].mxu0
      %v710 = vadd.f32 %v413, %v709
      %v711 = vpop.f32.mrb[0].mxu0
      %v712 = vpop.f32.mrb[0].mxu0
      %v713 = vadd.f32 %v416, %v712
      %v714 = vpop.f32.mrb[0].mxu0
      %715 = vmatprep.mubr.bf16.mxu0 0
      %716 = vmatmul.mubr.bf16.gmra.mrb[0].mxu0 %v623
      %v717 = vpop.f32.mrb[0].mxu0
      %v718 = vadd.f32 %v421, %v717
      %v719 = vpop.f32.mrb[0].mxu0
      %v720 = vpop.f32.mrb[0].mxu0
      %v721 = vadd.f32 %v424, %v720
      %v722 = vpop.f32.mrb[0].mxu0
      %723 = vmatprep.mubr.bf16.mxu0 0
      %724 = vmatmul.mubr.bf16.gmra.mrb[0].mxu0 %v626
      %v725 = vpop.f32.mrb[0].mxu0
      %v726 = vadd.f32 %v429, %v725
      %v727 = vpop.f32.mrb[0].mxu0
      %v728 = vpop.f32.mrb[0].mxu0
      %v729 = vadd.f32 %v432, %v728
      %v730 = vpop.f32.mrb[0].mxu0
      %731 = vmatprep.mubr.bf16.mxu0 0
      %732 = vmatmul.mubr.bf16.gmra.mrb[0].mxu0 %v629
      %v733 = vpop.f32.mrb[0].mxu0
      %v734 = vadd.f32 %v437, %v733
      %v735 = vpop.f32.mrb[0].mxu0
      %v736 = vpop.f32.mrb[0].mxu0
      %v737 = vadd.f32 %v440, %v736
      %v738 = vpop.f32.mrb[0].mxu0
      %739 = vmatprep.mubr.bf16.mxu0 0
      %740 = vmatmul.mubr.bf16.gmra.mrb[0].mxu0 %v632
      %v741 = vpop.f32.mrb[0].mxu0
      %v742 = vadd.f32 %v445, %v741
      %v743 = vpop.f32.mrb[0].mxu0
      %v744 = vpop.f32.mrb[0].mxu0
      %v745 = vadd.f32 %v448, %v744
      %v746 = vpop.f32.mrb[0].mxu0
      %747 = vmatprep.mubr.bf16.mxu0 0
      %748 = vmatmul.mubr.bf16.gmra.mrb[0].mxu0 %v635
      %v749 = vpop.f32.mrb[0].mxu0
      %v750 = vadd.f32 %v453, %v749
      %v751 = vpop.f32.mrb[0].mxu0
      %v752 = vpop.f32.mrb[0].mxu0
      %v753 = vadd.f32 %v456, %v752
      %v754 = vpop.f32.mrb[0].mxu0
      %755 = vmatprep.mubr.bf16.mxu0 0
      %756 = vmatmul.mubr.bf16.gmra.mrb[0].mxu0 %v638
      %v757 = vpop.f32.mrb[0].mxu0
      %v758 = vadd.f32 %v461, %v757
      %v759 = vpop.f32.mrb[0].mxu0
      %v760 = vpop.f32.mrb[0].mxu0
      %v761 = vadd.f32 %v464, %v760
      %v762 = vpop.f32.mrb[0].mxu0
      %763 = vmatprep.mubr.bf16.mxu0 0
      %764 = vmatmul.mubr.bf16.gmra.mrb[0].mxu0 %v641
      %v765 = vpop.f32.mrb[0].mxu0
      %v766 = vadd.f32 %v469, %v765
      %v767 = vpop.f32.mrb[0].mxu0
      %v768 = vpop.f32.mrb[0].mxu0
      %v769 = vadd.f32 %v472, %v768
      %v770 = vpop.f32.mrb[0].mxu0
      %771 = vmatprep.mubr.bf16.mxu0 0
      %772 = vmatmul.mubr.bf16.gmra.mrb[0].mxu0 %v644
      %v773 = vpop.f32.mrb[0].mxu0
      %v774 = vadd.f32 %v477, %v773
      %v775 = vpop.f32.mrb[0].mxu0
      %v776 = vpop.f32.mrb[0].mxu0
      %v777 = vadd.f32 %v480, %v776
      %v778 = vpop.f32.mrb[0].mxu0
      %779 = vmatprep.mubr.bf16.mxu0 0
      %780 = vmatmul.mubr.bf16.gmra.mrb[0].mxu0 %v647
      %v781 = vpop.f32.mrb[0].mxu0
      %v782 = vadd.f32 %v485, %v781
      %v783 = vpop.f32.mrb[0].mxu0
      %v784 = vpop.f32.mrb[0].mxu0
      %v785 = vadd.f32 %v488, %v784
      %v786 = vpop.f32.mrb[0].mxu0
      %787 = vmatprep.mubr.bf16.mxu0 0
      %788 = vmatmul.mubr.bf16.gmra.mrb[0].mxu0 %v650
      %v789 = vpop.f32.mrb[0].mxu0
      %v790 = vadd.f32 %v493, %v789
      %v791 = vpop.f32.mrb[0].mxu0
      %v792 = vpop.f32.mrb[0].mxu0
      %v793 = vadd.f32 %v496, %v792
      %v794 = vpop.f32.mrb[0].mxu0
      %795 = vmatprep.mubr.bf16.mxu0 0
      %796 = vmatmul.mubr.bf16.gmra.mrb[0].mxu0 %v653
      %v797 = vpop.f32.mrb[0].mxu0
      %v798 = vadd.f32 %v501, %v797
      %v799 = vpop.f32.mrb[0].mxu0
      %v800 = vpop.f32.mrb[0].mxu0
      %v801 = vadd.f32 %v504, %v800
      %v802 = vpop.f32.mrb[0].mxu0
      %803 = vmatprep.mubr.bf16.mxu0 0
      %804 = vmatmul.mubr.bf16.gmra.mrb[0].mxu0 %v656
      %v805 = vpop.f32.mrb[0].mxu0
      %v806 = vadd.f32 %v509, %v805
      %v807 = vpop.f32.mrb[0].mxu0
      %v808 = vpop.f32.mrb[0].mxu0
      %v809 = vadd.f32 %v512, %v808
      %v810 = vpop.f32.mrb[0].mxu0
      %811 = vmatprep.mubr.bf16.mxu0 0
      %812 = vmatmul.mubr.bf16.gmra.mrb[0].mxu0 %v659
      %v813 = vpop.f32.mrb[0].mxu0
      %v814 = vadd.f32 %v517, %v813
      %v815 = vpop.f32.mrb[0].mxu0
      %v816 = vpop.f32.mrb[0].mxu0
      %v817 = vadd.f32 %v520, %v816
      %v818 = vpop.f32.mrb[0].mxu0
      %819 = vmatprep.mubr.bf16.mxu0 0
      %820 = vmatmul.mubr.bf16.gmra.mrb[0].mxu0 %v662
      %v821 = vpop.f32.mrb[0].mxu0
      %v822 = vadd.f32 %v525, %v821
      %v823 = vpop.f32.mrb[0].mxu0
      %v824 = vpop.f32.mrb[0].mxu0
      %v825 = vadd.f32 %v528, %v824
      %v826 = vpop.f32.mrb[0].mxu0
      %827 = vdwg.mxu0
      %s828 = sadd.s32 %s153, 32
      %s829 = sshra.s32 %s828, 3
      %s830 = sand.u32 %s828, 7
      %s831 = smul.addr %s829, 4
      %s832 = scalar_lea.vmem %s0, %s831
      %v833 = vld [vmem:[%s832] sm:$0xf]
      %v834 = vld [vmem:[%s832 + $0x4] sm:$0xf]
      %v835 = vld [vmem:[%s832 + $0x8] sm:$0xf]
      %v836 = vld [vmem:[%s832 + $0xc] sm:$0xf]
      %v837 = vld [vmem:[%s832 + $0x10] sm:$0xf]
      %v838 = vld [vmem:[%s832 + $0x14] sm:$0xf]
      %v839 = vld [vmem:[%s832 + $0x18] sm:$0xf]
      %v840 = vld [vmem:[%s832 + $0x1c] sm:$0xf]
      %v841 = vld [vmem:[%s832 + $0x20] sm:$0xf]
      %v842 = vld [vmem:[%s832 + $0x24] sm:$0xf]
      %v843 = vld [vmem:[%s832 + $0x28] sm:$0xf]
      %v844 = vld [vmem:[%s832 + $0x2c] sm:$0xf]
      %v845 = vld [vmem:[%s832 + $0x30] sm:$0xf]
      %v846 = vld [vmem:[%s832 + $0x34] sm:$0xf]
      %v847 = vld [vmem:[%s832 + $0x38] sm:$0xf]
      %v848 = vld [vmem:[%s832 + $0x3c] sm:$0xf]
      %v849 = vld [vmem:[%s832 + $0x40] sm:$0xf]
      %v850 = vld [vmem:[%s832 + $0x44] sm:$0xf]
      %v851 = vld [vmem:[%s832 + $0x48] sm:$0xf]
      %v852 = vld [vmem:[%s832 + $0x4c] sm:$0xf]
      %v853 = vld [vmem:[%s832 + $0x50] sm:$0xf]
      %v854 = vld [vmem:[%s832 + $0x54] sm:$0xf]
      %v855 = vld [vmem:[%s832 + $0x58] sm:$0xf]
      %v856 = vld [vmem:[%s832 + $0x5c] sm:$0xf]
      %v857 = vld [vmem:[%s832 + $0x60] sm:$0xf]
      %v858 = vld [vmem:[%s832 + $0x64] sm:$0xf]
      %v859 = vld [vmem:[%s832 + $0x68] sm:$0xf]
      %v860 = vld [vmem:[%s832 + $0x6c] sm:$0xf]
      %v861 = vld [vmem:[%s832 + $0x70] sm:$0xf]
      %v862 = vld [vmem:[%s832 + $0x74] sm:$0xf]
      %v863 = vld [vmem:[%s832 + $0x78] sm:$0xf]
      %v864 = vld [vmem:[%s832 + $0x7c] sm:$0xf]
      %s865 = scalar_lea.vmem %s1, 16
      %v866 = vld [vmem:[%s865] sm:$0xf]
      %v867 = vld [vmem:[%s865 + $0x4] sm:$0x3]
      %v900 = vunpack.c.l.b16 %v833
      %v901 = vunpack.c.l.b16 %v834
      %v902 = vunpack.c.l.b16 %v835
      %v903 = vunpack.c.l.b16 %v836
      %v904 = vunpack.c.l.b16 %v837
      %v905 = vunpack.c.l.b16 %v838
      %v906 = vunpack.c.l.b16 %v839
      %v907 = vunpack.c.l.b16 %v840
      %v908 = vunpack.c.l.b16 %v841
      %v909 = vunpack.c.l.b16 %v842
      %v910 = vunpack.c.l.b16 %v843
      %v911 = vunpack.c.l.b16 %v844
      %v912 = vunpack.c.l.b16 %v845
      %v913 = vunpack.c.l.b16 %v846
      %v914 = vunpack.c.l.b16 %v847
      %v915 = vunpack.c.l.b16 %v848
      %v916 = vunpack.c.l.b16 %v849
      %v917 = vunpack.c.l.b16 %v850
      %v918 = vunpack.c.l.b16 %v851
      %v919 = vunpack.c.l.b16 %v852
      %v920 = vunpack.c.l.b16 %v853
      %v921 = vunpack.c.l.b16 %v854
      %v922 = vunpack.c.l.b16 %v855
      %v923 = vunpack.c.l.b16 %v856
      %v924 = vunpack.c.l.b16 %v857
      %v925 = vunpack.c.l.b16 %v858
      %v926 = vunpack.c.l.b16 %v859
      %v927 = vunpack.c.l.b16 %v860
      %v928 = vunpack.c.l.b16 %v861
      %v929 = vunpack.c.l.b16 %v862
      %v930 = vunpack.c.l.b16 %v863
      %v931 = vunpack.c.l.b16 %v864
      %v932 = vpack.c.b16 %v901, %v900
      %v933 = vpack.c.b16 %v903, %v902
      %v934 = vpack.c.b16 %v905, %v904
      %v935 = vpack.c.b16 %v907, %v906
      %v936 = vpack.c.b16 %v909, %v908
      %v937 = vpack.c.b16 %v911, %v910
      %v938 = vpack.c.b16 %v913, %v912
      %v939 = vpack.c.b16 %v915, %v914
      %v940 = vpack.c.b16 %v917, %v916
      %v941 = vpack.c.b16 %v919, %v918
      %v942 = vpack.c.b16 %v921, %v920
      %v943 = vpack.c.b16 %v923, %v922
      %v944 = vpack.c.b16 %v925, %v924
      %v945 = vpack.c.b16 %v927, %v926
      %v946 = vpack.c.b16 %v929, %v928
      %v947 = vpack.c.b16 %v931, %v930
      %v950 = vunpack.c.l.b16 %v866
      %v951 = vunpack.c.l.b16 %v867
      %v952 = vpack.c.b16 %v951, %v950
      %v954 = vsel %vm317, %v932, 0
      %v957 = vsel %vm317, %v933, 0
      %v960 = vsel %vm317, %v934, 0
      %v963 = vsel %vm317, %v935, 0
      %v966 = vsel %vm317, %v936, 0
      %v969 = vsel %vm317, %v937, 0
      %v972 = vsel %vm317, %v938, 0
      %v975 = vsel %vm317, %v939, 0
      %v978 = vsel %vm317, %v940, 0
      %v981 = vsel %vm317, %v941, 0
      %v984 = vsel %vm317, %v942, 0
      %v987 = vsel %vm317, %v943, 0
      %v990 = vsel %vm317, %v944, 0
      %v993 = vsel %vm317, %v945, 0
      %v996 = vsel %vm317, %v946, 0
      %v999 = vsel %vm317, %v947, 0
      %v1002 = vsel %vm366, %v952, 0
      %1004 = vmatprep.subr.bf16.mxu0 0
      %1005 = vmatpush1.bf16.msra.mxu0 %v1002
      %1006 = vmatprep.subr.bf16.mxu0 0
      %1007 = vmatpush1.bf16.msra.mxu0 0
      %1008 = vmatprep.subr.bf16.mxu0 0
      %1009 = vmatpush1.bf16.msra.mxu0 0
      %1010 = vmatprep.subr.bf16.mxu0 0
      %1011 = vmatpush1.bf16.msra.mxu0 0
      %1012 = vmatprep.subr.bf16.mxu0 0
      %1013 = vmatpush1.bf16.msra.mxu0 0
      %1014 = vmatprep.subr.bf16.mxu0 0
      %1015 = vmatpush1.bf16.msra.mxu0 0
      %1016 = vmatprep.subr.bf16.mxu0 0
      %1017 = vmatpush1.bf16.msra.mxu0 0
      %1018 = vmatprep.subr.bf16.mxu0 0
      %1019 = vmatpush1.bf16.msra.mxu0 0
      %1020 = vmatprep.subr.bf16.mxu0 0
      %1021 = vmatpush1.bf16.msra.mxu0 0
      %1022 = vmatprep.subr.bf16.mxu0 0
      %1023 = vmatpush1.bf16.msra.mxu0 0
      %1024 = vmatprep.subr.bf16.mxu0 0
      %1025 = vmatpush1.bf16.msra.mxu0 0
      %1026 = vmatprep.subr.bf16.mxu0 0
      %1027 = vmatpush1.bf16.msra.mxu0 0
      %1028 = vmatprep.subr.bf16.mxu0 0
      %1029 = vmatpush1.bf16.msra.mxu0 0
      %1030 = vmatprep.subr.bf16.mxu0 0
      %1031 = vmatpush1.bf16.msra.mxu0 0
      %1032 = vmatprep.subr.bf16.mxu0 0
      %1033 = vmatpush1.bf16.msra.mxu0 0
      %1034 = vmatprep.subr.bf16.mxu0 0
      %1035 = vmatpush1.bf16.msra.mxu0 0
      %1036 = vmatprep.mubr.bf16.mxu0 0
      %1037 = vmatmul.mubr.bf16.gmra.mrb[0].mxu0 %v954
      %v1038 = vpop.f32.mrb[0].mxu0
      %v1039 = vadd.f32 0.0, %v1038
      %v1040 = vpop.f32.mrb[0].mxu0
      %v1041 = vpop.f32.mrb[0].mxu0
      %v1042 = vadd.f32 0.0, %v1041
      %v1043 = vpop.f32.mrb[0].mxu0
      %1044 = vmatprep.mubr.bf16.mxu0 0
      %1045 = vmatmul.mubr.bf16.gmra.mrb[0].mxu0 %v957
      %v1046 = vpop.f32.mrb[0].mxu0
      %v1047 = vadd.f32 0.0, %v1046
      %v1048 = vpop.f32.mrb[0].mxu0
      %v1049 = vpop.f32.mrb[0].mxu0
      %v1050 = vadd.f32 0.0, %v1049
      %v1051 = vpop.f32.mrb[0].mxu0
      %1052 = vmatprep.mubr.bf16.mxu0 0
      %1053 = vmatmul.mubr.bf16.gmra.mrb[0].mxu0 %v960
      %v1054 = vpop.f32.mrb[0].mxu0
      %v1055 = vadd.f32 0.0, %v1054
      %v1056 = vpop.f32.mrb[0].mxu0
      %v1057 = vpop.f32.mrb[0].mxu0
      %v1058 = vadd.f32 0.0, %v1057
      %v1059 = vpop.f32.mrb[0].mxu0
      %1060 = vmatprep.mubr.bf16.mxu0 0
      %1061 = vmatmul.mubr.bf16.gmra.mrb[0].mxu0 %v963
      %v1062 = vpop.f32.mrb[0].mxu0
      %v1063 = vadd.f32 0.0, %v1062
      %v1064 = vpop.f32.mrb[0].mxu0
      %v1065 = vpop.f32.mrb[0].mxu0
      %v1066 = vadd.f32 0.0, %v1065
      %v1067 = vpop.f32.mrb[0].mxu0
      %1068 = vmatprep.mubr.bf16.mxu0 0
      %1069 = vmatmul.mubr.bf16.gmra.mrb[0].mxu0 %v966
      %v1070 = vpop.f32.mrb[0].mxu0
      %v1071 = vadd.f32 0.0, %v1070
      %v1072 = vpop.f32.mrb[0].mxu0
      %v1073 = vpop.f32.mrb[0].mxu0
      %v1074 = vadd.f32 0.0, %v1073
      %v1075 = vpop.f32.mrb[0].mxu0
      %1076 = vmatprep.mubr.bf16.mxu0 0
      %1077 = vmatmul.mubr.bf16.gmra.mrb[0].mxu0 %v969
      %v1078 = vpop.f32.mrb[0].mxu0
      %v1079 = vadd.f32 0.0, %v1078
      %v1080 = vpop.f32.mrb[0].mxu0
      %v1081 = vpop.f32.mrb[0].mxu0
      %v1082 = vadd.f32 0.0, %v1081
      %v1083 = vpop.f32.mrb[0].mxu0
      %1084 = vmatprep.mubr.bf16.mxu0 0
      %1085 = vmatmul.mubr.bf16.gmra.mrb[0].mxu0 %v972
      %v1086 = vpop.f32.mrb[0].mxu0
      %v1087 = vadd.f32 0.0, %v1086
      %v1088 = vpop.f32.mrb[0].mxu0
      %v1089 = vpop.f32.mrb[0].mxu0
      %v1090 = vadd.f32 0.0, %v1089
      %v1091 = vpop.f32.mrb[0].mxu0
      %1092 = vmatprep.mubr.bf16.mxu0 0
      %1093 = vmatmul.mubr.bf16.gmra.mrb[0].mxu0 %v975
      %v1094 = vpop.f32.mrb[0].mxu0
      %v1095 = vadd.f32 0.0, %v1094
      %v1096 = vpop.f32.mrb[0].mxu0
      %v1097 = vpop.f32.mrb[0].mxu0
      %v1098 = vadd.f32 0.0, %v1097
      %v1099 = vpop.f32.mrb[0].mxu0
      %1100 = vmatprep.mubr.bf16.mxu0 0
      %1101 = vmatmul.mubr.bf16.gmra.mrb[0].mxu0 %v978
      %v1102 = vpop.f32.mrb[0].mxu0
      %v1103 = vadd.f32 0.0, %v1102
      %v1104 = vpop.f32.mrb[0].mxu0
      %v1105 = vpop.f32.mrb[0].mxu0
      %v1106 = vadd.f32 0.0, %v1105
      %v1107 = vpop.f32.mrb[0].mxu0
      %1108 = vmatprep.mubr.bf16.mxu0 0
      %1109 = vmatmul.mubr.bf16.gmra.mrb[0].mxu0 %v981
      %v1110 = vpop.f32.mrb[0].mxu0
      %v1111 = vadd.f32 0.0, %v1110
      %v1112 = vpop.f32.mrb[0].mxu0
      %v1113 = vpop.f32.mrb[0].mxu0
      %v1114 = vadd.f32 0.0, %v1113
      %v1115 = vpop.f32.mrb[0].mxu0
      %1116 = vmatprep.mubr.bf16.mxu0 0
      %1117 = vmatmul.mubr.bf16.gmra.mrb[0].mxu0 %v984
      %v1118 = vpop.f32.mrb[0].mxu0
      %v1119 = vadd.f32 0.0, %v1118
      %v1120 = vpop.f32.mrb[0].mxu0
      %v1121 = vpop.f32.mrb[0].mxu0
      %v1122 = vadd.f32 0.0, %v1121
      %v1123 = vpop.f32.mrb[0].mxu0
      %1124 = vmatprep.mubr.bf16.mxu0 0
      %1125 = vmatmul.mubr.bf16.gmra.mrb[0].mxu0 %v987
      %v1126 = vpop.f32.mrb[0].mxu0
      %v1127 = vadd.f32 0.0, %v1126
      %v1128 = vpop.f32.mrb[0].mxu0
      %v1129 = vpop.f32.mrb[0].mxu0
      %v1130 = vadd.f32 0.0, %v1129
      %v1131 = vpop.f32.mrb[0].mxu0
      %1132 = vmatprep.mubr.bf16.mxu0 0
      %1133 = vmatmul.mubr.bf16.gmra.mrb[0].mxu0 %v990
      %v1134 = vpop.f32.mrb[0].mxu0
      %v1135 = vadd.f32 0.0, %v1134
      %v1136 = vpop.f32.mrb[0].mxu0
      %v1137 = vpop.f32.mrb[0].mxu0
      %v1138 = vadd.f32 0.0, %v1137
      %v1139 = vpop.f32.mrb[0].mxu0
      %1140 = vmatprep.mubr.bf16.mxu0 0
      %1141 = vmatmul.mubr.bf16.gmra.mrb[0].mxu0 %v993
      %v1142 = vpop.f32.mrb[0].mxu0
      %v1143 = vadd.f32 0.0, %v1142
      %v1144 = vpop.f32.mrb[0].mxu0
      %v1145 = vpop.f32.mrb[0].mxu0
      %v1146 = vadd.f32 0.0, %v1145
      %v1147 = vpop.f32.mrb[0].mxu0
      %1148 = vmatprep.mubr.bf16.mxu0 0
      %1149 = vmatmul.mubr.bf16.gmra.mrb[0].mxu0 %v996
      %v1150 = vpop.f32.mrb[0].mxu0
      %v1151 = vadd.f32 0.0, %v1150
      %v1152 = vpop.f32.mrb[0].mxu0
      %v1153 = vpop.f32.mrb[0].mxu0
      %v1154 = vadd.f32 0.0, %v1153
      %v1155 = vpop.f32.mrb[0].mxu0
      %1156 = vmatprep.mubr.bf16.mxu0 0
      %1157 = vmatmul.mubr.bf16.gmra.mrb[0].mxu0 %v999
      %v1158 = vpop.f32.mrb[0].mxu0
      %v1159 = vadd.f32 0.0, %v1158
      %v1160 = vpop.f32.mrb[0].mxu0
      %v1161 = vpop.f32.mrb[0].mxu0
      %v1162 = vadd.f32 0.0, %v1161
      %v1163 = vpop.f32.mrb[0].mxu0
      %1164 = vdwg.mxu0
      %v1165 = vadd.f32 %v702, %v1039
      %v1166 = vadd.f32 %v705, %v1042
      %v1167 = vadd.f32 %v710, %v1047
      %v1168 = vadd.f32 %v713, %v1050
      %v1169 = vadd.f32 %v718, %v1055
      %v1170 = vadd.f32 %v721, %v1058
      %v1171 = vadd.f32 %v726, %v1063
      %v1172 = vadd.f32 %v729, %v1066
      %v1173 = vadd.f32 %v734, %v1071
      %v1174 = vadd.f32 %v737, %v1074
      %v1175 = vadd.f32 %v742, %v1079
      %v1176 = vadd.f32 %v745, %v1082
      %v1177 = vadd.f32 %v750, %v1087
      %v1178 = vadd.f32 %v753, %v1090
      %v1179 = vadd.f32 %v758, %v1095
      %v1180 = vadd.f32 %v761, %v1098
      %v1181 = vadd.f32 %v766, %v1103
      %v1182 = vadd.f32 %v769, %v1106
      %v1183 = vadd.f32 %v774, %v1111
      %v1184 = vadd.f32 %v777, %v1114
      %v1185 = vadd.f32 %v782, %v1119
      %v1186 = vadd.f32 %v785, %v1122
      %v1187 = vadd.f32 %v790, %v1127
      %v1188 = vadd.f32 %v793, %v1130
      %v1189 = vadd.f32 %v798, %v1135
      %v1190 = vadd.f32 %v801, %v1138
      %v1191 = vadd.f32 %v806, %v1143
      %v1192 = vadd.f32 %v809, %v1146
      %v1193 = vadd.f32 %v814, %v1151
      %v1194 = vadd.f32 %v817, %v1154
      %v1195 = vadd.f32 %v822, %v1159
      %v1196 = vadd.f32 %v825, %v1162
      %s1197 = sadd.s32 %s153, 160
      %s1198 = sshra.s32 %s1197, 3
      %s1199 = sand.u32 %s1197, 7
      %s1200 = smul.addr %s1198, 4
      %s1201 = scalar_lea.vmem %s0, %s1200
      %v1202 = vld [vmem:[%s1201] sm:$0xf]
      %v1203 = vld [vmem:[%s1201 + $0x4] sm:$0xf]
      %v1204 = vld [vmem:[%s1201 + $0x8] sm:$0xf]
      %v1205 = vld [vmem:[%s1201 + $0xc] sm:$0xf]
      %v1206 = vld [vmem:[%s1201 + $0x10] sm:$0xf]
      %v1207 = vld [vmem:[%s1201 + $0x14] sm:$0xf]
      %v1208 = vld [vmem:[%s1201 + $0x18] sm:$0xf]
      %v1209 = vld [vmem:[%s1201 + $0x1c] sm:$0xf]
      %v1210 = vld [vmem:[%s1201 + $0x20] sm:$0xf]
      %v1211 = vld [vmem:[%s1201 + $0x24] sm:$0xf]
      %v1212 = vld [vmem:[%s1201 + $0x28] sm:$0xf]
      %v1213 = vld [vmem:[%s1201 + $0x2c] sm:$0xf]
      %v1214 = vld [vmem:[%s1201 + $0x30] sm:$0xf]
      %v1215 = vld [vmem:[%s1201 + $0x34] sm:$0xf]
      %v1216 = vld [vmem:[%s1201 + $0x38] sm:$0xf]
      %v1217 = vld [vmem:[%s1201 + $0x3c] sm:$0xf]
      %v1218 = vld [vmem:[%s1201 + $0x40] sm:$0xf]
      %v1219 = vld [vmem:[%s1201 + $0x44] sm:$0xf]
      %v1220 = vld [vmem:[%s1201 + $0x48] sm:$0xf]
      %v1221 = vld [vmem:[%s1201 + $0x4c] sm:$0xf]
      %v1222 = vld [vmem:[%s1201 + $0x50] sm:$0xf]
      %v1223 = vld [vmem:[%s1201 + $0x54] sm:$0xf]
      %v1224 = vld [vmem:[%s1201 + $0x58] sm:$0xf]
      %v1225 = vld [vmem:[%s1201 + $0x5c] sm:$0xf]
      %v1226 = vld [vmem:[%s1201 + $0x60] sm:$0xf]
      %v1227 = vld [vmem:[%s1201 + $0x64] sm:$0xf]
      %v1228 = vld [vmem:[%s1201 + $0x68] sm:$0xf]
      %v1229 = vld [vmem:[%s1201 + $0x6c] sm:$0xf]
      %v1230 = vld [vmem:[%s1201 + $0x70] sm:$0xf]
      %v1231 = vld [vmem:[%s1201 + $0x74] sm:$0xf]
      %v1232 = vld [vmem:[%s1201 + $0x78] sm:$0xf]
      %v1233 = vld [vmem:[%s1201 + $0x7c] sm:$0xf]
      %s1234 = scalar_lea.vmem %s1, 24
      %v1235 = vld [vmem:[%s1234] sm:$0xf]
      %v1236 = vld [vmem:[%s1234 + $0x4] sm:$0x3]
      %v1269 = vunpack.c.l.b16 %v1202
      %v1270 = vunpack.c.l.b16 %v1203
      %v1271 = vunpack.c.l.b16 %v1204
      %v1272 = vunpack.c.l.b16 %v1205
      %v1273 = vunpack.c.l.b16 %v1206
      %v1274 = vunpack.c.l.b16 %v1207
      %v1275 = vunpack.c.l.b16 %v1208
      %v1276 = vunpack.c.l.b16 %v1209
      %v1277 = vunpack.c.l.b16 %v1210
      %v1278 = vunpack.c.l.b16 %v1211
      %v1279 = vunpack.c.l.b16 %v1212
      %v1280 = vunpack.c.l.b16 %v1213
      %v1281 = vunpack.c.l.b16 %v1214
      %v1282 = vunpack.c.l.b16 %v1215
      %v1283 = vunpack.c.l.b16 %v1216
      %v1284 = vunpack.c.l.b16 %v1217
      %v1285 = vunpack.c.l.b16 %v1218
      %v1286 = vunpack.c.l.b16 %v1219
      %v1287 = vunpack.c.l.b16 %v1220
      %v1288 = vunpack.c.l.b16 %v1221
      %v1289 = vunpack.c.l.b16 %v1222
      %v1290 = vunpack.c.l.b16 %v1223
      %v1291 = vunpack.c.l.b16 %v1224
      %v1292 = vunpack.c.l.b16 %v1225
      %v1293 = vunpack.c.l.b16 %v1226
      %v1294 = vunpack.c.l.b16 %v1227
      %v1295 = vunpack.c.l.b16 %v1228
      %v1296 = vunpack.c.l.b16 %v1229
      %v1297 = vunpack.c.l.b16 %v1230
      %v1298 = vunpack.c.l.b16 %v1231
      %v1299 = vunpack.c.l.b16 %v1232
      %v1300 = vunpack.c.l.b16 %v1233
      %v1301 = vpack.c.b16 %v1270, %v1269
      %v1302 = vpack.c.b16 %v1272, %v1271
      %v1303 = vpack.c.b16 %v1274, %v1273
      %v1304 = vpack.c.b16 %v1276, %v1275
      %v1305 = vpack.c.b16 %v1278, %v1277
      %v1306 = vpack.c.b16 %v1280, %v1279
      %v1307 = vpack.c.b16 %v1282, %v1281
      %v1308 = vpack.c.b16 %v1284, %v1283
      %v1309 = vpack.c.b16 %v1286, %v1285
      %v1310 = vpack.c.b16 %v1288, %v1287
      %v1311 = vpack.c.b16 %v1290, %v1289
      %v1312 = vpack.c.b16 %v1292, %v1291
      %v1313 = vpack.c.b16 %v1294, %v1293
      %v1314 = vpack.c.b16 %v1296, %v1295
      %v1315 = vpack.c.b16 %v1298, %v1297
      %v1316 = vpack.c.b16 %v1300, %v1299
      %v1319 = vunpack.c.l.b16 %v1235
      %v1320 = vunpack.c.l.b16 %v1236
      %v1321 = vpack.c.b16 %v1320, %v1319
      %v1323 = vsel %vm317, %v1301, 0
      %v1326 = vsel %vm317, %v1302, 0
      %v1329 = vsel %vm317, %v1303, 0
      %v1332 = vsel %vm317, %v1304, 0
      %v1335 = vsel %vm317, %v1305, 0
      %v1338 = vsel %vm317, %v1306, 0
      %v1341 = vsel %vm317, %v1307, 0
      %v1344 = vsel %vm317, %v1308, 0
      %v1347 = vsel %vm317, %v1309, 0
      %v1350 = vsel %vm317, %v1310, 0
      %v1353 = vsel %vm317, %v1311, 0
      %v1356 = vsel %vm317, %v1312, 0
      %v1359 = vsel %vm317, %v1313, 0
      %v1362 = vsel %vm317, %v1314, 0
      %v1365 = vsel %vm317, %v1315, 0
      %v1368 = vsel %vm317, %v1316, 0
      %v1371 = vsel %vm366, %v1321, 0
      %1373 = vmatprep.subr.bf16.mxu0 0
      %1374 = vmatpush1.bf16.msra.mxu0 %v1371
      %1375 = vmatprep.subr.bf16.mxu0 0
      %1376 = vmatpush1.bf16.msra.mxu0 0
      %1377 = vmatprep.subr.bf16.mxu0 0
      %1378 = vmatpush1.bf16.msra.mxu0 0
      %1379 = vmatprep.subr.bf16.mxu0 0
      %1380 = vmatpush1.bf16.msra.mxu0 0
      %1381 = vmatprep.subr.bf16.mxu0 0
      %1382 = vmatpush1.bf16.msra.mxu0 0
      %1383 = vmatprep.subr.bf16.mxu0 0
      %1384 = vmatpush1.bf16.msra.mxu0 0
      %1385 = vmatprep.subr.bf16.mxu0 0
      %1386 = vmatpush1.bf16.msra.mxu0 0
      %1387 = vmatprep.subr.bf16.mxu0 0
      %1388 = vmatpush1.bf16.msra.mxu0 0
      %1389 = vmatprep.subr.bf16.mxu0 0
      %1390 = vmatpush1.bf16.msra.mxu0 0
      %1391 = vmatprep.subr.bf16.mxu0 0
      %1392 = vmatpush1.bf16.msra.mxu0 0
      %1393 = vmatprep.subr.bf16.mxu0 0
      %1394 = vmatpush1.bf16.msra.mxu0 0
      %1395 = vmatprep.subr.bf16.mxu0 0
      %1396 = vmatpush1.bf16.msra.mxu0 0
      %1397 = vmatprep.subr.bf16.mxu0 0
      %1398 = vmatpush1.bf16.msra.mxu0 0
      %1399 = vmatprep.subr.bf16.mxu0 0
      %1400 = vmatpush1.bf16.msra.mxu0 0
      %1401 = vmatprep.subr.bf16.mxu0 0
      %1402 = vmatpush1.bf16.msra.mxu0 0
      %1403 = vmatprep.subr.bf16.mxu0 0
      %1404 = vmatpush1.bf16.msra.mxu0 0
      %1405 = vmatprep.mubr.bf16.mxu0 0
      %1406 = vmatmul.mubr.bf16.gmra.mrb[0].mxu0 %v1323
      %v1407 = vpop.f32.mrb[0].mxu0
      %v1408 = vadd.f32 0.0, %v1407
      %v1409 = vpop.f32.mrb[0].mxu0
      %v1410 = vpop.f32.mrb[0].mxu0
      %v1411 = vadd.f32 0.0, %v1410
      %v1412 = vpop.f32.mrb[0].mxu0
      %1413 = vmatprep.mubr.bf16.mxu0 0
      %1414 = vmatmul.mubr.bf16.gmra.mrb[0].mxu0 %v1326
      %v1415 = vpop.f32.mrb[0].mxu0
      %v1416 = vadd.f32 0.0, %v1415
      %v1417 = vpop.f32.mrb[0].mxu0
      %v1418 = vpop.f32.mrb[0].mxu0
      %v1419 = vadd.f32 0.0, %v1418
      %v1420 = vpop.f32.mrb[0].mxu0
      %1421 = vmatprep.mubr.bf16.mxu0 0
      %1422 = vmatmul.mubr.bf16.gmra.mrb[0].mxu0 %v1329
      %v1423 = vpop.f32.mrb[0].mxu0
      %v1424 = vadd.f32 0.0, %v1423
      %v1425 = vpop.f32.mrb[0].mxu0
      %v1426 = vpop.f32.mrb[0].mxu0
      %v1427 = vadd.f32 0.0, %v1426
      %v1428 = vpop.f32.mrb[0].mxu0
      %1429 = vmatprep.mubr.bf16.mxu0 0
      %1430 = vmatmul.mubr.bf16.gmra.mrb[0].mxu0 %v1332
      %v1431 = vpop.f32.mrb[0].mxu0
      %v1432 = vadd.f32 0.0, %v1431
      %v1433 = vpop.f32.mrb[0].mxu0
      %v1434 = vpop.f32.mrb[0].mxu0
      %v1435 = vadd.f32 0.0, %v1434
      %v1436 = vpop.f32.mrb[0].mxu0
      %1437 = vmatprep.mubr.bf16.mxu0 0
      %1438 = vmatmul.mubr.bf16.gmra.mrb[0].mxu0 %v1335
      %v1439 = vpop.f32.mrb[0].mxu0
      %v1440 = vadd.f32 0.0, %v1439
      %v1441 = vpop.f32.mrb[0].mxu0
      %v1442 = vpop.f32.mrb[0].mxu0
      %v1443 = vadd.f32 0.0, %v1442
      %v1444 = vpop.f32.mrb[0].mxu0
      %1445 = vmatprep.mubr.bf16.mxu0 0
      %1446 = vmatmul.mubr.bf16.gmra.mrb[0].mxu0 %v1338
      %v1447 = vpop.f32.mrb[0].mxu0
      %v1448 = vadd.f32 0.0, %v1447
      %v1449 = vpop.f32.mrb[0].mxu0
      %v1450 = vpop.f32.mrb[0].mxu0
      %v1451 = vadd.f32 0.0, %v1450
      %v1452 = vpop.f32.mrb[0].mxu0
      %1453 = vmatprep.mubr.bf16.mxu0 0
      %1454 = vmatmul.mubr.bf16.gmra.mrb[0].mxu0 %v1341
      %v1455 = vpop.f32.mrb[0].mxu0
      %v1456 = vadd.f32 0.0, %v1455
      %v1457 = vpop.f32.mrb[0].mxu0
      %v1458 = vpop.f32.mrb[0].mxu0
      %v1459 = vadd.f32 0.0, %v1458
      %v1460 = vpop.f32.mrb[0].mxu0
      %1461 = vmatprep.mubr.bf16.mxu0 0
      %1462 = vmatmul.mubr.bf16.gmra.mrb[0].mxu0 %v1344
      %v1463 = vpop.f32.mrb[0].mxu0
      %v1464 = vadd.f32 0.0, %v1463
      %v1465 = vpop.f32.mrb[0].mxu0
      %v1466 = vpop.f32.mrb[0].mxu0
      %v1467 = vadd.f32 0.0, %v1466
      %v1468 = vpop.f32.mrb[0].mxu0
      %1469 = vmatprep.mubr.bf16.mxu0 0
      %1470 = vmatmul.mubr.bf16.gmra.mrb[0].mxu0 %v1347
      %v1471 = vpop.f32.mrb[0].mxu0
      %v1472 = vadd.f32 0.0, %v1471
      %v1473 = vpop.f32.mrb[0].mxu0
      %v1474 = vpop.f32.mrb[0].mxu0
      %v1475 = vadd.f32 0.0, %v1474
      %v1476 = vpop.f32.mrb[0].mxu0
      %1477 = vmatprep.mubr.bf16.mxu0 0
      %1478 = vmatmul.mubr.bf16.gmra.mrb[0].mxu0 %v1350
      %v1479 = vpop.f32.mrb[0].mxu0
      %v1480 = vadd.f32 0.0, %v1479
      %v1481 = vpop.f32.mrb[0].mxu0
      %v1482 = vpop.f32.mrb[0].mxu0
      %v1483 = vadd.f32 0.0, %v1482
      %v1484 = vpop.f32.mrb[0].mxu0
      %1485 = vmatprep.mubr.bf16.mxu0 0
      %1486 = vmatmul.mubr.bf16.gmra.mrb[0].mxu0 %v1353
      %v1487 = vpop.f32.mrb[0].mxu0
      %v1488 = vadd.f32 0.0, %v1487
      %v1489 = vpop.f32.mrb[0].mxu0
      %v1490 = vpop.f32.mrb[0].mxu0
      %v1491 = vadd.f32 0.0, %v1490
      %v1492 = vpop.f32.mrb[0].mxu0
      %1493 = vmatprep.mubr.bf16.mxu0 0
      %1494 = vmatmul.mubr.bf16.gmra.mrb[0].mxu0 %v1356
      %v1495 = vpop.f32.mrb[0].mxu0
      %v1496 = vadd.f32 0.0, %v1495
      %v1497 = vpop.f32.mrb[0].mxu0
      %v1498 = vpop.f32.mrb[0].mxu0
      %v1499 = vadd.f32 0.0, %v1498
      %v1500 = vpop.f32.mrb[0].mxu0
      %1501 = vmatprep.mubr.bf16.mxu0 0
      %1502 = vmatmul.mubr.bf16.gmra.mrb[0].mxu0 %v1359
      %v1503 = vpop.f32.mrb[0].mxu0
      %v1504 = vadd.f32 0.0, %v1503
      %v1505 = vpop.f32.mrb[0].mxu0
      %v1506 = vpop.f32.mrb[0].mxu0
      %v1507 = vadd.f32 0.0, %v1506
      %v1508 = vpop.f32.mrb[0].mxu0
      %1509 = vmatprep.mubr.bf16.mxu0 0
      %1510 = vmatmul.mubr.bf16.gmra.mrb[0].mxu0 %v1362
      %v1511 = vpop.f32.mrb[0].mxu0
      %v1512 = vadd.f32 0.0, %v1511
      %v1513 = vpop.f32.mrb[0].mxu0
      %v1514 = vpop.f32.mrb[0].mxu0
      %v1515 = vadd.f32 0.0, %v1514
      %v1516 = vpop.f32.mrb[0].mxu0
      %1517 = vmatprep.mubr.bf16.mxu0 0
      %1518 = vmatmul.mubr.bf16.gmra.mrb[0].mxu0 %v1365
      %v1519 = vpop.f32.mrb[0].mxu0
      %v1520 = vadd.f32 0.0, %v1519
      %v1521 = vpop.f32.mrb[0].mxu0
      %v1522 = vpop.f32.mrb[0].mxu0
      %v1523 = vadd.f32 0.0, %v1522
      %v1524 = vpop.f32.mrb[0].mxu0
      %1525 = vmatprep.mubr.bf16.mxu0 0
      %1526 = vmatmul.mubr.bf16.gmra.mrb[0].mxu0 %v1368
      %v1527 = vpop.f32.mrb[0].mxu0
      %v1528 = vadd.f32 0.0, %v1527
      %v1529 = vpop.f32.mrb[0].mxu0
      %v1530 = vpop.f32.mrb[0].mxu0
      %v1531 = vadd.f32 0.0, %v1530
      %v1532 = vpop.f32.mrb[0].mxu0
      %1533 = vdwg.mxu0
      %v1534 = vadd.f32 %v1165, %v1408
      %v1535 = vadd.f32 %v1166, %v1411
      %v1536 = vadd.f32 %v1167, %v1416
      %v1537 = vadd.f32 %v1168, %v1419
      %v1538 = vadd.f32 %v1169, %v1424
      %v1539 = vadd.f32 %v1170, %v1427
      %v1540 = vadd.f32 %v1171, %v1432
      %v1541 = vadd.f32 %v1172, %v1435
      %v1542 = vadd.f32 %v1173, %v1440
      %v1543 = vadd.f32 %v1174, %v1443
      %v1544 = vadd.f32 %v1175, %v1448
      %v1545 = vadd.f32 %v1176, %v1451
      %v1546 = vadd.f32 %v1177, %v1456
      %v1547 = vadd.f32 %v1178, %v1459
      %v1548 = vadd.f32 %v1179, %v1464
      %v1549 = vadd.f32 %v1180, %v1467
      %v1550 = vadd.f32 %v1181, %v1472
      %v1551 = vadd.f32 %v1182, %v1475
      %v1552 = vadd.f32 %v1183, %v1480
      %v1553 = vadd.f32 %v1184, %v1483
      %v1554 = vadd.f32 %v1185, %v1488
      %v1555 = vadd.f32 %v1186, %v1491
      %v1556 = vadd.f32 %v1187, %v1496
      %v1557 = vadd.f32 %v1188, %v1499
      %v1558 = vadd.f32 %v1189, %v1504
      %v1559 = vadd.f32 %v1190, %v1507
      %v1560 = vadd.f32 %v1191, %v1512
      %v1561 = vadd.f32 %v1192, %v1515
      %v1562 = vadd.f32 %v1193, %v1520
      %v1563 = vadd.f32 %v1194, %v1523
      %v1564 = vadd.f32 %v1195, %v1528
      %v1565 = vadd.f32 %v1196, %v1531
      %s1566 = sadd.s32 %s153, 176
      %s1567 = sshra.s32 %s1566, 3
      %s1568 = sand.u32 %s1566, 7
      %s1569 = smul.addr %s1567, 4
      %s1570 = scalar_lea.vmem %s0, %s1569
      %v1571 = vld [vmem:[%s1570] sm:$0xf]
      %v1572 = vld [vmem:[%s1570 + $0x4] sm:$0xf]
      %v1573 = vld [vmem:[%s1570 + $0x8] sm:$0xf]
      %v1574 = vld [vmem:[%s1570 + $0xc] sm:$0xf]
      %v1575 = vld [vmem:[%s1570 + $0x10] sm:$0xf]
      %v1576 = vld [vmem:[%s1570 + $0x14] sm:$0xf]
      %v1577 = vld [vmem:[%s1570 + $0x18] sm:$0xf]
      %v1578 = vld [vmem:[%s1570 + $0x1c] sm:$0xf]
      %v1579 = vld [vmem:[%s1570 + $0x20] sm:$0xf]
      %v1580 = vld [vmem:[%s1570 + $0x24] sm:$0xf]
      %v1581 = vld [vmem:[%s1570 + $0x28] sm:$0xf]
      %v1582 = vld [vmem:[%s1570 + $0x2c] sm:$0xf]
      %v1583 = vld [vmem:[%s1570 + $0x30] sm:$0xf]
      %v1584 = vld [vmem:[%s1570 + $0x34] sm:$0xf]
      %v1585 = vld [vmem:[%s1570 + $0x38] sm:$0xf]
      %v1586 = vld [vmem:[%s1570 + $0x3c] sm:$0xf]
      %v1587 = vld [vmem:[%s1570 + $0x40] sm:$0xf]
      %v1588 = vld [vmem:[%s1570 + $0x44] sm:$0xf]
      %v1589 = vld [vmem:[%s1570 + $0x48] sm:$0xf]
      %v1590 = vld [vmem:[%s1570 + $0x4c] sm:$0xf]
      %v1591 = vld [vmem:[%s1570 + $0x50] sm:$0xf]
      %v1592 = vld [vmem:[%s1570 + $0x54] sm:$0xf]
      %v1593 = vld [vmem:[%s1570 + $0x58] sm:$0xf]
      %v1594 = vld [vmem:[%s1570 + $0x5c] sm:$0xf]
      %v1595 = vld [vmem:[%s1570 + $0x60] sm:$0xf]
      %v1596 = vld [vmem:[%s1570 + $0x64] sm:$0xf]
      %v1597 = vld [vmem:[%s1570 + $0x68] sm:$0xf]
      %v1598 = vld [vmem:[%s1570 + $0x6c] sm:$0xf]
      %v1599 = vld [vmem:[%s1570 + $0x70] sm:$0xf]
      %v1600 = vld [vmem:[%s1570 + $0x74] sm:$0xf]
      %v1601 = vld [vmem:[%s1570 + $0x78] sm:$0xf]
      %v1602 = vld [vmem:[%s1570 + $0x7c] sm:$0xf]
      %s1603 = scalar_lea.vmem %s1, 32
      %v1604 = vld [vmem:[%s1603] sm:$0xf]
      %v1605 = vld [vmem:[%s1603 + $0x4] sm:$0x3]
      %v1638 = vunpack.c.l.b16 %v1571
      %v1639 = vunpack.c.l.b16 %v1572
      %v1640 = vunpack.c.l.b16 %v1573
      %v1641 = vunpack.c.l.b16 %v1574
      %v1642 = vunpack.c.l.b16 %v1575
      %v1643 = vunpack.c.l.b16 %v1576
      %v1644 = vunpack.c.l.b16 %v1577
      %v1645 = vunpack.c.l.b16 %v1578
      %v1646 = vunpack.c.l.b16 %v1579
      %v1647 = vunpack.c.l.b16 %v1580
      %v1648 = vunpack.c.l.b16 %v1581
      %v1649 = vunpack.c.l.b16 %v1582
      %v1650 = vunpack.c.l.b16 %v1583
      %v1651 = vunpack.c.l.b16 %v1584
      %v1652 = vunpack.c.l.b16 %v1585
      %v1653 = vunpack.c.l.b16 %v1586
      %v1654 = vunpack.c.l.b16 %v1587
      %v1655 = vunpack.c.l.b16 %v1588
      %v1656 = vunpack.c.l.b16 %v1589
      %v1657 = vunpack.c.l.b16 %v1590
      %v1658 = vunpack.c.l.b16 %v1591
      %v1659 = vunpack.c.l.b16 %v1592
      %v1660 = vunpack.c.l.b16 %v1593
      %v1661 = vunpack.c.l.b16 %v1594
      %v1662 = vunpack.c.l.b16 %v1595
      %v1663 = vunpack.c.l.b16 %v1596
      %v1664 = vunpack.c.l.b16 %v1597
      %v1665 = vunpack.c.l.b16 %v1598
      %v1666 = vunpack.c.l.b16 %v1599
      %v1667 = vunpack.c.l.b16 %v1600
      %v1668 = vunpack.c.l.b16 %v1601
      %v1669 = vunpack.c.l.b16 %v1602
      %v1670 = vpack.c.b16 %v1639, %v1638
      %v1671 = vpack.c.b16 %v1641, %v1640
      %v1672 = vpack.c.b16 %v1643, %v1642
      %v1673 = vpack.c.b16 %v1645, %v1644
      %v1674 = vpack.c.b16 %v1647, %v1646
      %v1675 = vpack.c.b16 %v1649, %v1648
      %v1676 = vpack.c.b16 %v1651, %v1650
      %v1677 = vpack.c.b16 %v1653, %v1652
      %v1678 = vpack.c.b16 %v1655, %v1654
      %v1679 = vpack.c.b16 %v1657, %v1656
      %v1680 = vpack.c.b16 %v1659, %v1658
      %v1681 = vpack.c.b16 %v1661, %v1660
      %v1682 = vpack.c.b16 %v1663, %v1662
      %v1683 = vpack.c.b16 %v1665, %v1664
      %v1684 = vpack.c.b16 %v1667, %v1666
      %v1685 = vpack.c.b16 %v1669, %v1668
      %v1688 = vunpack.c.l.b16 %v1604
      %v1689 = vunpack.c.l.b16 %v1605
      %v1690 = vpack.c.b16 %v1689, %v1688
      %v1692 = vsel %vm317, %v1670, 0
      %v1695 = vsel %vm317, %v1671, 0
      %v1698 = vsel %vm317, %v1672, 0
      %v1701 = vsel %vm317, %v1673, 0
      %v1704 = vsel %vm317, %v1674, 0
      %v1707 = vsel %vm317, %v1675, 0
      %v1710 = vsel %vm317, %v1676, 0
      %v1713 = vsel %vm317, %v1677, 0
      %v1716 = vsel %vm317, %v1678, 0
      %v1719 = vsel %vm317, %v1679, 0
      %v1722 = vsel %vm317, %v1680, 0
      %v1725 = vsel %vm317, %v1681, 0
      %v1728 = vsel %vm317, %v1682, 0
      %v1731 = vsel %vm317, %v1683, 0
      %v1734 = vsel %vm317, %v1684, 0
      %v1737 = vsel %vm317, %v1685, 0
      %v1740 = vsel %vm366, %v1690, 0
      %1742 = vmatprep.subr.bf16.mxu0 0
      %1743 = vmatpush1.bf16.msra.mxu0 %v1740
      %1744 = vmatprep.subr.bf16.mxu0 0
      %1745 = vmatpush1.bf16.msra.mxu0 0
      %1746 = vmatprep.subr.bf16.mxu0 0
      %1747 = vmatpush1.bf16.msra.mxu0 0
      %1748 = vmatprep.subr.bf16.mxu0 0
      %1749 = vmatpush1.bf16.msra.mxu0 0
      %1750 = vmatprep.subr.bf16.mxu0 0
      %1751 = vmatpush1.bf16.msra.mxu0 0
      %1752 = vmatprep.subr.bf16.mxu0 0
      %1753 = vmatpush1.bf16.msra.mxu0 0
      %1754 = vmatprep.subr.bf16.mxu0 0
      %1755 = vmatpush1.bf16.msra.mxu0 0
      %1756 = vmatprep.subr.bf16.mxu0 0
      %1757 = vmatpush1.bf16.msra.mxu0 0
      %1758 = vmatprep.subr.bf16.mxu0 0
      %1759 = vmatpush1.bf16.msra.mxu0 0
      %1760 = vmatprep.subr.bf16.mxu0 0
      %1761 = vmatpush1.bf16.msra.mxu0 0
      %1762 = vmatprep.subr.bf16.mxu0 0
      %1763 = vmatpush1.bf16.msra.mxu0 0
      %1764 = vmatprep.subr.bf16.mxu0 0
      %1765 = vmatpush1.bf16.msra.mxu0 0
      %1766 = vmatprep.subr.bf16.mxu0 0
      %1767 = vmatpush1.bf16.msra.mxu0 0
      %1768 = vmatprep.subr.bf16.mxu0 0
      %1769 = vmatpush1.bf16.msra.mxu0 0
      %1770 = vmatprep.subr.bf16.mxu0 0
      %1771 = vmatpush1.bf16.msra.mxu0 0
      %1772 = vmatprep.subr.bf16.mxu0 0
      %1773 = vmatpush1.bf16.msra.mxu0 0
      %1774 = vmatprep.mubr.bf16.mxu0 0
      %1775 = vmatmul.mubr.bf16.gmra.mrb[0].mxu0 %v1692
      %v1776 = vpop.f32.mrb[0].mxu0
      %v1777 = vadd.f32 0.0, %v1776
      %v1778 = vpop.f32.mrb[0].mxu0
      %v1779 = vpop.f32.mrb[0].mxu0
      %v1780 = vadd.f32 0.0, %v1779
      %v1781 = vpop.f32.mrb[0].mxu0
      %1782 = vmatprep.mubr.bf16.mxu0 0
      %1783 = vmatmul.mubr.bf16.gmra.mrb[0].mxu0 %v1695
      %v1784 = vpop.f32.mrb[0].mxu0
      %v1785 = vadd.f32 0.0, %v1784
      %v1786 = vpop.f32.mrb[0].mxu0
      %v1787 = vpop.f32.mrb[0].mxu0
      %v1788 = vadd.f32 0.0, %v1787
      %v1789 = vpop.f32.mrb[0].mxu0
      %1790 = vmatprep.mubr.bf16.mxu0 0
      %1791 = vmatmul.mubr.bf16.gmra.mrb[0].mxu0 %v1698
      %v1792 = vpop.f32.mrb[0].mxu0
      %v1793 = vadd.f32 0.0, %v1792
      %v1794 = vpop.f32.mrb[0].mxu0
      %v1795 = vpop.f32.mrb[0].mxu0
      %v1796 = vadd.f32 0.0, %v1795
      %v1797 = vpop.f32.mrb[0].mxu0
      %1798 = vmatprep.mubr.bf16.mxu0 0
      %1799 = vmatmul.mubr.bf16.gmra.mrb[0].mxu0 %v1701
      %v1800 = vpop.f32.mrb[0].mxu0
      %v1801 = vadd.f32 0.0, %v1800
      %v1802 = vpop.f32.mrb[0].mxu0
      %v1803 = vpop.f32.mrb[0].mxu0
      %v1804 = vadd.f32 0.0, %v1803
      %v1805 = vpop.f32.mrb[0].mxu0
      %1806 = vmatprep.mubr.bf16.mxu0 0
      %1807 = vmatmul.mubr.bf16.gmra.mrb[0].mxu0 %v1704
      %v1808 = vpop.f32.mrb[0].mxu0
      %v1809 = vadd.f32 0.0, %v1808
      %v1810 = vpop.f32.mrb[0].mxu0
      %v1811 = vpop.f32.mrb[0].mxu0
      %v1812 = vadd.f32 0.0, %v1811
      %v1813 = vpop.f32.mrb[0].mxu0
      %1814 = vmatprep.mubr.bf16.mxu0 0
      %1815 = vmatmul.mubr.bf16.gmra.mrb[0].mxu0 %v1707
      %v1816 = vpop.f32.mrb[0].mxu0
      %v1817 = vadd.f32 0.0, %v1816
      %v1818 = vpop.f32.mrb[0].mxu0
      %v1819 = vpop.f32.mrb[0].mxu0
      %v1820 = vadd.f32 0.0, %v1819
      %v1821 = vpop.f32.mrb[0].mxu0
      %1822 = vmatprep.mubr.bf16.mxu0 0
      %1823 = vmatmul.mubr.bf16.gmra.mrb[0].mxu0 %v1710
      %v1824 = vpop.f32.mrb[0].mxu0
      %v1825 = vadd.f32 0.0, %v1824
      %v1826 = vpop.f32.mrb[0].mxu0
      %v1827 = vpop.f32.mrb[0].mxu0
      %v1828 = vadd.f32 0.0, %v1827
      %v1829 = vpop.f32.mrb[0].mxu0
      %1830 = vmatprep.mubr.bf16.mxu0 0
      %1831 = vmatmul.mubr.bf16.gmra.mrb[0].mxu0 %v1713
      %v1832 = vpop.f32.mrb[0].mxu0
      %v1833 = vadd.f32 0.0, %v1832
      %v1834 = vpop.f32.mrb[0].mxu0
      %v1835 = vpop.f32.mrb[0].mxu0
      %v1836 = vadd.f32 0.0, %v1835
      %v1837 = vpop.f32.mrb[0].mxu0
      %1838 = vmatprep.mubr.bf16.mxu0 0
      %1839 = vmatmul.mubr.bf16.gmra.mrb[0].mxu0 %v1716
      %v1840 = vpop.f32.mrb[0].mxu0
      %v1841 = vadd.f32 0.0, %v1840
      %v1842 = vpop.f32.mrb[0].mxu0
      %v1843 = vpop.f32.mrb[0].mxu0
      %v1844 = vadd.f32 0.0, %v1843
      %v1845 = vpop.f32.mrb[0].mxu0
      %1846 = vmatprep.mubr.bf16.mxu0 0
      %1847 = vmatmul.mubr.bf16.gmra.mrb[0].mxu0 %v1719
      %v1848 = vpop.f32.mrb[0].mxu0
      %v1849 = vadd.f32 0.0, %v1848
      %v1850 = vpop.f32.mrb[0].mxu0
      %v1851 = vpop.f32.mrb[0].mxu0
      %v1852 = vadd.f32 0.0, %v1851
      %v1853 = vpop.f32.mrb[0].mxu0
      %1854 = vmatprep.mubr.bf16.mxu0 0
      %1855 = vmatmul.mubr.bf16.gmra.mrb[0].mxu0 %v1722
      %v1856 = vpop.f32.mrb[0].mxu0
      %v1857 = vadd.f32 0.0, %v1856
      %v1858 = vpop.f32.mrb[0].mxu0
      %v1859 = vpop.f32.mrb[0].mxu0
      %v1860 = vadd.f32 0.0, %v1859
      %v1861 = vpop.f32.mrb[0].mxu0
      %1862 = vmatprep.mubr.bf16.mxu0 0
      %1863 = vmatmul.mubr.bf16.gmra.mrb[0].mxu0 %v1725
      %v1864 = vpop.f32.mrb[0].mxu0
      %v1865 = vadd.f32 0.0, %v1864
      %v1866 = vpop.f32.mrb[0].mxu0
      %v1867 = vpop.f32.mrb[0].mxu0
      %v1868 = vadd.f32 0.0, %v1867
      %v1869 = vpop.f32.mrb[0].mxu0
      %1870 = vmatprep.mubr.bf16.mxu0 0
      %1871 = vmatmul.mubr.bf16.gmra.mrb[0].mxu0 %v1728
      %v1872 = vpop.f32.mrb[0].mxu0
      %v1873 = vadd.f32 0.0, %v1872
      %v1874 = vpop.f32.mrb[0].mxu0
      %v1875 = vpop.f32.mrb[0].mxu0
      %v1876 = vadd.f32 0.0, %v1875
      %v1877 = vpop.f32.mrb[0].mxu0
      %1878 = vmatprep.mubr.bf16.mxu0 0
      %1879 = vmatmul.mubr.bf16.gmra.mrb[0].mxu0 %v1731
      %v1880 = vpop.f32.mrb[0].mxu0
      %v1881 = vadd.f32 0.0, %v1880
      %v1882 = vpop.f32.mrb[0].mxu0
      %v1883 = vpop.f32.mrb[0].mxu0
      %v1884 = vadd.f32 0.0, %v1883
      %v1885 = vpop.f32.mrb[0].mxu0
      %1886 = vmatprep.mubr.bf16.mxu0 0
      %1887 = vmatmul.mubr.bf16.gmra.mrb[0].mxu0 %v1734
      %v1888 = vpop.f32.mrb[0].mxu0
      %v1889 = vadd.f32 0.0, %v1888
      %v1890 = vpop.f32.mrb[0].mxu0
      %v1891 = vpop.f32.mrb[0].mxu0
      %v1892 = vadd.f32 0.0, %v1891
      %v1893 = vpop.f32.mrb[0].mxu0
      %1894 = vmatprep.mubr.bf16.mxu0 0
      %1895 = vmatmul.mubr.bf16.gmra.mrb[0].mxu0 %v1737
      %v1896 = vpop.f32.mrb[0].mxu0
      %v1897 = vadd.f32 0.0, %v1896
      %v1898 = vpop.f32.mrb[0].mxu0
      %v1899 = vpop.f32.mrb[0].mxu0
      %v1900 = vadd.f32 0.0, %v1899
      %v1901 = vpop.f32.mrb[0].mxu0
      %1902 = vdwg.mxu0
      %v1903 = vadd.f32 %v1534, %v1777
      %v1904 = vadd.f32 %v1535, %v1780
      %v1905 = vadd.f32 %v1536, %v1785
      %v1906 = vadd.f32 %v1537, %v1788
      %v1907 = vadd.f32 %v1538, %v1793
      %v1908 = vadd.f32 %v1539, %v1796
      %v1909 = vadd.f32 %v1540, %v1801
      %v1910 = vadd.f32 %v1541, %v1804
      %v1911 = vadd.f32 %v1542, %v1809
      %v1912 = vadd.f32 %v1543, %v1812
      %v1913 = vadd.f32 %v1544, %v1817
      %v1914 = vadd.f32 %v1545, %v1820
      %v1915 = vadd.f32 %v1546, %v1825
      %v1916 = vadd.f32 %v1547, %v1828
      %v1917 = vadd.f32 %v1548, %v1833
      %v1918 = vadd.f32 %v1549, %v1836
      %v1919 = vadd.f32 %v1550, %v1841
      %v1920 = vadd.f32 %v1551, %v1844
      %v1921 = vadd.f32 %v1552, %v1849
      %v1922 = vadd.f32 %v1553, %v1852
      %v1923 = vadd.f32 %v1554, %v1857
      %v1924 = vadd.f32 %v1555, %v1860
      %v1925 = vadd.f32 %v1556, %v1865
      %v1926 = vadd.f32 %v1557, %v1868
      %v1927 = vadd.f32 %v1558, %v1873
      %v1928 = vadd.f32 %v1559, %v1876
      %v1929 = vadd.f32 %v1560, %v1881
      %v1930 = vadd.f32 %v1561, %v1884
      %v1931 = vadd.f32 %v1562, %v1889
      %v1932 = vadd.f32 %v1563, %v1892
      %v1933 = vadd.f32 %v1564, %v1897
      %v1934 = vadd.f32 %v1565, %v1900
      %s1935 = sadd.s32 %s153, 192
      %s1936 = sshra.s32 %s1935, 3
      %s1937 = sand.u32 %s1935, 7
      %s1938 = smul.addr %s1936, 4
      %s1939 = scalar_lea.vmem %s0, %s1938
      %v1940 = vld [vmem:[%s1939] sm:$0xf]
      %v1941 = vld [vmem:[%s1939 + $0x4] sm:$0xf]
      %v1942 = vld [vmem:[%s1939 + $0x8] sm:$0xf]
      %v1943 = vld [vmem:[%s1939 + $0xc] sm:$0xf]
      %v1944 = vld [vmem:[%s1939 + $0x10] sm:$0xf]
      %v1945 = vld [vmem:[%s1939 + $0x14] sm:$0xf]
      %v1946 = vld [vmem:[%s1939 + $0x18] sm:$0xf]
      %v1947 = vld [vmem:[%s1939 + $0x1c] sm:$0xf]
      %v1948 = vld [vmem:[%s1939 + $0x20] sm:$0xf]
      %v1949 = vld [vmem:[%s1939 + $0x24] sm:$0xf]
      %v1950 = vld [vmem:[%s1939 + $0x28] sm:$0xf]
      %v1951 = vld [vmem:[%s1939 + $0x2c] sm:$0xf]
      %v1952 = vld [vmem:[%s1939 + $0x30] sm:$0xf]
      %v1953 = vld [vmem:[%s1939 + $0x34] sm:$0xf]
      %v1954 = vld [vmem:[%s1939 + $0x38] sm:$0xf]
      %v1955 = vld [vmem:[%s1939 + $0x3c] sm:$0xf]
      %v1956 = vld [vmem:[%s1939 + $0x40] sm:$0xf]
      %v1957 = vld [vmem:[%s1939 + $0x44] sm:$0xf]
      %v1958 = vld [vmem:[%s1939 + $0x48] sm:$0xf]
      %v1959 = vld [vmem:[%s1939 + $0x4c] sm:$0xf]
      %v1960 = vld [vmem:[%s1939 + $0x50] sm:$0xf]
      %v1961 = vld [vmem:[%s1939 + $0x54] sm:$0xf]
      %v1962 = vld [vmem:[%s1939 + $0x58] sm:$0xf]
      %v1963 = vld [vmem:[%s1939 + $0x5c] sm:$0xf]
      %v1964 = vld [vmem:[%s1939 + $0x60] sm:$0xf]
      %v1965 = vld [vmem:[%s1939 + $0x64] sm:$0xf]
      %v1966 = vld [vmem:[%s1939 + $0x68] sm:$0xf]
      %v1967 = vld [vmem:[%s1939 + $0x6c] sm:$0xf]
      %v1968 = vld [vmem:[%s1939 + $0x70] sm:$0xf]
      %v1969 = vld [vmem:[%s1939 + $0x74] sm:$0xf]
      %v1970 = vld [vmem:[%s1939 + $0x78] sm:$0xf]
      %v1971 = vld [vmem:[%s1939 + $0x7c] sm:$0xf]
      %s1972 = scalar_lea.vmem %s1, 40
      %v1973 = vld [vmem:[%s1972] sm:$0xf]
      %v1974 = vld [vmem:[%s1972 + $0x4] sm:$0x3]
      %v2007 = vunpack.c.l.b16 %v1940
      %v2008 = vunpack.c.l.b16 %v1941
      %v2009 = vunpack.c.l.b16 %v1942
      %v2010 = vunpack.c.l.b16 %v1943
      %v2011 = vunpack.c.l.b16 %v1944
      %v2012 = vunpack.c.l.b16 %v1945
      %v2013 = vunpack.c.l.b16 %v1946
      %v2014 = vunpack.c.l.b16 %v1947
      %v2015 = vunpack.c.l.b16 %v1948
      %v2016 = vunpack.c.l.b16 %v1949
      %v2017 = vunpack.c.l.b16 %v1950
      %v2018 = vunpack.c.l.b16 %v1951
      %v2019 = vunpack.c.l.b16 %v1952
      %v2020 = vunpack.c.l.b16 %v1953
      %v2021 = vunpack.c.l.b16 %v1954
      %v2022 = vunpack.c.l.b16 %v1955
      %v2023 = vunpack.c.l.b16 %v1956
      %v2024 = vunpack.c.l.b16 %v1957
      %v2025 = vunpack.c.l.b16 %v1958
      %v2026 = vunpack.c.l.b16 %v1959
      %v2027 = vunpack.c.l.b16 %v1960
      %v2028 = vunpack.c.l.b16 %v1961
      %v2029 = vunpack.c.l.b16 %v1962
      %v2030 = vunpack.c.l.b16 %v1963
      %v2031 = vunpack.c.l.b16 %v1964
      %v2032 = vunpack.c.l.b16 %v1965
      %v2033 = vunpack.c.l.b16 %v1966
      %v2034 = vunpack.c.l.b16 %v1967
      %v2035 = vunpack.c.l.b16 %v1968
      %v2036 = vunpack.c.l.b16 %v1969
      %v2037 = vunpack.c.l.b16 %v1970
      %v2038 = vunpack.c.l.b16 %v1971
      %v2039 = vpack.c.b16 %v2008, %v2007
      %v2040 = vpack.c.b16 %v2010, %v2009
      %v2041 = vpack.c.b16 %v2012, %v2011
      %v2042 = vpack.c.b16 %v2014, %v2013
      %v2043 = vpack.c.b16 %v2016, %v2015
      %v2044 = vpack.c.b16 %v2018, %v2017
      %v2045 = vpack.c.b16 %v2020, %v2019
      %v2046 = vpack.c.b16 %v2022, %v2021
      %v2047 = vpack.c.b16 %v2024, %v2023
      %v2048 = vpack.c.b16 %v2026, %v2025
      %v2049 = vpack.c.b16 %v2028, %v2027
      %v2050 = vpack.c.b16 %v2030, %v2029
      %v2051 = vpack.c.b16 %v2032, %v2031
      %v2052 = vpack.c.b16 %v2034, %v2033
      %v2053 = vpack.c.b16 %v2036, %v2035
      %v2054 = vpack.c.b16 %v2038, %v2037
      %v2057 = vunpack.c.l.b16 %v1973
      %v2058 = vunpack.c.l.b16 %v1974
      %v2059 = vpack.c.b16 %v2058, %v2057
      %v2061 = vsel %vm317, %v2039, 0
      %v2064 = vsel %vm317, %v2040, 0
      %v2067 = vsel %vm317, %v2041, 0
      %v2070 = vsel %vm317, %v2042, 0
      %v2073 = vsel %vm317, %v2043, 0
      %v2076 = vsel %vm317, %v2044, 0
      %v2079 = vsel %vm317, %v2045, 0
      %v2082 = vsel %vm317, %v2046, 0
      %v2085 = vsel %vm317, %v2047, 0
      %v2088 = vsel %vm317, %v2048, 0
      %v2091 = vsel %vm317, %v2049, 0
      %v2094 = vsel %vm317, %v2050, 0
      %v2097 = vsel %vm317, %v2051, 0
      %v2100 = vsel %vm317, %v2052, 0
      %v2103 = vsel %vm317, %v2053, 0
      %v2106 = vsel %vm317, %v2054, 0
      %v2109 = vsel %vm366, %v2059, 0
      %2111 = vmatprep.subr.bf16.mxu0 0
      %2112 = vmatpush1.bf16.msra.mxu0 %v2109
      %2113 = vmatprep.subr.bf16.mxu0 0
      %2114 = vmatpush1.bf16.msra.mxu0 0
      %2115 = vmatprep.subr.bf16.mxu0 0
      %2116 = vmatpush1.bf16.msra.mxu0 0
      %2117 = vmatprep.subr.bf16.mxu0 0
      %2118 = vmatpush1.bf16.msra.mxu0 0
      %2119 = vmatprep.subr.bf16.mxu0 0
      %2120 = vmatpush1.bf16.msra.mxu0 0
      %2121 = vmatprep.subr.bf16.mxu0 0
      %2122 = vmatpush1.bf16.msra.mxu0 0
      %2123 = vmatprep.subr.bf16.mxu0 0
      %2124 = vmatpush1.bf16.msra.mxu0 0
      %2125 = vmatprep.subr.bf16.mxu0 0
      %2126 = vmatpush1.bf16.msra.mxu0 0
      %2127 = vmatprep.subr.bf16.mxu0 0
      %2128 = vmatpush1.bf16.msra.mxu0 0
      %2129 = vmatprep.subr.bf16.mxu0 0
      %2130 = vmatpush1.bf16.msra.mxu0 0
      %2131 = vmatprep.subr.bf16.mxu0 0
      %2132 = vmatpush1.bf16.msra.mxu0 0
      %2133 = vmatprep.subr.bf16.mxu0 0
      %2134 = vmatpush1.bf16.msra.mxu0 0
      %2135 = vmatprep.subr.bf16.mxu0 0
      %2136 = vmatpush1.bf16.msra.mxu0 0
      %2137 = vmatprep.subr.bf16.mxu0 0
      %2138 = vmatpush1.bf16.msra.mxu0 0
      %2139 = vmatprep.subr.bf16.mxu0 0
      %2140 = vmatpush1.bf16.msra.mxu0 0
      %2141 = vmatprep.subr.bf16.mxu0 0
      %2142 = vmatpush1.bf16.msra.mxu0 0
      %2143 = vmatprep.mubr.bf16.mxu0 0
      %2144 = vmatmul.mubr.bf16.gmra.mrb[0].mxu0 %v2061
      %v2145 = vpop.f32.mrb[0].mxu0
      %v2146 = vadd.f32 0.0, %v2145
      %v2147 = vpop.f32.mrb[0].mxu0
      %v2148 = vpop.f32.mrb[0].mxu0
      %v2149 = vadd.f32 0.0, %v2148
      %v2150 = vpop.f32.mrb[0].mxu0
      %2151 = vmatprep.mubr.bf16.mxu0 0
      %2152 = vmatmul.mubr.bf16.gmra.mrb[0].mxu0 %v2064
      %v2153 = vpop.f32.mrb[0].mxu0
      %v2154 = vadd.f32 0.0, %v2153
      %v2155 = vpop.f32.mrb[0].mxu0
      %v2156 = vpop.f32.mrb[0].mxu0
      %v2157 = vadd.f32 0.0, %v2156
      %v2158 = vpop.f32.mrb[0].mxu0
      %2159 = vmatprep.mubr.bf16.mxu0 0
      %2160 = vmatmul.mubr.bf16.gmra.mrb[0].mxu0 %v2067
      %v2161 = vpop.f32.mrb[0].mxu0
      %v2162 = vadd.f32 0.0, %v2161
      %v2163 = vpop.f32.mrb[0].mxu0
      %v2164 = vpop.f32.mrb[0].mxu0
      %v2165 = vadd.f32 0.0, %v2164
      %v2166 = vpop.f32.mrb[0].mxu0
      %2167 = vmatprep.mubr.bf16.mxu0 0
      %2168 = vmatmul.mubr.bf16.gmra.mrb[0].mxu0 %v2070
      %v2169 = vpop.f32.mrb[0].mxu0
      %v2170 = vadd.f32 0.0, %v2169
      %v2171 = vpop.f32.mrb[0].mxu0
      %v2172 = vpop.f32.mrb[0].mxu0
      %v2173 = vadd.f32 0.0, %v2172
      %v2174 = vpop.f32.mrb[0].mxu0
      %2175 = vmatprep.mubr.bf16.mxu0 0
      %2176 = vmatmul.mubr.bf16.gmra.mrb[0].mxu0 %v2073
      %v2177 = vpop.f32.mrb[0].mxu0
      %v2178 = vadd.f32 0.0, %v2177
      %v2179 = vpop.f32.mrb[0].mxu0
      %v2180 = vpop.f32.mrb[0].mxu0
      %v2181 = vadd.f32 0.0, %v2180
      %v2182 = vpop.f32.mrb[0].mxu0
      %2183 = vmatprep.mubr.bf16.mxu0 0
      %2184 = vmatmul.mubr.bf16.gmra.mrb[0].mxu0 %v2076
      %v2185 = vpop.f32.mrb[0].mxu0
      %v2186 = vadd.f32 0.0, %v2185
      %v2187 = vpop.f32.mrb[0].mxu0
      %v2188 = vpop.f32.mrb[0].mxu0
      %v2189 = vadd.f32 0.0, %v2188
      %v2190 = vpop.f32.mrb[0].mxu0
      %2191 = vmatprep.mubr.bf16.mxu0 0
      %2192 = vmatmul.mubr.bf16.gmra.mrb[0].mxu0 %v2079
      %v2193 = vpop.f32.mrb[0].mxu0
      %v2194 = vadd.f32 0.0, %v2193
      %v2195 = vpop.f32.mrb[0].mxu0
      %v2196 = vpop.f32.mrb[0].mxu0
      %v2197 = vadd.f32 0.0, %v2196
      %v2198 = vpop.f32.mrb[0].mxu0
      %2199 = vmatprep.mubr.bf16.mxu0 0
      %2200 = vmatmul.mubr.bf16.gmra.mrb[0].mxu0 %v2082
      %v2201 = vpop.f32.mrb[0].mxu0
      %v2202 = vadd.f32 0.0, %v2201
      %v2203 = vpop.f32.mrb[0].mxu0
      %v2204 = vpop.f32.mrb[0].mxu0
      %v2205 = vadd.f32 0.0, %v2204
      %v2206 = vpop.f32.mrb[0].mxu0
      %2207 = vmatprep.mubr.bf16.mxu0 0
      %2208 = vmatmul.mubr.bf16.gmra.mrb[0].mxu0 %v2085
      %v2209 = vpop.f32.mrb[0].mxu0
      %v2210 = vadd.f32 0.0, %v2209
      %v2211 = vpop.f32.mrb[0].mxu0
      %v2212 = vpop.f32.mrb[0].mxu0
      %v2213 = vadd.f32 0.0, %v2212
      %v2214 = vpop.f32.mrb[0].mxu0
      %2215 = vmatprep.mubr.bf16.mxu0 0
      %2216 = vmatmul.mubr.bf16.gmra.mrb[0].mxu0 %v2088
      %v2217 = vpop.f32.mrb[0].mxu0
      %v2218 = vadd.f32 0.0, %v2217
      %v2219 = vpop.f32.mrb[0].mxu0
      %v2220 = vpop.f32.mrb[0].mxu0
      %v2221 = vadd.f32 0.0, %v2220
      %v2222 = vpop.f32.mrb[0].mxu0
      %2223 = vmatprep.mubr.bf16.mxu0 0
      %2224 = vmatmul.mubr.bf16.gmra.mrb[0].mxu0 %v2091
      %v2225 = vpop.f32.mrb[0].mxu0
      %v2226 = vadd.f32 0.0, %v2225
      %v2227 = vpop.f32.mrb[0].mxu0
      %v2228 = vpop.f32.mrb[0].mxu0
      %v2229 = vadd.f32 0.0, %v2228
      %v2230 = vpop.f32.mrb[0].mxu0
      %2231 = vmatprep.mubr.bf16.mxu0 0
      %2232 = vmatmul.mubr.bf16.gmra.mrb[0].mxu0 %v2094
      %v2233 = vpop.f32.mrb[0].mxu0
      %v2234 = vadd.f32 0.0, %v2233
      %v2235 = vpop.f32.mrb[0].mxu0
      %v2236 = vpop.f32.mrb[0].mxu0
      %v2237 = vadd.f32 0.0, %v2236
      %v2238 = vpop.f32.mrb[0].mxu0
      %2239 = vmatprep.mubr.bf16.mxu0 0
      %2240 = vmatmul.mubr.bf16.gmra.mrb[0].mxu0 %v2097
      %v2241 = vpop.f32.mrb[0].mxu0
      %v2242 = vadd.f32 0.0, %v2241
      %v2243 = vpop.f32.mrb[0].mxu0
      %v2244 = vpop.f32.mrb[0].mxu0
      %v2245 = vadd.f32 0.0, %v2244
      %v2246 = vpop.f32.mrb[0].mxu0
      %2247 = vmatprep.mubr.bf16.mxu0 0
      %2248 = vmatmul.mubr.bf16.gmra.mrb[0].mxu0 %v2100
      %v2249 = vpop.f32.mrb[0].mxu0
      %v2250 = vadd.f32 0.0, %v2249
      %v2251 = vpop.f32.mrb[0].mxu0
      %v2252 = vpop.f32.mrb[0].mxu0
      %v2253 = vadd.f32 0.0, %v2252
      %v2254 = vpop.f32.mrb[0].mxu0
      %2255 = vmatprep.mubr.bf16.mxu0 0
      %2256 = vmatmul.mubr.bf16.gmra.mrb[0].mxu0 %v2103
      %v2257 = vpop.f32.mrb[0].mxu0
      %v2258 = vadd.f32 0.0, %v2257
      %v2259 = vpop.f32.mrb[0].mxu0
      %v2260 = vpop.f32.mrb[0].mxu0
      %v2261 = vadd.f32 0.0, %v2260
      %v2262 = vpop.f32.mrb[0].mxu0
      %2263 = vmatprep.mubr.bf16.mxu0 0
      %2264 = vmatmul.mubr.bf16.gmra.mrb[0].mxu0 %v2106
      %v2265 = vpop.f32.mrb[0].mxu0
      %v2266 = vadd.f32 0.0, %v2265
      %v2267 = vpop.f32.mrb[0].mxu0
      %v2268 = vpop.f32.mrb[0].mxu0
      %v2269 = vadd.f32 0.0, %v2268
      %v2270 = vpop.f32.mrb[0].mxu0
      %2271 = vdwg.mxu0
      %v2272 = vadd.f32 %v1903, %v2146
      %v2273 = vadd.f32 %v1904, %v2149
      %v2274 = vadd.f32 %v1905, %v2154
      %v2275 = vadd.f32 %v1906, %v2157
      %v2276 = vadd.f32 %v1907, %v2162
      %v2277 = vadd.f32 %v1908, %v2165
      %v2278 = vadd.f32 %v1909, %v2170
      %v2279 = vadd.f32 %v1910, %v2173
      %v2280 = vadd.f32 %v1911, %v2178
      %v2281 = vadd.f32 %v1912, %v2181
      %v2282 = vadd.f32 %v1913, %v2186
      %v2283 = vadd.f32 %v1914, %v2189
      %v2284 = vadd.f32 %v1915, %v2194
      %v2285 = vadd.f32 %v1916, %v2197
      %v2286 = vadd.f32 %v1917, %v2202
      %v2287 = vadd.f32 %v1918, %v2205
      %v2288 = vadd.f32 %v1919, %v2210
      %v2289 = vadd.f32 %v1920, %v2213
      %v2290 = vadd.f32 %v1921, %v2218
      %v2291 = vadd.f32 %v1922, %v2221
      %v2292 = vadd.f32 %v1923, %v2226
      %v2293 = vadd.f32 %v1924, %v2229
      %v2294 = vadd.f32 %v1925, %v2234
      %v2295 = vadd.f32 %v1926, %v2237
      %v2296 = vadd.f32 %v1927, %v2242
      %v2297 = vadd.f32 %v1928, %v2245
      %v2298 = vadd.f32 %v1929, %v2250
      %v2299 = vadd.f32 %v1930, %v2253
      %v2300 = vadd.f32 %v1931, %v2258
      %v2301 = vadd.f32 %v1932, %v2261
      %v2302 = vadd.f32 %v1933, %v2266
      %v2303 = vadd.f32 %v1934, %v2269
      %s2304 = sadd.s32 %s153, 320
      %s2305 = sshra.s32 %s2304, 3
      %s2306 = sand.u32 %s2304, 7
      %s2307 = smul.addr %s2305, 4
      %s2308 = scalar_lea.vmem %s0, %s2307
      %v2309 = vld [vmem:[%s2308] sm:$0xf]
      %v2310 = vld [vmem:[%s2308 + $0x4] sm:$0xf]
      %v2311 = vld [vmem:[%s2308 + $0x8] sm:$0xf]
      %v2312 = vld [vmem:[%s2308 + $0xc] sm:$0xf]
      %v2313 = vld [vmem:[%s2308 + $0x10] sm:$0xf]
      %v2314 = vld [vmem:[%s2308 + $0x14] sm:$0xf]
      %v2315 = vld [vmem:[%s2308 + $0x18] sm:$0xf]
      %v2316 = vld [vmem:[%s2308 + $0x1c] sm:$0xf]
      %v2317 = vld [vmem:[%s2308 + $0x20] sm:$0xf]
      %v2318 = vld [vmem:[%s2308 + $0x24] sm:$0xf]
      %v2319 = vld [vmem:[%s2308 + $0x28] sm:$0xf]
      %v2320 = vld [vmem:[%s2308 + $0x2c] sm:$0xf]
      %v2321 = vld [vmem:[%s2308 + $0x30] sm:$0xf]
      %v2322 = vld [vmem:[%s2308 + $0x34] sm:$0xf]
      %v2323 = vld [vmem:[%s2308 + $0x38] sm:$0xf]
      %v2324 = vld [vmem:[%s2308 + $0x3c] sm:$0xf]
      %v2325 = vld [vmem:[%s2308 + $0x40] sm:$0xf]
      %v2326 = vld [vmem:[%s2308 + $0x44] sm:$0xf]
      %v2327 = vld [vmem:[%s2308 + $0x48] sm:$0xf]
      %v2328 = vld [vmem:[%s2308 + $0x4c] sm:$0xf]
      %v2329 = vld [vmem:[%s2308 + $0x50] sm:$0xf]
      %v2330 = vld [vmem:[%s2308 + $0x54] sm:$0xf]
      %v2331 = vld [vmem:[%s2308 + $0x58] sm:$0xf]
      %v2332 = vld [vmem:[%s2308 + $0x5c] sm:$0xf]
      %v2333 = vld [vmem:[%s2308 + $0x60] sm:$0xf]
      %v2334 = vld [vmem:[%s2308 + $0x64] sm:$0xf]
      %v2335 = vld [vmem:[%s2308 + $0x68] sm:$0xf]
      %v2336 = vld [vmem:[%s2308 + $0x6c] sm:$0xf]
      %v2337 = vld [vmem:[%s2308 + $0x70] sm:$0xf]
      %v2338 = vld [vmem:[%s2308 + $0x74] sm:$0xf]
      %v2339 = vld [vmem:[%s2308 + $0x78] sm:$0xf]
      %v2340 = vld [vmem:[%s2308 + $0x7c] sm:$0xf]
      %s2341 = scalar_lea.vmem %s1, 48
      %v2342 = vld [vmem:[%s2341] sm:$0xf]
      %v2343 = vld [vmem:[%s2341 + $0x4] sm:$0x3]
      %v2376 = vunpack.c.l.b16 %v2309
      %v2377 = vunpack.c.l.b16 %v2310
      %v2378 = vunpack.c.l.b16 %v2311
      %v2379 = vunpack.c.l.b16 %v2312
      %v2380 = vunpack.c.l.b16 %v2313
      %v2381 = vunpack.c.l.b16 %v2314
      %v2382 = vunpack.c.l.b16 %v2315
      %v2383 = vunpack.c.l.b16 %v2316
      %v2384 = vunpack.c.l.b16 %v2317
      %v2385 = vunpack.c.l.b16 %v2318
      %v2386 = vunpack.c.l.b16 %v2319
      %v2387 = vunpack.c.l.b16 %v2320
      %v2388 = vunpack.c.l.b16 %v2321
      %v2389 = vunpack.c.l.b16 %v2322
      %v2390 = vunpack.c.l.b16 %v2323
      %v2391 = vunpack.c.l.b16 %v2324
      %v2392 = vunpack.c.l.b16 %v2325
      %v2393 = vunpack.c.l.b16 %v2326
      %v2394 = vunpack.c.l.b16 %v2327
      %v2395 = vunpack.c.l.b16 %v2328
      %v2396 = vunpack.c.l.b16 %v2329
      %v2397 = vunpack.c.l.b16 %v2330
      %v2398 = vunpack.c.l.b16 %v2331
      %v2399 = vunpack.c.l.b16 %v2332
      %v2400 = vunpack.c.l.b16 %v2333
      %v2401 = vunpack.c.l.b16 %v2334
      %v2402 = vunpack.c.l.b16 %v2335
      %v2403 = vunpack.c.l.b16 %v2336
      %v2404 = vunpack.c.l.b16 %v2337
      %v2405 = vunpack.c.l.b16 %v2338
      %v2406 = vunpack.c.l.b16 %v2339
      %v2407 = vunpack.c.l.b16 %v2340
      %v2408 = vpack.c.b16 %v2377, %v2376
      %v2409 = vpack.c.b16 %v2379, %v2378
      %v2410 = vpack.c.b16 %v2381, %v2380
      %v2411 = vpack.c.b16 %v2383, %v2382
      %v2412 = vpack.c.b16 %v2385, %v2384
      %v2413 = vpack.c.b16 %v2387, %v2386
      %v2414 = vpack.c.b16 %v2389, %v2388
      %v2415 = vpack.c.b16 %v2391, %v2390
      %v2416 = vpack.c.b16 %v2393, %v2392
      %v2417 = vpack.c.b16 %v2395, %v2394
      %v2418 = vpack.c.b16 %v2397, %v2396
      %v2419 = vpack.c.b16 %v2399, %v2398
      %v2420 = vpack.c.b16 %v2401, %v2400
      %v2421 = vpack.c.b16 %v2403, %v2402
      %v2422 = vpack.c.b16 %v2405, %v2404
      %v2423 = vpack.c.b16 %v2407, %v2406
      %v2426 = vunpack.c.l.b16 %v2342
      %v2427 = vunpack.c.l.b16 %v2343
      %v2428 = vpack.c.b16 %v2427, %v2426
      %v2430 = vsel %vm317, %v2408, 0
      %v2433 = vsel %vm317, %v2409, 0
      %v2436 = vsel %vm317, %v2410, 0
      %v2439 = vsel %vm317, %v2411, 0
      %v2442 = vsel %vm317, %v2412, 0
      %v2445 = vsel %vm317, %v2413, 0
      %v2448 = vsel %vm317, %v2414, 0
      %v2451 = vsel %vm317, %v2415, 0
      %v2454 = vsel %vm317, %v2416, 0
      %v2457 = vsel %vm317, %v2417, 0
      %v2460 = vsel %vm317, %v2418, 0
      %v2463 = vsel %vm317, %v2419, 0
      %v2466 = vsel %vm317, %v2420, 0
      %v2469 = vsel %vm317, %v2421, 0
      %v2472 = vsel %vm317, %v2422, 0
      %v2475 = vsel %vm317, %v2423, 0
      %v2478 = vsel %vm366, %v2428, 0
      %2480 = vmatprep.subr.bf16.mxu0 0
      %2481 = vmatpush1.bf16.msra.mxu0 %v2478
      %2482 = vmatprep.subr.bf16.mxu0 0
      %2483 = vmatpush1.bf16.msra.mxu0 0
      %2484 = vmatprep.subr.bf16.mxu0 0
      %2485 = vmatpush1.bf16.msra.mxu0 0
      %2486 = vmatprep.subr.bf16.mxu0 0
      %2487 = vmatpush1.bf16.msra.mxu0 0
      %2488 = vmatprep.subr.bf16.mxu0 0
      %2489 = vmatpush1.bf16.msra.mxu0 0
      %2490 = vmatprep.subr.bf16.mxu0 0
      %2491 = vmatpush1.bf16.msra.mxu0 0
      %2492 = vmatprep.subr.bf16.mxu0 0
      %2493 = vmatpush1.bf16.msra.mxu0 0
      %2494 = vmatprep.subr.bf16.mxu0 0
      %2495 = vmatpush1.bf16.msra.mxu0 0
      %2496 = vmatprep.subr.bf16.mxu0 0
      %2497 = vmatpush1.bf16.msra.mxu0 0
      %2498 = vmatprep.subr.bf16.mxu0 0
      %2499 = vmatpush1.bf16.msra.mxu0 0
      %2500 = vmatprep.subr.bf16.mxu0 0
      %2501 = vmatpush1.bf16.msra.mxu0 0
      %2502 = vmatprep.subr.bf16.mxu0 0
      %2503 = vmatpush1.bf16.msra.mxu0 0
      %2504 = vmatprep.subr.bf16.mxu0 0
      %2505 = vmatpush1.bf16.msra.mxu0 0
      %2506 = vmatprep.subr.bf16.mxu0 0
      %2507 = vmatpush1.bf16.msra.mxu0 0
      %2508 = vmatprep.subr.bf16.mxu0 0
      %2509 = vmatpush1.bf16.msra.mxu0 0
      %2510 = vmatprep.subr.bf16.mxu0 0
      %2511 = vmatpush1.bf16.msra.mxu0 0
      %2512 = vmatprep.mubr.bf16.mxu0 0
      %2513 = vmatmul.mubr.bf16.gmra.mrb[0].mxu0 %v2430
      %v2514 = vpop.f32.mrb[0].mxu0
      %v2515 = vadd.f32 0.0, %v2514
      %v2516 = vpop.f32.mrb[0].mxu0
      %v2517 = vpop.f32.mrb[0].mxu0
      %v2518 = vadd.f32 0.0, %v2517
      %v2519 = vpop.f32.mrb[0].mxu0
      %2520 = vmatprep.mubr.bf16.mxu0 0
      %2521 = vmatmul.mubr.bf16.gmra.mrb[0].mxu0 %v2433
      %v2522 = vpop.f32.mrb[0].mxu0
      %v2523 = vadd.f32 0.0, %v2522
      %v2524 = vpop.f32.mrb[0].mxu0
      %v2525 = vpop.f32.mrb[0].mxu0
      %v2526 = vadd.f32 0.0, %v2525
      %v2527 = vpop.f32.mrb[0].mxu0
      %2528 = vmatprep.mubr.bf16.mxu0 0
      %2529 = vmatmul.mubr.bf16.gmra.mrb[0].mxu0 %v2436
      %v2530 = vpop.f32.mrb[0].mxu0
      %v2531 = vadd.f32 0.0, %v2530
      %v2532 = vpop.f32.mrb[0].mxu0
      %v2533 = vpop.f32.mrb[0].mxu0
      %v2534 = vadd.f32 0.0, %v2533
      %v2535 = vpop.f32.mrb[0].mxu0
      %2536 = vmatprep.mubr.bf16.mxu0 0
      %2537 = vmatmul.mubr.bf16.gmra.mrb[0].mxu0 %v2439
      %v2538 = vpop.f32.mrb[0].mxu0
      %v2539 = vadd.f32 0.0, %v2538
      %v2540 = vpop.f32.mrb[0].mxu0
      %v2541 = vpop.f32.mrb[0].mxu0
      %v2542 = vadd.f32 0.0, %v2541
      %v2543 = vpop.f32.mrb[0].mxu0
      %2544 = vmatprep.mubr.bf16.mxu0 0
      %2545 = vmatmul.mubr.bf16.gmra.mrb[0].mxu0 %v2442
      %v2546 = vpop.f32.mrb[0].mxu0
      %v2547 = vadd.f32 0.0, %v2546
      %v2548 = vpop.f32.mrb[0].mxu0
      %v2549 = vpop.f32.mrb[0].mxu0
      %v2550 = vadd.f32 0.0, %v2549
      %v2551 = vpop.f32.mrb[0].mxu0
      %2552 = vmatprep.mubr.bf16.mxu0 0
      %2553 = vmatmul.mubr.bf16.gmra.mrb[0].mxu0 %v2445
      %v2554 = vpop.f32.mrb[0].mxu0
      %v2555 = vadd.f32 0.0, %v2554
      %v2556 = vpop.f32.mrb[0].mxu0
      %v2557 = vpop.f32.mrb[0].mxu0
      %v2558 = vadd.f32 0.0, %v2557
      %v2559 = vpop.f32.mrb[0].mxu0
      %2560 = vmatprep.mubr.bf16.mxu0 0
      %2561 = vmatmul.mubr.bf16.gmra.mrb[0].mxu0 %v2448
      %v2562 = vpop.f32.mrb[0].mxu0
      %v2563 = vadd.f32 0.0, %v2562
      %v2564 = vpop.f32.mrb[0].mxu0
      %v2565 = vpop.f32.mrb[0].mxu0
      %v2566 = vadd.f32 0.0, %v2565
      %v2567 = vpop.f32.mrb[0].mxu0
      %2568 = vmatprep.mubr.bf16.mxu0 0
      %2569 = vmatmul.mubr.bf16.gmra.mrb[0].mxu0 %v2451
      %v2570 = vpop.f32.mrb[0].mxu0
      %v2571 = vadd.f32 0.0, %v2570
      %v2572 = vpop.f32.mrb[0].mxu0
      %v2573 = vpop.f32.mrb[0].mxu0
      %v2574 = vadd.f32 0.0, %v2573
      %v2575 = vpop.f32.mrb[0].mxu0
      %2576 = vmatprep.mubr.bf16.mxu0 0
      %2577 = vmatmul.mubr.bf16.gmra.mrb[0].mxu0 %v2454
      %v2578 = vpop.f32.mrb[0].mxu0
      %v2579 = vadd.f32 0.0, %v2578
      %v2580 = vpop.f32.mrb[0].mxu0
      %v2581 = vpop.f32.mrb[0].mxu0
      %v2582 = vadd.f32 0.0, %v2581
      %v2583 = vpop.f32.mrb[0].mxu0
      %2584 = vmatprep.mubr.bf16.mxu0 0
      %2585 = vmatmul.mubr.bf16.gmra.mrb[0].mxu0 %v2457
      %v2586 = vpop.f32.mrb[0].mxu0
      %v2587 = vadd.f32 0.0, %v2586
      %v2588 = vpop.f32.mrb[0].mxu0
      %v2589 = vpop.f32.mrb[0].mxu0
      %v2590 = vadd.f32 0.0, %v2589
      %v2591 = vpop.f32.mrb[0].mxu0
      %2592 = vmatprep.mubr.bf16.mxu0 0
      %2593 = vmatmul.mubr.bf16.gmra.mrb[0].mxu0 %v2460
      %v2594 = vpop.f32.mrb[0].mxu0
      %v2595 = vadd.f32 0.0, %v2594
      %v2596 = vpop.f32.mrb[0].mxu0
      %v2597 = vpop.f32.mrb[0].mxu0
      %v2598 = vadd.f32 0.0, %v2597
      %v2599 = vpop.f32.mrb[0].mxu0
      %2600 = vmatprep.mubr.bf16.mxu0 0
      %2601 = vmatmul.mubr.bf16.gmra.mrb[0].mxu0 %v2463
      %v2602 = vpop.f32.mrb[0].mxu0
      %v2603 = vadd.f32 0.0, %v2602
      %v2604 = vpop.f32.mrb[0].mxu0
      %v2605 = vpop.f32.mrb[0].mxu0
      %v2606 = vadd.f32 0.0, %v2605
      %v2607 = vpop.f32.mrb[0].mxu0
      %2608 = vmatprep.mubr.bf16.mxu0 0
      %2609 = vmatmul.mubr.bf16.gmra.mrb[0].mxu0 %v2466
      %v2610 = vpop.f32.mrb[0].mxu0
      %v2611 = vadd.f32 0.0, %v2610
      %v2612 = vpop.f32.mrb[0].mxu0
      %v2613 = vpop.f32.mrb[0].mxu0
      %v2614 = vadd.f32 0.0, %v2613
      %v2615 = vpop.f32.mrb[0].mxu0
      %2616 = vmatprep.mubr.bf16.mxu0 0
      %2617 = vmatmul.mubr.bf16.gmra.mrb[0].mxu0 %v2469
      %v2618 = vpop.f32.mrb[0].mxu0
      %v2619 = vadd.f32 0.0, %v2618
      %v2620 = vpop.f32.mrb[0].mxu0
      %v2621 = vpop.f32.mrb[0].mxu0
      %v2622 = vadd.f32 0.0, %v2621
      %v2623 = vpop.f32.mrb[0].mxu0
      %2624 = vmatprep.mubr.bf16.mxu0 0
      %2625 = vmatmul.mubr.bf16.gmra.mrb[0].mxu0 %v2472
      %v2626 = vpop.f32.mrb[0].mxu0
      %v2627 = vadd.f32 0.0, %v2626
      %v2628 = vpop.f32.mrb[0].mxu0
      %v2629 = vpop.f32.mrb[0].mxu0
      %v2630 = vadd.f32 0.0, %v2629
      %v2631 = vpop.f32.mrb[0].mxu0
      %2632 = vmatprep.mubr.bf16.mxu0 0
      %2633 = vmatmul.mubr.bf16.gmra.mrb[0].mxu0 %v2475
      %v2634 = vpop.f32.mrb[0].mxu0
      %v2635 = vadd.f32 0.0, %v2634
      %v2636 = vpop.f32.mrb[0].mxu0
      %v2637 = vpop.f32.mrb[0].mxu0
      %v2638 = vadd.f32 0.0, %v2637
      %v2639 = vpop.f32.mrb[0].mxu0
      %2640 = vdwg.mxu0
      %v2641 = vadd.f32 %v2272, %v2515
      %v2642 = vadd.f32 %v2273, %v2518
      %v2643 = vadd.f32 %v2274, %v2523
      %v2644 = vadd.f32 %v2275, %v2526
      %v2645 = vadd.f32 %v2276, %v2531
      %v2646 = vadd.f32 %v2277, %v2534
      %v2647 = vadd.f32 %v2278, %v2539
      %v2648 = vadd.f32 %v2279, %v2542
      %v2649 = vadd.f32 %v2280, %v2547
      %v2650 = vadd.f32 %v2281, %v2550
      %v2651 = vadd.f32 %v2282, %v2555
      %v2652 = vadd.f32 %v2283, %v2558
      %v2653 = vadd.f32 %v2284, %v2563
      %v2654 = vadd.f32 %v2285, %v2566
      %v2655 = vadd.f32 %v2286, %v2571
      %v2656 = vadd.f32 %v2287, %v2574
      %v2657 = vadd.f32 %v2288, %v2579
      %v2658 = vadd.f32 %v2289, %v2582
      %v2659 = vadd.f32 %v2290, %v2587
      %v2660 = vadd.f32 %v2291, %v2590
      %v2661 = vadd.f32 %v2292, %v2595
      %v2662 = vadd.f32 %v2293, %v2598
      %v2663 = vadd.f32 %v2294, %v2603
      %v2664 = vadd.f32 %v2295, %v2606
      %v2665 = vadd.f32 %v2296, %v2611
      %v2666 = vadd.f32 %v2297, %v2614
      %v2667 = vadd.f32 %v2298, %v2619
      %v2668 = vadd.f32 %v2299, %v2622
      %v2669 = vadd.f32 %v2300, %v2627
      %v2670 = vadd.f32 %v2301, %v2630
      %v2671 = vadd.f32 %v2302, %v2635
      %v2672 = vadd.f32 %v2303, %v2638
      %s2673 = sadd.s32 %s153, 336
      %s2674 = sshra.s32 %s2673, 3
      %s2675 = sand.u32 %s2673, 7
      %s2676 = smul.addr %s2674, 4
      %s2677 = scalar_lea.vmem %s0, %s2676
      %v2678 = vld [vmem:[%s2677] sm:$0xf]
      %v2679 = vld [vmem:[%s2677 + $0x4] sm:$0xf]
      %v2680 = vld [vmem:[%s2677 + $0x8] sm:$0xf]
      %v2681 = vld [vmem:[%s2677 + $0xc] sm:$0xf]
      %v2682 = vld [vmem:[%s2677 + $0x10] sm:$0xf]
      %v2683 = vld [vmem:[%s2677 + $0x14] sm:$0xf]
      %v2684 = vld [vmem:[%s2677 + $0x18] sm:$0xf]
      %v2685 = vld [vmem:[%s2677 + $0x1c] sm:$0xf]
      %v2686 = vld [vmem:[%s2677 + $0x20] sm:$0xf]
      %v2687 = vld [vmem:[%s2677 + $0x24] sm:$0xf]
      %v2688 = vld [vmem:[%s2677 + $0x28] sm:$0xf]
      %v2689 = vld [vmem:[%s2677 + $0x2c] sm:$0xf]
      %v2690 = vld [vmem:[%s2677 + $0x30] sm:$0xf]
      %v2691 = vld [vmem:[%s2677 + $0x34] sm:$0xf]
      %v2692 = vld [vmem:[%s2677 + $0x38] sm:$0xf]
      %v2693 = vld [vmem:[%s2677 + $0x3c] sm:$0xf]
      %v2694 = vld [vmem:[%s2677 + $0x40] sm:$0xf]
      %v2695 = vld [vmem:[%s2677 + $0x44] sm:$0xf]
      %v2696 = vld [vmem:[%s2677 + $0x48] sm:$0xf]
      %v2697 = vld [vmem:[%s2677 + $0x4c] sm:$0xf]
      %v2698 = vld [vmem:[%s2677 + $0x50] sm:$0xf]
      %v2699 = vld [vmem:[%s2677 + $0x54] sm:$0xf]
      %v2700 = vld [vmem:[%s2677 + $0x58] sm:$0xf]
      %v2701 = vld [vmem:[%s2677 + $0x5c] sm:$0xf]
      %v2702 = vld [vmem:[%s2677 + $0x60] sm:$0xf]
      %v2703 = vld [vmem:[%s2677 + $0x64] sm:$0xf]
      %v2704 = vld [vmem:[%s2677 + $0x68] sm:$0xf]
      %v2705 = vld [vmem:[%s2677 + $0x6c] sm:$0xf]
      %v2706 = vld [vmem:[%s2677 + $0x70] sm:$0xf]
      %v2707 = vld [vmem:[%s2677 + $0x74] sm:$0xf]
      %v2708 = vld [vmem:[%s2677 + $0x78] sm:$0xf]
      %v2709 = vld [vmem:[%s2677 + $0x7c] sm:$0xf]
      %s2710 = scalar_lea.vmem %s1, 56
      %v2711 = vld [vmem:[%s2710] sm:$0xf]
      %v2712 = vld [vmem:[%s2710 + $0x4] sm:$0x3]
      %v2745 = vunpack.c.l.b16 %v2678
      %v2746 = vunpack.c.l.b16 %v2679
      %v2747 = vunpack.c.l.b16 %v2680
      %v2748 = vunpack.c.l.b16 %v2681
      %v2749 = vunpack.c.l.b16 %v2682
      %v2750 = vunpack.c.l.b16 %v2683
      %v2751 = vunpack.c.l.b16 %v2684
      %v2752 = vunpack.c.l.b16 %v2685
      %v2753 = vunpack.c.l.b16 %v2686
      %v2754 = vunpack.c.l.b16 %v2687
      %v2755 = vunpack.c.l.b16 %v2688
      %v2756 = vunpack.c.l.b16 %v2689
      %v2757 = vunpack.c.l.b16 %v2690
      %v2758 = vunpack.c.l.b16 %v2691
      %v2759 = vunpack.c.l.b16 %v2692
      %v2760 = vunpack.c.l.b16 %v2693
      %v2761 = vunpack.c.l.b16 %v2694
      %v2762 = vunpack.c.l.b16 %v2695
      %v2763 = vunpack.c.l.b16 %v2696
      %v2764 = vunpack.c.l.b16 %v2697
      %v2765 = vunpack.c.l.b16 %v2698
      %v2766 = vunpack.c.l.b16 %v2699
      %v2767 = vunpack.c.l.b16 %v2700
      %v2768 = vunpack.c.l.b16 %v2701
      %v2769 = vunpack.c.l.b16 %v2702
      %v2770 = vunpack.c.l.b16 %v2703
      %v2771 = vunpack.c.l.b16 %v2704
      %v2772 = vunpack.c.l.b16 %v2705
      %v2773 = vunpack.c.l.b16 %v2706
      %v2774 = vunpack.c.l.b16 %v2707
      %v2775 = vunpack.c.l.b16 %v2708
      %v2776 = vunpack.c.l.b16 %v2709
      %v2777 = vpack.c.b16 %v2746, %v2745
      %v2778 = vpack.c.b16 %v2748, %v2747
      %v2779 = vpack.c.b16 %v2750, %v2749
      %v2780 = vpack.c.b16 %v2752, %v2751
      %v2781 = vpack.c.b16 %v2754, %v2753
      %v2782 = vpack.c.b16 %v2756, %v2755
      %v2783 = vpack.c.b16 %v2758, %v2757
      %v2784 = vpack.c.b16 %v2760, %v2759
      %v2785 = vpack.c.b16 %v2762, %v2761
      %v2786 = vpack.c.b16 %v2764, %v2763
      %v2787 = vpack.c.b16 %v2766, %v2765
      %v2788 = vpack.c.b16 %v2768, %v2767
      %v2789 = vpack.c.b16 %v2770, %v2769
      %v2790 = vpack.c.b16 %v2772, %v2771
      %v2791 = vpack.c.b16 %v2774, %v2773
      %v2792 = vpack.c.b16 %v2776, %v2775
      %v2795 = vunpack.c.l.b16 %v2711
      %v2796 = vunpack.c.l.b16 %v2712
      %v2797 = vpack.c.b16 %v2796, %v2795
      %v2799 = vsel %vm317, %v2777, 0
      %v2802 = vsel %vm317, %v2778, 0
      %v2805 = vsel %vm317, %v2779, 0
      %v2808 = vsel %vm317, %v2780, 0
      %v2811 = vsel %vm317, %v2781, 0
      %v2814 = vsel %vm317, %v2782, 0
      %v2817 = vsel %vm317, %v2783, 0
      %v2820 = vsel %vm317, %v2784, 0
      %v2823 = vsel %vm317, %v2785, 0
      %v2826 = vsel %vm317, %v2786, 0
      %v2829 = vsel %vm317, %v2787, 0
      %v2832 = vsel %vm317, %v2788, 0
      %v2835 = vsel %vm317, %v2789, 0
      %v2838 = vsel %vm317, %v2790, 0
      %v2841 = vsel %vm317, %v2791, 0
      %v2844 = vsel %vm317, %v2792, 0
      %v2847 = vsel %vm366, %v2797, 0
      %2849 = vmatprep.subr.bf16.mxu0 0
      %2850 = vmatpush1.bf16.msra.mxu0 %v2847
      %2851 = vmatprep.subr.bf16.mxu0 0
      %2852 = vmatpush1.bf16.msra.mxu0 0
      %2853 = vmatprep.subr.bf16.mxu0 0
      %2854 = vmatpush1.bf16.msra.mxu0 0
      %2855 = vmatprep.subr.bf16.mxu0 0
      %2856 = vmatpush1.bf16.msra.mxu0 0
      %2857 = vmatprep.subr.bf16.mxu0 0
      %2858 = vmatpush1.bf16.msra.mxu0 0
      %2859 = vmatprep.subr.bf16.mxu0 0
      %2860 = vmatpush1.bf16.msra.mxu0 0
      %2861 = vmatprep.subr.bf16.mxu0 0
      %2862 = vmatpush1.bf16.msra.mxu0 0
      %2863 = vmatprep.subr.bf16.mxu0 0
      %2864 = vmatpush1.bf16.msra.mxu0 0
      %2865 = vmatprep.subr.bf16.mxu0 0
      %2866 = vmatpush1.bf16.msra.mxu0 0
      %2867 = vmatprep.subr.bf16.mxu0 0
      %2868 = vmatpush1.bf16.msra.mxu0 0
      %2869 = vmatprep.subr.bf16.mxu0 0
      %2870 = vmatpush1.bf16.msra.mxu0 0
      %2871 = vmatprep.subr.bf16.mxu0 0
      %2872 = vmatpush1.bf16.msra.mxu0 0
      %2873 = vmatprep.subr.bf16.mxu0 0
      %2874 = vmatpush1.bf16.msra.mxu0 0
      %2875 = vmatprep.subr.bf16.mxu0 0
      %2876 = vmatpush1.bf16.msra.mxu0 0
      %2877 = vmatprep.subr.bf16.mxu0 0
      %2878 = vmatpush1.bf16.msra.mxu0 0
      %2879 = vmatprep.subr.bf16.mxu0 0
      %2880 = vmatpush1.bf16.msra.mxu0 0
      %2881 = vmatprep.mubr.bf16.mxu0 0
      %2882 = vmatmul.mubr.bf16.gmra.mrb[0].mxu0 %v2799
      %v2883 = vpop.f32.mrb[0].mxu0
      %v2884 = vadd.f32 0.0, %v2883
      %v2885 = vpop.f32.mrb[0].mxu0
      %v2886 = vpop.f32.mrb[0].mxu0
      %v2887 = vadd.f32 0.0, %v2886
      %v2888 = vpop.f32.mrb[0].mxu0
      %2889 = vmatprep.mubr.bf16.mxu0 0
      %2890 = vmatmul.mubr.bf16.gmra.mrb[0].mxu0 %v2802
      %v2891 = vpop.f32.mrb[0].mxu0
      %v2892 = vadd.f32 0.0, %v2891
      %v2893 = vpop.f32.mrb[0].mxu0
      %v2894 = vpop.f32.mrb[0].mxu0
      %v2895 = vadd.f32 0.0, %v2894
      %v2896 = vpop.f32.mrb[0].mxu0
      %2897 = vmatprep.mubr.bf16.mxu0 0
      %2898 = vmatmul.mubr.bf16.gmra.mrb[0].mxu0 %v2805
      %v2899 = vpop.f32.mrb[0].mxu0
      %v2900 = vadd.f32 0.0, %v2899
      %v2901 = vpop.f32.mrb[0].mxu0
      %v2902 = vpop.f32.mrb[0].mxu0
      %v2903 = vadd.f32 0.0, %v2902
      %v2904 = vpop.f32.mrb[0].mxu0
      %2905 = vmatprep.mubr.bf16.mxu0 0
      %2906 = vmatmul.mubr.bf16.gmra.mrb[0].mxu0 %v2808
      %v2907 = vpop.f32.mrb[0].mxu0
      %v2908 = vadd.f32 0.0, %v2907
      %v2909 = vpop.f32.mrb[0].mxu0
      %v2910 = vpop.f32.mrb[0].mxu0
      %v2911 = vadd.f32 0.0, %v2910
      %v2912 = vpop.f32.mrb[0].mxu0
      %2913 = vmatprep.mubr.bf16.mxu0 0
      %2914 = vmatmul.mubr.bf16.gmra.mrb[0].mxu0 %v2811
      %v2915 = vpop.f32.mrb[0].mxu0
      %v2916 = vadd.f32 0.0, %v2915
      %v2917 = vpop.f32.mrb[0].mxu0
      %v2918 = vpop.f32.mrb[0].mxu0
      %v2919 = vadd.f32 0.0, %v2918
      %v2920 = vpop.f32.mrb[0].mxu0
      %2921 = vmatprep.mubr.bf16.mxu0 0
      %2922 = vmatmul.mubr.bf16.gmra.mrb[0].mxu0 %v2814
      %v2923 = vpop.f32.mrb[0].mxu0
      %v2924 = vadd.f32 0.0, %v2923
      %v2925 = vpop.f32.mrb[0].mxu0
      %v2926 = vpop.f32.mrb[0].mxu0
      %v2927 = vadd.f32 0.0, %v2926
      %v2928 = vpop.f32.mrb[0].mxu0
      %2929 = vmatprep.mubr.bf16.mxu0 0
      %2930 = vmatmul.mubr.bf16.gmra.mrb[0].mxu0 %v2817
      %v2931 = vpop.f32.mrb[0].mxu0
      %v2932 = vadd.f32 0.0, %v2931
      %v2933 = vpop.f32.mrb[0].mxu0
      %v2934 = vpop.f32.mrb[0].mxu0
      %v2935 = vadd.f32 0.0, %v2934
      %v2936 = vpop.f32.mrb[0].mxu0
      %2937 = vmatprep.mubr.bf16.mxu0 0
      %2938 = vmatmul.mubr.bf16.gmra.mrb[0].mxu0 %v2820
      %v2939 = vpop.f32.mrb[0].mxu0
      %v2940 = vadd.f32 0.0, %v2939
      %v2941 = vpop.f32.mrb[0].mxu0
      %v2942 = vpop.f32.mrb[0].mxu0
      %v2943 = vadd.f32 0.0, %v2942
      %v2944 = vpop.f32.mrb[0].mxu0
      %2945 = vmatprep.mubr.bf16.mxu0 0
      %2946 = vmatmul.mubr.bf16.gmra.mrb[0].mxu0 %v2823
      %v2947 = vpop.f32.mrb[0].mxu0
      %v2948 = vadd.f32 0.0, %v2947
      %v2949 = vpop.f32.mrb[0].mxu0
      %v2950 = vpop.f32.mrb[0].mxu0
      %v2951 = vadd.f32 0.0, %v2950
      %v2952 = vpop.f32.mrb[0].mxu0
      %2953 = vmatprep.mubr.bf16.mxu0 0
      %2954 = vmatmul.mubr.bf16.gmra.mrb[0].mxu0 %v2826
      %v2955 = vpop.f32.mrb[0].mxu0
      %v2956 = vadd.f32 0.0, %v2955
      %v2957 = vpop.f32.mrb[0].mxu0
      %v2958 = vpop.f32.mrb[0].mxu0
      %v2959 = vadd.f32 0.0, %v2958
      %v2960 = vpop.f32.mrb[0].mxu0
      %2961 = vmatprep.mubr.bf16.mxu0 0
      %2962 = vmatmul.mubr.bf16.gmra.mrb[0].mxu0 %v2829
      %v2963 = vpop.f32.mrb[0].mxu0
      %v2964 = vadd.f32 0.0, %v2963
      %v2965 = vpop.f32.mrb[0].mxu0
      %v2966 = vpop.f32.mrb[0].mxu0
      %v2967 = vadd.f32 0.0, %v2966
      %v2968 = vpop.f32.mrb[0].mxu0
      %2969 = vmatprep.mubr.bf16.mxu0 0
      %2970 = vmatmul.mubr.bf16.gmra.mrb[0].mxu0 %v2832
      %v2971 = vpop.f32.mrb[0].mxu0
      %v2972 = vadd.f32 0.0, %v2971
      %v2973 = vpop.f32.mrb[0].mxu0
      %v2974 = vpop.f32.mrb[0].mxu0
      %v2975 = vadd.f32 0.0, %v2974
      %v2976 = vpop.f32.mrb[0].mxu0
      %2977 = vmatprep.mubr.bf16.mxu0 0
      %2978 = vmatmul.mubr.bf16.gmra.mrb[0].mxu0 %v2835
      %v2979 = vpop.f32.mrb[0].mxu0
      %v2980 = vadd.f32 0.0, %v2979
      %v2981 = vpop.f32.mrb[0].mxu0
      %v2982 = vpop.f32.mrb[0].mxu0
      %v2983 = vadd.f32 0.0, %v2982
      %v2984 = vpop.f32.mrb[0].mxu0
      %2985 = vmatprep.mubr.bf16.mxu0 0
      %2986 = vmatmul.mubr.bf16.gmra.mrb[0].mxu0 %v2838
      %v2987 = vpop.f32.mrb[0].mxu0
      %v2988 = vadd.f32 0.0, %v2987
      %v2989 = vpop.f32.mrb[0].mxu0
      %v2990 = vpop.f32.mrb[0].mxu0
      %v2991 = vadd.f32 0.0, %v2990
      %v2992 = vpop.f32.mrb[0].mxu0
      %2993 = vmatprep.mubr.bf16.mxu0 0
      %2994 = vmatmul.mubr.bf16.gmra.mrb[0].mxu0 %v2841
      %v2995 = vpop.f32.mrb[0].mxu0
      %v2996 = vadd.f32 0.0, %v2995
      %v2997 = vpop.f32.mrb[0].mxu0
      %v2998 = vpop.f32.mrb[0].mxu0
      %v2999 = vadd.f32 0.0, %v2998
      %v3000 = vpop.f32.mrb[0].mxu0
      %3001 = vmatprep.mubr.bf16.mxu0 0
      %3002 = vmatmul.mubr.bf16.gmra.mrb[0].mxu0 %v2844
      %v3003 = vpop.f32.mrb[0].mxu0
      %v3004 = vadd.f32 0.0, %v3003
      %v3005 = vpop.f32.mrb[0].mxu0
      %v3006 = vpop.f32.mrb[0].mxu0
      %v3007 = vadd.f32 0.0, %v3006
      %v3008 = vpop.f32.mrb[0].mxu0
      %3009 = vdwg.mxu0
      %v3010 = vadd.f32 %v2641, %v2884
      %v3011 = vadd.f32 %v2642, %v2887
      %v3012 = vadd.f32 %v2643, %v2892
      %v3013 = vadd.f32 %v2644, %v2895
      %v3014 = vadd.f32 %v2645, %v2900
      %v3015 = vadd.f32 %v2646, %v2903
      %v3016 = vadd.f32 %v2647, %v2908
      %v3017 = vadd.f32 %v2648, %v2911
      %v3018 = vadd.f32 %v2649, %v2916
      %v3019 = vadd.f32 %v2650, %v2919
      %v3020 = vadd.f32 %v2651, %v2924
      %v3021 = vadd.f32 %v2652, %v2927
      %v3022 = vadd.f32 %v2653, %v2932
      %v3023 = vadd.f32 %v2654, %v2935
      %v3024 = vadd.f32 %v2655, %v2940
      %v3025 = vadd.f32 %v2656, %v2943
      %v3026 = vadd.f32 %v2657, %v2948
      %v3027 = vadd.f32 %v2658, %v2951
      %v3028 = vadd.f32 %v2659, %v2956
      %v3029 = vadd.f32 %v2660, %v2959
      %v3030 = vadd.f32 %v2661, %v2964
      %v3031 = vadd.f32 %v2662, %v2967
      %v3032 = vadd.f32 %v2663, %v2972
      %v3033 = vadd.f32 %v2664, %v2975
      %v3034 = vadd.f32 %v2665, %v2980
      %v3035 = vadd.f32 %v2666, %v2983
      %v3036 = vadd.f32 %v2667, %v2988
      %v3037 = vadd.f32 %v2668, %v2991
      %v3038 = vadd.f32 %v2669, %v2996
      %v3039 = vadd.f32 %v2670, %v2999
      %v3040 = vadd.f32 %v2671, %v3004
      %v3041 = vadd.f32 %v2672, %v3007
      %s3042 = sadd.s32 %s153, 352
      %s3043 = sshra.s32 %s3042, 3
      %s3044 = sand.u32 %s3042, 7
      %s3045 = smul.addr %s3043, 4
      %s3046 = scalar_lea.vmem %s0, %s3045
      %v3047 = vld [vmem:[%s3046] sm:$0xf]
      %v3048 = vld [vmem:[%s3046 + $0x4] sm:$0xf]
      %v3049 = vld [vmem:[%s3046 + $0x8] sm:$0xf]
      %v3050 = vld [vmem:[%s3046 + $0xc] sm:$0xf]
      %v3051 = vld [vmem:[%s3046 + $0x10] sm:$0xf]
      %v3052 = vld [vmem:[%s3046 + $0x14] sm:$0xf]
      %v3053 = vld [vmem:[%s3046 + $0x18] sm:$0xf]
      %v3054 = vld [vmem:[%s3046 + $0x1c] sm:$0xf]
      %v3055 = vld [vmem:[%s3046 + $0x20] sm:$0xf]
      %v3056 = vld [vmem:[%s3046 + $0x24] sm:$0xf]
      %v3057 = vld [vmem:[%s3046 + $0x28] sm:$0xf]
      %v3058 = vld [vmem:[%s3046 + $0x2c] sm:$0xf]
      %v3059 = vld [vmem:[%s3046 + $0x30] sm:$0xf]
      %v3060 = vld [vmem:[%s3046 + $0x34] sm:$0xf]
      %v3061 = vld [vmem:[%s3046 + $0x38] sm:$0xf]
      %v3062 = vld [vmem:[%s3046 + $0x3c] sm:$0xf]
      %v3063 = vld [vmem:[%s3046 + $0x40] sm:$0xf]
      %v3064 = vld [vmem:[%s3046 + $0x44] sm:$0xf]
      %v3065 = vld [vmem:[%s3046 + $0x48] sm:$0xf]
      %v3066 = vld [vmem:[%s3046 + $0x4c] sm:$0xf]
      %v3067 = vld [vmem:[%s3046 + $0x50] sm:$0xf]
      %v3068 = vld [vmem:[%s3046 + $0x54] sm:$0xf]
      %v3069 = vld [vmem:[%s3046 + $0x58] sm:$0xf]
      %v3070 = vld [vmem:[%s3046 + $0x5c] sm:$0xf]
      %v3071 = vld [vmem:[%s3046 + $0x60] sm:$0xf]
      %v3072 = vld [vmem:[%s3046 + $0x64] sm:$0xf]
      %v3073 = vld [vmem:[%s3046 + $0x68] sm:$0xf]
      %v3074 = vld [vmem:[%s3046 + $0x6c] sm:$0xf]
      %v3075 = vld [vmem:[%s3046 + $0x70] sm:$0xf]
      %v3076 = vld [vmem:[%s3046 + $0x74] sm:$0xf]
      %v3077 = vld [vmem:[%s3046 + $0x78] sm:$0xf]
      %v3078 = vld [vmem:[%s3046 + $0x7c] sm:$0xf]
      %s3079 = scalar_lea.vmem %s1, 64
      %v3080 = vld [vmem:[%s3079] sm:$0xf]
      %v3081 = vld [vmem:[%s3079 + $0x4] sm:$0x3]
      %v3114 = vunpack.c.l.b16 %v3047
      %v3115 = vunpack.c.l.b16 %v3048
      %v3116 = vunpack.c.l.b16 %v3049
      %v3117 = vunpack.c.l.b16 %v3050
      %v3118 = vunpack.c.l.b16 %v3051
      %v3119 = vunpack.c.l.b16 %v3052
      %v3120 = vunpack.c.l.b16 %v3053
      %v3121 = vunpack.c.l.b16 %v3054
      %v3122 = vunpack.c.l.b16 %v3055
      %v3123 = vunpack.c.l.b16 %v3056
      %v3124 = vunpack.c.l.b16 %v3057
      %v3125 = vunpack.c.l.b16 %v3058
      %v3126 = vunpack.c.l.b16 %v3059
      %v3127 = vunpack.c.l.b16 %v3060
      %v3128 = vunpack.c.l.b16 %v3061
      %v3129 = vunpack.c.l.b16 %v3062
      %v3130 = vunpack.c.l.b16 %v3063
      %v3131 = vunpack.c.l.b16 %v3064
      %v3132 = vunpack.c.l.b16 %v3065
      %v3133 = vunpack.c.l.b16 %v3066
      %v3134 = vunpack.c.l.b16 %v3067
      %v3135 = vunpack.c.l.b16 %v3068
      %v3136 = vunpack.c.l.b16 %v3069
      %v3137 = vunpack.c.l.b16 %v3070
      %v3138 = vunpack.c.l.b16 %v3071
      %v3139 = vunpack.c.l.b16 %v3072
      %v3140 = vunpack.c.l.b16 %v3073
      %v3141 = vunpack.c.l.b16 %v3074
      %v3142 = vunpack.c.l.b16 %v3075
      %v3143 = vunpack.c.l.b16 %v3076
      %v3144 = vunpack.c.l.b16 %v3077
      %v3145 = vunpack.c.l.b16 %v3078
      %v3146 = vpack.c.b16 %v3115, %v3114
      %v3147 = vpack.c.b16 %v3117, %v3116
      %v3148 = vpack.c.b16 %v3119, %v3118
      %v3149 = vpack.c.b16 %v3121, %v3120
      %v3150 = vpack.c.b16 %v3123, %v3122
      %v3151 = vpack.c.b16 %v3125, %v3124
      %v3152 = vpack.c.b16 %v3127, %v3126
      %v3153 = vpack.c.b16 %v3129, %v3128
      %v3154 = vpack.c.b16 %v3131, %v3130
      %v3155 = vpack.c.b16 %v3133, %v3132
      %v3156 = vpack.c.b16 %v3135, %v3134
      %v3157 = vpack.c.b16 %v3137, %v3136
      %v3158 = vpack.c.b16 %v3139, %v3138
      %v3159 = vpack.c.b16 %v3141, %v3140
      %v3160 = vpack.c.b16 %v3143, %v3142
      %v3161 = vpack.c.b16 %v3145, %v3144
      %v3164 = vunpack.c.l.b16 %v3080
      %v3165 = vunpack.c.l.b16 %v3081
      %v3166 = vpack.c.b16 %v3165, %v3164
      %v3168 = vsel %vm317, %v3146, 0
      %v3171 = vsel %vm317, %v3147, 0
      %v3174 = vsel %vm317, %v3148, 0
      %v3177 = vsel %vm317, %v3149, 0
      %v3180 = vsel %vm317, %v3150, 0
      %v3183 = vsel %vm317, %v3151, 0
      %v3186 = vsel %vm317, %v3152, 0
      %v3189 = vsel %vm317, %v3153, 0
      %v3192 = vsel %vm317, %v3154, 0
      %v3195 = vsel %vm317, %v3155, 0
      %v3198 = vsel %vm317, %v3156, 0
      %v3201 = vsel %vm317, %v3157, 0
      %v3204 = vsel %vm317, %v3158, 0
      %v3207 = vsel %vm317, %v3159, 0
      %v3210 = vsel %vm317, %v3160, 0
      %v3213 = vsel %vm317, %v3161, 0
      %v3216 = vsel %vm366, %v3166, 0
      %3218 = vmatprep.subr.bf16.mxu0 0
      %3219 = vmatpush1.bf16.msra.mxu0 %v3216
      %3220 = vmatprep.subr.bf16.mxu0 0
      %3221 = vmatpush1.bf16.msra.mxu0 0
      %3222 = vmatprep.subr.bf16.mxu0 0
      %3223 = vmatpush1.bf16.msra.mxu0 0
      %3224 = vmatprep.subr.bf16.mxu0 0
      %3225 = vmatpush1.bf16.msra.mxu0 0
      %3226 = vmatprep.subr.bf16.mxu0 0
      %3227 = vmatpush1.bf16.msra.mxu0 0
      %3228 = vmatprep.subr.bf16.mxu0 0
      %3229 = vmatpush1.bf16.msra.mxu0 0
      %3230 = vmatprep.subr.bf16.mxu0 0
      %3231 = vmatpush1.bf16.msra.mxu0 0
      %3232 = vmatprep.subr.bf16.mxu0 0
      %3233 = vmatpush1.bf16.msra.mxu0 0
      %3234 = vmatprep.subr.bf16.mxu0 0
      %3235 = vmatpush1.bf16.msra.mxu0 0
      %3236 = vmatprep.subr.bf16.mxu0 0
      %3237 = vmatpush1.bf16.msra.mxu0 0
      %3238 = vmatprep.subr.bf16.mxu0 0
      %3239 = vmatpush1.bf16.msra.mxu0 0
      %3240 = vmatprep.subr.bf16.mxu0 0
      %3241 = vmatpush1.bf16.msra.mxu0 0
      %3242 = vmatprep.subr.bf16.mxu0 0
      %3243 = vmatpush1.bf16.msra.mxu0 0
      %3244 = vmatprep.subr.bf16.mxu0 0
      %3245 = vmatpush1.bf16.msra.mxu0 0
      %3246 = vmatprep.subr.bf16.mxu0 0
      %3247 = vmatpush1.bf16.msra.mxu0 0
      %3248 = vmatprep.subr.bf16.mxu0 0
      %3249 = vmatpush1.bf16.msra.mxu0 0
      %3250 = vmatprep.mubr.bf16.mxu0 0
      %3251 = vmatmul.mubr.bf16.gmra.mrb[0].mxu0 %v3168
      %v3252 = vpop.f32.mrb[0].mxu0
      %v3253 = vadd.f32 0.0, %v3252
      %v3254 = vpop.f32.mrb[0].mxu0
      %v3255 = vpop.f32.mrb[0].mxu0
      %v3256 = vadd.f32 0.0, %v3255
      %v3257 = vpop.f32.mrb[0].mxu0
      %3258 = vmatprep.mubr.bf16.mxu0 0
      %3259 = vmatmul.mubr.bf16.gmra.mrb[0].mxu0 %v3171
      %v3260 = vpop.f32.mrb[0].mxu0
      %v3261 = vadd.f32 0.0, %v3260
      %v3262 = vpop.f32.mrb[0].mxu0
      %v3263 = vpop.f32.mrb[0].mxu0
      %v3264 = vadd.f32 0.0, %v3263
      %v3265 = vpop.f32.mrb[0].mxu0
      %3266 = vmatprep.mubr.bf16.mxu0 0
      %3267 = vmatmul.mubr.bf16.gmra.mrb[0].mxu0 %v3174
      %v3268 = vpop.f32.mrb[0].mxu0
      %v3269 = vadd.f32 0.0, %v3268
      %v3270 = vpop.f32.mrb[0].mxu0
      %v3271 = vpop.f32.mrb[0].mxu0
      %v3272 = vadd.f32 0.0, %v3271
      %v3273 = vpop.f32.mrb[0].mxu0
      %3274 = vmatprep.mubr.bf16.mxu0 0
      %3275 = vmatmul.mubr.bf16.gmra.mrb[0].mxu0 %v3177
      %v3276 = vpop.f32.mrb[0].mxu0
      %v3277 = vadd.f32 0.0, %v3276
      %v3278 = vpop.f32.mrb[0].mxu0
      %v3279 = vpop.f32.mrb[0].mxu0
      %v3280 = vadd.f32 0.0, %v3279
      %v3281 = vpop.f32.mrb[0].mxu0
      %3282 = vmatprep.mubr.bf16.mxu0 0
      %3283 = vmatmul.mubr.bf16.gmra.mrb[0].mxu0 %v3180
      %v3284 = vpop.f32.mrb[0].mxu0
      %v3285 = vadd.f32 0.0, %v3284
      %v3286 = vpop.f32.mrb[0].mxu0
      %v3287 = vpop.f32.mrb[0].mxu0
      %v3288 = vadd.f32 0.0, %v3287
      %v3289 = vpop.f32.mrb[0].mxu0
      %3290 = vmatprep.mubr.bf16.mxu0 0
      %3291 = vmatmul.mubr.bf16.gmra.mrb[0].mxu0 %v3183
      %v3292 = vpop.f32.mrb[0].mxu0
      %v3293 = vadd.f32 0.0, %v3292
      %v3294 = vpop.f32.mrb[0].mxu0
      %v3295 = vpop.f32.mrb[0].mxu0
      %v3296 = vadd.f32 0.0, %v3295
      %v3297 = vpop.f32.mrb[0].mxu0
      %3298 = vmatprep.mubr.bf16.mxu0 0
      %3299 = vmatmul.mubr.bf16.gmra.mrb[0].mxu0 %v3186
      %v3300 = vpop.f32.mrb[0].mxu0
      %v3301 = vadd.f32 0.0, %v3300
      %v3302 = vpop.f32.mrb[0].mxu0
      %v3303 = vpop.f32.mrb[0].mxu0
      %v3304 = vadd.f32 0.0, %v3303
      %v3305 = vpop.f32.mrb[0].mxu0
      %3306 = vmatprep.mubr.bf16.mxu0 0
      %3307 = vmatmul.mubr.bf16.gmra.mrb[0].mxu0 %v3189
      %v3308 = vpop.f32.mrb[0].mxu0
      %v3309 = vadd.f32 0.0, %v3308
      %v3310 = vpop.f32.mrb[0].mxu0
      %v3311 = vpop.f32.mrb[0].mxu0
      %v3312 = vadd.f32 0.0, %v3311
      %v3313 = vpop.f32.mrb[0].mxu0
      %3314 = vmatprep.mubr.bf16.mxu0 0
      %3315 = vmatmul.mubr.bf16.gmra.mrb[0].mxu0 %v3192
      %v3316 = vpop.f32.mrb[0].mxu0
      %v3317 = vadd.f32 0.0, %v3316
      %v3318 = vpop.f32.mrb[0].mxu0
      %v3319 = vpop.f32.mrb[0].mxu0
      %v3320 = vadd.f32 0.0, %v3319
      %v3321 = vpop.f32.mrb[0].mxu0
      %3322 = vmatprep.mubr.bf16.mxu0 0
      %3323 = vmatmul.mubr.bf16.gmra.mrb[0].mxu0 %v3195
      %v3324 = vpop.f32.mrb[0].mxu0
      %v3325 = vadd.f32 0.0, %v3324
      %v3326 = vpop.f32.mrb[0].mxu0
      %v3327 = vpop.f32.mrb[0].mxu0
      %v3328 = vadd.f32 0.0, %v3327
      %v3329 = vpop.f32.mrb[0].mxu0
      %3330 = vmatprep.mubr.bf16.mxu0 0
      %3331 = vmatmul.mubr.bf16.gmra.mrb[0].mxu0 %v3198
      %v3332 = vpop.f32.mrb[0].mxu0
      %v3333 = vadd.f32 0.0, %v3332
      %v3334 = vpop.f32.mrb[0].mxu0
      %v3335 = vpop.f32.mrb[0].mxu0
      %v3336 = vadd.f32 0.0, %v3335
      %v3337 = vpop.f32.mrb[0].mxu0
      %3338 = vmatprep.mubr.bf16.mxu0 0
      %3339 = vmatmul.mubr.bf16.gmra.mrb[0].mxu0 %v3201
      %v3340 = vpop.f32.mrb[0].mxu0
      %v3341 = vadd.f32 0.0, %v3340
      %v3342 = vpop.f32.mrb[0].mxu0
      %v3343 = vpop.f32.mrb[0].mxu0
      %v3344 = vadd.f32 0.0, %v3343
      %v3345 = vpop.f32.mrb[0].mxu0
      %3346 = vmatprep.mubr.bf16.mxu0 0
      %3347 = vmatmul.mubr.bf16.gmra.mrb[0].mxu0 %v3204
      %v3348 = vpop.f32.mrb[0].mxu0
      %v3349 = vadd.f32 0.0, %v3348
      %v3350 = vpop.f32.mrb[0].mxu0
      %v3351 = vpop.f32.mrb[0].mxu0
      %v3352 = vadd.f32 0.0, %v3351
      %v3353 = vpop.f32.mrb[0].mxu0
      %3354 = vmatprep.mubr.bf16.mxu0 0
      %3355 = vmatmul.mubr.bf16.gmra.mrb[0].mxu0 %v3207
      %v3356 = vpop.f32.mrb[0].mxu0
      %v3357 = vadd.f32 0.0, %v3356
      %v3358 = vpop.f32.mrb[0].mxu0
      %v3359 = vpop.f32.mrb[0].mxu0
      %v3360 = vadd.f32 0.0, %v3359
      %v3361 = vpop.f32.mrb[0].mxu0
      %3362 = vmatprep.mubr.bf16.mxu0 0
      %3363 = vmatmul.mubr.bf16.gmra.mrb[0].mxu0 %v3210
      %v3364 = vpop.f32.mrb[0].mxu0
      %v3365 = vadd.f32 0.0, %v3364
      %v3366 = vpop.f32.mrb[0].mxu0
      %v3367 = vpop.f32.mrb[0].mxu0
      %v3368 = vadd.f32 0.0, %v3367
      %v3369 = vpop.f32.mrb[0].mxu0
      %3370 = vmatprep.mubr.bf16.mxu0 0
      %3371 = vmatmul.mubr.bf16.gmra.mrb[0].mxu0 %v3213
      %v3372 = vpop.f32.mrb[0].mxu0
      %v3373 = vadd.f32 0.0, %v3372
      %v3374 = vpop.f32.mrb[0].mxu0
      %v3375 = vpop.f32.mrb[0].mxu0
      %v3376 = vadd.f32 0.0, %v3375
      %v3377 = vpop.f32.mrb[0].mxu0
      %3378 = vdwg.mxu0
      %v3379 = vadd.f32 %v3010, %v3253
      %v3380 = vadd.f32 %v3011, %v3256
      %v3381 = vadd.f32 %v3012, %v3261
      %v3382 = vadd.f32 %v3013, %v3264
      %v3383 = vadd.f32 %v3014, %v3269
      %v3384 = vadd.f32 %v3015, %v3272
      %v3385 = vadd.f32 %v3016, %v3277
      %v3386 = vadd.f32 %v3017, %v3280
      %v3387 = vadd.f32 %v3018, %v3285
      %v3388 = vadd.f32 %v3019, %v3288
      %v3389 = vadd.f32 %v3020, %v3293
      %v3390 = vadd.f32 %v3021, %v3296
      %v3391 = vadd.f32 %v3022, %v3301
      %v3392 = vadd.f32 %v3023, %v3304
      %v3393 = vadd.f32 %v3024, %v3309
      %v3394 = vadd.f32 %v3025, %v3312
      %v3395 = vadd.f32 %v3026, %v3317
      %v3396 = vadd.f32 %v3027, %v3320
      %v3397 = vadd.f32 %v3028, %v3325
      %v3398 = vadd.f32 %v3029, %v3328
      %v3399 = vadd.f32 %v3030, %v3333
      %v3400 = vadd.f32 %v3031, %v3336
      %v3401 = vadd.f32 %v3032, %v3341
      %v3402 = vadd.f32 %v3033, %v3344
      %v3403 = vadd.f32 %v3034, %v3349
      %v3404 = vadd.f32 %v3035, %v3352
      %v3405 = vadd.f32 %v3036, %v3357
      %v3406 = vadd.f32 %v3037, %v3360
      %v3407 = vadd.f32 %v3038, %v3365
      %v3408 = vadd.f32 %v3039, %v3368
      %v3409 = vadd.f32 %v3040, %v3373
      %v3410 = vadd.f32 %v3041, %v3376
      %v3411 = vld [vmem:[%s2] sm:$0x1]
      %v3413 = vlaneseq
      %v3414 = vshrl.u32 %v3413, 7
      %v3415 = vsub.s32 0, %v3414
      %v3416 = vrot.slane %v3411, %v3415
      %v3418 = vadd.f32 %v3379, %v3416
      %v3419 = vadd.f32 %v3380, %v3416
      %v3420 = vadd.f32 %v3381, %v3416
      %v3421 = vadd.f32 %v3382, %v3416
      %v3422 = vadd.f32 %v3383, %v3416
      %v3423 = vadd.f32 %v3384, %v3416
      %v3424 = vadd.f32 %v3385, %v3416
      %v3425 = vadd.f32 %v3386, %v3416
      %v3426 = vadd.f32 %v3387, %v3416
      %v3427 = vadd.f32 %v3388, %v3416
      %v3428 = vadd.f32 %v3389, %v3416
      %v3429 = vadd.f32 %v3390, %v3416
      %v3430 = vadd.f32 %v3391, %v3416
      %v3431 = vadd.f32 %v3392, %v3416
      %v3432 = vadd.f32 %v3393, %v3416
      %v3433 = vadd.f32 %v3394, %v3416
      %v3434 = vadd.f32 %v3395, %v3416
      %v3435 = vadd.f32 %v3396, %v3416
      %v3436 = vadd.f32 %v3397, %v3416
      %v3437 = vadd.f32 %v3398, %v3416
      %v3438 = vadd.f32 %v3399, %v3416
      %v3439 = vadd.f32 %v3400, %v3416
      %v3440 = vadd.f32 %v3401, %v3416
      %v3441 = vadd.f32 %v3402, %v3416
      %v3442 = vadd.f32 %v3403, %v3416
      %v3443 = vadd.f32 %v3404, %v3416
      %v3444 = vadd.f32 %v3405, %v3416
      %v3445 = vadd.f32 %v3406, %v3416
      %v3446 = vadd.f32 %v3407, %v3416
      %v3447 = vadd.f32 %v3408, %v3416
      %v3448 = vadd.f32 %v3409, %v3416
      %v3449 = vadd.f32 %v3410, %v3416
      %v3450 = vmax.f32 %v3418, 0.0
      %v3451 = vmax.f32 %v3419, 0.0
      %v3452 = vmax.f32 %v3420, 0.0
      %v3453 = vmax.f32 %v3421, 0.0
      %v3454 = vmax.f32 %v3422, 0.0
      %v3455 = vmax.f32 %v3423, 0.0
      %v3456 = vmax.f32 %v3424, 0.0
      %v3457 = vmax.f32 %v3425, 0.0
      %v3458 = vmax.f32 %v3426, 0.0
      %v3459 = vmax.f32 %v3427, 0.0
      %v3460 = vmax.f32 %v3428, 0.0
      %v3461 = vmax.f32 %v3429, 0.0
      %v3462 = vmax.f32 %v3430, 0.0
      %v3463 = vmax.f32 %v3431, 0.0
      %v3464 = vmax.f32 %v3432, 0.0
      %v3465 = vmax.f32 %v3433, 0.0
      %v3466 = vmax.f32 %v3434, 0.0
      %v3467 = vmax.f32 %v3435, 0.0
      %v3468 = vmax.f32 %v3436, 0.0
      %v3469 = vmax.f32 %v3437, 0.0
      %v3470 = vmax.f32 %v3438, 0.0
      %v3471 = vmax.f32 %v3439, 0.0
      %v3472 = vmax.f32 %v3440, 0.0
      %v3473 = vmax.f32 %v3441, 0.0
      %v3474 = vmax.f32 %v3442, 0.0
      %v3475 = vmax.f32 %v3443, 0.0
      %v3476 = vmax.f32 %v3444, 0.0
      %v3477 = vmax.f32 %v3445, 0.0
      %v3478 = vmax.f32 %v3446, 0.0
      %v3479 = vmax.f32 %v3447, 0.0
      %v3480 = vmax.f32 %v3448, 0.0
      %v3481 = vmax.f32 %v3449, 0.0
      %v3482 = vpack.c.bf16 %v3451, %v3450
      %v3483 = vpack.c.bf16 %v3453, %v3452
      %v3484 = vpack.c.bf16 %v3455, %v3454
      %v3485 = vpack.c.bf16 %v3457, %v3456
      %v3486 = vpack.c.bf16 %v3459, %v3458
      %v3487 = vpack.c.bf16 %v3461, %v3460
      %v3488 = vpack.c.bf16 %v3463, %v3462
      %v3489 = vpack.c.bf16 %v3465, %v3464
      %v3490 = vpack.c.bf16 %v3467, %v3466
      %v3491 = vpack.c.bf16 %v3469, %v3468
      %v3492 = vpack.c.bf16 %v3471, %v3470
      %v3493 = vpack.c.bf16 %v3473, %v3472
      %v3494 = vpack.c.bf16 %v3475, %v3474
      %v3495 = vpack.c.bf16 %v3477, %v3476
      %v3496 = vpack.c.bf16 %v3479, %v3478
      %v3497 = vpack.c.bf16 %v3481, %v3480
      %v3514 = vunpack.c.l.b16 %v3482
      %v3515 = vunpack.c.h.b16 %v3482
      %v3516 = vunpack.c.l.b16 %v3483
      %v3517 = vunpack.c.h.b16 %v3483
      %v3518 = vunpack.c.l.b16 %v3484
      %v3519 = vunpack.c.h.b16 %v3484
      %v3520 = vunpack.c.l.b16 %v3485
      %v3521 = vunpack.c.h.b16 %v3485
      %v3522 = vunpack.c.l.b16 %v3486
      %v3523 = vunpack.c.h.b16 %v3486
      %v3524 = vunpack.c.l.b16 %v3487
      %v3525 = vunpack.c.h.b16 %v3487
      %v3526 = vunpack.c.l.b16 %v3488
      %v3527 = vunpack.c.h.b16 %v3488
      %v3528 = vunpack.c.l.b16 %v3489
      %v3529 = vunpack.c.h.b16 %v3489
      %v3530 = vunpack.c.l.b16 %v3490
      %v3531 = vunpack.c.h.b16 %v3490
      %v3532 = vunpack.c.l.b16 %v3491
      %v3533 = vunpack.c.h.b16 %v3491
      %v3534 = vunpack.c.l.b16 %v3492
      %v3535 = vunpack.c.h.b16 %v3492
      %v3536 = vunpack.c.l.b16 %v3493
      %v3537 = vunpack.c.h.b16 %v3493
      %v3538 = vunpack.c.l.b16 %v3494
      %v3539 = vunpack.c.h.b16 %v3494
      %v3540 = vunpack.c.l.b16 %v3495
      %v3541 = vunpack.c.h.b16 %v3495
      %v3542 = vunpack.c.l.b16 %v3496
      %v3543 = vunpack.c.h.b16 %v3496
      %v3544 = vunpack.c.l.b16 %v3497
      %v3545 = vunpack.c.h.b16 %v3497
      %v3546 = vpack.c.b16 %v3514, %v3514
      %v3547 = vpack.c.b16 %v3515, %v3515
      %v3548 = vpack.c.b16 %v3516, %v3516
      %v3549 = vpack.c.b16 %v3517, %v3517
      %v3550 = vpack.c.b16 %v3518, %v3518
      %v3551 = vpack.c.b16 %v3519, %v3519
      %v3552 = vpack.c.b16 %v3520, %v3520
      %v3553 = vpack.c.b16 %v3521, %v3521
      %v3554 = vpack.c.b16 %v3522, %v3522
      %v3555 = vpack.c.b16 %v3523, %v3523
      %v3556 = vpack.c.b16 %v3524, %v3524
      %v3557 = vpack.c.b16 %v3525, %v3525
      %v3558 = vpack.c.b16 %v3526, %v3526
      %v3559 = vpack.c.b16 %v3527, %v3527
      %v3560 = vpack.c.b16 %v3528, %v3528
      %v3561 = vpack.c.b16 %v3529, %v3529
      %v3562 = vpack.c.b16 %v3530, %v3530
      %v3563 = vpack.c.b16 %v3531, %v3531
      %v3564 = vpack.c.b16 %v3532, %v3532
      %v3565 = vpack.c.b16 %v3533, %v3533
      %v3566 = vpack.c.b16 %v3534, %v3534
      %v3567 = vpack.c.b16 %v3535, %v3535
      %v3568 = vpack.c.b16 %v3536, %v3536
      %v3569 = vpack.c.b16 %v3537, %v3537
      %v3570 = vpack.c.b16 %v3538, %v3538
      %v3571 = vpack.c.b16 %v3539, %v3539
      %v3572 = vpack.c.b16 %v3540, %v3540
      %v3573 = vpack.c.b16 %v3541, %v3541
      %v3574 = vpack.c.b16 %v3542, %v3542
      %v3575 = vpack.c.b16 %v3543, %v3543
      %v3576 = vpack.c.b16 %v3544, %v3544
      %v3577 = vpack.c.b16 %v3545, %v3545
      %vm3610 = vcmask 60416
      %3611 = vst.msk [vmem:[%s150] sm:$0xf] %vm3610, %v3546
      %3612 = vst.msk [vmem:[%s150 + $0x4] sm:$0xf] %vm3610, %v3547
      %3613 = vst.msk [vmem:[%s150 + $0x8] sm:$0xf] %vm3610, %v3548
      %3614 = vst.msk [vmem:[%s150 + $0xc] sm:$0xf] %vm3610, %v3549
      %3615 = vst.msk [vmem:[%s150 + $0x10] sm:$0xf] %vm3610, %v3550
      %3616 = vst.msk [vmem:[%s150 + $0x14] sm:$0xf] %vm3610, %v3551
      %3617 = vst.msk [vmem:[%s150 + $0x18] sm:$0xf] %vm3610, %v3552
      %3618 = vst.msk [vmem:[%s150 + $0x1c] sm:$0xf] %vm3610, %v3553
      %3619 = vst.msk [vmem:[%s150 + $0x20] sm:$0xf] %vm3610, %v3554
      %3620 = vst.msk [vmem:[%s150 + $0x24] sm:$0xf] %vm3610, %v3555
      %3621 = vst.msk [vmem:[%s150 + $0x28] sm:$0xf] %vm3610, %v3556
      %3622 = vst.msk [vmem:[%s150 + $0x2c] sm:$0xf] %vm3610, %v3557
      %3623 = vst.msk [vmem:[%s150 + $0x30] sm:$0xf] %vm3610, %v3558
      %3624 = vst.msk [vmem:[%s150 + $0x34] sm:$0xf] %vm3610, %v3559
      %3625 = vst.msk [vmem:[%s150 + $0x38] sm:$0xf] %vm3610, %v3560
      %3626 = vst.msk [vmem:[%s150 + $0x3c] sm:$0xf] %vm3610, %v3561
      %3627 = vst.msk [vmem:[%s150 + $0x40] sm:$0xf] %vm3610, %v3562
      %3628 = vst.msk [vmem:[%s150 + $0x44] sm:$0xf] %vm3610, %v3563
      %3629 = vst.msk [vmem:[%s150 + $0x48] sm:$0xf] %vm3610, %v3564
      %3630 = vst.msk [vmem:[%s150 + $0x4c] sm:$0xf] %vm3610, %v3565
      %3631 = vst.msk [vmem:[%s150 + $0x50] sm:$0xf] %vm3610, %v3566
      %3632 = vst.msk [vmem:[%s150 + $0x54] sm:$0xf] %vm3610, %v3567
      %3633 = vst.msk [vmem:[%s150 + $0x58] sm:$0xf] %vm3610, %v3568
      %3634 = vst.msk [vmem:[%s150 + $0x5c] sm:$0xf] %vm3610, %v3569
      %3635 = vst.msk [vmem:[%s150 + $0x60] sm:$0xf] %vm3610, %v3570
      %3636 = vst.msk [vmem:[%s150 + $0x64] sm:$0xf] %vm3610, %v3571
      %3637 = vst.msk [vmem:[%s150 + $0x68] sm:$0xf] %vm3610, %v3572
      %3638 = vst.msk [vmem:[%s150 + $0x6c] sm:$0xf] %vm3610, %v3573
      %3639 = vst.msk [vmem:[%s150 + $0x70] sm:$0xf] %vm3610, %v3574
      %3640 = vst.msk [vmem:[%s150 + $0x74] sm:$0xf] %vm3610, %v3575
      %3641 = vst.msk [vmem:[%s150 + $0x78] sm:$0xf] %vm3610, %v3576
      %3642 = vst.msk [vmem:[%s150 + $0x7c] sm:$0xf] %vm3610, %v3577
      %s3643 = smul.u32 32, %s14
      %p3644 = scmp.lt.s32.totalorder %s3643, 415
      %s3645 = scalar_select %p3644, %s3643, 415
      %s3646 = smul.addr %s3645, 4
      %s3647 = scalar_lea.vmem %s3, %s3646
      // Predicated region
      $region33: #{down_forward.5} parent=31 // pred_check
        %p3648 = pneg %p95
      $region34: #{down_forward.5} parent=31 // pred_check_branch
        %3650 = sbr.rel (%p3648) target = $region36
      $region35: #{down_forward.5} parent=31 // pred_region
        %s3651 = smul.u32 32, %s14
      $region36: #{down_forward.5} parent=31 // pred_fallthru
        _
    $region32: #{down_forward.5} parent=5 // pred_fallthru
      _
    %p3652 = scmp.le.s32.totalorder 2, %s9
    // Predicated region
    $region37: #{down_forward.5} parent=5 // pred_check
      %p3653 = pneg %p3652
    $region38: #{down_forward.5} parent=5 // pred_check_branch
      %3655 = sbr.rel (%p3653) target = $region40
    $region39: #{down_forward.5} parent=5 // pred_region
      %s3656 = ssub.s32 %s9, 2
      // Predicated region
      $region41: #{down_forward.5} parent=39 // pred_check
        %p3657 = pneg %p101
      $region42: #{down_forward.5} parent=39 // pred_check_branch
        %3659 = sbr.rel (%p3657) target = $region44
      $region43: #{down_forward.5} parent=39 // pred_region
        %s3660 = smul.u32 32, %s15
        %p3661 = scmp.lt.s32.totalorder %s3660, 415
        %s3662 = scalar_select %p3661, %s3660, 415
        %s3663 = smul.addr %s3662, 4
        %s3664 = scalar_lea.vmem %s3, %s3663
      $region44: #{down_forward.5} parent=39 // pred_fallthru
        _
    $region40: #{down_forward.5} parent=5 // pred_fallthru
      _
  $region6: #{down_forward.5} parent=0 // loop_footer
    %s13 = sadd.s32 1, %s9
  $region7: #{down_forward.5} parent=0 // loop_footer_branch
    %8 = sbr.rel target = $region3
  $region8: #{down_forward.5} parent=0 // loop_exit
    _

// kernel: down_forward.6
$region0: #{down_forward.6}
  #allocation0 [shape = 'u32[]', space=smem, size = 0x4, offset = 0x4, fixed_abs, tag = 'smem constant byte address 0x4 - core index']
  #allocation1 [shape = 'u32[144,128]{1,0:T(1,128)}', space=vmem, size = 0x12000, scoped, tag = 'internal scratch']
  %s0 = inlined_call_operand.vmem [shape: bf16[3680,24], index: 0, kind: input, shape index: {}]
  %s1 = inlined_call_operand.vmem [shape: bf16[9,24,8], index: 1, kind: input, shape index: {}]
  %s2 = inlined_call_operand.vmem [shape: f32[1,8], index: 2, kind: input, shape index: {}]
  %s3 = inlined_call_operand.vmem [shape: bf16[3328,8], index: 3, kind: output, shape index: {}]
  %s4 = sld [smem:[#allocation0]]
  $region45: #{down_forward.6} parent=0
    _
  %s6 = ssub.s32 1, %s4
  %s7 = scalar_select 0, %s6, %s4
  loop: start=0, step=1, limit=15
  $region2: #{down_forward.6} parent=0 // loop_pre_header
    _
  $region3: #{down_forward.6} parent=0 // loop_header
    %s9 = sphi 0, %s13
    %p10 = scmp.ge.s32.totalorder %s9, 15
    %s17 = sphi 0, %s17
    %s19 = sphi 0, %s17
    %s20 = sphi 0, %s19
    %s34 = sphi 0, %s20
    %s38 = sphi 0, %s38
    %s40 = sphi 0, %s38
    %s41 = sphi 0, %s40
    %s55 = sphi 0, %s41
    %s59 = sphi 0, %s59
    %s61 = sphi 0, %s59
    %s62 = sphi 0, %s61
    %s76 = sphi 0, %s62
    %s82 = sphi 0, %s84
    %s85 = sphi 0, %s82
    %s86 = sphi 0, %s85
    %s102 = sphi 0, %s86
  $region4: #{down_forward.6} parent=0 // loop_header_branch
    %12 = sbr.rel (%p10) target = $region8
  $region5: #{down_forward.6} parent=0 // loop_body
    %s14 = ssub.s32 %s9, 1
    %s15 = ssub.s32 %s9, 2
    %s16 = sadd.s32 %s9, 1
    %s18 = sadd.s32 %s17, 1
    %p21 = scmp.eq.s32.totalorder %s9, 12
    %p22 = scmp.ne.s32.totalorder %s17, %s19
    %p23 = scmp.eq.s32.totalorder %s9, 0
    %p24 = por %p22, %p23
    %p25 = scmp.ne.s32.totalorder %s17, %s19
    %p26 = scmp.eq.s32.totalorder %s14, 12
    %p27 = por %p25, %p26
    %p28 = scmp.ne.s32.totalorder %s19, %s20
    %p29 = scmp.eq.s32.totalorder %s14, 0
    %p30 = por %p28, %p29
    %p31 = scmp.ne.s32.totalorder %s19, %s20
    %p32 = scmp.eq.s32.totalorder %s15, 12
    %p33 = por %p31, %p32
    %p35 = scmp.ne.s32.totalorder %s20, %s34
    %p36 = scmp.eq.s32.totalorder %s15, 0
    %p37 = por %p35, %p36
    %s39 = sadd.s32 %s38, 1
    %p42 = scmp.eq.s32.totalorder %s9, 12
    %p43 = scmp.ne.s32.totalorder %s38, %s40
    %p44 = scmp.eq.s32.totalorder %s9, 0
    %p45 = por %p43, %p44
    %p46 = scmp.ne.s32.totalorder %s38, %s40
    %p47 = scmp.eq.s32.totalorder %s14, 12
    %p48 = por %p46, %p47
    %p49 = scmp.ne.s32.totalorder %s40, %s41
    %p50 = scmp.eq.s32.totalorder %s14, 0
    %p51 = por %p49, %p50
    %p52 = scmp.ne.s32.totalorder %s40, %s41
    %p53 = scmp.eq.s32.totalorder %s15, 12
    %p54 = por %p52, %p53
    %p56 = scmp.ne.s32.totalorder %s41, %s55
    %p57 = scmp.eq.s32.totalorder %s15, 0
    %p58 = por %p56, %p57
    %s60 = sadd.s32 %s59, 1
    %p63 = scmp.eq.s32.totalorder %s9, 12
    %p64 = scmp.ne.s32.totalorder %s59, %s61
    %p65 = scmp.eq.s32.totalorder %s9, 0
    %p66 = por %p64, %p65
    %p67 = scmp.ne.s32.totalorder %s59, %s61
    %p68 = scmp.eq.s32.totalorder %s14, 12
    %p69 = por %p67, %p68
    %p70 = scmp.ne.s32.totalorder %s61, %s62
    %p71 = scmp.eq.s32.totalorder %s14, 0
    %p72 = por %p70, %p71
    %p73 = scmp.ne.s32.totalorder %s61, %s62
    %p74 = scmp.eq.s32.totalorder %s15, 12
    %p75 = por %p73, %p74
    %p77 = scmp.ne.s32.totalorder %s62, %s76
    %p78 = scmp.eq.s32.totalorder %s15, 0
    %p79 = por %p77, %p78
    %s80 = ssub.s32 %s9, %s16
    %p81 = scmp.eq.s32.totalorder %s80, 0
    %s83 = sadd.s32 %s82, 1
    %s84 = scalar_select %p81, %s82, %s83
    %p87 = pneg %p81
    %p88 = scmp.eq.s32.totalorder %s9, 12
    %p89 = por %p87, %p88
    %p90 = scmp.ne.s32.totalorder %s82, %s85
    %p91 = scmp.eq.s32.totalorder %s9, 0
    %p92 = por %p90, %p91
    %p93 = scmp.ne.s32.totalorder %s82, %s85
    %p94 = scmp.eq.s32.totalorder %s14, 12
    %p95 = por %p93, %p94
    %p96 = scmp.ne.s32.totalorder %s85, %s86
    %p97 = scmp.eq.s32.totalorder %s14, 0
    %p98 = por %p96, %p97
    %p99 = scmp.ne.s32.totalorder %s85, %s86
    %p100 = scmp.eq.s32.totalorder %s15, 12
    %p101 = por %p99, %p100
    %p103 = scmp.ne.s32.totalorder %s86, %s102
    %p104 = scmp.eq.s32.totalorder %s15, 0
    %p105 = por %p103, %p104
    %p106 = scmp.le.s32.totalorder 1, %s9
    %p107 = scmp.lt.s32.totalorder %s9, 14
    %p108 = pnand %p106, %p107
    %p109 = pneg %p108
    // Predicated region
    $region9: #{down_forward.6} parent=5 // pred_check
      _
    $region10: #{down_forward.6} parent=5 // pred_check_branch
      %111 = sbr.rel (%p108) target = $region12
    $region11: #{down_forward.6} parent=5 // pred_region
      %s112 = ssub.s32 %s9, 1
      // Predicated region
      $region13: #{down_forward.6} parent=11 // pred_check
        %p113 = pneg %p30
      $region14: #{down_forward.6} parent=11 // pred_check_branch
        %115 = sbr.rel (%p113) target = $region16
      $region15: #{down_forward.6} parent=11 // pred_region
        _
      $region16: #{down_forward.6} parent=11 // pred_fallthru
        _
      // Predicated region
      $region17: #{down_forward.6} parent=11 // pred_check
        %p116 = pneg %p51
      $region18: #{down_forward.6} parent=11 // pred_check_branch
        %118 = sbr.rel (%p116) target = $region20
      $region19: #{down_forward.6} parent=11 // pred_region
        _
      $region20: #{down_forward.6} parent=11 // pred_fallthru
        _
      // Predicated region
      $region21: #{down_forward.6} parent=11 // pred_check
        %p119 = pneg %p72
      $region22: #{down_forward.6} parent=11 // pred_check_branch
        %121 = sbr.rel (%p119) target = $region24
      $region23: #{down_forward.6} parent=11 // pred_region
        _
      $region24: #{down_forward.6} parent=11 // pred_fallthru
        _
    $region12: #{down_forward.6} parent=5 // pred_fallthru
      _
    %p122 = scmp.lt.s32.totalorder %s9, 13
    // Predicated region
    $region25: #{down_forward.6} parent=5 // pred_check
      %p123 = pneg %p122
    $region26: #{down_forward.6} parent=5 // pred_check_branch
      %125 = sbr.rel (%p123) target = $region28
    $region27: #{down_forward.6} parent=5 // pred_region
      _
    $region28: #{down_forward.6} parent=5 // pred_fallthru
      _
    %p126 = scmp.le.s32.totalorder 1, %s9
    %p127 = scmp.lt.s32.totalorder %s9, 14
    %p128 = pnand %p126, %p127
    %p129 = pneg %p128
    // Predicated region
    $region29: #{down_forward.6} parent=5 // pred_check
      _
    $region30: #{down_forward.6} parent=5 // pred_check_branch
      %131 = sbr.rel (%p128) target = $region32
    $region31: #{down_forward.6} parent=5 // pred_region
      %s132 = ssub.s32 %s9, 1
      %p133 = pneg %p30
      %p134 = pneg %p27
      %p135 = pneg %p51
      %p136 = pneg %p48
      %p137 = pneg %p72
      %p138 = pneg %p69
      %p139 = pneg %p98
      %p140 = pneg %p95
      %s141 = smul.u32 32, %s14
      %p142 = scmp.lt.s32.totalorder %s141, 415
      %s143 = scalar_select %p142, %s141, 415
      %s144 = smul.addr %s143, 4
      %s145 = scalar_lea.vmem %s3, %s144
      %s146 = smul.u32 32, %s14
      %p147 = scmp.lt.s32.totalorder %s146, 415
      %s148 = scalar_select %p147, %s146, 415
      %s149 = smul.addr %s148, 4
      %s150 = scalar_lea.vmem %s3, %s149
      %s151 = smul.u32 32, %s14
      %s153 = smul.u32 %s14, 256
      %s154 = sshra.s32 %s153, 3
      %s155 = sand.u32 %s153, 7
      %s156 = smul.addr %s154, 4
      %s157 = scalar_lea.vmem %s0, %s156
      %v158 = vld [vmem:[%s157] sm:$0xf]
      %v159 = vld [vmem:[%s157 + $0x4] sm:$0xf]
      %v160 = vld [vmem:[%s157 + $0x8] sm:$0xf]
      %v161 = vld [vmem:[%s157 + $0xc] sm:$0xf]
      %v162 = vld [vmem:[%s157 + $0x10] sm:$0xf]
      %v163 = vld [vmem:[%s157 + $0x14] sm:$0xf]
      %v164 = vld [vmem:[%s157 + $0x18] sm:$0xf]
      %v165 = vld [vmem:[%s157 + $0x1c] sm:$0xf]
      %v166 = vld [vmem:[%s157 + $0x20] sm:$0xf]
      %v167 = vld [vmem:[%s157 + $0x24] sm:$0xf]
      %v168 = vld [vmem:[%s157 + $0x28] sm:$0xf]
      %v169 = vld [vmem:[%s157 + $0x2c] sm:$0xf]
      %v170 = vld [vmem:[%s157 + $0x30] sm:$0xf]
      %v171 = vld [vmem:[%s157 + $0x34] sm:$0xf]
      %v172 = vld [vmem:[%s157 + $0x38] sm:$0xf]
      %v173 = vld [vmem:[%s157 + $0x3c] sm:$0xf]
      %v174 = vld [vmem:[%s157 + $0x40] sm:$0xf]
      %v175 = vld [vmem:[%s157 + $0x44] sm:$0xf]
      %v176 = vld [vmem:[%s157 + $0x48] sm:$0xf]
      %v177 = vld [vmem:[%s157 + $0x4c] sm:$0xf]
      %v178 = vld [vmem:[%s157 + $0x50] sm:$0xf]
      %v179 = vld [vmem:[%s157 + $0x54] sm:$0xf]
      %v180 = vld [vmem:[%s157 + $0x58] sm:$0xf]
      %v181 = vld [vmem:[%s157 + $0x5c] sm:$0xf]
      %v182 = vld [vmem:[%s157 + $0x60] sm:$0xf]
      %v183 = vld [vmem:[%s157 + $0x64] sm:$0xf]
      %v184 = vld [vmem:[%s157 + $0x68] sm:$0xf]
      %v185 = vld [vmem:[%s157 + $0x6c] sm:$0xf]
      %v186 = vld [vmem:[%s157 + $0x70] sm:$0xf]
      %v187 = vld [vmem:[%s157 + $0x74] sm:$0xf]
      %v188 = vld [vmem:[%s157 + $0x78] sm:$0xf]
      %v189 = vld [vmem:[%s157 + $0x7c] sm:$0xf]
      %v190 = vld [vmem:[%s1] sm:$0xf]
      %v191 = vld [vmem:[%s1 + $0x4] sm:$0xf]
      %v192 = vld [vmem:[%s1 + $0x8] sm:$0xf]
      %s193 = sadd.s32 %s153, 16
      %s194 = sshra.s32 %s193, 3
      %s195 = sand.u32 %s193, 7
      %s196 = smul.addr %s194, 4
      %s197 = scalar_lea.vmem %s0, %s196
      %v198 = vld [vmem:[%s197] sm:$0xf]
      %v199 = vld [vmem:[%s197 + $0x4] sm:$0xf]
      %v200 = vld [vmem:[%s197 + $0x8] sm:$0xf]
      %v201 = vld [vmem:[%s197 + $0xc] sm:$0xf]
      %v202 = vld [vmem:[%s197 + $0x10] sm:$0xf]
      %v203 = vld [vmem:[%s197 + $0x14] sm:$0xf]
      %v204 = vld [vmem:[%s197 + $0x18] sm:$0xf]
      %v205 = vld [vmem:[%s197 + $0x1c] sm:$0xf]
      %v206 = vld [vmem:[%s197 + $0x20] sm:$0xf]
      %v207 = vld [vmem:[%s197 + $0x24] sm:$0xf]
      %v208 = vld [vmem:[%s197 + $0x28] sm:$0xf]
      %v209 = vld [vmem:[%s197 + $0x2c] sm:$0xf]
      %v210 = vld [vmem:[%s197 + $0x30] sm:$0xf]
      %v211 = vld [vmem:[%s197 + $0x34] sm:$0xf]
      %v212 = vld [vmem:[%s197 + $0x38] sm:$0xf]
      %v213 = vld [vmem:[%s197 + $0x3c] sm:$0xf]
      %v214 = vld [vmem:[%s197 + $0x40] sm:$0xf]
      %v215 = vld [vmem:[%s197 + $0x44] sm:$0xf]
      %v216 = vld [vmem:[%s197 + $0x48] sm:$0xf]
      %v217 = vld [vmem:[%s197 + $0x4c] sm:$0xf]
      %v218 = vld [vmem:[%s197 + $0x50] sm:$0xf]
      %v219 = vld [vmem:[%s197 + $0x54] sm:$0xf]
      %v220 = vld [vmem:[%s197 + $0x58] sm:$0xf]
      %v221 = vld [vmem:[%s197 + $0x5c] sm:$0xf]
      %v222 = vld [vmem:[%s197 + $0x60] sm:$0xf]
      %v223 = vld [vmem:[%s197 + $0x64] sm:$0xf]
      %v224 = vld [vmem:[%s197 + $0x68] sm:$0xf]
      %v225 = vld [vmem:[%s197 + $0x6c] sm:$0xf]
      %v226 = vld [vmem:[%s197 + $0x70] sm:$0xf]
      %v227 = vld [vmem:[%s197 + $0x74] sm:$0xf]
      %v228 = vld [vmem:[%s197 + $0x78] sm:$0xf]
      %v229 = vld [vmem:[%s197 + $0x7c] sm:$0xf]
      %s230 = scalar_lea.vmem %s1, 12
      %v231 = vld [vmem:[%s230] sm:$0xf]
      %v232 = vld [vmem:[%s230 + $0x4] sm:$0xf]
      %v233 = vld [vmem:[%s230 + $0x8] sm:$0xf]
      %v266 = vunpack.c.l.b16 %v198
      %v267 = vunpack.c.l.b16 %v199
      %v268 = vunpack.c.l.b16 %v200
      %v269 = vunpack.c.l.b16 %v201
      %v270 = vunpack.c.l.b16 %v202
      %v271 = vunpack.c.l.b16 %v203
      %v272 = vunpack.c.l.b16 %v204
      %v273 = vunpack.c.l.b16 %v205
      %v274 = vunpack.c.l.b16 %v206
      %v275 = vunpack.c.l.b16 %v207
      %v276 = vunpack.c.l.b16 %v208
      %v277 = vunpack.c.l.b16 %v209
      %v278 = vunpack.c.l.b16 %v210
      %v279 = vunpack.c.l.b16 %v211
      %v280 = vunpack.c.l.b16 %v212
      %v281 = vunpack.c.l.b16 %v213
      %v282 = vunpack.c.l.b16 %v214
      %v283 = vunpack.c.l.b16 %v215
      %v284 = vunpack.c.l.b16 %v216
      %v285 = vunpack.c.l.b16 %v217
      %v286 = vunpack.c.l.b16 %v218
      %v287 = vunpack.c.l.b16 %v219
      %v288 = vunpack.c.l.b16 %v220
      %v289 = vunpack.c.l.b16 %v221
      %v290 = vunpack.c.l.b16 %v222
      %v291 = vunpack.c.l.b16 %v223
      %v292 = vunpack.c.l.b16 %v224
      %v293 = vunpack.c.l.b16 %v225
      %v294 = vunpack.c.l.b16 %v226
      %v295 = vunpack.c.l.b16 %v227
      %v296 = vunpack.c.l.b16 %v228
      %v297 = vunpack.c.l.b16 %v229
      %v298 = vpack.c.b16 %v267, %v266
      %v299 = vpack.c.b16 %v269, %v268
      %v300 = vpack.c.b16 %v271, %v270
      %v301 = vpack.c.b16 %v273, %v272
      %v302 = vpack.c.b16 %v275, %v274
      %v303 = vpack.c.b16 %v277, %v276
      %v304 = vpack.c.b16 %v279, %v278
      %v305 = vpack.c.b16 %v281, %v280
      %v306 = vpack.c.b16 %v283, %v282
      %v307 = vpack.c.b16 %v285, %v284
      %v308 = vpack.c.b16 %v287, %v286
      %v309 = vpack.c.b16 %v289, %v288
      %v310 = vpack.c.b16 %v291, %v290
      %v311 = vpack.c.b16 %v293, %v292
      %v312 = vpack.c.b16 %v295, %v294
      %v313 = vpack.c.b16 %v297, %v296
      %v317 = vunpack.c.l.b16 %v231
      %v318 = vunpack.c.l.b16 %v232
      %v319 = vunpack.c.l.b16 %v233
      %v320 = vpack.c.b16 %v318, %v317
      %v321 = vpack.c.b16 %v319, %v319
      %vm323 = vcmask 195584
      %v325 = vsel %vm323, %v298, 0
      %v328 = vsel %vm323, %v299, 0
      %v331 = vsel %vm323, %v300, 0
      %v334 = vsel %vm323, %v301, 0
      %v337 = vsel %vm323, %v302, 0
      %v340 = vsel %vm323, %v303, 0
      %v343 = vsel %vm323, %v304, 0
      %v346 = vsel %vm323, %v305, 0
      %v349 = vsel %vm323, %v306, 0
      %v352 = vsel %vm323, %v307, 0
      %v355 = vsel %vm323, %v308, 0
      %v358 = vsel %vm323, %v309, 0
      %v361 = vsel %vm323, %v310, 0
      %v364 = vsel %vm323, %v311, 0
      %v367 = vsel %vm323, %v312, 0
      %v370 = vsel %vm323, %v313, 0
      %vm372 = vcmask 1043456
      %v374 = vsel %vm372, %v321, 0
      %376 = vmatprep.subr.bf16.mxu0 0
      %377 = vmatpush1.bf16.msra.mxu0 %v320
      %378 = vmatprep.subr.bf16.mxu0 0
      %379 = vmatpush1.bf16.msra.mxu0 %v374
      %380 = vmatprep.subr.bf16.mxu0 0
      %381 = vmatpush1.bf16.msra.mxu0 0
      %382 = vmatprep.subr.bf16.mxu0 0
      %383 = vmatpush1.bf16.msra.mxu0 0
      %384 = vmatprep.subr.bf16.mxu0 0
      %385 = vmatpush1.bf16.msra.mxu0 0
      %386 = vmatprep.subr.bf16.mxu0 0
      %387 = vmatpush1.bf16.msra.mxu0 0
      %388 = vmatprep.subr.bf16.mxu0 0
      %389 = vmatpush1.bf16.msra.mxu0 0
      %390 = vmatprep.subr.bf16.mxu0 0
      %391 = vmatpush1.bf16.msra.mxu0 0
      %392 = vmatprep.subr.bf16.mxu0 0
      %393 = vmatpush1.bf16.msra.mxu0 0
      %394 = vmatprep.subr.bf16.mxu0 0
      %395 = vmatpush1.bf16.msra.mxu0 0
      %396 = vmatprep.subr.bf16.mxu0 0
      %397 = vmatpush1.bf16.msra.mxu0 0
      %398 = vmatprep.subr.bf16.mxu0 0
      %399 = vmatpush1.bf16.msra.mxu0 0
      %400 = vmatprep.subr.bf16.mxu0 0
      %401 = vmatpush1.bf16.msra.mxu0 0
      %402 = vmatprep.subr.bf16.mxu0 0
      %403 = vmatpush1.bf16.msra.mxu0 0
      %404 = vmatprep.subr.bf16.mxu0 0
      %405 = vmatpush1.bf16.msra.mxu0 0
      %406 = vmatprep.subr.bf16.mxu0 0
      %407 = vmatpush1.bf16.msra.mxu0 0
      %408 = vmatprep.mubr.bf16.mxu0 0
      %409 = vmatmul.mubr.bf16.gmra.mrb[0].mxu0 %v325
      %v410 = vpop.f32.mrb[0].mxu0
      %v411 = vadd.f32 0.0, %v410
      %v412 = vpop.f32.mrb[0].mxu0
      %v413 = vpop.f32.mrb[0].mxu0
      %v414 = vadd.f32 0.0, %v413
      %v415 = vpop.f32.mrb[0].mxu0
      %416 = vmatprep.mubr.bf16.mxu0 0
      %417 = vmatmul.mubr.bf16.gmra.mrb[0].mxu0 %v328
      %v418 = vpop.f32.mrb[0].mxu0
      %v419 = vadd.f32 0.0, %v418
      %v420 = vpop.f32.mrb[0].mxu0
      %v421 = vpop.f32.mrb[0].mxu0
      %v422 = vadd.f32 0.0, %v421
      %v423 = vpop.f32.mrb[0].mxu0
      %424 = vmatprep.mubr.bf16.mxu0 0
      %425 = vmatmul.mubr.bf16.gmra.mrb[0].mxu0 %v331
      %v426 = vpop.f32.mrb[0].mxu0
      %v427 = vadd.f32 0.0, %v426
      %v428 = vpop.f32.mrb[0].mxu0
      %v429 = vpop.f32.mrb[0].mxu0
      %v430 = vadd.f32 0.0, %v429
      %v431 = vpop.f32.mrb[0].mxu0
      %432 = vmatprep.mubr.bf16.mxu0 0
      %433 = vmatmul.mubr.bf16.gmra.mrb[0].mxu0 %v334
      %v434 = vpop.f32.mrb[0].mxu0
      %v435 = vadd.f32 0.0, %v434
      %v436 = vpop.f32.mrb[0].mxu0
      %v437 = vpop.f32.mrb[0].mxu0
      %v438 = vadd.f32 0.0, %v437
      %v439 = vpop.f32.mrb[0].mxu0
      %440 = vmatprep.mubr.bf16.mxu0 0
      %441 = vmatmul.mubr.bf16.gmra.mrb[0].mxu0 %v337
      %v442 = vpop.f32.mrb[0].mxu0
      %v443 = vadd.f32 0.0, %v442
      %v444 = vpop.f32.mrb[0].mxu0
      %v445 = vpop.f32.mrb[0].mxu0
      %v446 = vadd.f32 0.0, %v445
      %v447 = vpop.f32.mrb[0].mxu0
      %448 = vmatprep.mubr.bf16.mxu0 0
      %449 = vmatmul.mubr.bf16.gmra.mrb[0].mxu0 %v340
      %v450 = vpop.f32.mrb[0].mxu0
      %v451 = vadd.f32 0.0, %v450
      %v452 = vpop.f32.mrb[0].mxu0
      %v453 = vpop.f32.mrb[0].mxu0
      %v454 = vadd.f32 0.0, %v453
      %v455 = vpop.f32.mrb[0].mxu0
      %456 = vmatprep.mubr.bf16.mxu0 0
      %457 = vmatmul.mubr.bf16.gmra.mrb[0].mxu0 %v343
      %v458 = vpop.f32.mrb[0].mxu0
      %v459 = vadd.f32 0.0, %v458
      %v460 = vpop.f32.mrb[0].mxu0
      %v461 = vpop.f32.mrb[0].mxu0
      %v462 = vadd.f32 0.0, %v461
      %v463 = vpop.f32.mrb[0].mxu0
      %464 = vmatprep.mubr.bf16.mxu0 0
      %465 = vmatmul.mubr.bf16.gmra.mrb[0].mxu0 %v346
      %v466 = vpop.f32.mrb[0].mxu0
      %v467 = vadd.f32 0.0, %v466
      %v468 = vpop.f32.mrb[0].mxu0
      %v469 = vpop.f32.mrb[0].mxu0
      %v470 = vadd.f32 0.0, %v469
      %v471 = vpop.f32.mrb[0].mxu0
      %472 = vmatprep.mubr.bf16.mxu0 0
      %473 = vmatmul.mubr.bf16.gmra.mrb[0].mxu0 %v349
      %v474 = vpop.f32.mrb[0].mxu0
      %v475 = vadd.f32 0.0, %v474
      %v476 = vpop.f32.mrb[0].mxu0
      %v477 = vpop.f32.mrb[0].mxu0
      %v478 = vadd.f32 0.0, %v477
      %v479 = vpop.f32.mrb[0].mxu0
      %480 = vmatprep.mubr.bf16.mxu0 0
      %481 = vmatmul.mubr.bf16.gmra.mrb[0].mxu0 %v352
      %v482 = vpop.f32.mrb[0].mxu0
      %v483 = vadd.f32 0.0, %v482
      %v484 = vpop.f32.mrb[0].mxu0
      %v485 = vpop.f32.mrb[0].mxu0
      %v486 = vadd.f32 0.0, %v485
      %v487 = vpop.f32.mrb[0].mxu0
      %488 = vmatprep.mubr.bf16.mxu0 0
      %489 = vmatmul.mubr.bf16.gmra.mrb[0].mxu0 %v355
      %v490 = vpop.f32.mrb[0].mxu0
      %v491 = vadd.f32 0.0, %v490
      %v492 = vpop.f32.mrb[0].mxu0
      %v493 = vpop.f32.mrb[0].mxu0
      %v494 = vadd.f32 0.0, %v493
      %v495 = vpop.f32.mrb[0].mxu0
      %496 = vmatprep.mubr.bf16.mxu0 0
      %497 = vmatmul.mubr.bf16.gmra.mrb[0].mxu0 %v358
      %v498 = vpop.f32.mrb[0].mxu0
      %v499 = vadd.f32 0.0, %v498
      %v500 = vpop.f32.mrb[0].mxu0
      %v501 = vpop.f32.mrb[0].mxu0
      %v502 = vadd.f32 0.0, %v501
      %v503 = vpop.f32.mrb[0].mxu0
      %504 = vmatprep.mubr.bf16.mxu0 0
      %505 = vmatmul.mubr.bf16.gmra.mrb[0].mxu0 %v361
      %v506 = vpop.f32.mrb[0].mxu0
      %v507 = vadd.f32 0.0, %v506
      %v508 = vpop.f32.mrb[0].mxu0
      %v509 = vpop.f32.mrb[0].mxu0
      %v510 = vadd.f32 0.0, %v509
      %v511 = vpop.f32.mrb[0].mxu0
      %512 = vmatprep.mubr.bf16.mxu0 0
      %513 = vmatmul.mubr.bf16.gmra.mrb[0].mxu0 %v364
      %v514 = vpop.f32.mrb[0].mxu0
      %v515 = vadd.f32 0.0, %v514
      %v516 = vpop.f32.mrb[0].mxu0
      %v517 = vpop.f32.mrb[0].mxu0
      %v518 = vadd.f32 0.0, %v517
      %v519 = vpop.f32.mrb[0].mxu0
      %520 = vmatprep.mubr.bf16.mxu0 0
      %521 = vmatmul.mubr.bf16.gmra.mrb[0].mxu0 %v367
      %v522 = vpop.f32.mrb[0].mxu0
      %v523 = vadd.f32 0.0, %v522
      %v524 = vpop.f32.mrb[0].mxu0
      %v525 = vpop.f32.mrb[0].mxu0
      %v526 = vadd.f32 0.0, %v525
      %v527 = vpop.f32.mrb[0].mxu0
      %528 = vmatprep.mubr.bf16.mxu0 0
      %529 = vmatmul.mubr.bf16.gmra.mrb[0].mxu0 %v370
      %v530 = vpop.f32.mrb[0].mxu0
      %v531 = vadd.f32 0.0, %v530
      %v532 = vpop.f32.mrb[0].mxu0
      %v533 = vpop.f32.mrb[0].mxu0
      %v534 = vadd.f32 0.0, %v533
      %v535 = vpop.f32.mrb[0].mxu0
      %536 = vdwg.mxu0
      %v569 = vunpack.c.l.b16 %v158
      %v570 = vunpack.c.l.b16 %v159
      %v571 = vunpack.c.l.b16 %v160
      %v572 = vunpack.c.l.b16 %v161
      %v573 = vunpack.c.l.b16 %v162
      %v574 = vunpack.c.l.b16 %v163
      %v575 = vunpack.c.l.b16 %v164
      %v576 = vunpack.c.l.b16 %v165
      %v577 = vunpack.c.l.b16 %v166
      %v578 = vunpack.c.l.b16 %v167
      %v579 = vunpack.c.l.b16 %v168
      %v580 = vunpack.c.l.b16 %v169
      %v581 = vunpack.c.l.b16 %v170
      %v582 = vunpack.c.l.b16 %v171
      %v583 = vunpack.c.l.b16 %v172
      %v584 = vunpack.c.l.b16 %v173
      %v585 = vunpack.c.l.b16 %v174
      %v586 = vunpack.c.l.b16 %v175
      %v587 = vunpack.c.l.b16 %v176
      %v588 = vunpack.c.l.b16 %v177
      %v589 = vunpack.c.l.b16 %v178
      %v590 = vunpack.c.l.b16 %v179
      %v591 = vunpack.c.l.b16 %v180
      %v592 = vunpack.c.l.b16 %v181
      %v593 = vunpack.c.l.b16 %v182
      %v594 = vunpack.c.l.b16 %v183
      %v595 = vunpack.c.l.b16 %v184
      %v596 = vunpack.c.l.b16 %v185
      %v597 = vunpack.c.l.b16 %v186
      %v598 = vunpack.c.l.b16 %v187
      %v599 = vunpack.c.l.b16 %v188
      %v600 = vunpack.c.l.b16 %v189
      %v601 = vpack.c.b16 %v570, %v569
      %v602 = vpack.c.b16 %v572, %v571
      %v603 = vpack.c.b16 %v574, %v573
      %v604 = vpack.c.b16 %v576, %v575
      %v605 = vpack.c.b16 %v578, %v577
      %v606 = vpack.c.b16 %v580, %v579
      %v607 = vpack.c.b16 %v582, %v581
      %v608 = vpack.c.b16 %v584, %v583
      %v609 = vpack.c.b16 %v586, %v585
      %v610 = vpack.c.b16 %v588, %v587
      %v611 = vpack.c.b16 %v590, %v589
      %v612 = vpack.c.b16 %v592, %v591
      %v613 = vpack.c.b16 %v594, %v593
      %v614 = vpack.c.b16 %v596, %v595
      %v615 = vpack.c.b16 %v598, %v597
      %v616 = vpack.c.b16 %v600, %v599
      %v620 = vunpack.c.l.b16 %v190
      %v621 = vunpack.c.l.b16 %v191
      %v622 = vunpack.c.l.b16 %v192
      %v623 = vpack.c.b16 %v621, %v620
      %v624 = vpack.c.b16 %v622, %v622
      %v627 = vsel %vm323, %v601, 0
      %v630 = vsel %vm323, %v602, 0
      %v633 = vsel %vm323, %v603, 0
      %v636 = vsel %vm323, %v604, 0
      %v639 = vsel %vm323, %v605, 0
      %v642 = vsel %vm323, %v606, 0
      %v645 = vsel %vm323, %v607, 0
      %v648 = vsel %vm323, %v608, 0
      %v651 = vsel %vm323, %v609, 0
      %v654 = vsel %vm323, %v610, 0
      %v657 = vsel %vm323, %v611, 0
      %v660 = vsel %vm323, %v612, 0
      %v663 = vsel %vm323, %v613, 0
      %v666 = vsel %vm323, %v614, 0
      %v669 = vsel %vm323, %v615, 0
      %v672 = vsel %vm323, %v616, 0
      %v675 = vsel %vm372, %v624, 0
      %677 = vmatprep.subr.bf16.mxu0 0
      %678 = vmatpush1.bf16.msra.mxu0 %v623
      %679 = vmatprep.subr.bf16.mxu0 0
      %680 = vmatpush1.bf16.msra.mxu0 %v675
      %681 = vmatprep.subr.bf16.mxu0 0
      %682 = vmatpush1.bf16.msra.mxu0 0
      %683 = vmatprep.subr.bf16.mxu0 0
      %684 = vmatpush1.bf16.msra.mxu0 0
      %685 = vmatprep.subr.bf16.mxu0 0
      %686 = vmatpush1.bf16.msra.mxu0 0
      %687 = vmatprep.subr.bf16.mxu0 0
      %688 = vmatpush1.bf16.msra.mxu0 0
      %689 = vmatprep.subr.bf16.mxu0 0
      %690 = vmatpush1.bf16.msra.mxu0 0
      %691 = vmatprep.subr.bf16.mxu0 0
      %692 = vmatpush1.bf16.msra.mxu0 0
      %693 = vmatprep.subr.bf16.mxu0 0
      %694 = vmatpush1.bf16.msra.mxu0 0
      %695 = vmatprep.subr.bf16.mxu0 0
      %696 = vmatpush1.bf16.msra.mxu0 0
      %697 = vmatprep.subr.bf16.mxu0 0
      %698 = vmatpush1.bf16.msra.mxu0 0
      %699 = vmatprep.subr.bf16.mxu0 0
      %700 = vmatpush1.bf16.msra.mxu0 0
      %701 = vmatprep.subr.bf16.mxu0 0
      %702 = vmatpush1.bf16.msra.mxu0 0
      %703 = vmatprep.subr.bf16.mxu0 0
      %704 = vmatpush1.bf16.msra.mxu0 0
      %705 = vmatprep.subr.bf16.mxu0 0
      %706 = vmatpush1.bf16.msra.mxu0 0
      %707 = vmatprep.subr.bf16.mxu0 0
      %708 = vmatpush1.bf16.msra.mxu0 0
      %709 = vmatprep.mubr.bf16.mxu0 0
      %710 = vmatmul.mubr.bf16.gmra.mrb[0].mxu0 %v627
      %v711 = vpop.f32.mrb[0].mxu0
      %v712 = vadd.f32 %v411, %v711
      %v713 = vpop.f32.mrb[0].mxu0
      %v714 = vpop.f32.mrb[0].mxu0
      %v715 = vadd.f32 %v414, %v714
      %v716 = vpop.f32.mrb[0].mxu0
      %717 = vmatprep.mubr.bf16.mxu0 0
      %718 = vmatmul.mubr.bf16.gmra.mrb[0].mxu0 %v630
      %v719 = vpop.f32.mrb[0].mxu0
      %v720 = vadd.f32 %v419, %v719
      %v721 = vpop.f32.mrb[0].mxu0
      %v722 = vpop.f32.mrb[0].mxu0
      %v723 = vadd.f32 %v422, %v722
      %v724 = vpop.f32.mrb[0].mxu0
      %725 = vmatprep.mubr.bf16.mxu0 0
      %726 = vmatmul.mubr.bf16.gmra.mrb[0].mxu0 %v633
      %v727 = vpop.f32.mrb[0].mxu0
      %v728 = vadd.f32 %v427, %v727
      %v729 = vpop.f32.mrb[0].mxu0
      %v730 = vpop.f32.mrb[0].mxu0
      %v731 = vadd.f32 %v430, %v730
      %v732 = vpop.f32.mrb[0].mxu0
      %733 = vmatprep.mubr.bf16.mxu0 0
      %734 = vmatmul.mubr.bf16.gmra.mrb[0].mxu0 %v636
      %v735 = vpop.f32.mrb[0].mxu0
      %v736 = vadd.f32 %v435, %v735
      %v737 = vpop.f32.mrb[0].mxu0
      %v738 = vpop.f32.mrb[0].mxu0
      %v739 = vadd.f32 %v438, %v738
      %v740 = vpop.f32.mrb[0].mxu0
      %741 = vmatprep.mubr.bf16.mxu0 0
      %742 = vmatmul.mubr.bf16.gmra.mrb[0].mxu0 %v639
      %v743 = vpop.f32.mrb[0].mxu0
      %v744 = vadd.f32 %v443, %v743
      %v745 = vpop.f32.mrb[0].mxu0
      %v746 = vpop.f32.mrb[0].mxu0
      %v747 = vadd.f32 %v446, %v746
      %v748 = vpop.f32.mrb[0].mxu0
      %749 = vmatprep.mubr.bf16.mxu0 0
      %750 = vmatmul.mubr.bf16.gmra.mrb[0].mxu0 %v642
      %v751 = vpop.f32.mrb[0].mxu0
      %v752 = vadd.f32 %v451, %v751
      %v753 = vpop.f32.mrb[0].mxu0
      %v754 = vpop.f32.mrb[0].mxu0
      %v755 = vadd.f32 %v454, %v754
      %v756 = vpop.f32.mrb[0].mxu0
      %757 = vmatprep.mubr.bf16.mxu0 0
      %758 = vmatmul.mubr.bf16.gmra.mrb[0].mxu0 %v645
      %v759 = vpop.f32.mrb[0].mxu0
      %v760 = vadd.f32 %v459, %v759
      %v761 = vpop.f32.mrb[0].mxu0
      %v762 = vpop.f32.mrb[0].mxu0
      %v763 = vadd.f32 %v462, %v762
      %v764 = vpop.f32.mrb[0].mxu0
      %765 = vmatprep.mubr.bf16.mxu0 0
      %766 = vmatmul.mubr.bf16.gmra.mrb[0].mxu0 %v648
      %v767 = vpop.f32.mrb[0].mxu0
      %v768 = vadd.f32 %v467, %v767
      %v769 = vpop.f32.mrb[0].mxu0
      %v770 = vpop.f32.mrb[0].mxu0
      %v771 = vadd.f32 %v470, %v770
      %v772 = vpop.f32.mrb[0].mxu0
      %773 = vmatprep.mubr.bf16.mxu0 0
      %774 = vmatmul.mubr.bf16.gmra.mrb[0].mxu0 %v651
      %v775 = vpop.f32.mrb[0].mxu0
      %v776 = vadd.f32 %v475, %v775
      %v777 = vpop.f32.mrb[0].mxu0
      %v778 = vpop.f32.mrb[0].mxu0
      %v779 = vadd.f32 %v478, %v778
      %v780 = vpop.f32.mrb[0].mxu0
      %781 = vmatprep.mubr.bf16.mxu0 0
      %782 = vmatmul.mubr.bf16.gmra.mrb[0].mxu0 %v654
      %v783 = vpop.f32.mrb[0].mxu0
      %v784 = vadd.f32 %v483, %v783
      %v785 = vpop.f32.mrb[0].mxu0
      %v786 = vpop.f32.mrb[0].mxu0
      %v787 = vadd.f32 %v486, %v786
      %v788 = vpop.f32.mrb[0].mxu0
      %789 = vmatprep.mubr.bf16.mxu0 0
      %790 = vmatmul.mubr.bf16.gmra.mrb[0].mxu0 %v657
      %v791 = vpop.f32.mrb[0].mxu0
      %v792 = vadd.f32 %v491, %v791
      %v793 = vpop.f32.mrb[0].mxu0
      %v794 = vpop.f32.mrb[0].mxu0
      %v795 = vadd.f32 %v494, %v794
      %v796 = vpop.f32.mrb[0].mxu0
      %797 = vmatprep.mubr.bf16.mxu0 0
      %798 = vmatmul.mubr.bf16.gmra.mrb[0].mxu0 %v660
      %v799 = vpop.f32.mrb[0].mxu0
      %v800 = vadd.f32 %v499, %v799
      %v801 = vpop.f32.mrb[0].mxu0
      %v802 = vpop.f32.mrb[0].mxu0
      %v803 = vadd.f32 %v502, %v802
      %v804 = vpop.f32.mrb[0].mxu0
      %805 = vmatprep.mubr.bf16.mxu0 0
      %806 = vmatmul.mubr.bf16.gmra.mrb[0].mxu0 %v663
      %v807 = vpop.f32.mrb[0].mxu0
      %v808 = vadd.f32 %v507, %v807
      %v809 = vpop.f32.mrb[0].mxu0
      %v810 = vpop.f32.mrb[0].mxu0
      %v811 = vadd.f32 %v510, %v810
      %v812 = vpop.f32.mrb[0].mxu0
      %813 = vmatprep.mubr.bf16.mxu0 0
      %814 = vmatmul.mubr.bf16.gmra.mrb[0].mxu0 %v666
      %v815 = vpop.f32.mrb[0].mxu0
      %v816 = vadd.f32 %v515, %v815
      %v817 = vpop.f32.mrb[0].mxu0
      %v818 = vpop.f32.mrb[0].mxu0
      %v819 = vadd.f32 %v518, %v818
      %v820 = vpop.f32.mrb[0].mxu0
      %821 = vmatprep.mubr.bf16.mxu0 0
      %822 = vmatmul.mubr.bf16.gmra.mrb[0].mxu0 %v669
      %v823 = vpop.f32.mrb[0].mxu0
      %v824 = vadd.f32 %v523, %v823
      %v825 = vpop.f32.mrb[0].mxu0
      %v826 = vpop.f32.mrb[0].mxu0
      %v827 = vadd.f32 %v526, %v826
      %v828 = vpop.f32.mrb[0].mxu0
      %829 = vmatprep.mubr.bf16.mxu0 0
      %830 = vmatmul.mubr.bf16.gmra.mrb[0].mxu0 %v672
      %v831 = vpop.f32.mrb[0].mxu0
      %v832 = vadd.f32 %v531, %v831
      %v833 = vpop.f32.mrb[0].mxu0
      %v834 = vpop.f32.mrb[0].mxu0
      %v835 = vadd.f32 %v534, %v834
      %v836 = vpop.f32.mrb[0].mxu0
      %837 = vdwg.mxu0
      %s838 = sadd.s32 %s153, 32
      %s839 = sshra.s32 %s838, 3
      %s840 = sand.u32 %s838, 7
      %s841 = smul.addr %s839, 4
      %s842 = scalar_lea.vmem %s0, %s841
      %v843 = vld [vmem:[%s842] sm:$0xf]
      %v844 = vld [vmem:[%s842 + $0x4] sm:$0xf]
      %v845 = vld [vmem:[%s842 + $0x8] sm:$0xf]
      %v846 = vld [vmem:[%s842 + $0xc] sm:$0xf]
      %v847 = vld [vmem:[%s842 + $0x10] sm:$0xf]
      %v848 = vld [vmem:[%s842 + $0x14] sm:$0xf]
      %v849 = vld [vmem:[%s842 + $0x18] sm:$0xf]
      %v850 = vld [vmem:[%s842 + $0x1c] sm:$0xf]
      %v851 = vld [vmem:[%s842 + $0x20] sm:$0xf]
      %v852 = vld [vmem:[%s842 + $0x24] sm:$0xf]
      %v853 = vld [vmem:[%s842 + $0x28] sm:$0xf]
      %v854 = vld [vmem:[%s842 + $0x2c] sm:$0xf]
      %v855 = vld [vmem:[%s842 + $0x30] sm:$0xf]
      %v856 = vld [vmem:[%s842 + $0x34] sm:$0xf]
      %v857 = vld [vmem:[%s842 + $0x38] sm:$0xf]
      %v858 = vld [vmem:[%s842 + $0x3c] sm:$0xf]
      %v859 = vld [vmem:[%s842 + $0x40] sm:$0xf]
      %v860 = vld [vmem:[%s842 + $0x44] sm:$0xf]
      %v861 = vld [vmem:[%s842 + $0x48] sm:$0xf]
      %v862 = vld [vmem:[%s842 + $0x4c] sm:$0xf]
      %v863 = vld [vmem:[%s842 + $0x50] sm:$0xf]
      %v864 = vld [vmem:[%s842 + $0x54] sm:$0xf]
      %v865 = vld [vmem:[%s842 + $0x58] sm:$0xf]
      %v866 = vld [vmem:[%s842 + $0x5c] sm:$0xf]
      %v867 = vld [vmem:[%s842 + $0x60] sm:$0xf]
      %v868 = vld [vmem:[%s842 + $0x64] sm:$0xf]
      %v869 = vld [vmem:[%s842 + $0x68] sm:$0xf]
      %v870 = vld [vmem:[%s842 + $0x6c] sm:$0xf]
      %v871 = vld [vmem:[%s842 + $0x70] sm:$0xf]
      %v872 = vld [vmem:[%s842 + $0x74] sm:$0xf]
      %v873 = vld [vmem:[%s842 + $0x78] sm:$0xf]
      %v874 = vld [vmem:[%s842 + $0x7c] sm:$0xf]
      %s875 = scalar_lea.vmem %s1, 24
      %v876 = vld [vmem:[%s875] sm:$0xf]
      %v877 = vld [vmem:[%s875 + $0x4] sm:$0xf]
      %v878 = vld [vmem:[%s875 + $0x8] sm:$0xf]
      %v911 = vunpack.c.l.b16 %v843
      %v912 = vunpack.c.l.b16 %v844
      %v913 = vunpack.c.l.b16 %v845
      %v914 = vunpack.c.l.b16 %v846
      %v915 = vunpack.c.l.b16 %v847
      %v916 = vunpack.c.l.b16 %v848
      %v917 = vunpack.c.l.b16 %v849
      %v918 = vunpack.c.l.b16 %v850
      %v919 = vunpack.c.l.b16 %v851
      %v920 = vunpack.c.l.b16 %v852
      %v921 = vunpack.c.l.b16 %v853
      %v922 = vunpack.c.l.b16 %v854
      %v923 = vunpack.c.l.b16 %v855
      %v924 = vunpack.c.l.b16 %v856
      %v925 = vunpack.c.l.b16 %v857
      %v926 = vunpack.c.l.b16 %v858
      %v927 = vunpack.c.l.b16 %v859
      %v928 = vunpack.c.l.b16 %v860
      %v929 = vunpack.c.l.b16 %v861
      %v930 = vunpack.c.l.b16 %v862
      %v931 = vunpack.c.l.b16 %v863
      %v932 = vunpack.c.l.b16 %v864
      %v933 = vunpack.c.l.b16 %v865
      %v934 = vunpack.c.l.b16 %v866
      %v935 = vunpack.c.l.b16 %v867
      %v936 = vunpack.c.l.b16 %v868
      %v937 = vunpack.c.l.b16 %v869
      %v938 = vunpack.c.l.b16 %v870
      %v939 = vunpack.c.l.b16 %v871
      %v940 = vunpack.c.l.b16 %v872
      %v941 = vunpack.c.l.b16 %v873
      %v942 = vunpack.c.l.b16 %v874
      %v943 = vpack.c.b16 %v912, %v911
      %v944 = vpack.c.b16 %v914, %v913
      %v945 = vpack.c.b16 %v916, %v915
      %v946 = vpack.c.b16 %v918, %v917
      %v947 = vpack.c.b16 %v920, %v919
      %v948 = vpack.c.b16 %v922, %v921
      %v949 = vpack.c.b16 %v924, %v923
      %v950 = vpack.c.b16 %v926, %v925
      %v951 = vpack.c.b16 %v928, %v927
      %v952 = vpack.c.b16 %v930, %v929
      %v953 = vpack.c.b16 %v932, %v931
      %v954 = vpack.c.b16 %v934, %v933
      %v955 = vpack.c.b16 %v936, %v935
      %v956 = vpack.c.b16 %v938, %v937
      %v957 = vpack.c.b16 %v940, %v939
      %v958 = vpack.c.b16 %v942, %v941
      %v962 = vunpack.c.l.b16 %v876
      %v963 = vunpack.c.l.b16 %v877
      %v964 = vunpack.c.l.b16 %v878
      %v965 = vpack.c.b16 %v963, %v962
      %v966 = vpack.c.b16 %v964, %v964
      %v969 = vsel %vm323, %v943, 0
      %v972 = vsel %vm323, %v944, 0
      %v975 = vsel %vm323, %v945, 0
      %v978 = vsel %vm323, %v946, 0
      %v981 = vsel %vm323, %v947, 0
      %v984 = vsel %vm323, %v948, 0
      %v987 = vsel %vm323, %v949, 0
      %v990 = vsel %vm323, %v950, 0
      %v993 = vsel %vm323, %v951, 0
      %v996 = vsel %vm323, %v952, 0
      %v999 = vsel %vm323, %v953, 0
      %v1002 = vsel %vm323, %v954, 0
      %v1005 = vsel %vm323, %v955, 0
      %v1008 = vsel %vm323, %v956, 0
      %v1011 = vsel %vm323, %v957, 0
      %v1014 = vsel %vm323, %v958, 0
      %v1017 = vsel %vm372, %v966, 0
      %1019 = vmatprep.subr.bf16.mxu0 0
      %1020 = vmatpush1.bf16.msra.mxu0 %v965
      %1021 = vmatprep.subr.bf16.mxu0 0
      %1022 = vmatpush1.bf16.msra.mxu0 %v1017
      %1023 = vmatprep.subr.bf16.mxu0 0
      %1024 = vmatpush1.bf16.msra.mxu0 0
      %1025 = vmatprep.subr.bf16.mxu0 0
      %1026 = vmatpush1.bf16.msra.mxu0 0
      %1027 = vmatprep.subr.bf16.mxu0 0
      %1028 = vmatpush1.bf16.msra.mxu0 0
      %1029 = vmatprep.subr.bf16.mxu0 0
      %1030 = vmatpush1.bf16.msra.mxu0 0
      %1031 = vmatprep.subr.bf16.mxu0 0
      %1032 = vmatpush1.bf16.msra.mxu0 0
      %1033 = vmatprep.subr.bf16.mxu0 0
      %1034 = vmatpush1.bf16.msra.mxu0 0
      %1035 = vmatprep.subr.bf16.mxu0 0
      %1036 = vmatpush1.bf16.msra.mxu0 0
      %1037 = vmatprep.subr.bf16.mxu0 0
      %1038 = vmatpush1.bf16.msra.mxu0 0
      %1039 = vmatprep.subr.bf16.mxu0 0
      %1040 = vmatpush1.bf16.msra.mxu0 0
      %1041 = vmatprep.subr.bf16.mxu0 0
      %1042 = vmatpush1.bf16.msra.mxu0 0
      %1043 = vmatprep.subr.bf16.mxu0 0
      %1044 = vmatpush1.bf16.msra.mxu0 0
      %1045 = vmatprep.subr.bf16.mxu0 0
      %1046 = vmatpush1.bf16.msra.mxu0 0
      %1047 = vmatprep.subr.bf16.mxu0 0
      %1048 = vmatpush1.bf16.msra.mxu0 0
      %1049 = vmatprep.subr.bf16.mxu0 0
      %1050 = vmatpush1.bf16.msra.mxu0 0
      %1051 = vmatprep.mubr.bf16.mxu0 0
      %1052 = vmatmul.mubr.bf16.gmra.mrb[0].mxu0 %v969
      %v1053 = vpop.f32.mrb[0].mxu0
      %v1054 = vadd.f32 0.0, %v1053
      %v1055 = vpop.f32.mrb[0].mxu0
      %v1056 = vpop.f32.mrb[0].mxu0
      %v1057 = vadd.f32 0.0, %v1056
      %v1058 = vpop.f32.mrb[0].mxu0
      %1059 = vmatprep.mubr.bf16.mxu0 0
      %1060 = vmatmul.mubr.bf16.gmra.mrb[0].mxu0 %v972
      %v1061 = vpop.f32.mrb[0].mxu0
      %v1062 = vadd.f32 0.0, %v1061
      %v1063 = vpop.f32.mrb[0].mxu0
      %v1064 = vpop.f32.mrb[0].mxu0
      %v1065 = vadd.f32 0.0, %v1064
      %v1066 = vpop.f32.mrb[0].mxu0
      %1067 = vmatprep.mubr.bf16.mxu0 0
      %1068 = vmatmul.mubr.bf16.gmra.mrb[0].mxu0 %v975
      %v1069 = vpop.f32.mrb[0].mxu0
      %v1070 = vadd.f32 0.0, %v1069
      %v1071 = vpop.f32.mrb[0].mxu0
      %v1072 = vpop.f32.mrb[0].mxu0
      %v1073 = vadd.f32 0.0, %v1072
      %v1074 = vpop.f32.mrb[0].mxu0
      %1075 = vmatprep.mubr.bf16.mxu0 0
      %1076 = vmatmul.mubr.bf16.gmra.mrb[0].mxu0 %v978
      %v1077 = vpop.f32.mrb[0].mxu0
      %v1078 = vadd.f32 0.0, %v1077
      %v1079 = vpop.f32.mrb[0].mxu0
      %v1080 = vpop.f32.mrb[0].mxu0
      %v1081 = vadd.f32 0.0, %v1080
      %v1082 = vpop.f32.mrb[0].mxu0
      %1083 = vmatprep.mubr.bf16.mxu0 0
      %1084 = vmatmul.mubr.bf16.gmra.mrb[0].mxu0 %v981
      %v1085 = vpop.f32.mrb[0].mxu0
      %v1086 = vadd.f32 0.0, %v1085
      %v1087 = vpop.f32.mrb[0].mxu0
      %v1088 = vpop.f32.mrb[0].mxu0
      %v1089 = vadd.f32 0.0, %v1088
      %v1090 = vpop.f32.mrb[0].mxu0
      %1091 = vmatprep.mubr.bf16.mxu0 0
      %1092 = vmatmul.mubr.bf16.gmra.mrb[0].mxu0 %v984
      %v1093 = vpop.f32.mrb[0].mxu0
      %v1094 = vadd.f32 0.0, %v1093
      %v1095 = vpop.f32.mrb[0].mxu0
      %v1096 = vpop.f32.mrb[0].mxu0
      %v1097 = vadd.f32 0.0, %v1096
      %v1098 = vpop.f32.mrb[0].mxu0
      %1099 = vmatprep.mubr.bf16.mxu0 0
      %1100 = vmatmul.mubr.bf16.gmra.mrb[0].mxu0 %v987
      %v1101 = vpop.f32.mrb[0].mxu0
      %v1102 = vadd.f32 0.0, %v1101
      %v1103 = vpop.f32.mrb[0].mxu0
      %v1104 = vpop.f32.mrb[0].mxu0
      %v1105 = vadd.f32 0.0, %v1104
      %v1106 = vpop.f32.mrb[0].mxu0
      %1107 = vmatprep.mubr.bf16.mxu0 0
      %1108 = vmatmul.mubr.bf16.gmra.mrb[0].mxu0 %v990
      %v1109 = vpop.f32.mrb[0].mxu0
      %v1110 = vadd.f32 0.0, %v1109
      %v1111 = vpop.f32.mrb[0].mxu0
      %v1112 = vpop.f32.mrb[0].mxu0
      %v1113 = vadd.f32 0.0, %v1112
      %v1114 = vpop.f32.mrb[0].mxu0
      %1115 = vmatprep.mubr.bf16.mxu0 0
      %1116 = vmatmul.mubr.bf16.gmra.mrb[0].mxu0 %v993
      %v1117 = vpop.f32.mrb[0].mxu0
      %v1118 = vadd.f32 0.0, %v1117
      %v1119 = vpop.f32.mrb[0].mxu0
      %v1120 = vpop.f32.mrb[0].mxu0
      %v1121 = vadd.f32 0.0, %v1120
      %v1122 = vpop.f32.mrb[0].mxu0
      %1123 = vmatprep.mubr.bf16.mxu0 0
      %1124 = vmatmul.mubr.bf16.gmra.mrb[0].mxu0 %v996
      %v1125 = vpop.f32.mrb[0].mxu0
      %v1126 = vadd.f32 0.0, %v1125
      %v1127 = vpop.f32.mrb[0].mxu0
      %v1128 = vpop.f32.mrb[0].mxu0
      %v1129 = vadd.f32 0.0, %v1128
      %v1130 = vpop.f32.mrb[0].mxu0
      %1131 = vmatprep.mubr.bf16.mxu0 0
      %1132 = vmatmul.mubr.bf16.gmra.mrb[0].mxu0 %v999
      %v1133 = vpop.f32.mrb[0].mxu0
      %v1134 = vadd.f32 0.0, %v1133
      %v1135 = vpop.f32.mrb[0].mxu0
      %v1136 = vpop.f32.mrb[0].mxu0
      %v1137 = vadd.f32 0.0, %v1136
      %v1138 = vpop.f32.mrb[0].mxu0
      %1139 = vmatprep.mubr.bf16.mxu0 0
      %1140 = vmatmul.mubr.bf16.gmra.mrb[0].mxu0 %v1002
      %v1141 = vpop.f32.mrb[0].mxu0
      %v1142 = vadd.f32 0.0, %v1141
      %v1143 = vpop.f32.mrb[0].mxu0
      %v1144 = vpop.f32.mrb[0].mxu0
      %v1145 = vadd.f32 0.0, %v1144
      %v1146 = vpop.f32.mrb[0].mxu0
      %1147 = vmatprep.mubr.bf16.mxu0 0
      %1148 = vmatmul.mubr.bf16.gmra.mrb[0].mxu0 %v1005
      %v1149 = vpop.f32.mrb[0].mxu0
      %v1150 = vadd.f32 0.0, %v1149
      %v1151 = vpop.f32.mrb[0].mxu0
      %v1152 = vpop.f32.mrb[0].mxu0
      %v1153 = vadd.f32 0.0, %v1152
      %v1154 = vpop.f32.mrb[0].mxu0
      %1155 = vmatprep.mubr.bf16.mxu0 0
      %1156 = vmatmul.mubr.bf16.gmra.mrb[0].mxu0 %v1008
      %v1157 = vpop.f32.mrb[0].mxu0
      %v1158 = vadd.f32 0.0, %v1157
      %v1159 = vpop.f32.mrb[0].mxu0
      %v1160 = vpop.f32.mrb[0].mxu0
      %v1161 = vadd.f32 0.0, %v1160
      %v1162 = vpop.f32.mrb[0].mxu0
      %1163 = vmatprep.mubr.bf16.mxu0 0
      %1164 = vmatmul.mubr.bf16.gmra.mrb[0].mxu0 %v1011
      %v1165 = vpop.f32.mrb[0].mxu0
      %v1166 = vadd.f32 0.0, %v1165
      %v1167 = vpop.f32.mrb[0].mxu0
      %v1168 = vpop.f32.mrb[0].mxu0
      %v1169 = vadd.f32 0.0, %v1168
      %v1170 = vpop.f32.mrb[0].mxu0
      %1171 = vmatprep.mubr.bf16.mxu0 0
      %1172 = vmatmul.mubr.bf16.gmra.mrb[0].mxu0 %v1014
      %v1173 = vpop.f32.mrb[0].mxu0
      %v1174 = vadd.f32 0.0, %v1173
      %v1175 = vpop.f32.mrb[0].mxu0
      %v1176 = vpop.f32.mrb[0].mxu0
      %v1177 = vadd.f32 0.0, %v1176
      %v1178 = vpop.f32.mrb[0].mxu0
      %1179 = vdwg.mxu0
      %v1180 = vadd.f32 %v712, %v1054
      %v1181 = vadd.f32 %v715, %v1057
      %v1182 = vadd.f32 %v720, %v1062
      %v1183 = vadd.f32 %v723, %v1065
      %v1184 = vadd.f32 %v728, %v1070
      %v1185 = vadd.f32 %v731, %v1073
      %v1186 = vadd.f32 %v736, %v1078
      %v1187 = vadd.f32 %v739, %v1081
      %v1188 = vadd.f32 %v744, %v1086
      %v1189 = vadd.f32 %v747, %v1089
      %v1190 = vadd.f32 %v752, %v1094
      %v1191 = vadd.f32 %v755, %v1097
      %v1192 = vadd.f32 %v760, %v1102
      %v1193 = vadd.f32 %v763, %v1105
      %v1194 = vadd.f32 %v768, %v1110
      %v1195 = vadd.f32 %v771, %v1113
      %v1196 = vadd.f32 %v776, %v1118
      %v1197 = vadd.f32 %v779, %v1121
      %v1198 = vadd.f32 %v784, %v1126
      %v1199 = vadd.f32 %v787, %v1129
      %v1200 = vadd.f32 %v792, %v1134
      %v1201 = vadd.f32 %v795, %v1137
      %v1202 = vadd.f32 %v800, %v1142
      %v1203 = vadd.f32 %v803, %v1145
      %v1204 = vadd.f32 %v808, %v1150
      %v1205 = vadd.f32 %v811, %v1153
      %v1206 = vadd.f32 %v816, %v1158
      %v1207 = vadd.f32 %v819, %v1161
      %v1208 = vadd.f32 %v824, %v1166
      %v1209 = vadd.f32 %v827, %v1169
      %v1210 = vadd.f32 %v832, %v1174
      %v1211 = vadd.f32 %v835, %v1177
      %s1212 = sadd.s32 %s153, 160
      %s1213 = sshra.s32 %s1212, 3
      %s1214 = sand.u32 %s1212, 7
      %s1215 = smul.addr %s1213, 4
      %s1216 = scalar_lea.vmem %s0, %s1215
      %v1217 = vld [vmem:[%s1216] sm:$0xf]
      %v1218 = vld [vmem:[%s1216 + $0x4] sm:$0xf]
      %v1219 = vld [vmem:[%s1216 + $0x8] sm:$0xf]
      %v1220 = vld [vmem:[%s1216 + $0xc] sm:$0xf]
      %v1221 = vld [vmem:[%s1216 + $0x10] sm:$0xf]
      %v1222 = vld [vmem:[%s1216 + $0x14] sm:$0xf]
      %v1223 = vld [vmem:[%s1216 + $0x18] sm:$0xf]
      %v1224 = vld [vmem:[%s1216 + $0x1c] sm:$0xf]
      %v1225 = vld [vmem:[%s1216 + $0x20] sm:$0xf]
      %v1226 = vld [vmem:[%s1216 + $0x24] sm:$0xf]
      %v1227 = vld [vmem:[%s1216 + $0x28] sm:$0xf]
      %v1228 = vld [vmem:[%s1216 + $0x2c] sm:$0xf]
      %v1229 = vld [vmem:[%s1216 + $0x30] sm:$0xf]
      %v1230 = vld [vmem:[%s1216 + $0x34] sm:$0xf]
      %v1231 = vld [vmem:[%s1216 + $0x38] sm:$0xf]
      %v1232 = vld [vmem:[%s1216 + $0x3c] sm:$0xf]
      %v1233 = vld [vmem:[%s1216 + $0x40] sm:$0xf]
      %v1234 = vld [vmem:[%s1216 + $0x44] sm:$0xf]
      %v1235 = vld [vmem:[%s1216 + $0x48] sm:$0xf]
      %v1236 = vld [vmem:[%s1216 + $0x4c] sm:$0xf]
      %v1237 = vld [vmem:[%s1216 + $0x50] sm:$0xf]
      %v1238 = vld [vmem:[%s1216 + $0x54] sm:$0xf]
      %v1239 = vld [vmem:[%s1216 + $0x58] sm:$0xf]
      %v1240 = vld [vmem:[%s1216 + $0x5c] sm:$0xf]
      %v1241 = vld [vmem:[%s1216 + $0x60] sm:$0xf]
      %v1242 = vld [vmem:[%s1216 + $0x64] sm:$0xf]
      %v1243 = vld [vmem:[%s1216 + $0x68] sm:$0xf]
      %v1244 = vld [vmem:[%s1216 + $0x6c] sm:$0xf]
      %v1245 = vld [vmem:[%s1216 + $0x70] sm:$0xf]
      %v1246 = vld [vmem:[%s1216 + $0x74] sm:$0xf]
      %v1247 = vld [vmem:[%s1216 + $0x78] sm:$0xf]
      %v1248 = vld [vmem:[%s1216 + $0x7c] sm:$0xf]
      %s1249 = scalar_lea.vmem %s1, 36
      %v1250 = vld [vmem:[%s1249] sm:$0xf]
      %v1251 = vld [vmem:[%s1249 + $0x4] sm:$0xf]
      %v1252 = vld [vmem:[%s1249 + $0x8] sm:$0xf]
      %v1285 = vunpack.c.l.b16 %v1217
      %v1286 = vunpack.c.l.b16 %v1218
      %v1287 = vunpack.c.l.b16 %v1219
      %v1288 = vunpack.c.l.b16 %v1220
      %v1289 = vunpack.c.l.b16 %v1221
      %v1290 = vunpack.c.l.b16 %v1222
      %v1291 = vunpack.c.l.b16 %v1223
      %v1292 = vunpack.c.l.b16 %v1224
      %v1293 = vunpack.c.l.b16 %v1225
      %v1294 = vunpack.c.l.b16 %v1226
      %v1295 = vunpack.c.l.b16 %v1227
      %v1296 = vunpack.c.l.b16 %v1228
      %v1297 = vunpack.c.l.b16 %v1229
      %v1298 = vunpack.c.l.b16 %v1230
      %v1299 = vunpack.c.l.b16 %v1231
      %v1300 = vunpack.c.l.b16 %v1232
      %v1301 = vunpack.c.l.b16 %v1233
      %v1302 = vunpack.c.l.b16 %v1234
      %v1303 = vunpack.c.l.b16 %v1235
      %v1304 = vunpack.c.l.b16 %v1236
      %v1305 = vunpack.c.l.b16 %v1237
      %v1306 = vunpack.c.l.b16 %v1238
      %v1307 = vunpack.c.l.b16 %v1239
      %v1308 = vunpack.c.l.b16 %v1240
      %v1309 = vunpack.c.l.b16 %v1241
      %v1310 = vunpack.c.l.b16 %v1242
      %v1311 = vunpack.c.l.b16 %v1243
      %v1312 = vunpack.c.l.b16 %v1244
      %v1313 = vunpack.c.l.b16 %v1245
      %v1314 = vunpack.c.l.b16 %v1246
      %v1315 = vunpack.c.l.b16 %v1247
      %v1316 = vunpack.c.l.b16 %v1248
      %v1317 = vpack.c.b16 %v1286, %v1285
      %v1318 = vpack.c.b16 %v1288, %v1287
      %v1319 = vpack.c.b16 %v1290, %v1289
      %v1320 = vpack.c.b16 %v1292, %v1291
      %v1321 = vpack.c.b16 %v1294, %v1293
      %v1322 = vpack.c.b16 %v1296, %v1295
      %v1323 = vpack.c.b16 %v1298, %v1297
      %v1324 = vpack.c.b16 %v1300, %v1299
      %v1325 = vpack.c.b16 %v1302, %v1301
      %v1326 = vpack.c.b16 %v1304, %v1303
      %v1327 = vpack.c.b16 %v1306, %v1305
      %v1328 = vpack.c.b16 %v1308, %v1307
      %v1329 = vpack.c.b16 %v1310, %v1309
      %v1330 = vpack.c.b16 %v1312, %v1311
      %v1331 = vpack.c.b16 %v1314, %v1313
      %v1332 = vpack.c.b16 %v1316, %v1315
      %v1336 = vunpack.c.l.b16 %v1250
      %v1337 = vunpack.c.l.b16 %v1251
      %v1338 = vunpack.c.l.b16 %v1252
      %v1339 = vpack.c.b16 %v1337, %v1336
      %v1340 = vpack.c.b16 %v1338, %v1338
      %v1343 = vsel %vm323, %v1317, 0
      %v1346 = vsel %vm323, %v1318, 0
      %v1349 = vsel %vm323, %v1319, 0
      %v1352 = vsel %vm323, %v1320, 0
      %v1355 = vsel %vm323, %v1321, 0
      %v1358 = vsel %vm323, %v1322, 0
      %v1361 = vsel %vm323, %v1323, 0
      %v1364 = vsel %vm323, %v1324, 0
      %v1367 = vsel %vm323, %v1325, 0
      %v1370 = vsel %vm323, %v1326, 0
      %v1373 = vsel %vm323, %v1327, 0
      %v1376 = vsel %vm323, %v1328, 0
      %v1379 = vsel %vm323, %v1329, 0
      %v1382 = vsel %vm323, %v1330, 0
      %v1385 = vsel %vm323, %v1331, 0
      %v1388 = vsel %vm323, %v1332, 0
      %v1391 = vsel %vm372, %v1340, 0
      %1393 = vmatprep.subr.bf16.mxu0 0
      %1394 = vmatpush1.bf16.msra.mxu0 %v1339
      %1395 = vmatprep.subr.bf16.mxu0 0
      %1396 = vmatpush1.bf16.msra.mxu0 %v1391
      %1397 = vmatprep.subr.bf16.mxu0 0
      %1398 = vmatpush1.bf16.msra.mxu0 0
      %1399 = vmatprep.subr.bf16.mxu0 0
      %1400 = vmatpush1.bf16.msra.mxu0 0
      %1401 = vmatprep.subr.bf16.mxu0 0
      %1402 = vmatpush1.bf16.msra.mxu0 0
      %1403 = vmatprep.subr.bf16.mxu0 0
      %1404 = vmatpush1.bf16.msra.mxu0 0
      %1405 = vmatprep.subr.bf16.mxu0 0
      %1406 = vmatpush1.bf16.msra.mxu0 0
      %1407 = vmatprep.subr.bf16.mxu0 0
      %1408 = vmatpush1.bf16.msra.mxu0 0
      %1409 = vmatprep.subr.bf16.mxu0 0
      %1410 = vmatpush1.bf16.msra.mxu0 0
      %1411 = vmatprep.subr.bf16.mxu0 0
      %1412 = vmatpush1.bf16.msra.mxu0 0
      %1413 = vmatprep.subr.bf16.mxu0 0
      %1414 = vmatpush1.bf16.msra.mxu0 0
      %1415 = vmatprep.subr.bf16.mxu0 0
      %1416 = vmatpush1.bf16.msra.mxu0 0
      %1417 = vmatprep.subr.bf16.mxu0 0
      %1418 = vmatpush1.bf16.msra.mxu0 0
      %1419 = vmatprep.subr.bf16.mxu0 0
      %1420 = vmatpush1.bf16.msra.mxu0 0
      %1421 = vmatprep.subr.bf16.mxu0 0
      %1422 = vmatpush1.bf16.msra.mxu0 0
      %1423 = vmatprep.subr.bf16.mxu0 0
      %1424 = vmatpush1.bf16.msra.mxu0 0
      %1425 = vmatprep.mubr.bf16.mxu0 0
      %1426 = vmatmul.mubr.bf16.gmra.mrb[0].mxu0 %v1343
      %v1427 = vpop.f32.mrb[0].mxu0
      %v1428 = vadd.f32 0.0, %v1427
      %v1429 = vpop.f32.mrb[0].mxu0
      %v1430 = vpop.f32.mrb[0].mxu0
      %v1431 = vadd.f32 0.0, %v1430
      %v1432 = vpop.f32.mrb[0].mxu0
      %1433 = vmatprep.mubr.bf16.mxu0 0
      %1434 = vmatmul.mubr.bf16.gmra.mrb[0].mxu0 %v1346
      %v1435 = vpop.f32.mrb[0].mxu0
      %v1436 = vadd.f32 0.0, %v1435
      %v1437 = vpop.f32.mrb[0].mxu0
      %v1438 = vpop.f32.mrb[0].mxu0
      %v1439 = vadd.f32 0.0, %v1438
      %v1440 = vpop.f32.mrb[0].mxu0
      %1441 = vmatprep.mubr.bf16.mxu0 0
      %1442 = vmatmul.mubr.bf16.gmra.mrb[0].mxu0 %v1349
      %v1443 = vpop.f32.mrb[0].mxu0
      %v1444 = vadd.f32 0.0, %v1443
      %v1445 = vpop.f32.mrb[0].mxu0
      %v1446 = vpop.f32.mrb[0].mxu0
      %v1447 = vadd.f32 0.0, %v1446
      %v1448 = vpop.f32.mrb[0].mxu0
      %1449 = vmatprep.mubr.bf16.mxu0 0
      %1450 = vmatmul.mubr.bf16.gmra.mrb[0].mxu0 %v1352
      %v1451 = vpop.f32.mrb[0].mxu0
      %v1452 = vadd.f32 0.0, %v1451
      %v1453 = vpop.f32.mrb[0].mxu0
      %v1454 = vpop.f32.mrb[0].mxu0
      %v1455 = vadd.f32 0.0, %v1454
      %v1456 = vpop.f32.mrb[0].mxu0
      %1457 = vmatprep.mubr.bf16.mxu0 0
      %1458 = vmatmul.mubr.bf16.gmra.mrb[0].mxu0 %v1355
      %v1459 = vpop.f32.mrb[0].mxu0
      %v1460 = vadd.f32 0.0, %v1459
      %v1461 = vpop.f32.mrb[0].mxu0
      %v1462 = vpop.f32.mrb[0].mxu0
      %v1463 = vadd.f32 0.0, %v1462
      %v1464 = vpop.f32.mrb[0].mxu0
      %1465 = vmatprep.mubr.bf16.mxu0 0
      %1466 = vmatmul.mubr.bf16.gmra.mrb[0].mxu0 %v1358
      %v1467 = vpop.f32.mrb[0].mxu0
      %v1468 = vadd.f32 0.0, %v1467
      %v1469 = vpop.f32.mrb[0].mxu0
      %v1470 = vpop.f32.mrb[0].mxu0
      %v1471 = vadd.f32 0.0, %v1470
      %v1472 = vpop.f32.mrb[0].mxu0
      %1473 = vmatprep.mubr.bf16.mxu0 0
      %1474 = vmatmul.mubr.bf16.gmra.mrb[0].mxu0 %v1361
      %v1475 = vpop.f32.mrb[0].mxu0
      %v1476 = vadd.f32 0.0, %v1475
      %v1477 = vpop.f32.mrb[0].mxu0
      %v1478 = vpop.f32.mrb[0].mxu0
      %v1479 = vadd.f32 0.0, %v1478
      %v1480 = vpop.f32.mrb[0].mxu0
      %1481 = vmatprep.mubr.bf16.mxu0 0
      %1482 = vmatmul.mubr.bf16.gmra.mrb[0].mxu0 %v1364
      %v1483 = vpop.f32.mrb[0].mxu0
      %v1484 = vadd.f32 0.0, %v1483
      %v1485 = vpop.f32.mrb[0].mxu0
      %v1486 = vpop.f32.mrb[0].mxu0
      %v1487 = vadd.f32 0.0, %v1486
      %v1488 = vpop.f32.mrb[0].mxu0
      %1489 = vmatprep.mubr.bf16.mxu0 0
      %1490 = vmatmul.mubr.bf16.gmra.mrb[0].mxu0 %v1367
      %v1491 = vpop.f32.mrb[0].mxu0
      %v1492 = vadd.f32 0.0, %v1491
      %v1493 = vpop.f32.mrb[0].mxu0
      %v1494 = vpop.f32.mrb[0].mxu0
      %v1495 = vadd.f32 0.0, %v1494
      %v1496 = vpop.f32.mrb[0].mxu0
      %1497 = vmatprep.mubr.bf16.mxu0 0
      %1498 = vmatmul.mubr.bf16.gmra.mrb[0].mxu0 %v1370
      %v1499 = vpop.f32.mrb[0].mxu0
      %v1500 = vadd.f32 0.0, %v1499
      %v1501 = vpop.f32.mrb[0].mxu0
      %v1502 = vpop.f32.mrb[0].mxu0
      %v1503 = vadd.f32 0.0, %v1502
      %v1504 = vpop.f32.mrb[0].mxu0
      %1505 = vmatprep.mubr.bf16.mxu0 0
      %1506 = vmatmul.mubr.bf16.gmra.mrb[0].mxu0 %v1373
      %v1507 = vpop.f32.mrb[0].mxu0
      %v1508 = vadd.f32 0.0, %v1507
      %v1509 = vpop.f32.mrb[0].mxu0
      %v1510 = vpop.f32.mrb[0].mxu0
      %v1511 = vadd.f32 0.0, %v1510
      %v1512 = vpop.f32.mrb[0].mxu0
      %1513 = vmatprep.mubr.bf16.mxu0 0
      %1514 = vmatmul.mubr.bf16.gmra.mrb[0].mxu0 %v1376
      %v1515 = vpop.f32.mrb[0].mxu0
      %v1516 = vadd.f32 0.0, %v1515
      %v1517 = vpop.f32.mrb[0].mxu0
      %v1518 = vpop.f32.mrb[0].mxu0
      %v1519 = vadd.f32 0.0, %v1518
      %v1520 = vpop.f32.mrb[0].mxu0
      %1521 = vmatprep.mubr.bf16.mxu0 0
      %1522 = vmatmul.mubr.bf16.gmra.mrb[0].mxu0 %v1379
      %v1523 = vpop.f32.mrb[0].mxu0
      %v1524 = vadd.f32 0.0, %v1523
      %v1525 = vpop.f32.mrb[0].mxu0
      %v1526 = vpop.f32.mrb[0].mxu0
      %v1527 = vadd.f32 0.0, %v1526
      %v1528 = vpop.f32.mrb[0].mxu0
      %1529 = vmatprep.mubr.bf16.mxu0 0
      %1530 = vmatmul.mubr.bf16.gmra.mrb[0].mxu0 %v1382
      %v1531 = vpop.f32.mrb[0].mxu0
      %v1532 = vadd.f32 0.0, %v1531
      %v1533 = vpop.f32.mrb[0].mxu0
      %v1534 = vpop.f32.mrb[0].mxu0
      %v1535 = vadd.f32 0.0, %v1534
      %v1536 = vpop.f32.mrb[0].mxu0
      %1537 = vmatprep.mubr.bf16.mxu0 0
      %1538 = vmatmul.mubr.bf16.gmra.mrb[0].mxu0 %v1385
      %v1539 = vpop.f32.mrb[0].mxu0
      %v1540 = vadd.f32 0.0, %v1539
      %v1541 = vpop.f32.mrb[0].mxu0
      %v1542 = vpop.f32.mrb[0].mxu0
      %v1543 = vadd.f32 0.0, %v1542
      %v1544 = vpop.f32.mrb[0].mxu0
      %1545 = vmatprep.mubr.bf16.mxu0 0
      %1546 = vmatmul.mubr.bf16.gmra.mrb[0].mxu0 %v1388
      %v1547 = vpop.f32.mrb[0].mxu0
      %v1548 = vadd.f32 0.0, %v1547
      %v1549 = vpop.f32.mrb[0].mxu0
      %v1550 = vpop.f32.mrb[0].mxu0
      %v1551 = vadd.f32 0.0, %v1550
      %v1552 = vpop.f32.mrb[0].mxu0
      %1553 = vdwg.mxu0
      %v1554 = vadd.f32 %v1180, %v1428
      %v1555 = vadd.f32 %v1181, %v1431
      %v1556 = vadd.f32 %v1182, %v1436
      %v1557 = vadd.f32 %v1183, %v1439
      %v1558 = vadd.f32 %v1184, %v1444
      %v1559 = vadd.f32 %v1185, %v1447
      %v1560 = vadd.f32 %v1186, %v1452
      %v1561 = vadd.f32 %v1187, %v1455
      %v1562 = vadd.f32 %v1188, %v1460
      %v1563 = vadd.f32 %v1189, %v1463
      %v1564 = vadd.f32 %v1190, %v1468
      %v1565 = vadd.f32 %v1191, %v1471
      %v1566 = vadd.f32 %v1192, %v1476
      %v1567 = vadd.f32 %v1193, %v1479
      %v1568 = vadd.f32 %v1194, %v1484
      %v1569 = vadd.f32 %v1195, %v1487
      %v1570 = vadd.f32 %v1196, %v1492
      %v1571 = vadd.f32 %v1197, %v1495
      %v1572 = vadd.f32 %v1198, %v1500
      %v1573 = vadd.f32 %v1199, %v1503
      %v1574 = vadd.f32 %v1200, %v1508
      %v1575 = vadd.f32 %v1201, %v1511
      %v1576 = vadd.f32 %v1202, %v1516
      %v1577 = vadd.f32 %v1203, %v1519
      %v1578 = vadd.f32 %v1204, %v1524
      %v1579 = vadd.f32 %v1205, %v1527
      %v1580 = vadd.f32 %v1206, %v1532
      %v1581 = vadd.f32 %v1207, %v1535
      %v1582 = vadd.f32 %v1208, %v1540
      %v1583 = vadd.f32 %v1209, %v1543
      %v1584 = vadd.f32 %v1210, %v1548
      %v1585 = vadd.f32 %v1211, %v1551
      %s1586 = sadd.s32 %s153, 176
      %s1587 = sshra.s32 %s1586, 3
      %s1588 = sand.u32 %s1586, 7
      %s1589 = smul.addr %s1587, 4
      %s1590 = scalar_lea.vmem %s0, %s1589
      %v1591 = vld [vmem:[%s1590] sm:$0xf]
      %v1592 = vld [vmem:[%s1590 + $0x4] sm:$0xf]
      %v1593 = vld [vmem:[%s1590 + $0x8] sm:$0xf]
      %v1594 = vld [vmem:[%s1590 + $0xc] sm:$0xf]
      %v1595 = vld [vmem:[%s1590 + $0x10] sm:$0xf]
      %v1596 = vld [vmem:[%s1590 + $0x14] sm:$0xf]
      %v1597 = vld [vmem:[%s1590 + $0x18] sm:$0xf]
      %v1598 = vld [vmem:[%s1590 + $0x1c] sm:$0xf]
      %v1599 = vld [vmem:[%s1590 + $0x20] sm:$0xf]
      %v1600 = vld [vmem:[%s1590 + $0x24] sm:$0xf]
      %v1601 = vld [vmem:[%s1590 + $0x28] sm:$0xf]
      %v1602 = vld [vmem:[%s1590 + $0x2c] sm:$0xf]
      %v1603 = vld [vmem:[%s1590 + $0x30] sm:$0xf]
      %v1604 = vld [vmem:[%s1590 + $0x34] sm:$0xf]
      %v1605 = vld [vmem:[%s1590 + $0x38] sm:$0xf]
      %v1606 = vld [vmem:[%s1590 + $0x3c] sm:$0xf]
      %v1607 = vld [vmem:[%s1590 + $0x40] sm:$0xf]
      %v1608 = vld [vmem:[%s1590 + $0x44] sm:$0xf]
      %v1609 = vld [vmem:[%s1590 + $0x48] sm:$0xf]
      %v1610 = vld [vmem:[%s1590 + $0x4c] sm:$0xf]
      %v1611 = vld [vmem:[%s1590 + $0x50] sm:$0xf]
      %v1612 = vld [vmem:[%s1590 + $0x54] sm:$0xf]
      %v1613 = vld [vmem:[%s1590 + $0x58] sm:$0xf]
      %v1614 = vld [vmem:[%s1590 + $0x5c] sm:$0xf]
      %v1615 = vld [vmem:[%s1590 + $0x60] sm:$0xf]
      %v1616 = vld [vmem:[%s1590 + $0x64] sm:$0xf]
      %v1617 = vld [vmem:[%s1590 + $0x68] sm:$0xf]
      %v1618 = vld [vmem:[%s1590 + $0x6c] sm:$0xf]
      %v1619 = vld [vmem:[%s1590 + $0x70] sm:$0xf]
      %v1620 = vld [vmem:[%s1590 + $0x74] sm:$0xf]
      %v1621 = vld [vmem:[%s1590 + $0x78] sm:$0xf]
      %v1622 = vld [vmem:[%s1590 + $0x7c] sm:$0xf]
      %s1623 = scalar_lea.vmem %s1, 48
      %v1624 = vld [vmem:[%s1623] sm:$0xf]
      %v1625 = vld [vmem:[%s1623 + $0x4] sm:$0xf]
      %v1626 = vld [vmem:[%s1623 + $0x8] sm:$0xf]
      %v1659 = vunpack.c.l.b16 %v1591
      %v1660 = vunpack.c.l.b16 %v1592
      %v1661 = vunpack.c.l.b16 %v1593
      %v1662 = vunpack.c.l.b16 %v1594
      %v1663 = vunpack.c.l.b16 %v1595
      %v1664 = vunpack.c.l.b16 %v1596
      %v1665 = vunpack.c.l.b16 %v1597
      %v1666 = vunpack.c.l.b16 %v1598
      %v1667 = vunpack.c.l.b16 %v1599
      %v1668 = vunpack.c.l.b16 %v1600
      %v1669 = vunpack.c.l.b16 %v1601
      %v1670 = vunpack.c.l.b16 %v1602
      %v1671 = vunpack.c.l.b16 %v1603
      %v1672 = vunpack.c.l.b16 %v1604
      %v1673 = vunpack.c.l.b16 %v1605
      %v1674 = vunpack.c.l.b16 %v1606
      %v1675 = vunpack.c.l.b16 %v1607
      %v1676 = vunpack.c.l.b16 %v1608
      %v1677 = vunpack.c.l.b16 %v1609
      %v1678 = vunpack.c.l.b16 %v1610
      %v1679 = vunpack.c.l.b16 %v1611
      %v1680 = vunpack.c.l.b16 %v1612
      %v1681 = vunpack.c.l.b16 %v1613
      %v1682 = vunpack.c.l.b16 %v1614
      %v1683 = vunpack.c.l.b16 %v1615
      %v1684 = vunpack.c.l.b16 %v1616
      %v1685 = vunpack.c.l.b16 %v1617
      %v1686 = vunpack.c.l.b16 %v1618
      %v1687 = vunpack.c.l.b16 %v1619
      %v1688 = vunpack.c.l.b16 %v1620
      %v1689 = vunpack.c.l.b16 %v1621
      %v1690 = vunpack.c.l.b16 %v1622
      %v1691 = vpack.c.b16 %v1660, %v1659
      %v1692 = vpack.c.b16 %v1662, %v1661
      %v1693 = vpack.c.b16 %v1664, %v1663
      %v1694 = vpack.c.b16 %v1666, %v1665
      %v1695 = vpack.c.b16 %v1668, %v1667
      %v1696 = vpack.c.b16 %v1670, %v1669
      %v1697 = vpack.c.b16 %v1672, %v1671
      %v1698 = vpack.c.b16 %v1674, %v1673
      %v1699 = vpack.c.b16 %v1676, %v1675
      %v1700 = vpack.c.b16 %v1678, %v1677
      %v1701 = vpack.c.b16 %v1680, %v1679
      %v1702 = vpack.c.b16 %v1682, %v1681
      %v1703 = vpack.c.b16 %v1684, %v1683
      %v1704 = vpack.c.b16 %v1686, %v1685
      %v1705 = vpack.c.b16 %v1688, %v1687
      %v1706 = vpack.c.b16 %v1690, %v1689
      %v1710 = vunpack.c.l.b16 %v1624
      %v1711 = vunpack.c.l.b16 %v1625
      %v1712 = vunpack.c.l.b16 %v1626
      %v1713 = vpack.c.b16 %v1711, %v1710
      %v1714 = vpack.c.b16 %v1712, %v1712
      %v1717 = vsel %vm323, %v1691, 0
      %v1720 = vsel %vm323, %v1692, 0
      %v1723 = vsel %vm323, %v1693, 0
      %v1726 = vsel %vm323, %v1694, 0
      %v1729 = vsel %vm323, %v1695, 0
      %v1732 = vsel %vm323, %v1696, 0
      %v1735 = vsel %vm323, %v1697, 0
      %v1738 = vsel %vm323, %v1698, 0
      %v1741 = vsel %vm323, %v1699, 0
      %v1744 = vsel %vm323, %v1700, 0
      %v1747 = vsel %vm323, %v1701, 0
      %v1750 = vsel %vm323, %v1702, 0
      %v1753 = vsel %vm323, %v1703, 0
      %v1756 = vsel %vm323, %v1704, 0
      %v1759 = vsel %vm323, %v1705, 0
      %v1762 = vsel %vm323, %v1706, 0
      %v1765 = vsel %vm372, %v1714, 0
      %1767 = vmatprep.subr.bf16.mxu0 0
      %1768 = vmatpush1.bf16.msra.mxu0 %v1713
      %1769 = vmatprep.subr.bf16.mxu0 0
      %1770 = vmatpush1.bf16.msra.mxu0 %v1765
      %1771 = vmatprep.subr.bf16.mxu0 0
      %1772 = vmatpush1.bf16.msra.mxu0 0
      %1773 = vmatprep.subr.bf16.mxu0 0
      %1774 = vmatpush1.bf16.msra.mxu0 0
      %1775 = vmatprep.subr.bf16.mxu0 0
      %1776 = vmatpush1.bf16.msra.mxu0 0
      %1777 = vmatprep.subr.bf16.mxu0 0
      %1778 = vmatpush1.bf16.msra.mxu0 0
      %1779 = vmatprep.subr.bf16.mxu0 0
      %1780 = vmatpush1.bf16.msra.mxu0 0
      %1781 = vmatprep.subr.bf16.mxu0 0
      %1782 = vmatpush1.bf16.msra.mxu0 0
      %1783 = vmatprep.subr.bf16.mxu0 0
      %1784 = vmatpush1.bf16.msra.mxu0 0
      %1785 = vmatprep.subr.bf16.mxu0 0
      %1786 = vmatpush1.bf16.msra.mxu0 0
      %1787 = vmatprep.subr.bf16.mxu0 0
      %1788 = vmatpush1.bf16.msra.mxu0 0
      %1789 = vmatprep.subr.bf16.mxu0 0
      %1790 = vmatpush1.bf16.msra.mxu0 0
      %1791 = vmatprep.subr.bf16.mxu0 0
      %1792 = vmatpush1.bf16.msra.mxu0 0
      %1793 = vmatprep.subr.bf16.mxu0 0
      %1794 = vmatpush1.bf16.msra.mxu0 0
      %1795 = vmatprep.subr.bf16.mxu0 0
      %1796 = vmatpush1.bf16.msra.mxu0 0
      %1797 = vmatprep.subr.bf16.mxu0 0
      %1798 = vmatpush1.bf16.msra.mxu0 0
      %1799 = vmatprep.mubr.bf16.mxu0 0
      %1800 = vmatmul.mubr.bf16.gmra.mrb[0].mxu0 %v1717
      %v1801 = vpop.f32.mrb[0].mxu0
      %v1802 = vadd.f32 0.0, %v1801
      %v1803 = vpop.f32.mrb[0].mxu0
      %v1804 = vpop.f32.mrb[0].mxu0
      %v1805 = vadd.f32 0.0, %v1804
      %v1806 = vpop.f32.mrb[0].mxu0
      %1807 = vmatprep.mubr.bf16.mxu0 0
      %1808 = vmatmul.mubr.bf16.gmra.mrb[0].mxu0 %v1720
      %v1809 = vpop.f32.mrb[0].mxu0
      %v1810 = vadd.f32 0.0, %v1809
      %v1811 = vpop.f32.mrb[0].mxu0
      %v1812 = vpop.f32.mrb[0].mxu0
      %v1813 = vadd.f32 0.0, %v1812
      %v1814 = vpop.f32.mrb[0].mxu0
      %1815 = vmatprep.mubr.bf16.mxu0 0
      %1816 = vmatmul.mubr.bf16.gmra.mrb[0].mxu0 %v1723
      %v1817 = vpop.f32.mrb[0].mxu0
      %v1818 = vadd.f32 0.0, %v1817
      %v1819 = vpop.f32.mrb[0].mxu0
      %v1820 = vpop.f32.mrb[0].mxu0
      %v1821 = vadd.f32 0.0, %v1820
      %v1822 = vpop.f32.mrb[0].mxu0
      %1823 = vmatprep.mubr.bf16.mxu0 0
      %1824 = vmatmul.mubr.bf16.gmra.mrb[0].mxu0 %v1726
      %v1825 = vpop.f32.mrb[0].mxu0
      %v1826 = vadd.f32 0.0, %v1825
      %v1827 = vpop.f32.mrb[0].mxu0
      %v1828 = vpop.f32.mrb[0].mxu0
      %v1829 = vadd.f32 0.0, %v1828
      %v1830 = vpop.f32.mrb[0].mxu0
      %1831 = vmatprep.mubr.bf16.mxu0 0
      %1832 = vmatmul.mubr.bf16.gmra.mrb[0].mxu0 %v1729
      %v1833 = vpop.f32.mrb[0].mxu0
      %v1834 = vadd.f32 0.0, %v1833
      %v1835 = vpop.f32.mrb[0].mxu0
      %v1836 = vpop.f32.mrb[0].mxu0
      %v1837 = vadd.f32 0.0, %v1836
      %v1838 = vpop.f32.mrb[0].mxu0
      %1839 = vmatprep.mubr.bf16.mxu0 0
      %1840 = vmatmul.mubr.bf16.gmra.mrb[0].mxu0 %v1732
      %v1841 = vpop.f32.mrb[0].mxu0
      %v1842 = vadd.f32 0.0, %v1841
      %v1843 = vpop.f32.mrb[0].mxu0
      %v1844 = vpop.f32.mrb[0].mxu0
      %v1845 = vadd.f32 0.0, %v1844
      %v1846 = vpop.f32.mrb[0].mxu0
      %1847 = vmatprep.mubr.bf16.mxu0 0
      %1848 = vmatmul.mubr.bf16.gmra.mrb[0].mxu0 %v1735
      %v1849 = vpop.f32.mrb[0].mxu0
      %v1850 = vadd.f32 0.0, %v1849
      %v1851 = vpop.f32.mrb[0].mxu0
      %v1852 = vpop.f32.mrb[0].mxu0
      %v1853 = vadd.f32 0.0, %v1852
      %v1854 = vpop.f32.mrb[0].mxu0
      %1855 = vmatprep.mubr.bf16.mxu0 0
      %1856 = vmatmul.mubr.bf16.gmra.mrb[0].mxu0 %v1738
      %v1857 = vpop.f32.mrb[0].mxu0
      %v1858 = vadd.f32 0.0, %v1857
      %v1859 = vpop.f32.mrb[0].mxu0
      %v1860 = vpop.f32.mrb[0].mxu0
      %v1861 = vadd.f32 0.0, %v1860
      %v1862 = vpop.f32.mrb[0].mxu0
      %1863 = vmatprep.mubr.bf16.mxu0 0
      %1864 = vmatmul.mubr.bf16.gmra.mrb[0].mxu0 %v1741
      %v1865 = vpop.f32.mrb[0].mxu0
      %v1866 = vadd.f32 0.0, %v1865
      %v1867 = vpop.f32.mrb[0].mxu0
      %v1868 = vpop.f32.mrb[0].mxu0
      %v1869 = vadd.f32 0.0, %v1868
      %v1870 = vpop.f32.mrb[0].mxu0
      %1871 = vmatprep.mubr.bf16.mxu0 0
      %1872 = vmatmul.mubr.bf16.gmra.mrb[0].mxu0 %v1744
      %v1873 = vpop.f32.mrb[0].mxu0
      %v1874 = vadd.f32 0.0, %v1873
      %v1875 = vpop.f32.mrb[0].mxu0
      %v1876 = vpop.f32.mrb[0].mxu0
      %v1877 = vadd.f32 0.0, %v1876
      %v1878 = vpop.f32.mrb[0].mxu0
      %1879 = vmatprep.mubr.bf16.mxu0 0
      %1880 = vmatmul.mubr.bf16.gmra.mrb[0].mxu0 %v1747
      %v1881 = vpop.f32.mrb[0].mxu0
      %v1882 = vadd.f32 0.0, %v1881
      %v1883 = vpop.f32.mrb[0].mxu0
      %v1884 = vpop.f32.mrb[0].mxu0
      %v1885 = vadd.f32 0.0, %v1884
      %v1886 = vpop.f32.mrb[0].mxu0
      %1887 = vmatprep.mubr.bf16.mxu0 0
      %1888 = vmatmul.mubr.bf16.gmra.mrb[0].mxu0 %v1750
      %v1889 = vpop.f32.mrb[0].mxu0
      %v1890 = vadd.f32 0.0, %v1889
      %v1891 = vpop.f32.mrb[0].mxu0
      %v1892 = vpop.f32.mrb[0].mxu0
      %v1893 = vadd.f32 0.0, %v1892
      %v1894 = vpop.f32.mrb[0].mxu0
      %1895 = vmatprep.mubr.bf16.mxu0 0
      %1896 = vmatmul.mubr.bf16.gmra.mrb[0].mxu0 %v1753
      %v1897 = vpop.f32.mrb[0].mxu0
      %v1898 = vadd.f32 0.0, %v1897
      %v1899 = vpop.f32.mrb[0].mxu0
      %v1900 = vpop.f32.mrb[0].mxu0
      %v1901 = vadd.f32 0.0, %v1900
      %v1902 = vpop.f32.mrb[0].mxu0
      %1903 = vmatprep.mubr.bf16.mxu0 0
      %1904 = vmatmul.mubr.bf16.gmra.mrb[0].mxu0 %v1756
      %v1905 = vpop.f32.mrb[0].mxu0
      %v1906 = vadd.f32 0.0, %v1905
      %v1907 = vpop.f32.mrb[0].mxu0
      %v1908 = vpop.f32.mrb[0].mxu0
      %v1909 = vadd.f32 0.0, %v1908
      %v1910 = vpop.f32.mrb[0].mxu0
      %1911 = vmatprep.mubr.bf16.mxu0 0
      %1912 = vmatmul.mubr.bf16.gmra.mrb[0].mxu0 %v1759
      %v1913 = vpop.f32.mrb[0].mxu0
      %v1914 = vadd.f32 0.0, %v1913
      %v1915 = vpop.f32.mrb[0].mxu0
      %v1916 = vpop.f32.mrb[0].mxu0
      %v1917 = vadd.f32 0.0, %v1916
      %v1918 = vpop.f32.mrb[0].mxu0
      %1919 = vmatprep.mubr.bf16.mxu0 0
      %1920 = vmatmul.mubr.bf16.gmra.mrb[0].mxu0 %v1762
      %v1921 = vpop.f32.mrb[0].mxu0
      %v1922 = vadd.f32 0.0, %v1921
      %v1923 = vpop.f32.mrb[0].mxu0
      %v1924 = vpop.f32.mrb[0].mxu0
      %v1925 = vadd.f32 0.0, %v1924
      %v1926 = vpop.f32.mrb[0].mxu0
      %1927 = vdwg.mxu0
      %v1928 = vadd.f32 %v1554, %v1802
      %v1929 = vadd.f32 %v1555, %v1805
      %v1930 = vadd.f32 %v1556, %v1810
      %v1931 = vadd.f32 %v1557, %v1813
      %v1932 = vadd.f32 %v1558, %v1818
      %v1933 = vadd.f32 %v1559, %v1821
      %v1934 = vadd.f32 %v1560, %v1826
      %v1935 = vadd.f32 %v1561, %v1829
      %v1936 = vadd.f32 %v1562, %v1834
      %v1937 = vadd.f32 %v1563, %v1837
      %v1938 = vadd.f32 %v1564, %v1842
      %v1939 = vadd.f32 %v1565, %v1845
      %v1940 = vadd.f32 %v1566, %v1850
      %v1941 = vadd.f32 %v1567, %v1853
      %v1942 = vadd.f32 %v1568, %v1858
      %v1943 = vadd.f32 %v1569, %v1861
      %v1944 = vadd.f32 %v1570, %v1866
      %v1945 = vadd.f32 %v1571, %v1869
      %v1946 = vadd.f32 %v1572, %v1874
      %v1947 = vadd.f32 %v1573, %v1877
      %v1948 = vadd.f32 %v1574, %v1882
      %v1949 = vadd.f32 %v1575, %v1885
      %v1950 = vadd.f32 %v1576, %v1890
      %v1951 = vadd.f32 %v1577, %v1893
      %v1952 = vadd.f32 %v1578, %v1898
      %v1953 = vadd.f32 %v1579, %v1901
      %v1954 = vadd.f32 %v1580, %v1906
      %v1955 = vadd.f32 %v1581, %v1909
      %v1956 = vadd.f32 %v1582, %v1914
      %v1957 = vadd.f32 %v1583, %v1917
      %v1958 = vadd.f32 %v1584, %v1922
      %v1959 = vadd.f32 %v1585, %v1925
      %s1960 = sadd.s32 %s153, 192
      %s1961 = sshra.s32 %s1960, 3
      %s1962 = sand.u32 %s1960, 7
      %s1963 = smul.addr %s1961, 4
      %s1964 = scalar_lea.vmem %s0, %s1963
      %v1965 = vld [vmem:[%s1964] sm:$0xf]
      %v1966 = vld [vmem:[%s1964 + $0x4] sm:$0xf]
      %v1967 = vld [vmem:[%s1964 + $0x8] sm:$0xf]
      %v1968 = vld [vmem:[%s1964 + $0xc] sm:$0xf]
      %v1969 = vld [vmem:[%s1964 + $0x10] sm:$0xf]
      %v1970 = vld [vmem:[%s1964 + $0x14] sm:$0xf]
      %v1971 = vld [vmem:[%s1964 + $0x18] sm:$0xf]
      %v1972 = vld [vmem:[%s1964 + $0x1c] sm:$0xf]
      %v1973 = vld [vmem:[%s1964 + $0x20] sm:$0xf]
      %v1974 = vld [vmem:[%s1964 + $0x24] sm:$0xf]
      %v1975 = vld [vmem:[%s1964 + $0x28] sm:$0xf]
      %v1976 = vld [vmem:[%s1964 + $0x2c] sm:$0xf]
      %v1977 = vld [vmem:[%s1964 + $0x30] sm:$0xf]
      %v1978 = vld [vmem:[%s1964 + $0x34] sm:$0xf]
      %v1979 = vld [vmem:[%s1964 + $0x38] sm:$0xf]
      %v1980 = vld [vmem:[%s1964 + $0x3c] sm:$0xf]
      %v1981 = vld [vmem:[%s1964 + $0x40] sm:$0xf]
      %v1982 = vld [vmem:[%s1964 + $0x44] sm:$0xf]
      %v1983 = vld [vmem:[%s1964 + $0x48] sm:$0xf]
      %v1984 = vld [vmem:[%s1964 + $0x4c] sm:$0xf]
      %v1985 = vld [vmem:[%s1964 + $0x50] sm:$0xf]
      %v1986 = vld [vmem:[%s1964 + $0x54] sm:$0xf]
      %v1987 = vld [vmem:[%s1964 + $0x58] sm:$0xf]
      %v1988 = vld [vmem:[%s1964 + $0x5c] sm:$0xf]
      %v1989 = vld [vmem:[%s1964 + $0x60] sm:$0xf]
      %v1990 = vld [vmem:[%s1964 + $0x64] sm:$0xf]
      %v1991 = vld [vmem:[%s1964 + $0x68] sm:$0xf]
      %v1992 = vld [vmem:[%s1964 + $0x6c] sm:$0xf]
      %v1993 = vld [vmem:[%s1964 + $0x70] sm:$0xf]
      %v1994 = vld [vmem:[%s1964 + $0x74] sm:$0xf]
      %v1995 = vld [vmem:[%s1964 + $0x78] sm:$0xf]
      %v1996 = vld [vmem:[%s1964 + $0x7c] sm:$0xf]
      %s1997 = scalar_lea.vmem %s1, 60
      %v1998 = vld [vmem:[%s1997] sm:$0xf]
      %v1999 = vld [vmem:[%s1997 + $0x4] sm:$0xf]
      %v2000 = vld [vmem:[%s1997 + $0x8] sm:$0xf]
      %v2033 = vunpack.c.l.b16 %v1965
      %v2034 = vunpack.c.l.b16 %v1966
      %v2035 = vunpack.c.l.b16 %v1967
      %v2036 = vunpack.c.l.b16 %v1968
      %v2037 = vunpack.c.l.b16 %v1969
      %v2038 = vunpack.c.l.b16 %v1970
      %v2039 = vunpack.c.l.b16 %v1971
      %v2040 = vunpack.c.l.b16 %v1972
      %v2041 = vunpack.c.l.b16 %v1973
      %v2042 = vunpack.c.l.b16 %v1974
      %v2043 = vunpack.c.l.b16 %v1975
      %v2044 = vunpack.c.l.b16 %v1976
      %v2045 = vunpack.c.l.b16 %v1977
      %v2046 = vunpack.c.l.b16 %v1978
      %v2047 = vunpack.c.l.b16 %v1979
      %v2048 = vunpack.c.l.b16 %v1980
      %v2049 = vunpack.c.l.b16 %v1981
      %v2050 = vunpack.c.l.b16 %v1982
      %v2051 = vunpack.c.l.b16 %v1983
      %v2052 = vunpack.c.l.b16 %v1984
      %v2053 = vunpack.c.l.b16 %v1985
      %v2054 = vunpack.c.l.b16 %v1986
      %v2055 = vunpack.c.l.b16 %v1987
      %v2056 = vunpack.c.l.b16 %v1988
      %v2057 = vunpack.c.l.b16 %v1989
      %v2058 = vunpack.c.l.b16 %v1990
      %v2059 = vunpack.c.l.b16 %v1991
      %v2060 = vunpack.c.l.b16 %v1992
      %v2061 = vunpack.c.l.b16 %v1993
      %v2062 = vunpack.c.l.b16 %v1994
      %v2063 = vunpack.c.l.b16 %v1995
      %v2064 = vunpack.c.l.b16 %v1996
      %v2065 = vpack.c.b16 %v2034, %v2033
      %v2066 = vpack.c.b16 %v2036, %v2035
      %v2067 = vpack.c.b16 %v2038, %v2037
      %v2068 = vpack.c.b16 %v2040, %v2039
      %v2069 = vpack.c.b16 %v2042, %v2041
      %v2070 = vpack.c.b16 %v2044, %v2043
      %v2071 = vpack.c.b16 %v2046, %v2045
      %v2072 = vpack.c.b16 %v2048, %v2047
      %v2073 = vpack.c.b16 %v2050, %v2049
      %v2074 = vpack.c.b16 %v2052, %v2051
      %v2075 = vpack.c.b16 %v2054, %v2053
      %v2076 = vpack.c.b16 %v2056, %v2055
      %v2077 = vpack.c.b16 %v2058, %v2057
      %v2078 = vpack.c.b16 %v2060, %v2059
      %v2079 = vpack.c.b16 %v2062, %v2061
      %v2080 = vpack.c.b16 %v2064, %v2063
      %v2084 = vunpack.c.l.b16 %v1998
      %v2085 = vunpack.c.l.b16 %v1999
      %v2086 = vunpack.c.l.b16 %v2000
      %v2087 = vpack.c.b16 %v2085, %v2084
      %v2088 = vpack.c.b16 %v2086, %v2086
      %v2091 = vsel %vm323, %v2065, 0
      %v2094 = vsel %vm323, %v2066, 0
      %v2097 = vsel %vm323, %v2067, 0
      %v2100 = vsel %vm323, %v2068, 0
      %v2103 = vsel %vm323, %v2069, 0
      %v2106 = vsel %vm323, %v2070, 0
      %v2109 = vsel %vm323, %v2071, 0
      %v2112 = vsel %vm323, %v2072, 0
      %v2115 = vsel %vm323, %v2073, 0
      %v2118 = vsel %vm323, %v2074, 0
      %v2121 = vsel %vm323, %v2075, 0
      %v2124 = vsel %vm323, %v2076, 0
      %v2127 = vsel %vm323, %v2077, 0
      %v2130 = vsel %vm323, %v2078, 0
      %v2133 = vsel %vm323, %v2079, 0
      %v2136 = vsel %vm323, %v2080, 0
      %v2139 = vsel %vm372, %v2088, 0
      %2141 = vmatprep.subr.bf16.mxu0 0
      %2142 = vmatpush1.bf16.msra.mxu0 %v2087
      %2143 = vmatprep.subr.bf16.mxu0 0
      %2144 = vmatpush1.bf16.msra.mxu0 %v2139
      %2145 = vmatprep.subr.bf16.mxu0 0
      %2146 = vmatpush1.bf16.msra.mxu0 0
      %2147 = vmatprep.subr.bf16.mxu0 0
      %2148 = vmatpush1.bf16.msra.mxu0 0
      %2149 = vmatprep.subr.bf16.mxu0 0
      %2150 = vmatpush1.bf16.msra.mxu0 0
      %2151 = vmatprep.subr.bf16.mxu0 0
      %2152 = vmatpush1.bf16.msra.mxu0 0
      %2153 = vmatprep.subr.bf16.mxu0 0
      %2154 = vmatpush1.bf16.msra.mxu0 0
      %2155 = vmatprep.subr.bf16.mxu0 0
      %2156 = vmatpush1.bf16.msra.mxu0 0
      %2157 = vmatprep.subr.bf16.mxu0 0
      %2158 = vmatpush1.bf16.msra.mxu0 0
      %2159 = vmatprep.subr.bf16.mxu0 0
      %2160 = vmatpush1.bf16.msra.mxu0 0
      %2161 = vmatprep.subr.bf16.mxu0 0
      %2162 = vmatpush1.bf16.msra.mxu0 0
      %2163 = vmatprep.subr.bf16.mxu0 0
      %2164 = vmatpush1.bf16.msra.mxu0 0
      %2165 = vmatprep.subr.bf16.mxu0 0
      %2166 = vmatpush1.bf16.msra.mxu0 0
      %2167 = vmatprep.subr.bf16.mxu0 0
      %2168 = vmatpush1.bf16.msra.mxu0 0
      %2169 = vmatprep.subr.bf16.mxu0 0
      %2170 = vmatpush1.bf16.msra.mxu0 0
      %2171 = vmatprep.subr.bf16.mxu0 0
      %2172 = vmatpush1.bf16.msra.mxu0 0
      %2173 = vmatprep.mubr.bf16.mxu0 0
      %2174 = vmatmul.mubr.bf16.gmra.mrb[0].mxu0 %v2091
      %v2175 = vpop.f32.mrb[0].mxu0
      %v2176 = vadd.f32 0.0, %v2175
      %v2177 = vpop.f32.mrb[0].mxu0
      %v2178 = vpop.f32.mrb[0].mxu0
      %v2179 = vadd.f32 0.0, %v2178
      %v2180 = vpop.f32.mrb[0].mxu0
      %2181 = vmatprep.mubr.bf16.mxu0 0
      %2182 = vmatmul.mubr.bf16.gmra.mrb[0].mxu0 %v2094
      %v2183 = vpop.f32.mrb[0].mxu0
      %v2184 = vadd.f32 0.0, %v2183
      %v2185 = vpop.f32.mrb[0].mxu0
      %v2186 = vpop.f32.mrb[0].mxu0
      %v2187 = vadd.f32 0.0, %v2186
      %v2188 = vpop.f32.mrb[0].mxu0
      %2189 = vmatprep.mubr.bf16.mxu0 0
      %2190 = vmatmul.mubr.bf16.gmra.mrb[0].mxu0 %v2097
      %v2191 = vpop.f32.mrb[0].mxu0
      %v2192 = vadd.f32 0.0, %v2191
      %v2193 = vpop.f32.mrb[0].mxu0
      %v2194 = vpop.f32.mrb[0].mxu0
      %v2195 = vadd.f32 0.0, %v2194
      %v2196 = vpop.f32.mrb[0].mxu0
      %2197 = vmatprep.mubr.bf16.mxu0 0
      %2198 = vmatmul.mubr.bf16.gmra.mrb[0].mxu0 %v2100
      %v2199 = vpop.f32.mrb[0].mxu0
      %v2200 = vadd.f32 0.0, %v2199
      %v2201 = vpop.f32.mrb[0].mxu0
      %v2202 = vpop.f32.mrb[0].mxu0
      %v2203 = vadd.f32 0.0, %v2202
      %v2204 = vpop.f32.mrb[0].mxu0
      %2205 = vmatprep.mubr.bf16.mxu0 0
      %2206 = vmatmul.mubr.bf16.gmra.mrb[0].mxu0 %v2103
      %v2207 = vpop.f32.mrb[0].mxu0
      %v2208 = vadd.f32 0.0, %v2207
      %v2209 = vpop.f32.mrb[0].mxu0
      %v2210 = vpop.f32.mrb[0].mxu0
      %v2211 = vadd.f32 0.0, %v2210
      %v2212 = vpop.f32.mrb[0].mxu0
      %2213 = vmatprep.mubr.bf16.mxu0 0
      %2214 = vmatmul.mubr.bf16.gmra.mrb[0].mxu0 %v2106
      %v2215 = vpop.f32.mrb[0].mxu0
      %v2216 = vadd.f32 0.0, %v2215
      %v2217 = vpop.f32.mrb[0].mxu0
      %v2218 = vpop.f32.mrb[0].mxu0
      %v2219 = vadd.f32 0.0, %v2218
      %v2220 = vpop.f32.mrb[0].mxu0
      %2221 = vmatprep.mubr.bf16.mxu0 0
      %2222 = vmatmul.mubr.bf16.gmra.mrb[0].mxu0 %v2109
      %v2223 = vpop.f32.mrb[0].mxu0
      %v2224 = vadd.f32 0.0, %v2223
      %v2225 = vpop.f32.mrb[0].mxu0
      %v2226 = vpop.f32.mrb[0].mxu0
      %v2227 = vadd.f32 0.0, %v2226
      %v2228 = vpop.f32.mrb[0].mxu0
      %2229 = vmatprep.mubr.bf16.mxu0 0
      %2230 = vmatmul.mubr.bf16.gmra.mrb[0].mxu0 %v2112
      %v2231 = vpop.f32.mrb[0].mxu0
      %v2232 = vadd.f32 0.0, %v2231
      %v2233 = vpop.f32.mrb[0].mxu0
      %v2234 = vpop.f32.mrb[0].mxu0
      %v2235 = vadd.f32 0.0, %v2234
      %v2236 = vpop.f32.mrb[0].mxu0
      %2237 = vmatprep.mubr.bf16.mxu0 0
      %2238 = vmatmul.mubr.bf16.gmra.mrb[0].mxu0 %v2115
      %v2239 = vpop.f32.mrb[0].mxu0
      %v2240 = vadd.f32 0.0, %v2239
      %v2241 = vpop.f32.mrb[0].mxu0
      %v2242 = vpop.f32.mrb[0].mxu0
      %v2243 = vadd.f32 0.0, %v2242
      %v2244 = vpop.f32.mrb[0].mxu0
      %2245 = vmatprep.mubr.bf16.mxu0 0
      %2246 = vmatmul.mubr.bf16.gmra.mrb[0].mxu0 %v2118
      %v2247 = vpop.f32.mrb[0].mxu0
      %v2248 = vadd.f32 0.0, %v2247
      %v2249 = vpop.f32.mrb[0].mxu0
      %v2250 = vpop.f32.mrb[0].mxu0
      %v2251 = vadd.f32 0.0, %v2250
      %v2252 = vpop.f32.mrb[0].mxu0
      %2253 = vmatprep.mubr.bf16.mxu0 0
      %2254 = vmatmul.mubr.bf16.gmra.mrb[0].mxu0 %v2121
      %v2255 = vpop.f32.mrb[0].mxu0
      %v2256 = vadd.f32 0.0, %v2255
      %v2257 = vpop.f32.mrb[0].mxu0
      %v2258 = vpop.f32.mrb[0].mxu0
      %v2259 = vadd.f32 0.0, %v2258
      %v2260 = vpop.f32.mrb[0].mxu0
      %2261 = vmatprep.mubr.bf16.mxu0 0
      %2262 = vmatmul.mubr.bf16.gmra.mrb[0].mxu0 %v2124
      %v2263 = vpop.f32.mrb[0].mxu0
      %v2264 = vadd.f32 0.0, %v2263
      %v2265 = vpop.f32.mrb[0].mxu0
      %v2266 = vpop.f32.mrb[0].mxu0
      %v2267 = vadd.f32 0.0, %v2266
      %v2268 = vpop.f32.mrb[0].mxu0
      %2269 = vmatprep.mubr.bf16.mxu0 0
      %2270 = vmatmul.mubr.bf16.gmra.mrb[0].mxu0 %v2127
      %v2271 = vpop.f32.mrb[0].mxu0
      %v2272 = vadd.f32 0.0, %v2271
      %v2273 = vpop.f32.mrb[0].mxu0
      %v2274 = vpop.f32.mrb[0].mxu0
      %v2275 = vadd.f32 0.0, %v2274
      %v2276 = vpop.f32.mrb[0].mxu0
      %2277 = vmatprep.mubr.bf16.mxu0 0
      %2278 = vmatmul.mubr.bf16.gmra.mrb[0].mxu0 %v2130
      %v2279 = vpop.f32.mrb[0].mxu0
      %v2280 = vadd.f32 0.0, %v2279
      %v2281 = vpop.f32.mrb[0].mxu0
      %v2282 = vpop.f32.mrb[0].mxu0
      %v2283 = vadd.f32 0.0, %v2282
      %v2284 = vpop.f32.mrb[0].mxu0
      %2285 = vmatprep.mubr.bf16.mxu0 0
      %2286 = vmatmul.mubr.bf16.gmra.mrb[0].mxu0 %v2133
      %v2287 = vpop.f32.mrb[0].mxu0
      %v2288 = vadd.f32 0.0, %v2287
      %v2289 = vpop.f32.mrb[0].mxu0
      %v2290 = vpop.f32.mrb[0].mxu0
      %v2291 = vadd.f32 0.0, %v2290
      %v2292 = vpop.f32.mrb[0].mxu0
      %2293 = vmatprep.mubr.bf16.mxu0 0
      %2294 = vmatmul.mubr.bf16.gmra.mrb[0].mxu0 %v2136
      %v2295 = vpop.f32.mrb[0].mxu0
      %v2296 = vadd.f32 0.0, %v2295
      %v2297 = vpop.f32.mrb[0].mxu0
      %v2298 = vpop.f32.mrb[0].mxu0
      %v2299 = vadd.f32 0.0, %v2298
      %v2300 = vpop.f32.mrb[0].mxu0
      %2301 = vdwg.mxu0
      %v2302 = vadd.f32 %v1928, %v2176
      %v2303 = vadd.f32 %v1929, %v2179
      %v2304 = vadd.f32 %v1930, %v2184
      %v2305 = vadd.f32 %v1931, %v2187
      %v2306 = vadd.f32 %v1932, %v2192
      %v2307 = vadd.f32 %v1933, %v2195
      %v2308 = vadd.f32 %v1934, %v2200
      %v2309 = vadd.f32 %v1935, %v2203
      %v2310 = vadd.f32 %v1936, %v2208
      %v2311 = vadd.f32 %v1937, %v2211
      %v2312 = vadd.f32 %v1938, %v2216
      %v2313 = vadd.f32 %v1939, %v2219
      %v2314 = vadd.f32 %v1940, %v2224
      %v2315 = vadd.f32 %v1941, %v2227
      %v2316 = vadd.f32 %v1942, %v2232
      %v2317 = vadd.f32 %v1943, %v2235
      %v2318 = vadd.f32 %v1944, %v2240
      %v2319 = vadd.f32 %v1945, %v2243
      %v2320 = vadd.f32 %v1946, %v2248
      %v2321 = vadd.f32 %v1947, %v2251
      %v2322 = vadd.f32 %v1948, %v2256
      %v2323 = vadd.f32 %v1949, %v2259
      %v2324 = vadd.f32 %v1950, %v2264
      %v2325 = vadd.f32 %v1951, %v2267
      %v2326 = vadd.f32 %v1952, %v2272
      %v2327 = vadd.f32 %v1953, %v2275
      %v2328 = vadd.f32 %v1954, %v2280
      %v2329 = vadd.f32 %v1955, %v2283
      %v2330 = vadd.f32 %v1956, %v2288
      %v2331 = vadd.f32 %v1957, %v2291
      %v2332 = vadd.f32 %v1958, %v2296
      %v2333 = vadd.f32 %v1959, %v2299
      %s2334 = sadd.s32 %s153, 320
      %s2335 = sshra.s32 %s2334, 3
      %s2336 = sand.u32 %s2334, 7
      %s2337 = smul.addr %s2335, 4
      %s2338 = scalar_lea.vmem %s0, %s2337
      %v2339 = vld [vmem:[%s2338] sm:$0xf]
      %v2340 = vld [vmem:[%s2338 + $0x4] sm:$0xf]
      %v2341 = vld [vmem:[%s2338 + $0x8] sm:$0xf]
      %v2342 = vld [vmem:[%s2338 + $0xc] sm:$0xf]
      %v2343 = vld [vmem:[%s2338 + $0x10] sm:$0xf]
      %v2344 = vld [vmem:[%s2338 + $0x14] sm:$0xf]
      %v2345 = vld [vmem:[%s2338 + $0x18] sm:$0xf]
      %v2346 = vld [vmem:[%s2338 + $0x1c] sm:$0xf]
      %v2347 = vld [vmem:[%s2338 + $0x20] sm:$0xf]
      %v2348 = vld [vmem:[%s2338 + $0x24] sm:$0xf]
      %v2349 = vld [vmem:[%s2338 + $0x28] sm:$0xf]
      %v2350 = vld [vmem:[%s2338 + $0x2c] sm:$0xf]
      %v2351 = vld [vmem:[%s2338 + $0x30] sm:$0xf]
      %v2352 = vld [vmem:[%s2338 + $0x34] sm:$0xf]
      %v2353 = vld [vmem:[%s2338 + $0x38] sm:$0xf]
      %v2354 = vld [vmem:[%s2338 + $0x3c] sm:$0xf]
      %v2355 = vld [vmem:[%s2338 + $0x40] sm:$0xf]
      %v2356 = vld [vmem:[%s2338 + $0x44] sm:$0xf]
      %v2357 = vld [vmem:[%s2338 + $0x48] sm:$0xf]
      %v2358 = vld [vmem:[%s2338 + $0x4c] sm:$0xf]
      %v2359 = vld [vmem:[%s2338 + $0x50] sm:$0xf]
      %v2360 = vld [vmem:[%s2338 + $0x54] sm:$0xf]
      %v2361 = vld [vmem:[%s2338 + $0x58] sm:$0xf]
      %v2362 = vld [vmem:[%s2338 + $0x5c] sm:$0xf]
      %v2363 = vld [vmem:[%s2338 + $0x60] sm:$0xf]
      %v2364 = vld [vmem:[%s2338 + $0x64] sm:$0xf]
      %v2365 = vld [vmem:[%s2338 + $0x68] sm:$0xf]
      %v2366 = vld [vmem:[%s2338 + $0x6c] sm:$0xf]
      %v2367 = vld [vmem:[%s2338 + $0x70] sm:$0xf]
      %v2368 = vld [vmem:[%s2338 + $0x74] sm:$0xf]
      %v2369 = vld [vmem:[%s2338 + $0x78] sm:$0xf]
      %v2370 = vld [vmem:[%s2338 + $0x7c] sm:$0xf]
      %s2371 = scalar_lea.vmem %s1, 72
      %v2372 = vld [vmem:[%s2371] sm:$0xf]
      %v2373 = vld [vmem:[%s2371 + $0x4] sm:$0xf]
      %v2374 = vld [vmem:[%s2371 + $0x8] sm:$0xf]
      %v2407 = vunpack.c.l.b16 %v2339
      %v2408 = vunpack.c.l.b16 %v2340
      %v2409 = vunpack.c.l.b16 %v2341
      %v2410 = vunpack.c.l.b16 %v2342
      %v2411 = vunpack.c.l.b16 %v2343
      %v2412 = vunpack.c.l.b16 %v2344
      %v2413 = vunpack.c.l.b16 %v2345
      %v2414 = vunpack.c.l.b16 %v2346
      %v2415 = vunpack.c.l.b16 %v2347
      %v2416 = vunpack.c.l.b16 %v2348
      %v2417 = vunpack.c.l.b16 %v2349
      %v2418 = vunpack.c.l.b16 %v2350
      %v2419 = vunpack.c.l.b16 %v2351
      %v2420 = vunpack.c.l.b16 %v2352
      %v2421 = vunpack.c.l.b16 %v2353
      %v2422 = vunpack.c.l.b16 %v2354
      %v2423 = vunpack.c.l.b16 %v2355
      %v2424 = vunpack.c.l.b16 %v2356
      %v2425 = vunpack.c.l.b16 %v2357
      %v2426 = vunpack.c.l.b16 %v2358
      %v2427 = vunpack.c.l.b16 %v2359
      %v2428 = vunpack.c.l.b16 %v2360
      %v2429 = vunpack.c.l.b16 %v2361
      %v2430 = vunpack.c.l.b16 %v2362
      %v2431 = vunpack.c.l.b16 %v2363
      %v2432 = vunpack.c.l.b16 %v2364
      %v2433 = vunpack.c.l.b16 %v2365
      %v2434 = vunpack.c.l.b16 %v2366
      %v2435 = vunpack.c.l.b16 %v2367
      %v2436 = vunpack.c.l.b16 %v2368
      %v2437 = vunpack.c.l.b16 %v2369
      %v2438 = vunpack.c.l.b16 %v2370
      %v2439 = vpack.c.b16 %v2408, %v2407
      %v2440 = vpack.c.b16 %v2410, %v2409
      %v2441 = vpack.c.b16 %v2412, %v2411
      %v2442 = vpack.c.b16 %v2414, %v2413
      %v2443 = vpack.c.b16 %v2416, %v2415
      %v2444 = vpack.c.b16 %v2418, %v2417
      %v2445 = vpack.c.b16 %v2420, %v2419
      %v2446 = vpack.c.b16 %v2422, %v2421
      %v2447 = vpack.c.b16 %v2424, %v2423
      %v2448 = vpack.c.b16 %v2426, %v2425
      %v2449 = vpack.c.b16 %v2428, %v2427
      %v2450 = vpack.c.b16 %v2430, %v2429
      %v2451 = vpack.c.b16 %v2432, %v2431
      %v2452 = vpack.c.b16 %v2434, %v2433
      %v2453 = vpack.c.b16 %v2436, %v2435
      %v2454 = vpack.c.b16 %v2438, %v2437
      %v2458 = vunpack.c.l.b16 %v2372
      %v2459 = vunpack.c.l.b16 %v2373
      %v2460 = vunpack.c.l.b16 %v2374
      %v2461 = vpack.c.b16 %v2459, %v2458
      %v2462 = vpack.c.b16 %v2460, %v2460
      %v2465 = vsel %vm323, %v2439, 0
      %v2468 = vsel %vm323, %v2440, 0
      %v2471 = vsel %vm323, %v2441, 0
      %v2474 = vsel %vm323, %v2442, 0
      %v2477 = vsel %vm323, %v2443, 0
      %v2480 = vsel %vm323, %v2444, 0
      %v2483 = vsel %vm323, %v2445, 0
      %v2486 = vsel %vm323, %v2446, 0
      %v2489 = vsel %vm323, %v2447, 0
      %v2492 = vsel %vm323, %v2448, 0
      %v2495 = vsel %vm323, %v2449, 0
      %v2498 = vsel %vm323, %v2450, 0
      %v2501 = vsel %vm323, %v2451, 0
      %v2504 = vsel %vm323, %v2452, 0
      %v2507 = vsel %vm323, %v2453, 0
      %v2510 = vsel %vm323, %v2454, 0
      %v2513 = vsel %vm372, %v2462, 0
      %2515 = vmatprep.subr.bf16.mxu0 0
      %2516 = vmatpush1.bf16.msra.mxu0 %v2461
      %2517 = vmatprep.subr.bf16.mxu0 0
      %2518 = vmatpush1.bf16.msra.mxu0 %v2513
      %2519 = vmatprep.subr.bf16.mxu0 0
      %2520 = vmatpush1.bf16.msra.mxu0 0
      %2521 = vmatprep.subr.bf16.mxu0 0
      %2522 = vmatpush1.bf16.msra.mxu0 0
      %2523 = vmatprep.subr.bf16.mxu0 0
      %2524 = vmatpush1.bf16.msra.mxu0 0
      %2525 = vmatprep.subr.bf16.mxu0 0
      %2526 = vmatpush1.bf16.msra.mxu0 0
      %2527 = vmatprep.subr.bf16.mxu0 0
      %2528 = vmatpush1.bf16.msra.mxu0 0
      %2529 = vmatprep.subr.bf16.mxu0 0
      %2530 = vmatpush1.bf16.msra.mxu0 0
      %2531 = vmatprep.subr.bf16.mxu0 0
      %2532 = vmatpush1.bf16.msra.mxu0 0
      %2533 = vmatprep.subr.bf16.mxu0 0
      %2534 = vmatpush1.bf16.msra.mxu0 0
      %2535 = vmatprep.subr.bf16.mxu0 0
      %2536 = vmatpush1.bf16.msra.mxu0 0
      %2537 = vmatprep.subr.bf16.mxu0 0
      %2538 = vmatpush1.bf16.msra.mxu0 0
      %2539 = vmatprep.subr.bf16.mxu0 0
      %2540 = vmatpush1.bf16.msra.mxu0 0
      %2541 = vmatprep.subr.bf16.mxu0 0
      %2542 = vmatpush1.bf16.msra.mxu0 0
      %2543 = vmatprep.subr.bf16.mxu0 0
      %2544 = vmatpush1.bf16.msra.mxu0 0
      %2545 = vmatprep.subr.bf16.mxu0 0
      %2546 = vmatpush1.bf16.msra.mxu0 0
      %2547 = vmatprep.mubr.bf16.mxu0 0
      %2548 = vmatmul.mubr.bf16.gmra.mrb[0].mxu0 %v2465
      %v2549 = vpop.f32.mrb[0].mxu0
      %v2550 = vadd.f32 0.0, %v2549
      %v2551 = vpop.f32.mrb[0].mxu0
      %v2552 = vpop.f32.mrb[0].mxu0
      %v2553 = vadd.f32 0.0, %v2552
      %v2554 = vpop.f32.mrb[0].mxu0
      %2555 = vmatprep.mubr.bf16.mxu0 0
      %2556 = vmatmul.mubr.bf16.gmra.mrb[0].mxu0 %v2468
      %v2557 = vpop.f32.mrb[0].mxu0
      %v2558 = vadd.f32 0.0, %v2557
      %v2559 = vpop.f32.mrb[0].mxu0
      %v2560 = vpop.f32.mrb[0].mxu0
      %v2561 = vadd.f32 0.0, %v2560
      %v2562 = vpop.f32.mrb[0].mxu0
      %2563 = vmatprep.mubr.bf16.mxu0 0
      %2564 = vmatmul.mubr.bf16.gmra.mrb[0].mxu0 %v2471
      %v2565 = vpop.f32.mrb[0].mxu0
      %v2566 = vadd.f32 0.0, %v2565
      %v2567 = vpop.f32.mrb[0].mxu0
      %v2568 = vpop.f32.mrb[0].mxu0
      %v2569 = vadd.f32 0.0, %v2568
      %v2570 = vpop.f32.mrb[0].mxu0
      %2571 = vmatprep.mubr.bf16.mxu0 0
      %2572 = vmatmul.mubr.bf16.gmra.mrb[0].mxu0 %v2474
      %v2573 = vpop.f32.mrb[0].mxu0
      %v2574 = vadd.f32 0.0, %v2573
      %v2575 = vpop.f32.mrb[0].mxu0
      %v2576 = vpop.f32.mrb[0].mxu0
      %v2577 = vadd.f32 0.0, %v2576
      %v2578 = vpop.f32.mrb[0].mxu0
      %2579 = vmatprep.mubr.bf16.mxu0 0
      %2580 = vmatmul.mubr.bf16.gmra.mrb[0].mxu0 %v2477
      %v2581 = vpop.f32.mrb[0].mxu0
      %v2582 = vadd.f32 0.0, %v2581
      %v2583 = vpop.f32.mrb[0].mxu0
      %v2584 = vpop.f32.mrb[0].mxu0
      %v2585 = vadd.f32 0.0, %v2584
      %v2586 = vpop.f32.mrb[0].mxu0
      %2587 = vmatprep.mubr.bf16.mxu0 0
      %2588 = vmatmul.mubr.bf16.gmra.mrb[0].mxu0 %v2480
      %v2589 = vpop.f32.mrb[0].mxu0
      %v2590 = vadd.f32 0.0, %v2589
      %v2591 = vpop.f32.mrb[0].mxu0
      %v2592 = vpop.f32.mrb[0].mxu0
      %v2593 = vadd.f32 0.0, %v2592
      %v2594 = vpop.f32.mrb[0].mxu0
      %2595 = vmatprep.mubr.bf16.mxu0 0
      %2596 = vmatmul.mubr.bf16.gmra.mrb[0].mxu0 %v2483
      %v2597 = vpop.f32.mrb[0].mxu0
      %v2598 = vadd.f32 0.0, %v2597
      %v2599 = vpop.f32.mrb[0].mxu0
      %v2600 = vpop.f32.mrb[0].mxu0
      %v2601 = vadd.f32 0.0, %v2600
      %v2602 = vpop.f32.mrb[0].mxu0
      %2603 = vmatprep.mubr.bf16.mxu0 0
      %2604 = vmatmul.mubr.bf16.gmra.mrb[0].mxu0 %v2486
      %v2605 = vpop.f32.mrb[0].mxu0
      %v2606 = vadd.f32 0.0, %v2605
      %v2607 = vpop.f32.mrb[0].mxu0
      %v2608 = vpop.f32.mrb[0].mxu0
      %v2609 = vadd.f32 0.0, %v2608
      %v2610 = vpop.f32.mrb[0].mxu0
      %2611 = vmatprep.mubr.bf16.mxu0 0
      %2612 = vmatmul.mubr.bf16.gmra.mrb[0].mxu0 %v2489
      %v2613 = vpop.f32.mrb[0].mxu0
      %v2614 = vadd.f32 0.0, %v2613
      %v2615 = vpop.f32.mrb[0].mxu0
      %v2616 = vpop.f32.mrb[0].mxu0
      %v2617 = vadd.f32 0.0, %v2616
      %v2618 = vpop.f32.mrb[0].mxu0
      %2619 = vmatprep.mubr.bf16.mxu0 0
      %2620 = vmatmul.mubr.bf16.gmra.mrb[0].mxu0 %v2492
      %v2621 = vpop.f32.mrb[0].mxu0
      %v2622 = vadd.f32 0.0, %v2621
      %v2623 = vpop.f32.mrb[0].mxu0
      %v2624 = vpop.f32.mrb[0].mxu0
      %v2625 = vadd.f32 0.0, %v2624
      %v2626 = vpop.f32.mrb[0].mxu0
      %2627 = vmatprep.mubr.bf16.mxu0 0
      %2628 = vmatmul.mubr.bf16.gmra.mrb[0].mxu0 %v2495
      %v2629 = vpop.f32.mrb[0].mxu0
      %v2630 = vadd.f32 0.0, %v2629
      %v2631 = vpop.f32.mrb[0].mxu0
      %v2632 = vpop.f32.mrb[0].mxu0
      %v2633 = vadd.f32 0.0, %v2632
      %v2634 = vpop.f32.mrb[0].mxu0
      %2635 = vmatprep.mubr.bf16.mxu0 0
      %2636 = vmatmul.mubr.bf16.gmra.mrb[0].mxu0 %v2498
      %v2637 = vpop.f32.mrb[0].mxu0
      %v2638 = vadd.f32 0.0, %v2637
      %v2639 = vpop.f32.mrb[0].mxu0
      %v2640 = vpop.f32.mrb[0].mxu0
      %v2641 = vadd.f32 0.0, %v2640
      %v2642 = vpop.f32.mrb[0].mxu0
      %2643 = vmatprep.mubr.bf16.mxu0 0
      %2644 = vmatmul.mubr.bf16.gmra.mrb[0].mxu0 %v2501
      %v2645 = vpop.f32.mrb[0].mxu0
      %v2646 = vadd.f32 0.0, %v2645
      %v2647 = vpop.f32.mrb[0].mxu0
      %v2648 = vpop.f32.mrb[0].mxu0
      %v2649 = vadd.f32 0.0, %v2648
      %v2650 = vpop.f32.mrb[0].mxu0
      %2651 = vmatprep.mubr.bf16.mxu0 0
      %2652 = vmatmul.mubr.bf16.gmra.mrb[0].mxu0 %v2504
      %v2653 = vpop.f32.mrb[0].mxu0
      %v2654 = vadd.f32 0.0, %v2653
      %v2655 = vpop.f32.mrb[0].mxu0
      %v2656 = vpop.f32.mrb[0].mxu0
      %v2657 = vadd.f32 0.0, %v2656
      %v2658 = vpop.f32.mrb[0].mxu0
      %2659 = vmatprep.mubr.bf16.mxu0 0
      %2660 = vmatmul.mubr.bf16.gmra.mrb[0].mxu0 %v2507
      %v2661 = vpop.f32.mrb[0].mxu0
      %v2662 = vadd.f32 0.0, %v2661
      %v2663 = vpop.f32.mrb[0].mxu0
      %v2664 = vpop.f32.mrb[0].mxu0
      %v2665 = vadd.f32 0.0, %v2664
      %v2666 = vpop.f32.mrb[0].mxu0
      %2667 = vmatprep.mubr.bf16.mxu0 0
      %2668 = vmatmul.mubr.bf16.gmra.mrb[0].mxu0 %v2510
      %v2669 = vpop.f32.mrb[0].mxu0
      %v2670 = vadd.f32 0.0, %v2669
      %v2671 = vpop.f32.mrb[0].mxu0
      %v2672 = vpop.f32.mrb[0].mxu0
      %v2673 = vadd.f32 0.0, %v2672
      %v2674 = vpop.f32.mrb[0].mxu0
      %2675 = vdwg.mxu0
      %v2676 = vadd.f32 %v2302, %v2550
      %v2677 = vadd.f32 %v2303, %v2553
      %v2678 = vadd.f32 %v2304, %v2558
      %v2679 = vadd.f32 %v2305, %v2561
      %v2680 = vadd.f32 %v2306, %v2566
      %v2681 = vadd.f32 %v2307, %v2569
      %v2682 = vadd.f32 %v2308, %v2574
      %v2683 = vadd.f32 %v2309, %v2577
      %v2684 = vadd.f32 %v2310, %v2582
      %v2685 = vadd.f32 %v2311, %v2585
      %v2686 = vadd.f32 %v2312, %v2590
      %v2687 = vadd.f32 %v2313, %v2593
      %v2688 = vadd.f32 %v2314, %v2598
      %v2689 = vadd.f32 %v2315, %v2601
      %v2690 = vadd.f32 %v2316, %v2606
      %v2691 = vadd.f32 %v2317, %v2609
      %v2692 = vadd.f32 %v2318, %v2614
      %v2693 = vadd.f32 %v2319, %v2617
      %v2694 = vadd.f32 %v2320, %v2622
      %v2695 = vadd.f32 %v2321, %v2625
      %v2696 = vadd.f32 %v2322, %v2630
      %v2697 = vadd.f32 %v2323, %v2633
      %v2698 = vadd.f32 %v2324, %v2638
      %v2699 = vadd.f32 %v2325, %v2641
      %v2700 = vadd.f32 %v2326, %v2646
      %v2701 = vadd.f32 %v2327, %v2649
      %v2702 = vadd.f32 %v2328, %v2654
      %v2703 = vadd.f32 %v2329, %v2657
      %v2704 = vadd.f32 %v2330, %v2662
      %v2705 = vadd.f32 %v2331, %v2665
      %v2706 = vadd.f32 %v2332, %v2670
      %v2707 = vadd.f32 %v2333, %v2673
      %s2708 = sadd.s32 %s153, 336
      %s2709 = sshra.s32 %s2708, 3
      %s2710 = sand.u32 %s2708, 7
      %s2711 = smul.addr %s2709, 4
      %s2712 = scalar_lea.vmem %s0, %s2711
      %v2713 = vld [vmem:[%s2712] sm:$0xf]
      %v2714 = vld [vmem:[%s2712 + $0x4] sm:$0xf]
      %v2715 = vld [vmem:[%s2712 + $0x8] sm:$0xf]
      %v2716 = vld [vmem:[%s2712 + $0xc] sm:$0xf]
      %v2717 = vld [vmem:[%s2712 + $0x10] sm:$0xf]
      %v2718 = vld [vmem:[%s2712 + $0x14] sm:$0xf]
      %v2719 = vld [vmem:[%s2712 + $0x18] sm:$0xf]
      %v2720 = vld [vmem:[%s2712 + $0x1c] sm:$0xf]
      %v2721 = vld [vmem:[%s2712 + $0x20] sm:$0xf]
      %v2722 = vld [vmem:[%s2712 + $0x24] sm:$0xf]
      %v2723 = vld [vmem:[%s2712 + $0x28] sm:$0xf]
      %v2724 = vld [vmem:[%s2712 + $0x2c] sm:$0xf]
      %v2725 = vld [vmem:[%s2712 + $0x30] sm:$0xf]
      %v2726 = vld [vmem:[%s2712 + $0x34] sm:$0xf]
      %v2727 = vld [vmem:[%s2712 + $0x38] sm:$0xf]
      %v2728 = vld [vmem:[%s2712 + $0x3c] sm:$0xf]
      %v2729 = vld [vmem:[%s2712 + $0x40] sm:$0xf]
      %v2730 = vld [vmem:[%s2712 + $0x44] sm:$0xf]
      %v2731 = vld [vmem:[%s2712 + $0x48] sm:$0xf]
      %v2732 = vld [vmem:[%s2712 + $0x4c] sm:$0xf]
      %v2733 = vld [vmem:[%s2712 + $0x50] sm:$0xf]
      %v2734 = vld [vmem:[%s2712 + $0x54] sm:$0xf]
      %v2735 = vld [vmem:[%s2712 + $0x58] sm:$0xf]
      %v2736 = vld [vmem:[%s2712 + $0x5c] sm:$0xf]
      %v2737 = vld [vmem:[%s2712 + $0x60] sm:$0xf]
      %v2738 = vld [vmem:[%s2712 + $0x64] sm:$0xf]
      %v2739 = vld [vmem:[%s2712 + $0x68] sm:$0xf]
      %v2740 = vld [vmem:[%s2712 + $0x6c] sm:$0xf]
      %v2741 = vld [vmem:[%s2712 + $0x70] sm:$0xf]
      %v2742 = vld [vmem:[%s2712 + $0x74] sm:$0xf]
      %v2743 = vld [vmem:[%s2712 + $0x78] sm:$0xf]
      %v2744 = vld [vmem:[%s2712 + $0x7c] sm:$0xf]
      %s2745 = scalar_lea.vmem %s1, 84
      %v2746 = vld [vmem:[%s2745] sm:$0xf]
      %v2747 = vld [vmem:[%s2745 + $0x4] sm:$0xf]
      %v2748 = vld [vmem:[%s2745 + $0x8] sm:$0xf]
      %v2781 = vunpack.c.l.b16 %v2713
      %v2782 = vunpack.c.l.b16 %v2714
      %v2783 = vunpack.c.l.b16 %v2715
      %v2784 = vunpack.c.l.b16 %v2716
      %v2785 = vunpack.c.l.b16 %v2717
      %v2786 = vunpack.c.l.b16 %v2718
      %v2787 = vunpack.c.l.b16 %v2719
      %v2788 = vunpack.c.l.b16 %v2720
      %v2789 = vunpack.c.l.b16 %v2721
      %v2790 = vunpack.c.l.b16 %v2722
      %v2791 = vunpack.c.l.b16 %v2723
      %v2792 = vunpack.c.l.b16 %v2724
      %v2793 = vunpack.c.l.b16 %v2725
      %v2794 = vunpack.c.l.b16 %v2726
      %v2795 = vunpack.c.l.b16 %v2727
      %v2796 = vunpack.c.l.b16 %v2728
      %v2797 = vunpack.c.l.b16 %v2729
      %v2798 = vunpack.c.l.b16 %v2730
      %v2799 = vunpack.c.l.b16 %v2731
      %v2800 = vunpack.c.l.b16 %v2732
      %v2801 = vunpack.c.l.b16 %v2733
      %v2802 = vunpack.c.l.b16 %v2734
      %v2803 = vunpack.c.l.b16 %v2735
      %v2804 = vunpack.c.l.b16 %v2736
      %v2805 = vunpack.c.l.b16 %v2737
      %v2806 = vunpack.c.l.b16 %v2738
      %v2807 = vunpack.c.l.b16 %v2739
      %v2808 = vunpack.c.l.b16 %v2740
      %v2809 = vunpack.c.l.b16 %v2741
      %v2810 = vunpack.c.l.b16 %v2742
      %v2811 = vunpack.c.l.b16 %v2743
      %v2812 = vunpack.c.l.b16 %v2744
      %v2813 = vpack.c.b16 %v2782, %v2781
      %v2814 = vpack.c.b16 %v2784, %v2783
      %v2815 = vpack.c.b16 %v2786, %v2785
      %v2816 = vpack.c.b16 %v2788, %v2787
      %v2817 = vpack.c.b16 %v2790, %v2789
      %v2818 = vpack.c.b16 %v2792, %v2791
      %v2819 = vpack.c.b16 %v2794, %v2793
      %v2820 = vpack.c.b16 %v2796, %v2795
      %v2821 = vpack.c.b16 %v2798, %v2797
      %v2822 = vpack.c.b16 %v2800, %v2799
      %v2823 = vpack.c.b16 %v2802, %v2801
      %v2824 = vpack.c.b16 %v2804, %v2803
      %v2825 = vpack.c.b16 %v2806, %v2805
      %v2826 = vpack.c.b16 %v2808, %v2807
      %v2827 = vpack.c.b16 %v2810, %v2809
      %v2828 = vpack.c.b16 %v2812, %v2811
      %v2832 = vunpack.c.l.b16 %v2746
      %v2833 = vunpack.c.l.b16 %v2747
      %v2834 = vunpack.c.l.b16 %v2748
      %v2835 = vpack.c.b16 %v2833, %v2832
      %v2836 = vpack.c.b16 %v2834, %v2834
      %v2839 = vsel %vm323, %v2813, 0
      %v2842 = vsel %vm323, %v2814, 0
      %v2845 = vsel %vm323, %v2815, 0
      %v2848 = vsel %vm323, %v2816, 0
      %v2851 = vsel %vm323, %v2817, 0
      %v2854 = vsel %vm323, %v2818, 0
      %v2857 = vsel %vm323, %v2819, 0
      %v2860 = vsel %vm323, %v2820, 0
      %v2863 = vsel %vm323, %v2821, 0
      %v2866 = vsel %vm323, %v2822, 0
      %v2869 = vsel %vm323, %v2823, 0
      %v2872 = vsel %vm323, %v2824, 0
      %v2875 = vsel %vm323, %v2825, 0
      %v2878 = vsel %vm323, %v2826, 0
      %v2881 = vsel %vm323, %v2827, 0
      %v2884 = vsel %vm323, %v2828, 0
      %v2887 = vsel %vm372, %v2836, 0
      %2889 = vmatprep.subr.bf16.mxu0 0
      %2890 = vmatpush1.bf16.msra.mxu0 %v2835
      %2891 = vmatprep.subr.bf16.mxu0 0
      %2892 = vmatpush1.bf16.msra.mxu0 %v2887
      %2893 = vmatprep.subr.bf16.mxu0 0
      %2894 = vmatpush1.bf16.msra.mxu0 0
      %2895 = vmatprep.subr.bf16.mxu0 0
      %2896 = vmatpush1.bf16.msra.mxu0 0
      %2897 = vmatprep.subr.bf16.mxu0 0
      %2898 = vmatpush1.bf16.msra.mxu0 0
      %2899 = vmatprep.subr.bf16.mxu0 0
      %2900 = vmatpush1.bf16.msra.mxu0 0
      %2901 = vmatprep.subr.bf16.mxu0 0
      %2902 = vmatpush1.bf16.msra.mxu0 0
      %2903 = vmatprep.subr.bf16.mxu0 0
      %2904 = vmatpush1.bf16.msra.mxu0 0
      %2905 = vmatprep.subr.bf16.mxu0 0
      %2906 = vmatpush1.bf16.msra.mxu0 0
      %2907 = vmatprep.subr.bf16.mxu0 0
      %2908 = vmatpush1.bf16.msra.mxu0 0
      %2909 = vmatprep.subr.bf16.mxu0 0
      %2910 = vmatpush1.bf16.msra.mxu0 0
      %2911 = vmatprep.subr.bf16.mxu0 0
      %2912 = vmatpush1.bf16.msra.mxu0 0
      %2913 = vmatprep.subr.bf16.mxu0 0
      %2914 = vmatpush1.bf16.msra.mxu0 0
      %2915 = vmatprep.subr.bf16.mxu0 0
      %2916 = vmatpush1.bf16.msra.mxu0 0
      %2917 = vmatprep.subr.bf16.mxu0 0
      %2918 = vmatpush1.bf16.msra.mxu0 0
      %2919 = vmatprep.subr.bf16.mxu0 0
      %2920 = vmatpush1.bf16.msra.mxu0 0
      %2921 = vmatprep.mubr.bf16.mxu0 0
      %2922 = vmatmul.mubr.bf16.gmra.mrb[0].mxu0 %v2839
      %v2923 = vpop.f32.mrb[0].mxu0
      %v2924 = vadd.f32 0.0, %v2923
      %v2925 = vpop.f32.mrb[0].mxu0
      %v2926 = vpop.f32.mrb[0].mxu0
      %v2927 = vadd.f32 0.0, %v2926
      %v2928 = vpop.f32.mrb[0].mxu0
      %2929 = vmatprep.mubr.bf16.mxu0 0
      %2930 = vmatmul.mubr.bf16.gmra.mrb[0].mxu0 %v2842
      %v2931 = vpop.f32.mrb[0].mxu0
      %v2932 = vadd.f32 0.0, %v2931
      %v2933 = vpop.f32.mrb[0].mxu0
      %v2934 = vpop.f32.mrb[0].mxu0
      %v2935 = vadd.f32 0.0, %v2934
      %v2936 = vpop.f32.mrb[0].mxu0
      %2937 = vmatprep.mubr.bf16.mxu0 0
      %2938 = vmatmul.mubr.bf16.gmra.mrb[0].mxu0 %v2845
      %v2939 = vpop.f32.mrb[0].mxu0
      %v2940 = vadd.f32 0.0, %v2939
      %v2941 = vpop.f32.mrb[0].mxu0
      %v2942 = vpop.f32.mrb[0].mxu0
      %v2943 = vadd.f32 0.0, %v2942
      %v2944 = vpop.f32.mrb[0].mxu0
      %2945 = vmatprep.mubr.bf16.mxu0 0
      %2946 = vmatmul.mubr.bf16.gmra.mrb[0].mxu0 %v2848
      %v2947 = vpop.f32.mrb[0].mxu0
      %v2948 = vadd.f32 0.0, %v2947
      %v2949 = vpop.f32.mrb[0].mxu0
      %v2950 = vpop.f32.mrb[0].mxu0
      %v2951 = vadd.f32 0.0, %v2950
      %v2952 = vpop.f32.mrb[0].mxu0
      %2953 = vmatprep.mubr.bf16.mxu0 0
      %2954 = vmatmul.mubr.bf16.gmra.mrb[0].mxu0 %v2851
      %v2955 = vpop.f32.mrb[0].mxu0
      %v2956 = vadd.f32 0.0, %v2955
      %v2957 = vpop.f32.mrb[0].mxu0
      %v2958 = vpop.f32.mrb[0].mxu0
      %v2959 = vadd.f32 0.0, %v2958
      %v2960 = vpop.f32.mrb[0].mxu0
      %2961 = vmatprep.mubr.bf16.mxu0 0
      %2962 = vmatmul.mubr.bf16.gmra.mrb[0].mxu0 %v2854
      %v2963 = vpop.f32.mrb[0].mxu0
      %v2964 = vadd.f32 0.0, %v2963
      %v2965 = vpop.f32.mrb[0].mxu0
      %v2966 = vpop.f32.mrb[0].mxu0
      %v2967 = vadd.f32 0.0, %v2966
      %v2968 = vpop.f32.mrb[0].mxu0
      %2969 = vmatprep.mubr.bf16.mxu0 0
      %2970 = vmatmul.mubr.bf16.gmra.mrb[0].mxu0 %v2857
      %v2971 = vpop.f32.mrb[0].mxu0
      %v2972 = vadd.f32 0.0, %v2971
      %v2973 = vpop.f32.mrb[0].mxu0
      %v2974 = vpop.f32.mrb[0].mxu0
      %v2975 = vadd.f32 0.0, %v2974
      %v2976 = vpop.f32.mrb[0].mxu0
      %2977 = vmatprep.mubr.bf16.mxu0 0
      %2978 = vmatmul.mubr.bf16.gmra.mrb[0].mxu0 %v2860
      %v2979 = vpop.f32.mrb[0].mxu0
      %v2980 = vadd.f32 0.0, %v2979
      %v2981 = vpop.f32.mrb[0].mxu0
      %v2982 = vpop.f32.mrb[0].mxu0
      %v2983 = vadd.f32 0.0, %v2982
      %v2984 = vpop.f32.mrb[0].mxu0
      %2985 = vmatprep.mubr.bf16.mxu0 0
      %2986 = vmatmul.mubr.bf16.gmra.mrb[0].mxu0 %v2863
      %v2987 = vpop.f32.mrb[0].mxu0
      %v2988 = vadd.f32 0.0, %v2987
      %v2989 = vpop.f32.mrb[0].mxu0
      %v2990 = vpop.f32.mrb[0].mxu0
      %v2991 = vadd.f32 0.0, %v2990
      %v2992 = vpop.f32.mrb[0].mxu0
      %2993 = vmatprep.mubr.bf16.mxu0 0
      %2994 = vmatmul.mubr.bf16.gmra.mrb[0].mxu0 %v2866
      %v2995 = vpop.f32.mrb[0].mxu0
      %v2996 = vadd.f32 0.0, %v2995
      %v2997 = vpop.f32.mrb[0].mxu0
      %v2998 = vpop.f32.mrb[0].mxu0
      %v2999 = vadd.f32 0.0, %v2998
      %v3000 = vpop.f32.mrb[0].mxu0
      %3001 = vmatprep.mubr.bf16.mxu0 0
      %3002 = vmatmul.mubr.bf16.gmra.mrb[0].mxu0 %v2869
      %v3003 = vpop.f32.mrb[0].mxu0
      %v3004 = vadd.f32 0.0, %v3003
      %v3005 = vpop.f32.mrb[0].mxu0
      %v3006 = vpop.f32.mrb[0].mxu0
      %v3007 = vadd.f32 0.0, %v3006
      %v3008 = vpop.f32.mrb[0].mxu0
      %3009 = vmatprep.mubr.bf16.mxu0 0
      %3010 = vmatmul.mubr.bf16.gmra.mrb[0].mxu0 %v2872
      %v3011 = vpop.f32.mrb[0].mxu0
      %v3012 = vadd.f32 0.0, %v3011
      %v3013 = vpop.f32.mrb[0].mxu0
      %v3014 = vpop.f32.mrb[0].mxu0
      %v3015 = vadd.f32 0.0, %v3014
      %v3016 = vpop.f32.mrb[0].mxu0
      %3017 = vmatprep.mubr.bf16.mxu0 0
      %3018 = vmatmul.mubr.bf16.gmra.mrb[0].mxu0 %v2875
      %v3019 = vpop.f32.mrb[0].mxu0
      %v3020 = vadd.f32 0.0, %v3019
      %v3021 = vpop.f32.mrb[0].mxu0
      %v3022 = vpop.f32.mrb[0].mxu0
      %v3023 = vadd.f32 0.0, %v3022
      %v3024 = vpop.f32.mrb[0].mxu0
      %3025 = vmatprep.mubr.bf16.mxu0 0
      %3026 = vmatmul.mubr.bf16.gmra.mrb[0].mxu0 %v2878
      %v3027 = vpop.f32.mrb[0].mxu0
      %v3028 = vadd.f32 0.0, %v3027
      %v3029 = vpop.f32.mrb[0].mxu0
      %v3030 = vpop.f32.mrb[0].mxu0
      %v3031 = vadd.f32 0.0, %v3030
      %v3032 = vpop.f32.mrb[0].mxu0
      %3033 = vmatprep.mubr.bf16.mxu0 0
      %3034 = vmatmul.mubr.bf16.gmra.mrb[0].mxu0 %v2881
      %v3035 = vpop.f32.mrb[0].mxu0
      %v3036 = vadd.f32 0.0, %v3035
      %v3037 = vpop.f32.mrb[0].mxu0
      %v3038 = vpop.f32.mrb[0].mxu0
      %v3039 = vadd.f32 0.0, %v3038
      %v3040 = vpop.f32.mrb[0].mxu0
      %3041 = vmatprep.mubr.bf16.mxu0 0
      %3042 = vmatmul.mubr.bf16.gmra.mrb[0].mxu0 %v2884
      %v3043 = vpop.f32.mrb[0].mxu0
      %v3044 = vadd.f32 0.0, %v3043
      %v3045 = vpop.f32.mrb[0].mxu0
      %v3046 = vpop.f32.mrb[0].mxu0
      %v3047 = vadd.f32 0.0, %v3046
      %v3048 = vpop.f32.mrb[0].mxu0
      %3049 = vdwg.mxu0
      %v3050 = vadd.f32 %v2676, %v2924
      %v3051 = vadd.f32 %v2677, %v2927
      %v3052 = vadd.f32 %v2678, %v2932
      %v3053 = vadd.f32 %v2679, %v2935
      %v3054 = vadd.f32 %v2680, %v2940
      %v3055 = vadd.f32 %v2681, %v2943
      %v3056 = vadd.f32 %v2682, %v2948
      %v3057 = vadd.f32 %v2683, %v2951
      %v3058 = vadd.f32 %v2684, %v2956
      %v3059 = vadd.f32 %v2685, %v2959
      %v3060 = vadd.f32 %v2686, %v2964
      %v3061 = vadd.f32 %v2687, %v2967
      %v3062 = vadd.f32 %v2688, %v2972
      %v3063 = vadd.f32 %v2689, %v2975
      %v3064 = vadd.f32 %v2690, %v2980
      %v3065 = vadd.f32 %v2691, %v2983
      %v3066 = vadd.f32 %v2692, %v2988
      %v3067 = vadd.f32 %v2693, %v2991
      %v3068 = vadd.f32 %v2694, %v2996
      %v3069 = vadd.f32 %v2695, %v2999
      %v3070 = vadd.f32 %v2696, %v3004
      %v3071 = vadd.f32 %v2697, %v3007
      %v3072 = vadd.f32 %v2698, %v3012
      %v3073 = vadd.f32 %v2699, %v3015
      %v3074 = vadd.f32 %v2700, %v3020
      %v3075 = vadd.f32 %v2701, %v3023
      %v3076 = vadd.f32 %v2702, %v3028
      %v3077 = vadd.f32 %v2703, %v3031
      %v3078 = vadd.f32 %v2704, %v3036
      %v3079 = vadd.f32 %v2705, %v3039
      %v3080 = vadd.f32 %v2706, %v3044
      %v3081 = vadd.f32 %v2707, %v3047
      %s3082 = sadd.s32 %s153, 352
      %s3083 = sshra.s32 %s3082, 3
      %s3084 = sand.u32 %s3082, 7
      %s3085 = smul.addr %s3083, 4
      %s3086 = scalar_lea.vmem %s0, %s3085
      %v3087 = vld [vmem:[%s3086] sm:$0xf]
      %v3088 = vld [vmem:[%s3086 + $0x4] sm:$0xf]
      %v3089 = vld [vmem:[%s3086 + $0x8] sm:$0xf]
      %v3090 = vld [vmem:[%s3086 + $0xc] sm:$0xf]
      %v3091 = vld [vmem:[%s3086 + $0x10] sm:$0xf]
      %v3092 = vld [vmem:[%s3086 + $0x14] sm:$0xf]
      %v3093 = vld [vmem:[%s3086 + $0x18] sm:$0xf]
      %v3094 = vld [vmem:[%s3086 + $0x1c] sm:$0xf]
      %v3095 = vld [vmem:[%s3086 + $0x20] sm:$0xf]
      %v3096 = vld [vmem:[%s3086 + $0x24] sm:$0xf]
      %v3097 = vld [vmem:[%s3086 + $0x28] sm:$0xf]
      %v3098 = vld [vmem:[%s3086 + $0x2c] sm:$0xf]
      %v3099 = vld [vmem:[%s3086 + $0x30] sm:$0xf]
      %v3100 = vld [vmem:[%s3086 + $0x34] sm:$0xf]
      %v3101 = vld [vmem:[%s3086 + $0x38] sm:$0xf]
      %v3102 = vld [vmem:[%s3086 + $0x3c] sm:$0xf]
      %v3103 = vld [vmem:[%s3086 + $0x40] sm:$0xf]
      %v3104 = vld [vmem:[%s3086 + $0x44] sm:$0xf]
      %v3105 = vld [vmem:[%s3086 + $0x48] sm:$0xf]
      %v3106 = vld [vmem:[%s3086 + $0x4c] sm:$0xf]
      %v3107 = vld [vmem:[%s3086 + $0x50] sm:$0xf]
      %v3108 = vld [vmem:[%s3086 + $0x54] sm:$0xf]
      %v3109 = vld [vmem:[%s3086 + $0x58] sm:$0xf]
      %v3110 = vld [vmem:[%s3086 + $0x5c] sm:$0xf]
      %v3111 = vld [vmem:[%s3086 + $0x60] sm:$0xf]
      %v3112 = vld [vmem:[%s3086 + $0x64] sm:$0xf]
      %v3113 = vld [vmem:[%s3086 + $0x68] sm:$0xf]
      %v3114 = vld [vmem:[%s3086 + $0x6c] sm:$0xf]
      %v3115 = vld [vmem:[%s3086 + $0x70] sm:$0xf]
      %v3116 = vld [vmem:[%s3086 + $0x74] sm:$0xf]
      %v3117 = vld [vmem:[%s3086 + $0x78] sm:$0xf]
      %v3118 = vld [vmem:[%s3086 + $0x7c] sm:$0xf]
      %s3119 = scalar_lea.vmem %s1, 96
      %v3120 = vld [vmem:[%s3119] sm:$0xf]
      %v3121 = vld [vmem:[%s3119 + $0x4] sm:$0xf]
      %v3122 = vld [vmem:[%s3119 + $0x8] sm:$0xf]
      %v3155 = vunpack.c.l.b16 %v3087
      %v3156 = vunpack.c.l.b16 %v3088
      %v3157 = vunpack.c.l.b16 %v3089
      %v3158 = vunpack.c.l.b16 %v3090
      %v3159 = vunpack.c.l.b16 %v3091
      %v3160 = vunpack.c.l.b16 %v3092
      %v3161 = vunpack.c.l.b16 %v3093
      %v3162 = vunpack.c.l.b16 %v3094
      %v3163 = vunpack.c.l.b16 %v3095
      %v3164 = vunpack.c.l.b16 %v3096
      %v3165 = vunpack.c.l.b16 %v3097
      %v3166 = vunpack.c.l.b16 %v3098
      %v3167 = vunpack.c.l.b16 %v3099
      %v3168 = vunpack.c.l.b16 %v3100
      %v3169 = vunpack.c.l.b16 %v3101
      %v3170 = vunpack.c.l.b16 %v3102
      %v3171 = vunpack.c.l.b16 %v3103
      %v3172 = vunpack.c.l.b16 %v3104
      %v3173 = vunpack.c.l.b16 %v3105
      %v3174 = vunpack.c.l.b16 %v3106
      %v3175 = vunpack.c.l.b16 %v3107
      %v3176 = vunpack.c.l.b16 %v3108
      %v3177 = vunpack.c.l.b16 %v3109
      %v3178 = vunpack.c.l.b16 %v3110
      %v3179 = vunpack.c.l.b16 %v3111
      %v3180 = vunpack.c.l.b16 %v3112
      %v3181 = vunpack.c.l.b16 %v3113
      %v3182 = vunpack.c.l.b16 %v3114
      %v3183 = vunpack.c.l.b16 %v3115
      %v3184 = vunpack.c.l.b16 %v3116
      %v3185 = vunpack.c.l.b16 %v3117
      %v3186 = vunpack.c.l.b16 %v3118
      %v3187 = vpack.c.b16 %v3156, %v3155
      %v3188 = vpack.c.b16 %v3158, %v3157
      %v3189 = vpack.c.b16 %v3160, %v3159
      %v3190 = vpack.c.b16 %v3162, %v3161
      %v3191 = vpack.c.b16 %v3164, %v3163
      %v3192 = vpack.c.b16 %v3166, %v3165
      %v3193 = vpack.c.b16 %v3168, %v3167
      %v3194 = vpack.c.b16 %v3170, %v3169
      %v3195 = vpack.c.b16 %v3172, %v3171
      %v3196 = vpack.c.b16 %v3174, %v3173
      %v3197 = vpack.c.b16 %v3176, %v3175
      %v3198 = vpack.c.b16 %v3178, %v3177
      %v3199 = vpack.c.b16 %v3180, %v3179
      %v3200 = vpack.c.b16 %v3182, %v3181
      %v3201 = vpack.c.b16 %v3184, %v3183
      %v3202 = vpack.c.b16 %v3186, %v3185
      %v3206 = vunpack.c.l.b16 %v3120
      %v3207 = vunpack.c.l.b16 %v3121
      %v3208 = vunpack.c.l.b16 %v3122
      %v3209 = vpack.c.b16 %v3207, %v3206
      %v3210 = vpack.c.b16 %v3208, %v3208
      %v3213 = vsel %vm323, %v3187, 0
      %v3216 = vsel %vm323, %v3188, 0
      %v3219 = vsel %vm323, %v3189, 0
      %v3222 = vsel %vm323, %v3190, 0
      %v3225 = vsel %vm323, %v3191, 0
      %v3228 = vsel %vm323, %v3192, 0
      %v3231 = vsel %vm323, %v3193, 0
      %v3234 = vsel %vm323, %v3194, 0
      %v3237 = vsel %vm323, %v3195, 0
      %v3240 = vsel %vm323, %v3196, 0
      %v3243 = vsel %vm323, %v3197, 0
      %v3246 = vsel %vm323, %v3198, 0
      %v3249 = vsel %vm323, %v3199, 0
      %v3252 = vsel %vm323, %v3200, 0
      %v3255 = vsel %vm323, %v3201, 0
      %v3258 = vsel %vm323, %v3202, 0
      %v3261 = vsel %vm372, %v3210, 0
      %3263 = vmatprep.subr.bf16.mxu0 0
      %3264 = vmatpush1.bf16.msra.mxu0 %v3209
      %3265 = vmatprep.subr.bf16.mxu0 0
      %3266 = vmatpush1.bf16.msra.mxu0 %v3261
      %3267 = vmatprep.subr.bf16.mxu0 0
      %3268 = vmatpush1.bf16.msra.mxu0 0
      %3269 = vmatprep.subr.bf16.mxu0 0
      %3270 = vmatpush1.bf16.msra.mxu0 0
      %3271 = vmatprep.subr.bf16.mxu0 0
      %3272 = vmatpush1.bf16.msra.mxu0 0
      %3273 = vmatprep.subr.bf16.mxu0 0
      %3274 = vmatpush1.bf16.msra.mxu0 0
      %3275 = vmatprep.subr.bf16.mxu0 0
      %3276 = vmatpush1.bf16.msra.mxu0 0
      %3277 = vmatprep.subr.bf16.mxu0 0
      %3278 = vmatpush1.bf16.msra.mxu0 0
      %3279 = vmatprep.subr.bf16.mxu0 0
      %3280 = vmatpush1.bf16.msra.mxu0 0
      %3281 = vmatprep.subr.bf16.mxu0 0
      %3282 = vmatpush1.bf16.msra.mxu0 0
      %3283 = vmatprep.subr.bf16.mxu0 0
      %3284 = vmatpush1.bf16.msra.mxu0 0
      %3285 = vmatprep.subr.bf16.mxu0 0
      %3286 = vmatpush1.bf16.msra.mxu0 0
      %3287 = vmatprep.subr.bf16.mxu0 0
      %3288 = vmatpush1.bf16.msra.mxu0 0
      %3289 = vmatprep.subr.bf16.mxu0 0
      %3290 = vmatpush1.bf16.msra.mxu0 0
      %3291 = vmatprep.subr.bf16.mxu0 0
      %3292 = vmatpush1.bf16.msra.mxu0 0
      %3293 = vmatprep.subr.bf16.mxu0 0
      %3294 = vmatpush1.bf16.msra.mxu0 0
      %3295 = vmatprep.mubr.bf16.mxu0 0
      %3296 = vmatmul.mubr.bf16.gmra.mrb[0].mxu0 %v3213
      %v3297 = vpop.f32.mrb[0].mxu0
      %v3298 = vadd.f32 0.0, %v3297
      %v3299 = vpop.f32.mrb[0].mxu0
      %v3300 = vpop.f32.mrb[0].mxu0
      %v3301 = vadd.f32 0.0, %v3300
      %v3302 = vpop.f32.mrb[0].mxu0
      %3303 = vmatprep.mubr.bf16.mxu0 0
      %3304 = vmatmul.mubr.bf16.gmra.mrb[0].mxu0 %v3216
      %v3305 = vpop.f32.mrb[0].mxu0
      %v3306 = vadd.f32 0.0, %v3305
      %v3307 = vpop.f32.mrb[0].mxu0
      %v3308 = vpop.f32.mrb[0].mxu0
      %v3309 = vadd.f32 0.0, %v3308
      %v3310 = vpop.f32.mrb[0].mxu0
      %3311 = vmatprep.mubr.bf16.mxu0 0
      %3312 = vmatmul.mubr.bf16.gmra.mrb[0].mxu0 %v3219
      %v3313 = vpop.f32.mrb[0].mxu0
      %v3314 = vadd.f32 0.0, %v3313
      %v3315 = vpop.f32.mrb[0].mxu0
      %v3316 = vpop.f32.mrb[0].mxu0
      %v3317 = vadd.f32 0.0, %v3316
      %v3318 = vpop.f32.mrb[0].mxu0
      %3319 = vmatprep.mubr.bf16.mxu0 0
      %3320 = vmatmul.mubr.bf16.gmra.mrb[0].mxu0 %v3222
      %v3321 = vpop.f32.mrb[0].mxu0
      %v3322 = vadd.f32 0.0, %v3321
      %v3323 = vpop.f32.mrb[0].mxu0
      %v3324 = vpop.f32.mrb[0].mxu0
      %v3325 = vadd.f32 0.0, %v3324
      %v3326 = vpop.f32.mrb[0].mxu0
      %3327 = vmatprep.mubr.bf16.mxu0 0
      %3328 = vmatmul.mubr.bf16.gmra.mrb[0].mxu0 %v3225
      %v3329 = vpop.f32.mrb[0].mxu0
      %v3330 = vadd.f32 0.0, %v3329
      %v3331 = vpop.f32.mrb[0].mxu0
      %v3332 = vpop.f32.mrb[0].mxu0
      %v3333 = vadd.f32 0.0, %v3332
      %v3334 = vpop.f32.mrb[0].mxu0
      %3335 = vmatprep.mubr.bf16.mxu0 0
      %3336 = vmatmul.mubr.bf16.gmra.mrb[0].mxu0 %v3228
      %v3337 = vpop.f32.mrb[0].mxu0
      %v3338 = vadd.f32 0.0, %v3337
      %v3339 = vpop.f32.mrb[0].mxu0
      %v3340 = vpop.f32.mrb[0].mxu0
      %v3341 = vadd.f32 0.0, %v3340
      %v3342 = vpop.f32.mrb[0].mxu0
      %3343 = vmatprep.mubr.bf16.mxu0 0
      %3344 = vmatmul.mubr.bf16.gmra.mrb[0].mxu0 %v3231
      %v3345 = vpop.f32.mrb[0].mxu0
      %v3346 = vadd.f32 0.0, %v3345
      %v3347 = vpop.f32.mrb[0].mxu0
      %v3348 = vpop.f32.mrb[0].mxu0
      %v3349 = vadd.f32 0.0, %v3348
      %v3350 = vpop.f32.mrb[0].mxu0
      %3351 = vmatprep.mubr.bf16.mxu0 0
      %3352 = vmatmul.mubr.bf16.gmra.mrb[0].mxu0 %v3234
      %v3353 = vpop.f32.mrb[0].mxu0
      %v3354 = vadd.f32 0.0, %v3353
      %v3355 = vpop.f32.mrb[0].mxu0
      %v3356 = vpop.f32.mrb[0].mxu0
      %v3357 = vadd.f32 0.0, %v3356
      %v3358 = vpop.f32.mrb[0].mxu0
      %3359 = vmatprep.mubr.bf16.mxu0 0
      %3360 = vmatmul.mubr.bf16.gmra.mrb[0].mxu0 %v3237
      %v3361 = vpop.f32.mrb[0].mxu0
      %v3362 = vadd.f32 0.0, %v3361
      %v3363 = vpop.f32.mrb[0].mxu0
      %v3364 = vpop.f32.mrb[0].mxu0
      %v3365 = vadd.f32 0.0, %v3364
      %v3366 = vpop.f32.mrb[0].mxu0
      %3367 = vmatprep.mubr.bf16.mxu0 0
      %3368 = vmatmul.mubr.bf16.gmra.mrb[0].mxu0 %v3240
      %v3369 = vpop.f32.mrb[0].mxu0
      %v3370 = vadd.f32 0.0, %v3369
      %v3371 = vpop.f32.mrb[0].mxu0
      %v3372 = vpop.f32.mrb[0].mxu0
      %v3373 = vadd.f32 0.0, %v3372
      %v3374 = vpop.f32.mrb[0].mxu0
      %3375 = vmatprep.mubr.bf16.mxu0 0
      %3376 = vmatmul.mubr.bf16.gmra.mrb[0].mxu0 %v3243
      %v3377 = vpop.f32.mrb[0].mxu0
      %v3378 = vadd.f32 0.0, %v3377
      %v3379 = vpop.f32.mrb[0].mxu0
      %v3380 = vpop.f32.mrb[0].mxu0
      %v3381 = vadd.f32 0.0, %v3380
      %v3382 = vpop.f32.mrb[0].mxu0
      %3383 = vmatprep.mubr.bf16.mxu0 0
      %3384 = vmatmul.mubr.bf16.gmra.mrb[0].mxu0 %v3246
      %v3385 = vpop.f32.mrb[0].mxu0
      %v3386 = vadd.f32 0.0, %v3385
      %v3387 = vpop.f32.mrb[0].mxu0
      %v3388 = vpop.f32.mrb[0].mxu0
      %v3389 = vadd.f32 0.0, %v3388
      %v3390 = vpop.f32.mrb[0].mxu0
      %3391 = vmatprep.mubr.bf16.mxu0 0
      %3392 = vmatmul.mubr.bf16.gmra.mrb[0].mxu0 %v3249
      %v3393 = vpop.f32.mrb[0].mxu0
      %v3394 = vadd.f32 0.0, %v3393
      %v3395 = vpop.f32.mrb[0].mxu0
      %v3396 = vpop.f32.mrb[0].mxu0
      %v3397 = vadd.f32 0.0, %v3396
      %v3398 = vpop.f32.mrb[0].mxu0
      %3399 = vmatprep.mubr.bf16.mxu0 0
      %3400 = vmatmul.mubr.bf16.gmra.mrb[0].mxu0 %v3252
      %v3401 = vpop.f32.mrb[0].mxu0
      %v3402 = vadd.f32 0.0, %v3401
      %v3403 = vpop.f32.mrb[0].mxu0
      %v3404 = vpop.f32.mrb[0].mxu0
      %v3405 = vadd.f32 0.0, %v3404
      %v3406 = vpop.f32.mrb[0].mxu0
      %3407 = vmatprep.mubr.bf16.mxu0 0
      %3408 = vmatmul.mubr.bf16.gmra.mrb[0].mxu0 %v3255
      %v3409 = vpop.f32.mrb[0].mxu0
      %v3410 = vadd.f32 0.0, %v3409
      %v3411 = vpop.f32.mrb[0].mxu0
      %v3412 = vpop.f32.mrb[0].mxu0
      %v3413 = vadd.f32 0.0, %v3412
      %v3414 = vpop.f32.mrb[0].mxu0
      %3415 = vmatprep.mubr.bf16.mxu0 0
      %3416 = vmatmul.mubr.bf16.gmra.mrb[0].mxu0 %v3258
      %v3417 = vpop.f32.mrb[0].mxu0
      %v3418 = vadd.f32 0.0, %v3417
      %v3419 = vpop.f32.mrb[0].mxu0
      %v3420 = vpop.f32.mrb[0].mxu0
      %v3421 = vadd.f32 0.0, %v3420
      %v3422 = vpop.f32.mrb[0].mxu0
      %3423 = vdwg.mxu0
      %v3424 = vadd.f32 %v3050, %v3298
      %v3425 = vadd.f32 %v3051, %v3301
      %v3426 = vadd.f32 %v3052, %v3306
      %v3427 = vadd.f32 %v3053, %v3309
      %v3428 = vadd.f32 %v3054, %v3314
      %v3429 = vadd.f32 %v3055, %v3317
      %v3430 = vadd.f32 %v3056, %v3322
      %v3431 = vadd.f32 %v3057, %v3325
      %v3432 = vadd.f32 %v3058, %v3330
      %v3433 = vadd.f32 %v3059, %v3333
      %v3434 = vadd.f32 %v3060, %v3338
      %v3435 = vadd.f32 %v3061, %v3341
      %v3436 = vadd.f32 %v3062, %v3346
      %v3437 = vadd.f32 %v3063, %v3349
      %v3438 = vadd.f32 %v3064, %v3354
      %v3439 = vadd.f32 %v3065, %v3357
      %v3440 = vadd.f32 %v3066, %v3362
      %v3441 = vadd.f32 %v3067, %v3365
      %v3442 = vadd.f32 %v3068, %v3370
      %v3443 = vadd.f32 %v3069, %v3373
      %v3444 = vadd.f32 %v3070, %v3378
      %v3445 = vadd.f32 %v3071, %v3381
      %v3446 = vadd.f32 %v3072, %v3386
      %v3447 = vadd.f32 %v3073, %v3389
      %v3448 = vadd.f32 %v3074, %v3394
      %v3449 = vadd.f32 %v3075, %v3397
      %v3450 = vadd.f32 %v3076, %v3402
      %v3451 = vadd.f32 %v3077, %v3405
      %v3452 = vadd.f32 %v3078, %v3410
      %v3453 = vadd.f32 %v3079, %v3413
      %v3454 = vadd.f32 %v3080, %v3418
      %v3455 = vadd.f32 %v3081, %v3421
      %v3456 = vld [vmem:[%s2] sm:$0x1]
      %v3458 = vlaneseq
      %v3459 = vshrl.u32 %v3458, 7
      %v3460 = vsub.s32 0, %v3459
      %v3461 = vrot.slane %v3456, %v3460
      %v3463 = vadd.f32 %v3424, %v3461
      %v3464 = vadd.f32 %v3425, %v3461
      %v3465 = vadd.f32 %v3426, %v3461
      %v3466 = vadd.f32 %v3427, %v3461
      %v3467 = vadd.f32 %v3428, %v3461
      %v3468 = vadd.f32 %v3429, %v3461
      %v3469 = vadd.f32 %v3430, %v3461
      %v3470 = vadd.f32 %v3431, %v3461
      %v3471 = vadd.f32 %v3432, %v3461
      %v3472 = vadd.f32 %v3433, %v3461
      %v3473 = vadd.f32 %v3434, %v3461
      %v3474 = vadd.f32 %v3435, %v3461
      %v3475 = vadd.f32 %v3436, %v3461
      %v3476 = vadd.f32 %v3437, %v3461
      %v3477 = vadd.f32 %v3438, %v3461
      %v3478 = vadd.f32 %v3439, %v3461
      %v3479 = vadd.f32 %v3440, %v3461
      %v3480 = vadd.f32 %v3441, %v3461
      %v3481 = vadd.f32 %v3442, %v3461
      %v3482 = vadd.f32 %v3443, %v3461
      %v3483 = vadd.f32 %v3444, %v3461
      %v3484 = vadd.f32 %v3445, %v3461
      %v3485 = vadd.f32 %v3446, %v3461
      %v3486 = vadd.f32 %v3447, %v3461
      %v3487 = vadd.f32 %v3448, %v3461
      %v3488 = vadd.f32 %v3449, %v3461
      %v3489 = vadd.f32 %v3450, %v3461
      %v3490 = vadd.f32 %v3451, %v3461
      %v3491 = vadd.f32 %v3452, %v3461
      %v3492 = vadd.f32 %v3453, %v3461
      %v3493 = vadd.f32 %v3454, %v3461
      %v3494 = vadd.f32 %v3455, %v3461
      %v3495 = vmax.f32 %v3463, 0.0
      %v3496 = vmax.f32 %v3464, 0.0
      %v3497 = vmax.f32 %v3465, 0.0
      %v3498 = vmax.f32 %v3466, 0.0
      %v3499 = vmax.f32 %v3467, 0.0
      %v3500 = vmax.f32 %v3468, 0.0
      %v3501 = vmax.f32 %v3469, 0.0
      %v3502 = vmax.f32 %v3470, 0.0
      %v3503 = vmax.f32 %v3471, 0.0
      %v3504 = vmax.f32 %v3472, 0.0
      %v3505 = vmax.f32 %v3473, 0.0
      %v3506 = vmax.f32 %v3474, 0.0
      %v3507 = vmax.f32 %v3475, 0.0
      %v3508 = vmax.f32 %v3476, 0.0
      %v3509 = vmax.f32 %v3477, 0.0
      %v3510 = vmax.f32 %v3478, 0.0
      %v3511 = vmax.f32 %v3479, 0.0
      %v3512 = vmax.f32 %v3480, 0.0
      %v3513 = vmax.f32 %v3481, 0.0
      %v3514 = vmax.f32 %v3482, 0.0
      %v3515 = vmax.f32 %v3483, 0.0
      %v3516 = vmax.f32 %v3484, 0.0
      %v3517 = vmax.f32 %v3485, 0.0
      %v3518 = vmax.f32 %v3486, 0.0
      %v3519 = vmax.f32 %v3487, 0.0
      %v3520 = vmax.f32 %v3488, 0.0
      %v3521 = vmax.f32 %v3489, 0.0
      %v3522 = vmax.f32 %v3490, 0.0
      %v3523 = vmax.f32 %v3491, 0.0
      %v3524 = vmax.f32 %v3492, 0.0
      %v3525 = vmax.f32 %v3493, 0.0
      %v3526 = vmax.f32 %v3494, 0.0
      %v3527 = vpack.c.bf16 %v3496, %v3495
      %v3528 = vpack.c.bf16 %v3498, %v3497
      %v3529 = vpack.c.bf16 %v3500, %v3499
      %v3530 = vpack.c.bf16 %v3502, %v3501
      %v3531 = vpack.c.bf16 %v3504, %v3503
      %v3532 = vpack.c.bf16 %v3506, %v3505
      %v3533 = vpack.c.bf16 %v3508, %v3507
      %v3534 = vpack.c.bf16 %v3510, %v3509
      %v3535 = vpack.c.bf16 %v3512, %v3511
      %v3536 = vpack.c.bf16 %v3514, %v3513
      %v3537 = vpack.c.bf16 %v3516, %v3515
      %v3538 = vpack.c.bf16 %v3518, %v3517
      %v3539 = vpack.c.bf16 %v3520, %v3519
      %v3540 = vpack.c.bf16 %v3522, %v3521
      %v3541 = vpack.c.bf16 %v3524, %v3523
      %v3542 = vpack.c.bf16 %v3526, %v3525
      %v3559 = vunpack.c.l.b16 %v3527
      %v3560 = vunpack.c.h.b16 %v3527
      %v3561 = vunpack.c.l.b16 %v3528
      %v3562 = vunpack.c.h.b16 %v3528
      %v3563 = vunpack.c.l.b16 %v3529
      %v3564 = vunpack.c.h.b16 %v3529
      %v3565 = vunpack.c.l.b16 %v3530
      %v3566 = vunpack.c.h.b16 %v3530
      %v3567 = vunpack.c.l.b16 %v3531
      %v3568 = vunpack.c.h.b16 %v3531
      %v3569 = vunpack.c.l.b16 %v3532
      %v3570 = vunpack.c.h.b16 %v3532
      %v3571 = vunpack.c.l.b16 %v3533
      %v3572 = vunpack.c.h.b16 %v3533
      %v3573 = vunpack.c.l.b16 %v3534
      %v3574 = vunpack.c.h.b16 %v3534
      %v3575 = vunpack.c.l.b16 %v3535
      %v3576 = vunpack.c.h.b16 %v3535
      %v3577 = vunpack.c.l.b16 %v3536
      %v3578 = vunpack.c.h.b16 %v3536
      %v3579 = vunpack.c.l.b16 %v3537
      %v3580 = vunpack.c.h.b16 %v3537
      %v3581 = vunpack.c.l.b16 %v3538
      %v3582 = vunpack.c.h.b16 %v3538
      %v3583 = vunpack.c.l.b16 %v3539
      %v3584 = vunpack.c.h.b16 %v3539
      %v3585 = vunpack.c.l.b16 %v3540
      %v3586 = vunpack.c.h.b16 %v3540
      %v3587 = vunpack.c.l.b16 %v3541
      %v3588 = vunpack.c.h.b16 %v3541
      %v3589 = vunpack.c.l.b16 %v3542
      %v3590 = vunpack.c.h.b16 %v3542
      %v3591 = vpack.c.b16 %v3559, %v3559
      %v3592 = vpack.c.b16 %v3560, %v3560
      %v3593 = vpack.c.b16 %v3561, %v3561
      %v3594 = vpack.c.b16 %v3562, %v3562
      %v3595 = vpack.c.b16 %v3563, %v3563
      %v3596 = vpack.c.b16 %v3564, %v3564
      %v3597 = vpack.c.b16 %v3565, %v3565
      %v3598 = vpack.c.b16 %v3566, %v3566
      %v3599 = vpack.c.b16 %v3567, %v3567
      %v3600 = vpack.c.b16 %v3568, %v3568
      %v3601 = vpack.c.b16 %v3569, %v3569
      %v3602 = vpack.c.b16 %v3570, %v3570
      %v3603 = vpack.c.b16 %v3571, %v3571
      %v3604 = vpack.c.b16 %v3572, %v3572
      %v3605 = vpack.c.b16 %v3573, %v3573
      %v3606 = vpack.c.b16 %v3574, %v3574
      %v3607 = vpack.c.b16 %v3575, %v3575
      %v3608 = vpack.c.b16 %v3576, %v3576
      %v3609 = vpack.c.b16 %v3577, %v3577
      %v3610 = vpack.c.b16 %v3578, %v3578
      %v3611 = vpack.c.b16 %v3579, %v3579
      %v3612 = vpack.c.b16 %v3580, %v3580
      %v3613 = vpack.c.b16 %v3581, %v3581
      %v3614 = vpack.c.b16 %v3582, %v3582
      %v3615 = vpack.c.b16 %v3583, %v3583
      %v3616 = vpack.c.b16 %v3584, %v3584
      %v3617 = vpack.c.b16 %v3585, %v3585
      %v3618 = vpack.c.b16 %v3586, %v3586
      %v3619 = vpack.c.b16 %v3587, %v3587
      %v3620 = vpack.c.b16 %v3588, %v3588
      %v3621 = vpack.c.b16 %v3589, %v3589
      %v3622 = vpack.c.b16 %v3590, %v3590
      %vm3655 = vcmask 60416
      %3656 = vst.msk [vmem:[%s150] sm:$0xf] %vm3655, %v3591
      %3657 = vst.msk [vmem:[%s150 + $0x4] sm:$0xf] %vm3655, %v3592
      %3658 = vst.msk [vmem:[%s150 + $0x8] sm:$0xf] %vm3655, %v3593
      %3659 = vst.msk [vmem:[%s150 + $0xc] sm:$0xf] %vm3655, %v3594
      %3660 = vst.msk [vmem:[%s150 + $0x10] sm:$0xf] %vm3655, %v3595
      %3661 = vst.msk [vmem:[%s150 + $0x14] sm:$0xf] %vm3655, %v3596
      %3662 = vst.msk [vmem:[%s150 + $0x18] sm:$0xf] %vm3655, %v3597
      %3663 = vst.msk [vmem:[%s150 + $0x1c] sm:$0xf] %vm3655, %v3598
      %3664 = vst.msk [vmem:[%s150 + $0x20] sm:$0xf] %vm3655, %v3599
      %3665 = vst.msk [vmem:[%s150 + $0x24] sm:$0xf] %vm3655, %v3600
      %3666 = vst.msk [vmem:[%s150 + $0x28] sm:$0xf] %vm3655, %v3601
      %3667 = vst.msk [vmem:[%s150 + $0x2c] sm:$0xf] %vm3655, %v3602
      %3668 = vst.msk [vmem:[%s150 + $0x30] sm:$0xf] %vm3655, %v3603
      %3669 = vst.msk [vmem:[%s150 + $0x34] sm:$0xf] %vm3655, %v3604
      %3670 = vst.msk [vmem:[%s150 + $0x38] sm:$0xf] %vm3655, %v3605
      %3671 = vst.msk [vmem:[%s150 + $0x3c] sm:$0xf] %vm3655, %v3606
      %3672 = vst.msk [vmem:[%s150 + $0x40] sm:$0xf] %vm3655, %v3607
      %3673 = vst.msk [vmem:[%s150 + $0x44] sm:$0xf] %vm3655, %v3608
      %3674 = vst.msk [vmem:[%s150 + $0x48] sm:$0xf] %vm3655, %v3609
      %3675 = vst.msk [vmem:[%s150 + $0x4c] sm:$0xf] %vm3655, %v3610
      %3676 = vst.msk [vmem:[%s150 + $0x50] sm:$0xf] %vm3655, %v3611
      %3677 = vst.msk [vmem:[%s150 + $0x54] sm:$0xf] %vm3655, %v3612
      %3678 = vst.msk [vmem:[%s150 + $0x58] sm:$0xf] %vm3655, %v3613
      %3679 = vst.msk [vmem:[%s150 + $0x5c] sm:$0xf] %vm3655, %v3614
      %3680 = vst.msk [vmem:[%s150 + $0x60] sm:$0xf] %vm3655, %v3615
      %3681 = vst.msk [vmem:[%s150 + $0x64] sm:$0xf] %vm3655, %v3616
      %3682 = vst.msk [vmem:[%s150 + $0x68] sm:$0xf] %vm3655, %v3617
      %3683 = vst.msk [vmem:[%s150 + $0x6c] sm:$0xf] %vm3655, %v3618
      %3684 = vst.msk [vmem:[%s150 + $0x70] sm:$0xf] %vm3655, %v3619
      %3685 = vst.msk [vmem:[%s150 + $0x74] sm:$0xf] %vm3655, %v3620
      %3686 = vst.msk [vmem:[%s150 + $0x78] sm:$0xf] %vm3655, %v3621
      %3687 = vst.msk [vmem:[%s150 + $0x7c] sm:$0xf] %vm3655, %v3622
      %s3688 = smul.u32 32, %s14
      %p3689 = scmp.lt.s32.totalorder %s3688, 415
      %s3690 = scalar_select %p3689, %s3688, 415
      %s3691 = smul.addr %s3690, 4
      %s3692 = scalar_lea.vmem %s3, %s3691
      // Predicated region
      $region33: #{down_forward.6} parent=31 // pred_check
        %p3693 = pneg %p95
      $region34: #{down_forward.6} parent=31 // pred_check_branch
        %3695 = sbr.rel (%p3693) target = $region36
      $region35: #{down_forward.6} parent=31 // pred_region
        %s3696 = smul.u32 32, %s14
      $region36: #{down_forward.6} parent=31 // pred_fallthru
        _
    $region32: #{down_forward.6} parent=5 // pred_fallthru
      _
    %p3697 = scmp.le.s32.totalorder 2, %s9
    // Predicated region
    $region37: #{down_forward.6} parent=5 // pred_check
      %p3698 = pneg %p3697
    $region38: #{down_forward.6} parent=5 // pred_check_branch
      %3700 = sbr.rel (%p3698) target = $region40
    $region39: #{down_forward.6} parent=5 // pred_region
      %s3701 = ssub.s32 %s9, 2
      // Predicated region
      $region41: #{down_forward.6} parent=39 // pred_check
        %p3702 = pneg %p101
      $region42: #{down_forward.6} parent=39 // pred_check_branch
        %3704 = sbr.rel (%p3702) target = $region44
      $region43: #{down_forward.6} parent=39 // pred_region
        %s3705 = smul.u32 32, %s15
        %p3706 = scmp.lt.s32.totalorder %s3705, 415
        %s3707 = scalar_select %p3706, %s3705, 415
        %s3708 = smul.addr %s3707, 4
        %s3709 = scalar_lea.vmem %s3, %s3708
      $region44: #{down_forward.6} parent=39 // pred_fallthru
        _
    $region40: #{down_forward.6} parent=5 // pred_fallthru
      _
  $region6: #{down_forward.6} parent=0 // loop_footer
    %s13 = sadd.s32 1, %s9
  $region7: #{down_forward.6} parent=0 // loop_footer_branch
    %8 = sbr.rel target = $region3
  $region8: #{down_forward.6} parent=0 // loop_exit
    _

</llo_original>
